<compile_context>
chip_gen: v7x
topology: tpu7x:2x2x1
jax: 0.10.0
libtpu: 0.0.40
codegen_flags: <defaults>
</compile_context>

<pallas_src>
import functools

import jax
import jax.numpy as jnp
from jax.experimental import pallas as pl
from jax.experimental.pallas import tpu as pltpu

_VMEM_LIMIT = 32 * 1024 * 1024  # <= v7x physical VMEM (64 MiB/TC); actual peak ~11 MiB


# ----------------------------------------------------------------------------
# Pallas kernels
# ----------------------------------------------------------------------------
def _apply_act(acc, activation):
    if activation == "leaky_relu":
        return jnp.where(acc >= 0, acc, 0.01 * acc)   # torch default slope 0.01
    if activation == "relu":
        return jnp.maximum(acc, 0.0)
    if activation == "tanh":
        return jnp.tanh(acc)
    return acc                                         # "none"


def _matmul_bias_act_kernel(x_ref, w_ref, b_ref, o_ref, *, activation):
    """o = act(x @ w + b) on one (M, tn) output tile."""
    acc = jnp.dot(x_ref[...], w_ref[...], preferred_element_type=jnp.float32)
    acc = acc + b_ref[...]                             # (1, tn) broadcast over rows
    acc = _apply_act(acc, activation)
    o_ref[...] = acc.astype(o_ref.dtype)


def _matmul_bias_act_bn_kernel(x_ref, w_ref, b_ref, g_ref, bt_ref, o_ref,
                               *, activation, eps):
    """Conv block tile: o = BN(act(x @ w + b)) with training-mode batch stats.

    Only the channel (N) axis is tiled, so this tile holds every row
    (batch * spatial) of its channel slice -> per-channel mean/var are exact.
    """
    acc = jnp.dot(x_ref[...], w_ref[...], preferred_element_type=jnp.float32)
    acc = acc + b_ref[...]
    acc = _apply_act(acc, activation)
    mean = jnp.mean(acc, axis=0, keepdims=True)
    var = jnp.mean(jnp.square(acc - mean), axis=0, keepdims=True)   # biased var
    inv = jax.lax.rsqrt(var + eps)
    o_ref[...] = ((acc - mean) * inv * g_ref[...] + bt_ref[...]).astype(o_ref.dtype)


def linear_act(x, w, b, activation="none", tn=None, out_dtype=jnp.float32):
    """y = act(x @ w + b).  x:(M,K), w:(K,N), b:(N,).  Tiles the N axis by tn."""
    M, K = x.shape
    K2, N = w.shape
    assert K == K2
    if tn is None or N % tn != 0 or tn % 128 != 0:
        tn = N                                     # single full-width block
    grid = (N // tn,)
    kernel = functools.partial(_matmul_bias_act_kernel, activation=activation)
    return pl.pallas_call(
        kernel,
        out_shape=jax.ShapeDtypeStruct((M, N), out_dtype),
        grid=grid,
        in_specs=[
            pl.BlockSpec((M, K), lambda j: (0, 0)),    # full LHS, stays resident
            pl.BlockSpec((K, tn), lambda j: (0, j)),   # weight column tile
            pl.BlockSpec((1, tn), lambda j: (0, j)),   # bias column tile
        ],
        out_specs=pl.BlockSpec((M, tn), lambda j: (0, j)),
        compiler_params=pltpu.CompilerParams(
            dimension_semantics=("parallel",),
            vmem_limit_bytes=_VMEM_LIMIT,
        ),
    )(x, w, b.reshape(1, N))


def conv_matmul_bn(cols, w, b, gamma, beta, activation, eps=1e-5,
                   out_dtype=jnp.bfloat16):
    """Fused conv-as-matmul + bias + activation + BatchNorm (batch stats)."""
    M, K = cols.shape
    K2, N = w.shape
    assert K == K2
    tn = 128 if N % 128 == 0 else N                # parallel channel tiles
    grid = (N // tn,)
    kernel = functools.partial(_matmul_bias_act_bn_kernel,
                               activation=activation, eps=eps)
    return pl.pallas_call(
        kernel,
        out_shape=jax.ShapeDtypeStruct((M, N), out_dtype),
        grid=grid,
        in_specs=[
            pl.BlockSpec((M, K), lambda j: (0, 0)),    # full LHS, stays resident
            pl.BlockSpec((K, tn), lambda j: (0, j)),   # weight column tile
            pl.BlockSpec((1, tn), lambda j: (0, j)),   # bias
            pl.BlockSpec((1, tn), lambda j: (0, j)),   # gamma
            pl.BlockSpec((1, tn), lambda j: (0, j)),   # beta
        ],
        out_specs=pl.BlockSpec((M, tn), lambda j: (0, j)),
        compiler_params=pltpu.CompilerParams(
            dimension_semantics=("parallel",),
            vmem_limit_bytes=_VMEM_LIMIT,
        ),
    )(cols, w, b.reshape(1, N), gamma.reshape(1, N), beta.reshape(1, N))


# ----------------------------------------------------------------------------
# Glue (plain JAX): im2col + layer wiring
# ----------------------------------------------------------------------------
def im2col(x_nhwc, kh, kw, stride):
    """Extract 3x3 patches; column ordering (C, KH, KW) matches torch OIHW flatten."""
    # TODO(synk): fuse the 9-shift accumulation into the Pallas conv kernel to
    # avoid materializing the im2col tensor in HBM (kept in bf16 here instead).
    N, H, W, C = x_nhwc.shape
    OH = (H - kh) // stride + 1
    OW = (W - kw) // stride + 1
    patches = []
    for i in range(kh):
        for j in range(kw):
            p = x_nhwc[:, i:i + (OH - 1) * stride + 1:stride,
                          j:j + (OW - 1) * stride + 1:stride, :]
            patches.append(p)                          # (N, OH, OW, C)
    P = jnp.stack(patches, axis=0).reshape(kh, kw, N, OH, OW, C)
    P = jnp.transpose(P, (2, 3, 4, 5, 0, 1))           # (N, OH, OW, C, KH, KW)
    return P.reshape(N * OH * OW, C * kh * kw), OH, OW


def conv_block(x_nhwc, layer, act):
    """Conv2d(3x3, stride) -> activation -> BatchNorm2d, fused in one kernel."""
    N = x_nhwc.shape[0]
    w, b, gamma, beta, stride = (layer["w"], layer["b"], layer["gamma"],
                                 layer["beta"], layer["stride"])
    OC, IC, KH, KW = w.shape
    cols, OH, OW = im2col(x_nhwc, KH, KW, stride)                  # bf16
    wmat = jnp.transpose(w.reshape(OC, IC * KH * KW), (1, 0))      # (K, OC) bf16
    if OC < 128:
        # Lane-dense stores: pad Cout (64 -> 128) with zero columns; padded
        # channels stay exactly 0 through act+BN and are sliced off below.
        pad = 128 - OC
        wmat = jnp.pad(wmat, ((0, 0), (0, pad)))
        y = conv_matmul_bn(cols, wmat,
                           jnp.pad(b, (0, pad)), jnp.pad(gamma, (0, pad)),
                           jnp.pad(beta, (0, pad)), act)
        y = y[:, :OC]
    else:
        y = conv_matmul_bn(cols, wmat, b, gamma, beta, act)
    return y.reshape(N, OH, OW, OC)


CONV_CFG = [  # out_ch, stride per layer (in_ch handled at init)
    (64, 2), (128, 2), (256, 2), (256, 1), (256, 1), (512, 2), (512, 1),
]
CONV_ACTS = ["leaky_relu"] * 6 + ["relu"]


def conv_out_hw(h, w):
    for _, s in CONV_CFG:
        h = (h - 3) // s + 1
        w = (w - 3) // s + 1
    return h, w


def _uniform(key, shape, bound, dtype=jnp.float32):
    return jax.random.uniform(key, shape, jnp.float32, -bound, bound).astype(dtype)


def init_params(key, img_shape):
    c, h, w = img_shape
    params = {"convs": []}
    ic = c
    for oc, stride in CONV_CFG:
        key, kw_, kb_ = jax.random.split(key, 3)
        bound = 1.0 / float(ic * 9) ** 0.5
        params["convs"].append(dict(
            w=_uniform(kw_, (oc, ic, 3, 3), bound, jnp.bfloat16),   # bf16 weights
            b=_uniform(kb_, (oc,), bound),                          # f32 bias
            gamma=jnp.ones((oc,), jnp.float32),
            beta=jnp.zeros((oc,), jnp.float32),
            stride=stride,
        ))
        ic = oc

    oh, ow = conv_out_hw(h, w)
    # The torch module hard-codes fc1 in_features=32768, which is inconsistent
    # with its own conv stack; we derive the real flatten dim (512*oh*ow).
    flat = 512 * oh * ow

    key, kw_, kb_ = jax.random.split(key, 3)
    bound = 1.0 / float(flat) ** 0.5
    params["fc1_w"] = _uniform(kw_, (flat, 5120), bound, jnp.bfloat16)
    params["fc1_b"] = _uniform(kb_, (5120,), bound)

    # viewpoint (512) and identity (1024) heads merged into one weight matrix.
    bound = 1.0 / float(5120) ** 0.5
    key, kvw, kvb, kiw, kib = jax.random.split(key, 5)
    vp_w = _uniform(kvw, (5120, 512), bound, jnp.bfloat16)
    vp_b = _uniform(kvb, (512,), bound)
    id_w = _uniform(kiw, (5120, 1024), bound, jnp.bfloat16)
    id_b = _uniform(kib, (1024,), bound)
    params["heads_w"] = jnp.concatenate([vp_w, id_w], axis=1)       # (5120, 1536)
    params["heads_b"] = jnp.concatenate([vp_b, id_b], axis=0)       # (1536,)
    return params


def disentangling_net_r_forward(params, img_nchw):
    """Returns [view (N,512), identity (N,1024)] — same as the torch forward."""
    x = jnp.transpose(img_nchw, (0, 2, 3, 1)).astype(jnp.bfloat16)  # NCHW -> NHWC
    for layer, act in zip(params["convs"], CONV_ACTS):
        x = conv_block(x, layer, act)
    n = x.shape[0]
    # TODO(synk): torch source has `x = x.view(x.size(0), 1)` which only works
    # when the feature count is 1; implement the intended flatten (NCHW order).
    x = jnp.transpose(x, (0, 3, 1, 2)).reshape(n, -1)               # bf16
    x = linear_act(x, params["fc1_w"], params["fc1_b"], "leaky_relu",
                   tn=2560, out_dtype=jnp.bfloat16)
    heads = linear_act(x, params["heads_w"], params["heads_b"], "tanh",
                       tn=512, out_dtype=jnp.float32)               # one launch
    view = heads[:, :512]
    identity = heads[:, 512:]
    return [view, identity]


# ----------------------------------------------------------------------------
if __name__ == "__main__":
    img_shape = (3, 96, 96)        # small but deep enough for all 7 convs
    batch = 2

    key = jax.random.PRNGKey(0)
    key, pkey, xkey = jax.random.split(key, 3)
    params = init_params(pkey, img_shape)
    img = jax.random.normal(xkey, (batch,) + img_shape, jnp.float32)

    view, identity = disentangling_net_r_forward(params, img)
    jax.block_until_ready(view)
    jax.block_until_ready(identity)

    assert view.shape == (batch, 512), view.shape
    assert identity.shape == (batch, 1024), identity.shape
    assert bool(jnp.all(jnp.isfinite(view))) and bool(jnp.all(jnp.isfinite(identity)))
    print("KERNEL_OK")
</pallas_src>

<mosaic_0001>
module attributes {stable_mosaic.version = 11 : i64} {
  func.func @_matmul_bias_act_bn_kernel(%arg0: i32, %arg1: memref<4418x27xbf16, #tpu.memory_space<vmem>>, %arg2: memref<27x128xbf16, #tpu.memory_space<vmem>>, %arg3: memref<1x128xf32, #tpu.memory_space<vmem>>, %arg4: memref<1x128xf32, #tpu.memory_space<vmem>>, %arg5: memref<1x128xf32, #tpu.memory_space<vmem>>, %arg6: memref<4418x128xbf16, #tpu.memory_space<vmem>>) attributes {dimension_semantics = [#tpu.dimension_semantics<parallel>], iteration_bounds = array<i64: 1>, scalar_prefetch = 0 : i64, scratch_operands = 0 : i64, tpu.core_type = #tpu.core_type<tc>, window_params = [{pipeline_mode = #tpu.pipeline_mode<synchronous>, transform_indices = @transform_0, window_bounds = array<i64: 4418, 27>}, {transform_indices = @transform_1, window_bounds = array<i64: 27, 128>}, {transform_indices = @transform_2, window_bounds = array<i64: 1, 128>}, {transform_indices = @transform_3, window_bounds = array<i64: 1, 128>}, {transform_indices = @transform_4, window_bounds = array<i64: 1, 128>}, {transform_indices = @transform_5, window_bounds = array<i64: 4418, 128>}]} {
    %c0 = arith.constant 0 : index
    %c0_0 = arith.constant 0 : index
    %0 = vector.load %arg1[%c0, %c0_0] : memref<4418x27xbf16, #tpu.memory_space<vmem>>, vector<4418x27xbf16>
    %c0_1 = arith.constant 0 : index
    %c0_2 = arith.constant 0 : index
    %1 = vector.load %arg2[%c0_1, %c0_2] : memref<27x128xbf16, #tpu.memory_space<vmem>>, vector<27x128xbf16>
    %cst = arith.constant dense<0.000000e+00> : vector<4418x128xf32>
    %2 = tpu.matmul %0, %1, %cst {dimension_numbers = #tpu.dot_dimension_numbers<[1], [0], [0], [1], [0, 0, 1, 1], [], []>} : vector<4418x27xbf16>, vector<27x128xbf16>, vector<4418x128xf32> -> vector<4418x128xf32>
    %c0_3 = arith.constant 0 : index
    %c0_4 = arith.constant 0 : index
    %3 = vector.load %arg3[%c0_3, %c0_4] : memref<1x128xf32, #tpu.memory_space<vmem>>, vector<1x128xf32>
    %4 = vector.broadcast %3 : vector<1x128xf32> to vector<4418x128xf32>
    %5 = arith.addf %2, %4 : vector<4418x128xf32>
    %cst_5 = arith.constant 0.000000e+00 : f32
    %6 = vector.broadcast %cst_5 : f32 to vector<4418x128xf32>
    %7 = arith.cmpf oge, %5, %6 : vector<4418x128xf32>
    %cst_6 = arith.constant 0.00999999977 : f32
    %8 = vector.broadcast %cst_6 : f32 to vector<4418x128xf32>
    %9 = arith.mulf %8, %5 : vector<4418x128xf32>
    %10 = arith.select %7, %5, %9 : vector<4418x128xi1>, vector<4418x128xf32>
    %cst_7 = arith.constant dense<0.000000e+00> : vector<128xf32>
    %11 = vector.multi_reduction <add>, %10, %cst_7 [0] : vector<4418x128xf32> to vector<128xf32>
    %12 = vector.shape_cast %11 : vector<128xf32> to vector<1x128xf32>
    %cst_8 = arith.constant 4.418000e+03 : f32
    %13 = vector.broadcast %cst_8 : f32 to vector<1x128xf32>
    %14 = arith.divf %12, %13 : vector<1x128xf32>
    %15 = vector.broadcast %14 : vector<1x128xf32> to vector<4418x128xf32>
    %16 = arith.subf %10, %15 : vector<4418x128xf32>
    %17 = arith.mulf %16, %16 : vector<4418x128xf32>
    %cst_9 = arith.constant dense<0.000000e+00> : vector<128xf32>
    %18 = vector.multi_reduction <add>, %17, %cst_9 [0] : vector<4418x128xf32> to vector<128xf32>
    %19 = vector.shape_cast %18 : vector<128xf32> to vector<1x128xf32>
    %cst_10 = arith.constant 4.418000e+03 : f32
    %20 = vector.broadcast %cst_10 : f32 to vector<1x128xf32>
    %21 = arith.divf %19, %20 : vector<1x128xf32>
    %cst_11 = arith.constant 9.99999974E-6 : f32
    %22 = vector.broadcast %cst_11 : f32 to vector<1x128xf32>
    %23 = arith.addf %21, %22 : vector<1x128xf32>
    %24 = math.rsqrt %23 : vector<1x128xf32>
    %25 = vector.broadcast %14 : vector<1x128xf32> to vector<4418x128xf32>
    %26 = arith.subf %10, %25 : vector<4418x128xf32>
    %27 = vector.broadcast %24 : vector<1x128xf32> to vector<4418x128xf32>
    %28 = arith.mulf %26, %27 : vector<4418x128xf32>
    %c0_12 = arith.constant 0 : index
    %c0_13 = arith.constant 0 : index
    %29 = vector.load %arg4[%c0_12, %c0_13] : memref<1x128xf32, #tpu.memory_space<vmem>>, vector<1x128xf32>
    %30 = vector.broadcast %29 : vector<1x128xf32> to vector<4418x128xf32>
    %31 = arith.mulf %28, %30 : vector<4418x128xf32>
    %c0_14 = arith.constant 0 : index
    %c0_15 = arith.constant 0 : index
    %32 = vector.load %arg5[%c0_14, %c0_15] : memref<1x128xf32, #tpu.memory_space<vmem>>, vector<1x128xf32>
    %33 = vector.broadcast %32 : vector<1x128xf32> to vector<4418x128xf32>
    %34 = arith.addf %31, %33 : vector<4418x128xf32>
    %35 = arith.truncf %34 : vector<4418x128xf32> to vector<4418x128xbf16>
    %c0_16 = arith.constant 0 : index
    %c0_17 = arith.constant 0 : index
    %36 = vector.load %arg6[%c0_16, %c0_17] : memref<4418x128xbf16, #tpu.memory_space<vmem>>, vector<4418x128xbf16>
    tpu.vector_store %arg6[%c0_16, %c0_17], %35 {strides = array<i32>} : memref<4418x128xbf16, #tpu.memory_space<vmem>>, vector<4418x128xbf16>,
    return
  }
  func.func @transform_0(%arg0: i32) -> (i32, i32) {
    %c0_i32 = arith.constant 0 : i32
    %c0_i32_0 = arith.constant 0 : i32
    %c0_i32_1 = arith.constant 0 : i32
    return %c0_i32, %c0_i32_0 : i32, i32
  }
  func.func @transform_1(%arg0: i32) -> (i32, i32) {
    %c0_i32 = arith.constant 0 : i32
    %c0_i32_0 = arith.constant 0 : i32
    return %c0_i32, %arg0 : i32, i32
  }
  func.func @transform_2(%arg0: i32) -> (i32, i32) {
    %c0_i32 = arith.constant 0 : i32
    %c0_i32_0 = arith.constant 0 : i32
    return %c0_i32, %arg0 : i32, i32
  }
  func.func @transform_3(%arg0: i32) -> (i32, i32) {
    %c0_i32 = arith.constant 0 : i32
    %c0_i32_0 = arith.constant 0 : i32
    return %c0_i32, %arg0 : i32, i32
  }
  func.func @transform_4(%arg0: i32) -> (i32, i32) {
    %c0_i32 = arith.constant 0 : i32
    %c0_i32_0 = arith.constant 0 : i32
    return %c0_i32, %arg0 : i32, i32
  }
  func.func @transform_5(%arg0: i32) -> (i32, i32) {
    %c0_i32 = arith.constant 0 : i32
    %c0_i32_0 = arith.constant 0 : i32
    return %c0_i32, %arg0 : i32, i32
  }
}

</mosaic_0001>

<llo_original>
// kernel: tpu_custom_call.1
$region0: #{tpu_custom_call.1}
  #allocation0 [shape = 'u32[]', space=smem, size = 0x4, offset = 0x4, fixed_abs, tag = 'smem constant byte address 0x4 - core index']
  #allocation1 [shape = 'u32[144,128]{1,0:T(1,128)}', space=vmem, size = 0x12000, scoped, tag = 'internal scratch']
  %s0 = inlined_call_operand.vmem [shape: bf16[4418,27], index: 0, kind: input, shape index: {}]
  %s1 = inlined_call_operand.vmem [shape: bf16[27,128], index: 1, kind: input, shape index: {}]
  %s2 = inlined_call_operand.vmem [shape: f32[1,128], index: 2, kind: input, shape index: {}]
  %s3 = inlined_call_operand.vmem [shape: f32[1,128], index: 3, kind: input, shape index: {}]
  %s4 = inlined_call_operand.vmem [shape: f32[1,128], index: 4, kind: input, shape index: {}]
  %s5 = inlined_call_operand.hbm [shape: bf16[4418,128], index: 5, kind: output, shape index: {}]
  %s6 = sld [smem:[#allocation0]]
  $region30: #{tpu_custom_call.1} parent=0
    _
  %s8 = ssub.s32 1, %s6
  %s9 = scalar_select 0, %s8, %s6
  $region1: #{tpu_custom_call.1} parent=0
    #allocation2 [shape = 'u8[1132544]{0}', space=vmem, size = 0x114800, scoped, tag = 'output window, operand 0, single buffered']
    #allocation3 [shape = 's32[1]{0}', space=sflag, size = 0x4, scoped, tag = 'scoped memory for tpu_custom_call.1']
    %10 = vsyncpa [#allocation3], 0
    // Predicated region
    $region2: #{tpu_custom_call.1} parent=1 // pred_check
      _
    $region3: #{tpu_custom_call.1} parent=1 // pred_check_branch
      %12 = sbr.rel (0) target = $region5
    $region4: #{tpu_custom_call.1} parent=1 // pred_region
      _
    $region5: #{tpu_custom_call.1} parent=1 // pred_fallthru
      _
    // Predicated region
    $region6: #{tpu_custom_call.1} parent=1 // pred_check
      _
    $region7: #{tpu_custom_call.1} parent=1 // pred_check_branch
      %14 = sbr.rel (0) target = $region9
    $region8: #{tpu_custom_call.1} parent=1 // pred_region
      _
    $region9: #{tpu_custom_call.1} parent=1 // pred_fallthru
      _
    // Predicated region
    $region10: #{tpu_custom_call.1} parent=1 // pred_check
      _
    $region11: #{tpu_custom_call.1} parent=1 // pred_check_branch
      %16 = sbr.rel (0) target = $region13
    $region12: #{tpu_custom_call.1} parent=1 // pred_region
      _
    $region13: #{tpu_custom_call.1} parent=1 // pred_fallthru
      _
    // Predicated region
    $region14: #{tpu_custom_call.1} parent=1 // pred_check
      _
    $region15: #{tpu_custom_call.1} parent=1 // pred_check_branch
      %18 = sbr.rel (0) target = $region17
    $region16: #{tpu_custom_call.1} parent=1 // pred_region
      _
    $region17: #{tpu_custom_call.1} parent=1 // pred_fallthru
      _
    // Predicated region
    $region18: #{tpu_custom_call.1} parent=1 // pred_check
      _
    $region19: #{tpu_custom_call.1} parent=1 // pred_check_branch
      %20 = sbr.rel (0) target = $region21
    $region20: #{tpu_custom_call.1} parent=1 // pred_region
      _
    $region21: #{tpu_custom_call.1} parent=1 // pred_fallthru
      _
    %v22 = vld [vmem:[%s0] sm:$0xf]
    %v23 = vld [vmem:[%s0 + $0x4] sm:$0xf]
    %v24 = vld [vmem:[%s0 + $0x8] sm:$0xf]
    %v25 = vld [vmem:[%s0 + $0xc] sm:$0xf]
    %v26 = vld [vmem:[%s0 + $0x10] sm:$0xf]
    %v27 = vld [vmem:[%s0 + $0x14] sm:$0xf]
    %v28 = vld [vmem:[%s0 + $0x18] sm:$0xf]
    %v29 = vld [vmem:[%s0 + $0x1c] sm:$0xf]
    %v30 = vld [vmem:[%s0 + $0x20] sm:$0xf]
    %v31 = vld [vmem:[%s0 + $0x24] sm:$0xf]
    %v32 = vld [vmem:[%s0 + $0x28] sm:$0xf]
    %v33 = vld [vmem:[%s0 + $0x2c] sm:$0xf]
    %v34 = vld [vmem:[%s0 + $0x30] sm:$0xf]
    %v35 = vld [vmem:[%s0 + $0x34] sm:$0xf]
    %v36 = vld [vmem:[%s0 + $0x38] sm:$0xf]
    %v37 = vld [vmem:[%s0 + $0x3c] sm:$0xf]
    %v38 = vld [vmem:[%s0 + $0x40] sm:$0xf]
    %v39 = vld [vmem:[%s0 + $0x44] sm:$0xf]
    %v40 = vld [vmem:[%s0 + $0x48] sm:$0xf]
    %v41 = vld [vmem:[%s0 + $0x4c] sm:$0xf]
    %v42 = vld [vmem:[%s0 + $0x50] sm:$0xf]
    %v43 = vld [vmem:[%s0 + $0x54] sm:$0xf]
    %v44 = vld [vmem:[%s0 + $0x58] sm:$0xf]
    %v45 = vld [vmem:[%s0 + $0x5c] sm:$0xf]
    %v46 = vld [vmem:[%s0 + $0x60] sm:$0xf]
    %v47 = vld [vmem:[%s0 + $0x64] sm:$0xf]
    %v48 = vld [vmem:[%s0 + $0x68] sm:$0xf]
    %v49 = vld [vmem:[%s0 + $0x6c] sm:$0xf]
    %v50 = vld [vmem:[%s0 + $0x70] sm:$0xf]
    %v51 = vld [vmem:[%s0 + $0x74] sm:$0xf]
    %v52 = vld [vmem:[%s0 + $0x78] sm:$0xf]
    %v53 = vld [vmem:[%s0 + $0x7c] sm:$0xf]
    %v54 = vld [vmem:[%s0 + $0x80] sm:$0xf]
    %v55 = vld [vmem:[%s0 + $0x84] sm:$0xf]
    %v56 = vld [vmem:[%s0 + $0x88] sm:$0xf]
    %v57 = vld [vmem:[%s0 + $0x8c] sm:$0xf]
    %v58 = vld [vmem:[%s0 + $0x90] sm:$0xf]
    %v59 = vld [vmem:[%s0 + $0x94] sm:$0xf]
    %v60 = vld [vmem:[%s0 + $0x98] sm:$0xf]
    %v61 = vld [vmem:[%s0 + $0x9c] sm:$0xf]
    %v62 = vld [vmem:[%s0 + $0xa0] sm:$0xf]
    %v63 = vld [vmem:[%s0 + $0xa4] sm:$0xf]
    %v64 = vld [vmem:[%s0 + $0xa8] sm:$0xf]
    %v65 = vld [vmem:[%s0 + $0xac] sm:$0xf]
    %v66 = vld [vmem:[%s0 + $0xb0] sm:$0xf]
    %v67 = vld [vmem:[%s0 + $0xb4] sm:$0xf]
    %v68 = vld [vmem:[%s0 + $0xb8] sm:$0xf]
    %v69 = vld [vmem:[%s0 + $0xbc] sm:$0xf]
    %v70 = vld [vmem:[%s0 + $0xc0] sm:$0xf]
    %v71 = vld [vmem:[%s0 + $0xc4] sm:$0xf]
    %v72 = vld [vmem:[%s0 + $0xc8] sm:$0xf]
    %v73 = vld [vmem:[%s0 + $0xcc] sm:$0xf]
    %v74 = vld [vmem:[%s0 + $0xd0] sm:$0xf]
    %v75 = vld [vmem:[%s0 + $0xd4] sm:$0xf]
    %v76 = vld [vmem:[%s0 + $0xd8] sm:$0xf]
    %v77 = vld [vmem:[%s0 + $0xdc] sm:$0xf]
    %v78 = vld [vmem:[%s0 + $0xe0] sm:$0xf]
    %v79 = vld [vmem:[%s0 + $0xe4] sm:$0xf]
    %v80 = vld [vmem:[%s0 + $0xe8] sm:$0xf]
    %v81 = vld [vmem:[%s0 + $0xec] sm:$0xf]
    %v82 = vld [vmem:[%s0 + $0xf0] sm:$0xf]
    %v83 = vld [vmem:[%s0 + $0xf4] sm:$0xf]
    %v84 = vld [vmem:[%s0 + $0xf8] sm:$0xf]
    %v85 = vld [vmem:[%s0 + $0xfc] sm:$0xf]
    %v86 = vld [vmem:[%s0 + $0x100] sm:$0xf]
    %v87 = vld [vmem:[%s0 + $0x104] sm:$0xf]
    %v88 = vld [vmem:[%s0 + $0x108] sm:$0xf]
    %v89 = vld [vmem:[%s0 + $0x10c] sm:$0xf]
    %v90 = vld [vmem:[%s0 + $0x110] sm:$0xf]
    %v91 = vld [vmem:[%s0 + $0x114] sm:$0xf]
    %v92 = vld [vmem:[%s0 + $0x118] sm:$0xf]
    %v93 = vld [vmem:[%s0 + $0x11c] sm:$0xf]
    %v94 = vld [vmem:[%s0 + $0x120] sm:$0xf]
    %v95 = vld [vmem:[%s0 + $0x124] sm:$0xf]
    %v96 = vld [vmem:[%s0 + $0x128] sm:$0xf]
    %v97 = vld [vmem:[%s0 + $0x12c] sm:$0xf]
    %v98 = vld [vmem:[%s0 + $0x130] sm:$0xf]
    %v99 = vld [vmem:[%s0 + $0x134] sm:$0xf]
    %v100 = vld [vmem:[%s0 + $0x138] sm:$0xf]
    %v101 = vld [vmem:[%s0 + $0x13c] sm:$0xf]
    %v102 = vld [vmem:[%s0 + $0x140] sm:$0xf]
    %v103 = vld [vmem:[%s0 + $0x144] sm:$0xf]
    %v104 = vld [vmem:[%s0 + $0x148] sm:$0xf]
    %v105 = vld [vmem:[%s0 + $0x14c] sm:$0xf]
    %v106 = vld [vmem:[%s0 + $0x150] sm:$0xf]
    %v107 = vld [vmem:[%s0 + $0x154] sm:$0xf]
    %v108 = vld [vmem:[%s0 + $0x158] sm:$0xf]
    %v109 = vld [vmem:[%s0 + $0x15c] sm:$0xf]
    %v110 = vld [vmem:[%s0 + $0x160] sm:$0xf]
    %v111 = vld [vmem:[%s0 + $0x164] sm:$0xf]
    %v112 = vld [vmem:[%s0 + $0x168] sm:$0xf]
    %v113 = vld [vmem:[%s0 + $0x16c] sm:$0xf]
    %v114 = vld [vmem:[%s0 + $0x170] sm:$0xf]
    %v115 = vld [vmem:[%s0 + $0x174] sm:$0xf]
    %v116 = vld [vmem:[%s0 + $0x178] sm:$0xf]
    %v117 = vld [vmem:[%s0 + $0x17c] sm:$0xf]
    %v118 = vld [vmem:[%s0 + $0x180] sm:$0xf]
    %v119 = vld [vmem:[%s0 + $0x184] sm:$0xf]
    %v120 = vld [vmem:[%s0 + $0x188] sm:$0xf]
    %v121 = vld [vmem:[%s0 + $0x18c] sm:$0xf]
    %v122 = vld [vmem:[%s0 + $0x190] sm:$0xf]
    %v123 = vld [vmem:[%s0 + $0x194] sm:$0xf]
    %v124 = vld [vmem:[%s0 + $0x198] sm:$0xf]
    %v125 = vld [vmem:[%s0 + $0x19c] sm:$0xf]
    %v126 = vld [vmem:[%s0 + $0x1a0] sm:$0xf]
    %v127 = vld [vmem:[%s0 + $0x1a4] sm:$0xf]
    %v128 = vld [vmem:[%s0 + $0x1a8] sm:$0xf]
    %v129 = vld [vmem:[%s0 + $0x1ac] sm:$0xf]
    %v130 = vld [vmem:[%s0 + $0x1b0] sm:$0xf]
    %v131 = vld [vmem:[%s0 + $0x1b4] sm:$0xf]
    %v132 = vld [vmem:[%s0 + $0x1b8] sm:$0xf]
    %v133 = vld [vmem:[%s0 + $0x1bc] sm:$0xf]
    %v134 = vld [vmem:[%s0 + $0x1c0] sm:$0xf]
    %v135 = vld [vmem:[%s0 + $0x1c4] sm:$0xf]
    %v136 = vld [vmem:[%s0 + $0x1c8] sm:$0xf]
    %v137 = vld [vmem:[%s0 + $0x1cc] sm:$0xf]
    %v138 = vld [vmem:[%s0 + $0x1d0] sm:$0xf]
    %v139 = vld [vmem:[%s0 + $0x1d4] sm:$0xf]
    %v140 = vld [vmem:[%s0 + $0x1d8] sm:$0xf]
    %v141 = vld [vmem:[%s0 + $0x1dc] sm:$0xf]
    %v142 = vld [vmem:[%s0 + $0x1e0] sm:$0xf]
    %v143 = vld [vmem:[%s0 + $0x1e4] sm:$0xf]
    %v144 = vld [vmem:[%s0 + $0x1e8] sm:$0xf]
    %v145 = vld [vmem:[%s0 + $0x1ec] sm:$0xf]
    %v146 = vld [vmem:[%s0 + $0x1f0] sm:$0xf]
    %v147 = vld [vmem:[%s0 + $0x1f4] sm:$0xf]
    %v148 = vld [vmem:[%s0 + $0x1f8] sm:$0xf]
    %v149 = vld [vmem:[%s0 + $0x1fc] sm:$0xf]
    %v150 = vld [vmem:[%s0 + $0x200] sm:$0xf]
    %v151 = vld [vmem:[%s0 + $0x204] sm:$0xf]
    %v152 = vld [vmem:[%s0 + $0x208] sm:$0xf]
    %v153 = vld [vmem:[%s0 + $0x20c] sm:$0xf]
    %v154 = vld [vmem:[%s0 + $0x210] sm:$0xf]
    %v155 = vld [vmem:[%s0 + $0x214] sm:$0xf]
    %v156 = vld [vmem:[%s0 + $0x218] sm:$0xf]
    %v157 = vld [vmem:[%s0 + $0x21c] sm:$0xf]
    %v158 = vld [vmem:[%s0 + $0x220] sm:$0xf]
    %v159 = vld [vmem:[%s0 + $0x224] sm:$0xf]
    %v160 = vld [vmem:[%s0 + $0x228] sm:$0xf]
    %v161 = vld [vmem:[%s0 + $0x22c] sm:$0xf]
    %v162 = vld [vmem:[%s0 + $0x230] sm:$0xf]
    %v163 = vld [vmem:[%s0 + $0x234] sm:$0xf]
    %v164 = vld [vmem:[%s0 + $0x238] sm:$0xf]
    %v165 = vld [vmem:[%s0 + $0x23c] sm:$0xf]
    %v166 = vld [vmem:[%s0 + $0x240] sm:$0xf]
    %v167 = vld [vmem:[%s0 + $0x244] sm:$0xf]
    %v168 = vld [vmem:[%s0 + $0x248] sm:$0xf]
    %v169 = vld [vmem:[%s0 + $0x24c] sm:$0xf]
    %v170 = vld [vmem:[%s0 + $0x250] sm:$0xf]
    %v171 = vld [vmem:[%s0 + $0x254] sm:$0xf]
    %v172 = vld [vmem:[%s0 + $0x258] sm:$0xf]
    %v173 = vld [vmem:[%s0 + $0x25c] sm:$0xf]
    %v174 = vld [vmem:[%s0 + $0x260] sm:$0xf]
    %v175 = vld [vmem:[%s0 + $0x264] sm:$0xf]
    %v176 = vld [vmem:[%s0 + $0x268] sm:$0xf]
    %v177 = vld [vmem:[%s0 + $0x26c] sm:$0xf]
    %v178 = vld [vmem:[%s0 + $0x270] sm:$0xf]
    %v179 = vld [vmem:[%s0 + $0x274] sm:$0xf]
    %v180 = vld [vmem:[%s0 + $0x278] sm:$0xf]
    %v181 = vld [vmem:[%s0 + $0x27c] sm:$0xf]
    %v182 = vld [vmem:[%s0 + $0x280] sm:$0xf]
    %v183 = vld [vmem:[%s0 + $0x284] sm:$0xf]
    %v184 = vld [vmem:[%s0 + $0x288] sm:$0xf]
    %v185 = vld [vmem:[%s0 + $0x28c] sm:$0xf]
    %v186 = vld [vmem:[%s0 + $0x290] sm:$0xf]
    %v187 = vld [vmem:[%s0 + $0x294] sm:$0xf]
    %v188 = vld [vmem:[%s0 + $0x298] sm:$0xf]
    %v189 = vld [vmem:[%s0 + $0x29c] sm:$0xf]
    %v190 = vld [vmem:[%s0 + $0x2a0] sm:$0xf]
    %v191 = vld [vmem:[%s0 + $0x2a4] sm:$0xf]
    %v192 = vld [vmem:[%s0 + $0x2a8] sm:$0xf]
    %v193 = vld [vmem:[%s0 + $0x2ac] sm:$0xf]
    %v194 = vld [vmem:[%s0 + $0x2b0] sm:$0xf]
    %v195 = vld [vmem:[%s0 + $0x2b4] sm:$0xf]
    %v196 = vld [vmem:[%s0 + $0x2b8] sm:$0xf]
    %v197 = vld [vmem:[%s0 + $0x2bc] sm:$0xf]
    %v198 = vld [vmem:[%s0 + $0x2c0] sm:$0xf]
    %v199 = vld [vmem:[%s0 + $0x2c4] sm:$0xf]
    %v200 = vld [vmem:[%s0 + $0x2c8] sm:$0xf]
    %v201 = vld [vmem:[%s0 + $0x2cc] sm:$0xf]
    %v202 = vld [vmem:[%s0 + $0x2d0] sm:$0xf]
    %v203 = vld [vmem:[%s0 + $0x2d4] sm:$0xf]
    %v204 = vld [vmem:[%s0 + $0x2d8] sm:$0xf]
    %v205 = vld [vmem:[%s0 + $0x2dc] sm:$0xf]
    %v206 = vld [vmem:[%s0 + $0x2e0] sm:$0xf]
    %v207 = vld [vmem:[%s0 + $0x2e4] sm:$0xf]
    %v208 = vld [vmem:[%s0 + $0x2e8] sm:$0xf]
    %v209 = vld [vmem:[%s0 + $0x2ec] sm:$0xf]
    %v210 = vld [vmem:[%s0 + $0x2f0] sm:$0xf]
    %v211 = vld [vmem:[%s0 + $0x2f4] sm:$0xf]
    %v212 = vld [vmem:[%s0 + $0x2f8] sm:$0xf]
    %v213 = vld [vmem:[%s0 + $0x2fc] sm:$0xf]
    %v214 = vld [vmem:[%s0 + $0x300] sm:$0xf]
    %v215 = vld [vmem:[%s0 + $0x304] sm:$0xf]
    %v216 = vld [vmem:[%s0 + $0x308] sm:$0xf]
    %v217 = vld [vmem:[%s0 + $0x30c] sm:$0xf]
    %v218 = vld [vmem:[%s0 + $0x310] sm:$0xf]
    %v219 = vld [vmem:[%s0 + $0x314] sm:$0xf]
    %v220 = vld [vmem:[%s0 + $0x318] sm:$0xf]
    %v221 = vld [vmem:[%s0 + $0x31c] sm:$0xf]
    %v222 = vld [vmem:[%s0 + $0x320] sm:$0xf]
    %v223 = vld [vmem:[%s0 + $0x324] sm:$0xf]
    %v224 = vld [vmem:[%s0 + $0x328] sm:$0xf]
    %v225 = vld [vmem:[%s0 + $0x32c] sm:$0xf]
    %v226 = vld [vmem:[%s0 + $0x330] sm:$0xf]
    %v227 = vld [vmem:[%s0 + $0x334] sm:$0xf]
    %v228 = vld [vmem:[%s0 + $0x338] sm:$0xf]
    %v229 = vld [vmem:[%s0 + $0x33c] sm:$0xf]
    %v230 = vld [vmem:[%s0 + $0x340] sm:$0xf]
    %v231 = vld [vmem:[%s0 + $0x344] sm:$0xf]
    %v232 = vld [vmem:[%s0 + $0x348] sm:$0xf]
    %v233 = vld [vmem:[%s0 + $0x34c] sm:$0xf]
    %v234 = vld [vmem:[%s0 + $0x350] sm:$0xf]
    %v235 = vld [vmem:[%s0 + $0x354] sm:$0xf]
    %v236 = vld [vmem:[%s0 + $0x358] sm:$0xf]
    %v237 = vld [vmem:[%s0 + $0x35c] sm:$0xf]
    %v238 = vld [vmem:[%s0 + $0x360] sm:$0xf]
    %v239 = vld [vmem:[%s0 + $0x364] sm:$0xf]
    %v240 = vld [vmem:[%s0 + $0x368] sm:$0xf]
    %v241 = vld [vmem:[%s0 + $0x36c] sm:$0xf]
    %v242 = vld [vmem:[%s0 + $0x370] sm:$0xf]
    %v243 = vld [vmem:[%s0 + $0x374] sm:$0xf]
    %v244 = vld [vmem:[%s0 + $0x378] sm:$0xf]
    %v245 = vld [vmem:[%s0 + $0x37c] sm:$0xf]
    %v246 = vld [vmem:[%s0 + $0x380] sm:$0xf]
    %v247 = vld [vmem:[%s0 + $0x384] sm:$0xf]
    %v248 = vld [vmem:[%s0 + $0x388] sm:$0xf]
    %v249 = vld [vmem:[%s0 + $0x38c] sm:$0xf]
    %v250 = vld [vmem:[%s0 + $0x390] sm:$0xf]
    %v251 = vld [vmem:[%s0 + $0x394] sm:$0xf]
    %v252 = vld [vmem:[%s0 + $0x398] sm:$0xf]
    %v253 = vld [vmem:[%s0 + $0x39c] sm:$0xf]
    %v254 = vld [vmem:[%s0 + $0x3a0] sm:$0xf]
    %v255 = vld [vmem:[%s0 + $0x3a4] sm:$0xf]
    %v256 = vld [vmem:[%s0 + $0x3a8] sm:$0xf]
    %v257 = vld [vmem:[%s0 + $0x3ac] sm:$0xf]
    %v258 = vld [vmem:[%s0 + $0x3b0] sm:$0xf]
    %v259 = vld [vmem:[%s0 + $0x3b4] sm:$0xf]
    %v260 = vld [vmem:[%s0 + $0x3b8] sm:$0xf]
    %v261 = vld [vmem:[%s0 + $0x3bc] sm:$0xf]
    %v262 = vld [vmem:[%s0 + $0x3c0] sm:$0xf]
    %v263 = vld [vmem:[%s0 + $0x3c4] sm:$0xf]
    %v264 = vld [vmem:[%s0 + $0x3c8] sm:$0xf]
    %v265 = vld [vmem:[%s0 + $0x3cc] sm:$0xf]
    %v266 = vld [vmem:[%s0 + $0x3d0] sm:$0xf]
    %v267 = vld [vmem:[%s0 + $0x3d4] sm:$0xf]
    %v268 = vld [vmem:[%s0 + $0x3d8] sm:$0xf]
    %v269 = vld [vmem:[%s0 + $0x3dc] sm:$0xf]
    %v270 = vld [vmem:[%s0 + $0x3e0] sm:$0xf]
    %v271 = vld [vmem:[%s0 + $0x3e4] sm:$0xf]
    %v272 = vld [vmem:[%s0 + $0x3e8] sm:$0xf]
    %v273 = vld [vmem:[%s0 + $0x3ec] sm:$0xf]
    %v274 = vld [vmem:[%s0 + $0x3f0] sm:$0xf]
    %v275 = vld [vmem:[%s0 + $0x3f4] sm:$0xf]
    %v276 = vld [vmem:[%s0 + $0x3f8] sm:$0xf]
    %v277 = vld [vmem:[%s0 + $0x3fc] sm:$0xf]
    %v278 = vld [vmem:[%s0 + $0x400] sm:$0xf]
    %v279 = vld [vmem:[%s0 + $0x404] sm:$0xf]
    %v280 = vld [vmem:[%s0 + $0x408] sm:$0xf]
    %v281 = vld [vmem:[%s0 + $0x40c] sm:$0xf]
    %v282 = vld [vmem:[%s0 + $0x410] sm:$0xf]
    %v283 = vld [vmem:[%s0 + $0x414] sm:$0xf]
    %v284 = vld [vmem:[%s0 + $0x418] sm:$0xf]
    %v285 = vld [vmem:[%s0 + $0x41c] sm:$0xf]
    %v286 = vld [vmem:[%s0 + $0x420] sm:$0xf]
    %v287 = vld [vmem:[%s0 + $0x424] sm:$0xf]
    %v288 = vld [vmem:[%s0 + $0x428] sm:$0xf]
    %v289 = vld [vmem:[%s0 + $0x42c] sm:$0xf]
    %v290 = vld [vmem:[%s0 + $0x430] sm:$0xf]
    %v291 = vld [vmem:[%s0 + $0x434] sm:$0xf]
    %v292 = vld [vmem:[%s0 + $0x438] sm:$0xf]
    %v293 = vld [vmem:[%s0 + $0x43c] sm:$0xf]
    %v294 = vld [vmem:[%s0 + $0x440] sm:$0xf]
    %v295 = vld [vmem:[%s0 + $0x444] sm:$0xf]
    %v296 = vld [vmem:[%s0 + $0x448] sm:$0xf]
    %v297 = vld [vmem:[%s0 + $0x44c] sm:$0xf]
    %v298 = vld [vmem:[%s0 + $0x450] sm:$0xf]
    %v299 = vld [vmem:[%s0 + $0x454] sm:$0xf]
    %v300 = vld [vmem:[%s0 + $0x458] sm:$0xf]
    %v301 = vld [vmem:[%s0 + $0x45c] sm:$0xf]
    %v302 = vld [vmem:[%s0 + $0x460] sm:$0xf]
    %v303 = vld [vmem:[%s0 + $0x464] sm:$0xf]
    %v304 = vld [vmem:[%s0 + $0x468] sm:$0xf]
    %v305 = vld [vmem:[%s0 + $0x46c] sm:$0xf]
    %v306 = vld [vmem:[%s0 + $0x470] sm:$0xf]
    %v307 = vld [vmem:[%s0 + $0x474] sm:$0xf]
    %v308 = vld [vmem:[%s0 + $0x478] sm:$0xf]
    %v309 = vld [vmem:[%s0 + $0x47c] sm:$0xf]
    %v310 = vld [vmem:[%s0 + $0x480] sm:$0xf]
    %v311 = vld [vmem:[%s0 + $0x484] sm:$0xf]
    %v312 = vld [vmem:[%s0 + $0x488] sm:$0xf]
    %v313 = vld [vmem:[%s0 + $0x48c] sm:$0xf]
    %v314 = vld [vmem:[%s0 + $0x490] sm:$0xf]
    %v315 = vld [vmem:[%s0 + $0x494] sm:$0xf]
    %v316 = vld [vmem:[%s0 + $0x498] sm:$0xf]
    %v317 = vld [vmem:[%s0 + $0x49c] sm:$0xf]
    %v318 = vld [vmem:[%s0 + $0x4a0] sm:$0xf]
    %v319 = vld [vmem:[%s0 + $0x4a4] sm:$0xf]
    %v320 = vld [vmem:[%s0 + $0x4a8] sm:$0xf]
    %v321 = vld [vmem:[%s0 + $0x4ac] sm:$0xf]
    %v322 = vld [vmem:[%s0 + $0x4b0] sm:$0xf]
    %v323 = vld [vmem:[%s0 + $0x4b4] sm:$0xf]
    %v324 = vld [vmem:[%s0 + $0x4b8] sm:$0xf]
    %v325 = vld [vmem:[%s0 + $0x4bc] sm:$0xf]
    %v326 = vld [vmem:[%s0 + $0x4c0] sm:$0xf]
    %v327 = vld [vmem:[%s0 + $0x4c4] sm:$0xf]
    %v328 = vld [vmem:[%s0 + $0x4c8] sm:$0xf]
    %v329 = vld [vmem:[%s0 + $0x4cc] sm:$0xf]
    %v330 = vld [vmem:[%s0 + $0x4d0] sm:$0xf]
    %v331 = vld [vmem:[%s0 + $0x4d4] sm:$0xf]
    %v332 = vld [vmem:[%s0 + $0x4d8] sm:$0xf]
    %v333 = vld [vmem:[%s0 + $0x4dc] sm:$0xf]
    %v334 = vld [vmem:[%s0 + $0x4e0] sm:$0xf]
    %v335 = vld [vmem:[%s0 + $0x4e4] sm:$0xf]
    %v336 = vld [vmem:[%s0 + $0x4e8] sm:$0xf]
    %v337 = vld [vmem:[%s0 + $0x4ec] sm:$0xf]
    %v338 = vld [vmem:[%s0 + $0x4f0] sm:$0xf]
    %v339 = vld [vmem:[%s0 + $0x4f4] sm:$0xf]
    %v340 = vld [vmem:[%s0 + $0x4f8] sm:$0xf]
    %v341 = vld [vmem:[%s0 + $0x4fc] sm:$0xf]
    %v342 = vld [vmem:[%s0 + $0x500] sm:$0xf]
    %v343 = vld [vmem:[%s0 + $0x504] sm:$0xf]
    %v344 = vld [vmem:[%s0 + $0x508] sm:$0xf]
    %v345 = vld [vmem:[%s0 + $0x50c] sm:$0xf]
    %v346 = vld [vmem:[%s0 + $0x510] sm:$0xf]
    %v347 = vld [vmem:[%s0 + $0x514] sm:$0xf]
    %v348 = vld [vmem:[%s0 + $0x518] sm:$0xf]
    %v349 = vld [vmem:[%s0 + $0x51c] sm:$0xf]
    %v350 = vld [vmem:[%s0 + $0x520] sm:$0xf]
    %v351 = vld [vmem:[%s0 + $0x524] sm:$0xf]
    %v352 = vld [vmem:[%s0 + $0x528] sm:$0xf]
    %v353 = vld [vmem:[%s0 + $0x52c] sm:$0xf]
    %v354 = vld [vmem:[%s0 + $0x530] sm:$0xf]
    %v355 = vld [vmem:[%s0 + $0x534] sm:$0xf]
    %v356 = vld [vmem:[%s0 + $0x538] sm:$0xf]
    %v357 = vld [vmem:[%s0 + $0x53c] sm:$0xf]
    %v358 = vld [vmem:[%s0 + $0x540] sm:$0xf]
    %v359 = vld [vmem:[%s0 + $0x544] sm:$0xf]
    %v360 = vld [vmem:[%s0 + $0x548] sm:$0xf]
    %v361 = vld [vmem:[%s0 + $0x54c] sm:$0xf]
    %v362 = vld [vmem:[%s0 + $0x550] sm:$0xf]
    %v363 = vld [vmem:[%s0 + $0x554] sm:$0xf]
    %v364 = vld [vmem:[%s0 + $0x558] sm:$0xf]
    %v365 = vld [vmem:[%s0 + $0x55c] sm:$0xf]
    %v366 = vld [vmem:[%s0 + $0x560] sm:$0xf]
    %v367 = vld [vmem:[%s0 + $0x564] sm:$0xf]
    %v368 = vld [vmem:[%s0 + $0x568] sm:$0xf]
    %v369 = vld [vmem:[%s0 + $0x56c] sm:$0xf]
    %v370 = vld [vmem:[%s0 + $0x570] sm:$0xf]
    %v371 = vld [vmem:[%s0 + $0x574] sm:$0xf]
    %v372 = vld [vmem:[%s0 + $0x578] sm:$0xf]
    %v373 = vld [vmem:[%s0 + $0x57c] sm:$0xf]
    %v374 = vld [vmem:[%s0 + $0x580] sm:$0xf]
    %v375 = vld [vmem:[%s0 + $0x584] sm:$0xf]
    %v376 = vld [vmem:[%s0 + $0x588] sm:$0xf]
    %v377 = vld [vmem:[%s0 + $0x58c] sm:$0xf]
    %v378 = vld [vmem:[%s0 + $0x590] sm:$0xf]
    %v379 = vld [vmem:[%s0 + $0x594] sm:$0xf]
    %v380 = vld [vmem:[%s0 + $0x598] sm:$0xf]
    %v381 = vld [vmem:[%s0 + $0x59c] sm:$0xf]
    %v382 = vld [vmem:[%s0 + $0x5a0] sm:$0xf]
    %v383 = vld [vmem:[%s0 + $0x5a4] sm:$0xf]
    %v384 = vld [vmem:[%s0 + $0x5a8] sm:$0xf]
    %v385 = vld [vmem:[%s0 + $0x5ac] sm:$0xf]
    %v386 = vld [vmem:[%s0 + $0x5b0] sm:$0xf]
    %v387 = vld [vmem:[%s0 + $0x5b4] sm:$0xf]
    %v388 = vld [vmem:[%s0 + $0x5b8] sm:$0xf]
    %v389 = vld [vmem:[%s0 + $0x5bc] sm:$0xf]
    %v390 = vld [vmem:[%s0 + $0x5c0] sm:$0xf]
    %v391 = vld [vmem:[%s0 + $0x5c4] sm:$0xf]
    %v392 = vld [vmem:[%s0 + $0x5c8] sm:$0xf]
    %v393 = vld [vmem:[%s0 + $0x5cc] sm:$0xf]
    %v394 = vld [vmem:[%s0 + $0x5d0] sm:$0xf]
    %v395 = vld [vmem:[%s0 + $0x5d4] sm:$0xf]
    %v396 = vld [vmem:[%s0 + $0x5d8] sm:$0xf]
    %v397 = vld [vmem:[%s0 + $0x5dc] sm:$0xf]
    %v398 = vld [vmem:[%s0 + $0x5e0] sm:$0xf]
    %v399 = vld [vmem:[%s0 + $0x5e4] sm:$0xf]
    %v400 = vld [vmem:[%s0 + $0x5e8] sm:$0xf]
    %v401 = vld [vmem:[%s0 + $0x5ec] sm:$0xf]
    %v402 = vld [vmem:[%s0 + $0x5f0] sm:$0xf]
    %v403 = vld [vmem:[%s0 + $0x5f4] sm:$0xf]
    %v404 = vld [vmem:[%s0 + $0x5f8] sm:$0xf]
    %v405 = vld [vmem:[%s0 + $0x5fc] sm:$0xf]
    %v406 = vld [vmem:[%s0 + $0x600] sm:$0xf]
    %v407 = vld [vmem:[%s0 + $0x604] sm:$0xf]
    %v408 = vld [vmem:[%s0 + $0x608] sm:$0xf]
    %v409 = vld [vmem:[%s0 + $0x60c] sm:$0xf]
    %v410 = vld [vmem:[%s0 + $0x610] sm:$0xf]
    %v411 = vld [vmem:[%s0 + $0x614] sm:$0xf]
    %v412 = vld [vmem:[%s0 + $0x618] sm:$0xf]
    %v413 = vld [vmem:[%s0 + $0x61c] sm:$0xf]
    %v414 = vld [vmem:[%s0 + $0x620] sm:$0xf]
    %v415 = vld [vmem:[%s0 + $0x624] sm:$0xf]
    %v416 = vld [vmem:[%s0 + $0x628] sm:$0xf]
    %v417 = vld [vmem:[%s0 + $0x62c] sm:$0xf]
    %v418 = vld [vmem:[%s0 + $0x630] sm:$0xf]
    %v419 = vld [vmem:[%s0 + $0x634] sm:$0xf]
    %v420 = vld [vmem:[%s0 + $0x638] sm:$0xf]
    %v421 = vld [vmem:[%s0 + $0x63c] sm:$0xf]
    %v422 = vld [vmem:[%s0 + $0x640] sm:$0xf]
    %v423 = vld [vmem:[%s0 + $0x644] sm:$0xf]
    %v424 = vld [vmem:[%s0 + $0x648] sm:$0xf]
    %v425 = vld [vmem:[%s0 + $0x64c] sm:$0xf]
    %v426 = vld [vmem:[%s0 + $0x650] sm:$0xf]
    %v427 = vld [vmem:[%s0 + $0x654] sm:$0xf]
    %v428 = vld [vmem:[%s0 + $0x658] sm:$0xf]
    %v429 = vld [vmem:[%s0 + $0x65c] sm:$0xf]
    %v430 = vld [vmem:[%s0 + $0x660] sm:$0xf]
    %v431 = vld [vmem:[%s0 + $0x664] sm:$0xf]
    %v432 = vld [vmem:[%s0 + $0x668] sm:$0xf]
    %v433 = vld [vmem:[%s0 + $0x66c] sm:$0xf]
    %v434 = vld [vmem:[%s0 + $0x670] sm:$0xf]
    %v435 = vld [vmem:[%s0 + $0x674] sm:$0xf]
    %v436 = vld [vmem:[%s0 + $0x678] sm:$0xf]
    %v437 = vld [vmem:[%s0 + $0x67c] sm:$0xf]
    %v438 = vld [vmem:[%s0 + $0x680] sm:$0xf]
    %v439 = vld [vmem:[%s0 + $0x684] sm:$0xf]
    %v440 = vld [vmem:[%s0 + $0x688] sm:$0xf]
    %v441 = vld [vmem:[%s0 + $0x68c] sm:$0xf]
    %v442 = vld [vmem:[%s0 + $0x690] sm:$0xf]
    %v443 = vld [vmem:[%s0 + $0x694] sm:$0xf]
    %v444 = vld [vmem:[%s0 + $0x698] sm:$0xf]
    %v445 = vld [vmem:[%s0 + $0x69c] sm:$0xf]
    %v446 = vld [vmem:[%s0 + $0x6a0] sm:$0xf]
    %v447 = vld [vmem:[%s0 + $0x6a4] sm:$0xf]
    %v448 = vld [vmem:[%s0 + $0x6a8] sm:$0xf]
    %v449 = vld [vmem:[%s0 + $0x6ac] sm:$0xf]
    %v450 = vld [vmem:[%s0 + $0x6b0] sm:$0xf]
    %v451 = vld [vmem:[%s0 + $0x6b4] sm:$0xf]
    %v452 = vld [vmem:[%s0 + $0x6b8] sm:$0xf]
    %v453 = vld [vmem:[%s0 + $0x6bc] sm:$0xf]
    %v454 = vld [vmem:[%s0 + $0x6c0] sm:$0xf]
    %v455 = vld [vmem:[%s0 + $0x6c4] sm:$0xf]
    %v456 = vld [vmem:[%s0 + $0x6c8] sm:$0xf]
    %v457 = vld [vmem:[%s0 + $0x6cc] sm:$0xf]
    %v458 = vld [vmem:[%s0 + $0x6d0] sm:$0xf]
    %v459 = vld [vmem:[%s0 + $0x6d4] sm:$0xf]
    %v460 = vld [vmem:[%s0 + $0x6d8] sm:$0xf]
    %v461 = vld [vmem:[%s0 + $0x6dc] sm:$0xf]
    %v462 = vld [vmem:[%s0 + $0x6e0] sm:$0xf]
    %v463 = vld [vmem:[%s0 + $0x6e4] sm:$0xf]
    %v464 = vld [vmem:[%s0 + $0x6e8] sm:$0xf]
    %v465 = vld [vmem:[%s0 + $0x6ec] sm:$0xf]
    %v466 = vld [vmem:[%s0 + $0x6f0] sm:$0xf]
    %v467 = vld [vmem:[%s0 + $0x6f4] sm:$0xf]
    %v468 = vld [vmem:[%s0 + $0x6f8] sm:$0xf]
    %v469 = vld [vmem:[%s0 + $0x6fc] sm:$0xf]
    %v470 = vld [vmem:[%s0 + $0x700] sm:$0xf]
    %v471 = vld [vmem:[%s0 + $0x704] sm:$0xf]
    %v472 = vld [vmem:[%s0 + $0x708] sm:$0xf]
    %v473 = vld [vmem:[%s0 + $0x70c] sm:$0xf]
    %v474 = vld [vmem:[%s0 + $0x710] sm:$0xf]
    %v475 = vld [vmem:[%s0 + $0x714] sm:$0xf]
    %v476 = vld [vmem:[%s0 + $0x718] sm:$0xf]
    %v477 = vld [vmem:[%s0 + $0x71c] sm:$0xf]
    %v478 = vld [vmem:[%s0 + $0x720] sm:$0xf]
    %v479 = vld [vmem:[%s0 + $0x724] sm:$0xf]
    %v480 = vld [vmem:[%s0 + $0x728] sm:$0xf]
    %v481 = vld [vmem:[%s0 + $0x72c] sm:$0xf]
    %v482 = vld [vmem:[%s0 + $0x730] sm:$0xf]
    %v483 = vld [vmem:[%s0 + $0x734] sm:$0xf]
    %v484 = vld [vmem:[%s0 + $0x738] sm:$0xf]
    %v485 = vld [vmem:[%s0 + $0x73c] sm:$0xf]
    %v486 = vld [vmem:[%s0 + $0x740] sm:$0xf]
    %v487 = vld [vmem:[%s0 + $0x744] sm:$0xf]
    %v488 = vld [vmem:[%s0 + $0x748] sm:$0xf]
    %v489 = vld [vmem:[%s0 + $0x74c] sm:$0xf]
    %v490 = vld [vmem:[%s0 + $0x750] sm:$0xf]
    %v491 = vld [vmem:[%s0 + $0x754] sm:$0xf]
    %v492 = vld [vmem:[%s0 + $0x758] sm:$0xf]
    %v493 = vld [vmem:[%s0 + $0x75c] sm:$0xf]
    %v494 = vld [vmem:[%s0 + $0x760] sm:$0xf]
    %v495 = vld [vmem:[%s0 + $0x764] sm:$0xf]
    %v496 = vld [vmem:[%s0 + $0x768] sm:$0xf]
    %v497 = vld [vmem:[%s0 + $0x76c] sm:$0xf]
    %v498 = vld [vmem:[%s0 + $0x770] sm:$0xf]
    %v499 = vld [vmem:[%s0 + $0x774] sm:$0xf]
    %v500 = vld [vmem:[%s0 + $0x778] sm:$0xf]
    %v501 = vld [vmem:[%s0 + $0x77c] sm:$0xf]
    %v502 = vld [vmem:[%s0 + $0x780] sm:$0xf]
    %v503 = vld [vmem:[%s0 + $0x784] sm:$0xf]
    %v504 = vld [vmem:[%s0 + $0x788] sm:$0xf]
    %v505 = vld [vmem:[%s0 + $0x78c] sm:$0xf]
    %v506 = vld [vmem:[%s0 + $0x790] sm:$0xf]
    %v507 = vld [vmem:[%s0 + $0x794] sm:$0xf]
    %v508 = vld [vmem:[%s0 + $0x798] sm:$0xf]
    %v509 = vld [vmem:[%s0 + $0x79c] sm:$0xf]
    %v510 = vld [vmem:[%s0 + $0x7a0] sm:$0xf]
    %v511 = vld [vmem:[%s0 + $0x7a4] sm:$0xf]
    %v512 = vld [vmem:[%s0 + $0x7a8] sm:$0xf]
    %v513 = vld [vmem:[%s0 + $0x7ac] sm:$0xf]
    %v514 = vld [vmem:[%s0 + $0x7b0] sm:$0xf]
    %v515 = vld [vmem:[%s0 + $0x7b4] sm:$0xf]
    %v516 = vld [vmem:[%s0 + $0x7b8] sm:$0xf]
    %v517 = vld [vmem:[%s0 + $0x7bc] sm:$0xf]
    %v518 = vld [vmem:[%s0 + $0x7c0] sm:$0xf]
    %v519 = vld [vmem:[%s0 + $0x7c4] sm:$0xf]
    %v520 = vld [vmem:[%s0 + $0x7c8] sm:$0xf]
    %v521 = vld [vmem:[%s0 + $0x7cc] sm:$0xf]
    %v522 = vld [vmem:[%s0 + $0x7d0] sm:$0xf]
    %v523 = vld [vmem:[%s0 + $0x7d4] sm:$0xf]
    %v524 = vld [vmem:[%s0 + $0x7d8] sm:$0xf]
    %v525 = vld [vmem:[%s0 + $0x7dc] sm:$0xf]
    %v526 = vld [vmem:[%s0 + $0x7e0] sm:$0xf]
    %v527 = vld [vmem:[%s0 + $0x7e4] sm:$0xf]
    %v528 = vld [vmem:[%s0 + $0x7e8] sm:$0xf]
    %v529 = vld [vmem:[%s0 + $0x7ec] sm:$0xf]
    %v530 = vld [vmem:[%s0 + $0x7f0] sm:$0xf]
    %v531 = vld [vmem:[%s0 + $0x7f4] sm:$0xf]
    %v532 = vld [vmem:[%s0 + $0x7f8] sm:$0xf]
    %v533 = vld [vmem:[%s0 + $0x7fc] sm:$0xf]
    %v534 = vld [vmem:[%s0 + $0x800] sm:$0xf]
    %v535 = vld [vmem:[%s0 + $0x804] sm:$0xf]
    %v536 = vld [vmem:[%s0 + $0x808] sm:$0xf]
    %v537 = vld [vmem:[%s0 + $0x80c] sm:$0xf]
    %v538 = vld [vmem:[%s0 + $0x810] sm:$0xf]
    %v539 = vld [vmem:[%s0 + $0x814] sm:$0xf]
    %v540 = vld [vmem:[%s0 + $0x818] sm:$0xf]
    %v541 = vld [vmem:[%s0 + $0x81c] sm:$0xf]
    %v542 = vld [vmem:[%s0 + $0x820] sm:$0xf]
    %v543 = vld [vmem:[%s0 + $0x824] sm:$0xf]
    %v544 = vld [vmem:[%s0 + $0x828] sm:$0xf]
    %v545 = vld [vmem:[%s0 + $0x82c] sm:$0xf]
    %v546 = vld [vmem:[%s0 + $0x830] sm:$0xf]
    %v547 = vld [vmem:[%s0 + $0x834] sm:$0xf]
    %v548 = vld [vmem:[%s0 + $0x838] sm:$0xf]
    %v549 = vld [vmem:[%s0 + $0x83c] sm:$0xf]
    %v550 = vld [vmem:[%s0 + $0x840] sm:$0xf]
    %v551 = vld [vmem:[%s0 + $0x844] sm:$0xf]
    %v552 = vld [vmem:[%s0 + $0x848] sm:$0xf]
    %v553 = vld [vmem:[%s0 + $0x84c] sm:$0xf]
    %v554 = vld [vmem:[%s0 + $0x850] sm:$0xf]
    %v555 = vld [vmem:[%s0 + $0x854] sm:$0xf]
    %v556 = vld [vmem:[%s0 + $0x858] sm:$0xf]
    %v557 = vld [vmem:[%s0 + $0x85c] sm:$0xf]
    %v558 = vld [vmem:[%s0 + $0x860] sm:$0xf]
    %v559 = vld [vmem:[%s0 + $0x864] sm:$0xf]
    %v560 = vld [vmem:[%s0 + $0x868] sm:$0xf]
    %v561 = vld [vmem:[%s0 + $0x86c] sm:$0xf]
    %v562 = vld [vmem:[%s0 + $0x870] sm:$0xf]
    %v563 = vld [vmem:[%s0 + $0x874] sm:$0xf]
    %v564 = vld [vmem:[%s0 + $0x878] sm:$0xf]
    %v565 = vld [vmem:[%s0 + $0x87c] sm:$0xf]
    %v566 = vld [vmem:[%s0 + $0x880] sm:$0xf]
    %v567 = vld [vmem:[%s0 + $0x884] sm:$0xf]
    %v568 = vld [vmem:[%s0 + $0x888] sm:$0xf]
    %v569 = vld [vmem:[%s0 + $0x88c] sm:$0xf]
    %v570 = vld [vmem:[%s0 + $0x890] sm:$0xf]
    %v571 = vld [vmem:[%s0 + $0x894] sm:$0xf]
    %v572 = vld [vmem:[%s0 + $0x898] sm:$0xf]
    %v573 = vld [vmem:[%s0 + $0x89c] sm:$0xf]
    %v574 = vld [vmem:[%s0 + $0x8a0] sm:$0x1]
    %v575 = vld [vmem:[%s1] sm:$0xf]
    %v576 = vld [vmem:[%s1 + $0x4] sm:$0xf]
    %v577 = vld [vmem:[%s1 + $0x8] sm:$0xf]
    %v578 = vld [vmem:[%s1 + $0xc] sm:$0x3]
    %v579 = vld [vmem:[%s2] sm:$0x1]
    %v581 = vlaneseq
    %v582 = vshrl.u32 %v581, 7
    %v583 = vsub.s32 0, %v582
    %v584 = vrot.slane %v579, %v583
    %v1139 = vunpack.c.l.b16 %v22
    %v1140 = vunpack.c.l.b16 %v23
    %v1141 = vunpack.c.l.b16 %v24
    %v1142 = vunpack.c.l.b16 %v25
    %v1143 = vunpack.c.l.b16 %v26
    %v1144 = vunpack.c.l.b16 %v27
    %v1145 = vunpack.c.l.b16 %v28
    %v1146 = vunpack.c.l.b16 %v29
    %v1147 = vunpack.c.l.b16 %v30
    %v1148 = vunpack.c.l.b16 %v31
    %v1149 = vunpack.c.l.b16 %v32
    %v1150 = vunpack.c.l.b16 %v33
    %v1151 = vunpack.c.l.b16 %v34
    %v1152 = vunpack.c.l.b16 %v35
    %v1153 = vunpack.c.l.b16 %v36
    %v1154 = vunpack.c.l.b16 %v37
    %v1155 = vunpack.c.l.b16 %v38
    %v1156 = vunpack.c.l.b16 %v39
    %v1157 = vunpack.c.l.b16 %v40
    %v1158 = vunpack.c.l.b16 %v41
    %v1159 = vunpack.c.l.b16 %v42
    %v1160 = vunpack.c.l.b16 %v43
    %v1161 = vunpack.c.l.b16 %v44
    %v1162 = vunpack.c.l.b16 %v45
    %v1163 = vunpack.c.l.b16 %v46
    %v1164 = vunpack.c.l.b16 %v47
    %v1165 = vunpack.c.l.b16 %v48
    %v1166 = vunpack.c.l.b16 %v49
    %v1167 = vunpack.c.l.b16 %v50
    %v1168 = vunpack.c.l.b16 %v51
    %v1169 = vunpack.c.l.b16 %v52
    %v1170 = vunpack.c.l.b16 %v53
    %v1171 = vunpack.c.l.b16 %v54
    %v1172 = vunpack.c.l.b16 %v55
    %v1173 = vunpack.c.l.b16 %v56
    %v1174 = vunpack.c.l.b16 %v57
    %v1175 = vunpack.c.l.b16 %v58
    %v1176 = vunpack.c.l.b16 %v59
    %v1177 = vunpack.c.l.b16 %v60
    %v1178 = vunpack.c.l.b16 %v61
    %v1179 = vunpack.c.l.b16 %v62
    %v1180 = vunpack.c.l.b16 %v63
    %v1181 = vunpack.c.l.b16 %v64
    %v1182 = vunpack.c.l.b16 %v65
    %v1183 = vunpack.c.l.b16 %v66
    %v1184 = vunpack.c.l.b16 %v67
    %v1185 = vunpack.c.l.b16 %v68
    %v1186 = vunpack.c.l.b16 %v69
    %v1187 = vunpack.c.l.b16 %v70
    %v1188 = vunpack.c.l.b16 %v71
    %v1189 = vunpack.c.l.b16 %v72
    %v1190 = vunpack.c.l.b16 %v73
    %v1191 = vunpack.c.l.b16 %v74
    %v1192 = vunpack.c.l.b16 %v75
    %v1193 = vunpack.c.l.b16 %v76
    %v1194 = vunpack.c.l.b16 %v77
    %v1195 = vunpack.c.l.b16 %v78
    %v1196 = vunpack.c.l.b16 %v79
    %v1197 = vunpack.c.l.b16 %v80
    %v1198 = vunpack.c.l.b16 %v81
    %v1199 = vunpack.c.l.b16 %v82
    %v1200 = vunpack.c.l.b16 %v83
    %v1201 = vunpack.c.l.b16 %v84
    %v1202 = vunpack.c.l.b16 %v85
    %v1203 = vunpack.c.l.b16 %v86
    %v1204 = vunpack.c.l.b16 %v87
    %v1205 = vunpack.c.l.b16 %v88
    %v1206 = vunpack.c.l.b16 %v89
    %v1207 = vunpack.c.l.b16 %v90
    %v1208 = vunpack.c.l.b16 %v91
    %v1209 = vunpack.c.l.b16 %v92
    %v1210 = vunpack.c.l.b16 %v93
    %v1211 = vunpack.c.l.b16 %v94
    %v1212 = vunpack.c.l.b16 %v95
    %v1213 = vunpack.c.l.b16 %v96
    %v1214 = vunpack.c.l.b16 %v97
    %v1215 = vunpack.c.l.b16 %v98
    %v1216 = vunpack.c.l.b16 %v99
    %v1217 = vunpack.c.l.b16 %v100
    %v1218 = vunpack.c.l.b16 %v101
    %v1219 = vunpack.c.l.b16 %v102
    %v1220 = vunpack.c.l.b16 %v103
    %v1221 = vunpack.c.l.b16 %v104
    %v1222 = vunpack.c.l.b16 %v105
    %v1223 = vunpack.c.l.b16 %v106
    %v1224 = vunpack.c.l.b16 %v107
    %v1225 = vunpack.c.l.b16 %v108
    %v1226 = vunpack.c.l.b16 %v109
    %v1227 = vunpack.c.l.b16 %v110
    %v1228 = vunpack.c.l.b16 %v111
    %v1229 = vunpack.c.l.b16 %v112
    %v1230 = vunpack.c.l.b16 %v113
    %v1231 = vunpack.c.l.b16 %v114
    %v1232 = vunpack.c.l.b16 %v115
    %v1233 = vunpack.c.l.b16 %v116
    %v1234 = vunpack.c.l.b16 %v117
    %v1235 = vunpack.c.l.b16 %v118
    %v1236 = vunpack.c.l.b16 %v119
    %v1237 = vunpack.c.l.b16 %v120
    %v1238 = vunpack.c.l.b16 %v121
    %v1239 = vunpack.c.l.b16 %v122
    %v1240 = vunpack.c.l.b16 %v123
    %v1241 = vunpack.c.l.b16 %v124
    %v1242 = vunpack.c.l.b16 %v125
    %v1243 = vunpack.c.l.b16 %v126
    %v1244 = vunpack.c.l.b16 %v127
    %v1245 = vunpack.c.l.b16 %v128
    %v1246 = vunpack.c.l.b16 %v129
    %v1247 = vunpack.c.l.b16 %v130
    %v1248 = vunpack.c.l.b16 %v131
    %v1249 = vunpack.c.l.b16 %v132
    %v1250 = vunpack.c.l.b16 %v133
    %v1251 = vunpack.c.l.b16 %v134
    %v1252 = vunpack.c.l.b16 %v135
    %v1253 = vunpack.c.l.b16 %v136
    %v1254 = vunpack.c.l.b16 %v137
    %v1255 = vunpack.c.l.b16 %v138
    %v1256 = vunpack.c.l.b16 %v139
    %v1257 = vunpack.c.l.b16 %v140
    %v1258 = vunpack.c.l.b16 %v141
    %v1259 = vunpack.c.l.b16 %v142
    %v1260 = vunpack.c.l.b16 %v143
    %v1261 = vunpack.c.l.b16 %v144
    %v1262 = vunpack.c.l.b16 %v145
    %v1263 = vunpack.c.l.b16 %v146
    %v1264 = vunpack.c.l.b16 %v147
    %v1265 = vunpack.c.l.b16 %v148
    %v1266 = vunpack.c.l.b16 %v149
    %v1267 = vunpack.c.l.b16 %v150
    %v1268 = vunpack.c.l.b16 %v151
    %v1269 = vunpack.c.l.b16 %v152
    %v1270 = vunpack.c.l.b16 %v153
    %v1271 = vunpack.c.l.b16 %v154
    %v1272 = vunpack.c.l.b16 %v155
    %v1273 = vunpack.c.l.b16 %v156
    %v1274 = vunpack.c.l.b16 %v157
    %v1275 = vunpack.c.l.b16 %v158
    %v1276 = vunpack.c.l.b16 %v159
    %v1277 = vunpack.c.l.b16 %v160
    %v1278 = vunpack.c.l.b16 %v161
    %v1279 = vunpack.c.l.b16 %v162
    %v1280 = vunpack.c.l.b16 %v163
    %v1281 = vunpack.c.l.b16 %v164
    %v1282 = vunpack.c.l.b16 %v165
    %v1283 = vunpack.c.l.b16 %v166
    %v1284 = vunpack.c.l.b16 %v167
    %v1285 = vunpack.c.l.b16 %v168
    %v1286 = vunpack.c.l.b16 %v169
    %v1287 = vunpack.c.l.b16 %v170
    %v1288 = vunpack.c.l.b16 %v171
    %v1289 = vunpack.c.l.b16 %v172
    %v1290 = vunpack.c.l.b16 %v173
    %v1291 = vunpack.c.l.b16 %v174
    %v1292 = vunpack.c.l.b16 %v175
    %v1293 = vunpack.c.l.b16 %v176
    %v1294 = vunpack.c.l.b16 %v177
    %v1295 = vunpack.c.l.b16 %v178
    %v1296 = vunpack.c.l.b16 %v179
    %v1297 = vunpack.c.l.b16 %v180
    %v1298 = vunpack.c.l.b16 %v181
    %v1299 = vunpack.c.l.b16 %v182
    %v1300 = vunpack.c.l.b16 %v183
    %v1301 = vunpack.c.l.b16 %v184
    %v1302 = vunpack.c.l.b16 %v185
    %v1303 = vunpack.c.l.b16 %v186
    %v1304 = vunpack.c.l.b16 %v187
    %v1305 = vunpack.c.l.b16 %v188
    %v1306 = vunpack.c.l.b16 %v189
    %v1307 = vunpack.c.l.b16 %v190
    %v1308 = vunpack.c.l.b16 %v191
    %v1309 = vunpack.c.l.b16 %v192
    %v1310 = vunpack.c.l.b16 %v193
    %v1311 = vunpack.c.l.b16 %v194
    %v1312 = vunpack.c.l.b16 %v195
    %v1313 = vunpack.c.l.b16 %v196
    %v1314 = vunpack.c.l.b16 %v197
    %v1315 = vunpack.c.l.b16 %v198
    %v1316 = vunpack.c.l.b16 %v199
    %v1317 = vunpack.c.l.b16 %v200
    %v1318 = vunpack.c.l.b16 %v201
    %v1319 = vunpack.c.l.b16 %v202
    %v1320 = vunpack.c.l.b16 %v203
    %v1321 = vunpack.c.l.b16 %v204
    %v1322 = vunpack.c.l.b16 %v205
    %v1323 = vunpack.c.l.b16 %v206
    %v1324 = vunpack.c.l.b16 %v207
    %v1325 = vunpack.c.l.b16 %v208
    %v1326 = vunpack.c.l.b16 %v209
    %v1327 = vunpack.c.l.b16 %v210
    %v1328 = vunpack.c.l.b16 %v211
    %v1329 = vunpack.c.l.b16 %v212
    %v1330 = vunpack.c.l.b16 %v213
    %v1331 = vunpack.c.l.b16 %v214
    %v1332 = vunpack.c.l.b16 %v215
    %v1333 = vunpack.c.l.b16 %v216
    %v1334 = vunpack.c.l.b16 %v217
    %v1335 = vunpack.c.l.b16 %v218
    %v1336 = vunpack.c.l.b16 %v219
    %v1337 = vunpack.c.l.b16 %v220
    %v1338 = vunpack.c.l.b16 %v221
    %v1339 = vunpack.c.l.b16 %v222
    %v1340 = vunpack.c.l.b16 %v223
    %v1341 = vunpack.c.l.b16 %v224
    %v1342 = vunpack.c.l.b16 %v225
    %v1343 = vunpack.c.l.b16 %v226
    %v1344 = vunpack.c.l.b16 %v227
    %v1345 = vunpack.c.l.b16 %v228
    %v1346 = vunpack.c.l.b16 %v229
    %v1347 = vunpack.c.l.b16 %v230
    %v1348 = vunpack.c.l.b16 %v231
    %v1349 = vunpack.c.l.b16 %v232
    %v1350 = vunpack.c.l.b16 %v233
    %v1351 = vunpack.c.l.b16 %v234
    %v1352 = vunpack.c.l.b16 %v235
    %v1353 = vunpack.c.l.b16 %v236
    %v1354 = vunpack.c.l.b16 %v237
    %v1355 = vunpack.c.l.b16 %v238
    %v1356 = vunpack.c.l.b16 %v239
    %v1357 = vunpack.c.l.b16 %v240
    %v1358 = vunpack.c.l.b16 %v241
    %v1359 = vunpack.c.l.b16 %v242
    %v1360 = vunpack.c.l.b16 %v243
    %v1361 = vunpack.c.l.b16 %v244
    %v1362 = vunpack.c.l.b16 %v245
    %v1363 = vunpack.c.l.b16 %v246
    %v1364 = vunpack.c.l.b16 %v247
    %v1365 = vunpack.c.l.b16 %v248
    %v1366 = vunpack.c.l.b16 %v249
    %v1367 = vunpack.c.l.b16 %v250
    %v1368 = vunpack.c.l.b16 %v251
    %v1369 = vunpack.c.l.b16 %v252
    %v1370 = vunpack.c.l.b16 %v253
    %v1371 = vunpack.c.l.b16 %v254
    %v1372 = vunpack.c.l.b16 %v255
    %v1373 = vunpack.c.l.b16 %v256
    %v1374 = vunpack.c.l.b16 %v257
    %v1375 = vunpack.c.l.b16 %v258
    %v1376 = vunpack.c.l.b16 %v259
    %v1377 = vunpack.c.l.b16 %v260
    %v1378 = vunpack.c.l.b16 %v261
    %v1379 = vunpack.c.l.b16 %v262
    %v1380 = vunpack.c.l.b16 %v263
    %v1381 = vunpack.c.l.b16 %v264
    %v1382 = vunpack.c.l.b16 %v265
    %v1383 = vunpack.c.l.b16 %v266
    %v1384 = vunpack.c.l.b16 %v267
    %v1385 = vunpack.c.l.b16 %v268
    %v1386 = vunpack.c.l.b16 %v269
    %v1387 = vunpack.c.l.b16 %v270
    %v1388 = vunpack.c.l.b16 %v271
    %v1389 = vunpack.c.l.b16 %v272
    %v1390 = vunpack.c.l.b16 %v273
    %v1391 = vunpack.c.l.b16 %v274
    %v1392 = vunpack.c.l.b16 %v275
    %v1393 = vunpack.c.l.b16 %v276
    %v1394 = vunpack.c.l.b16 %v277
    %v1395 = vunpack.c.l.b16 %v278
    %v1396 = vunpack.c.l.b16 %v279
    %v1397 = vunpack.c.l.b16 %v280
    %v1398 = vunpack.c.l.b16 %v281
    %v1399 = vunpack.c.l.b16 %v282
    %v1400 = vunpack.c.l.b16 %v283
    %v1401 = vunpack.c.l.b16 %v284
    %v1402 = vunpack.c.l.b16 %v285
    %v1403 = vunpack.c.l.b16 %v286
    %v1404 = vunpack.c.l.b16 %v287
    %v1405 = vunpack.c.l.b16 %v288
    %v1406 = vunpack.c.l.b16 %v289
    %v1407 = vunpack.c.l.b16 %v290
    %v1408 = vunpack.c.l.b16 %v291
    %v1409 = vunpack.c.l.b16 %v292
    %v1410 = vunpack.c.l.b16 %v293
    %v1411 = vunpack.c.l.b16 %v294
    %v1412 = vunpack.c.l.b16 %v295
    %v1413 = vunpack.c.l.b16 %v296
    %v1414 = vunpack.c.l.b16 %v297
    %v1415 = vunpack.c.l.b16 %v298
    %v1416 = vunpack.c.l.b16 %v299
    %v1417 = vunpack.c.l.b16 %v300
    %v1418 = vunpack.c.l.b16 %v301
    %v1419 = vunpack.c.l.b16 %v302
    %v1420 = vunpack.c.l.b16 %v303
    %v1421 = vunpack.c.l.b16 %v304
    %v1422 = vunpack.c.l.b16 %v305
    %v1423 = vunpack.c.l.b16 %v306
    %v1424 = vunpack.c.l.b16 %v307
    %v1425 = vunpack.c.l.b16 %v308
    %v1426 = vunpack.c.l.b16 %v309
    %v1427 = vunpack.c.l.b16 %v310
    %v1428 = vunpack.c.l.b16 %v311
    %v1429 = vunpack.c.l.b16 %v312
    %v1430 = vunpack.c.l.b16 %v313
    %v1431 = vunpack.c.l.b16 %v314
    %v1432 = vunpack.c.l.b16 %v315
    %v1433 = vunpack.c.l.b16 %v316
    %v1434 = vunpack.c.l.b16 %v317
    %v1435 = vunpack.c.l.b16 %v318
    %v1436 = vunpack.c.l.b16 %v319
    %v1437 = vunpack.c.l.b16 %v320
    %v1438 = vunpack.c.l.b16 %v321
    %v1439 = vunpack.c.l.b16 %v322
    %v1440 = vunpack.c.l.b16 %v323
    %v1441 = vunpack.c.l.b16 %v324
    %v1442 = vunpack.c.l.b16 %v325
    %v1443 = vunpack.c.l.b16 %v326
    %v1444 = vunpack.c.l.b16 %v327
    %v1445 = vunpack.c.l.b16 %v328
    %v1446 = vunpack.c.l.b16 %v329
    %v1447 = vunpack.c.l.b16 %v330
    %v1448 = vunpack.c.l.b16 %v331
    %v1449 = vunpack.c.l.b16 %v332
    %v1450 = vunpack.c.l.b16 %v333
    %v1451 = vunpack.c.l.b16 %v334
    %v1452 = vunpack.c.l.b16 %v335
    %v1453 = vunpack.c.l.b16 %v336
    %v1454 = vunpack.c.l.b16 %v337
    %v1455 = vunpack.c.l.b16 %v338
    %v1456 = vunpack.c.l.b16 %v339
    %v1457 = vunpack.c.l.b16 %v340
    %v1458 = vunpack.c.l.b16 %v341
    %v1459 = vunpack.c.l.b16 %v342
    %v1460 = vunpack.c.l.b16 %v343
    %v1461 = vunpack.c.l.b16 %v344
    %v1462 = vunpack.c.l.b16 %v345
    %v1463 = vunpack.c.l.b16 %v346
    %v1464 = vunpack.c.l.b16 %v347
    %v1465 = vunpack.c.l.b16 %v348
    %v1466 = vunpack.c.l.b16 %v349
    %v1467 = vunpack.c.l.b16 %v350
    %v1468 = vunpack.c.l.b16 %v351
    %v1469 = vunpack.c.l.b16 %v352
    %v1470 = vunpack.c.l.b16 %v353
    %v1471 = vunpack.c.l.b16 %v354
    %v1472 = vunpack.c.l.b16 %v355
    %v1473 = vunpack.c.l.b16 %v356
    %v1474 = vunpack.c.l.b16 %v357
    %v1475 = vunpack.c.l.b16 %v358
    %v1476 = vunpack.c.l.b16 %v359
    %v1477 = vunpack.c.l.b16 %v360
    %v1478 = vunpack.c.l.b16 %v361
    %v1479 = vunpack.c.l.b16 %v362
    %v1480 = vunpack.c.l.b16 %v363
    %v1481 = vunpack.c.l.b16 %v364
    %v1482 = vunpack.c.l.b16 %v365
    %v1483 = vunpack.c.l.b16 %v366
    %v1484 = vunpack.c.l.b16 %v367
    %v1485 = vunpack.c.l.b16 %v368
    %v1486 = vunpack.c.l.b16 %v369
    %v1487 = vunpack.c.l.b16 %v370
    %v1488 = vunpack.c.l.b16 %v371
    %v1489 = vunpack.c.l.b16 %v372
    %v1490 = vunpack.c.l.b16 %v373
    %v1491 = vunpack.c.l.b16 %v374
    %v1492 = vunpack.c.l.b16 %v375
    %v1493 = vunpack.c.l.b16 %v376
    %v1494 = vunpack.c.l.b16 %v377
    %v1495 = vunpack.c.l.b16 %v378
    %v1496 = vunpack.c.l.b16 %v379
    %v1497 = vunpack.c.l.b16 %v380
    %v1498 = vunpack.c.l.b16 %v381
    %v1499 = vunpack.c.l.b16 %v382
    %v1500 = vunpack.c.l.b16 %v383
    %v1501 = vunpack.c.l.b16 %v384
    %v1502 = vunpack.c.l.b16 %v385
    %v1503 = vunpack.c.l.b16 %v386
    %v1504 = vunpack.c.l.b16 %v387
    %v1505 = vunpack.c.l.b16 %v388
    %v1506 = vunpack.c.l.b16 %v389
    %v1507 = vunpack.c.l.b16 %v390
    %v1508 = vunpack.c.l.b16 %v391
    %v1509 = vunpack.c.l.b16 %v392
    %v1510 = vunpack.c.l.b16 %v393
    %v1511 = vunpack.c.l.b16 %v394
    %v1512 = vunpack.c.l.b16 %v395
    %v1513 = vunpack.c.l.b16 %v396
    %v1514 = vunpack.c.l.b16 %v397
    %v1515 = vunpack.c.l.b16 %v398
    %v1516 = vunpack.c.l.b16 %v399
    %v1517 = vunpack.c.l.b16 %v400
    %v1518 = vunpack.c.l.b16 %v401
    %v1519 = vunpack.c.l.b16 %v402
    %v1520 = vunpack.c.l.b16 %v403
    %v1521 = vunpack.c.l.b16 %v404
    %v1522 = vunpack.c.l.b16 %v405
    %v1523 = vunpack.c.l.b16 %v406
    %v1524 = vunpack.c.l.b16 %v407
    %v1525 = vunpack.c.l.b16 %v408
    %v1526 = vunpack.c.l.b16 %v409
    %v1527 = vunpack.c.l.b16 %v410
    %v1528 = vunpack.c.l.b16 %v411
    %v1529 = vunpack.c.l.b16 %v412
    %v1530 = vunpack.c.l.b16 %v413
    %v1531 = vunpack.c.l.b16 %v414
    %v1532 = vunpack.c.l.b16 %v415
    %v1533 = vunpack.c.l.b16 %v416
    %v1534 = vunpack.c.l.b16 %v417
    %v1535 = vunpack.c.l.b16 %v418
    %v1536 = vunpack.c.l.b16 %v419
    %v1537 = vunpack.c.l.b16 %v420
    %v1538 = vunpack.c.l.b16 %v421
    %v1539 = vunpack.c.l.b16 %v422
    %v1540 = vunpack.c.l.b16 %v423
    %v1541 = vunpack.c.l.b16 %v424
    %v1542 = vunpack.c.l.b16 %v425
    %v1543 = vunpack.c.l.b16 %v426
    %v1544 = vunpack.c.l.b16 %v427
    %v1545 = vunpack.c.l.b16 %v428
    %v1546 = vunpack.c.l.b16 %v429
    %v1547 = vunpack.c.l.b16 %v430
    %v1548 = vunpack.c.l.b16 %v431
    %v1549 = vunpack.c.l.b16 %v432
    %v1550 = vunpack.c.l.b16 %v433
    %v1551 = vunpack.c.l.b16 %v434
    %v1552 = vunpack.c.l.b16 %v435
    %v1553 = vunpack.c.l.b16 %v436
    %v1554 = vunpack.c.l.b16 %v437
    %v1555 = vunpack.c.l.b16 %v438
    %v1556 = vunpack.c.l.b16 %v439
    %v1557 = vunpack.c.l.b16 %v440
    %v1558 = vunpack.c.l.b16 %v441
    %v1559 = vunpack.c.l.b16 %v442
    %v1560 = vunpack.c.l.b16 %v443
    %v1561 = vunpack.c.l.b16 %v444
    %v1562 = vunpack.c.l.b16 %v445
    %v1563 = vunpack.c.l.b16 %v446
    %v1564 = vunpack.c.l.b16 %v447
    %v1565 = vunpack.c.l.b16 %v448
    %v1566 = vunpack.c.l.b16 %v449
    %v1567 = vunpack.c.l.b16 %v450
    %v1568 = vunpack.c.l.b16 %v451
    %v1569 = vunpack.c.l.b16 %v452
    %v1570 = vunpack.c.l.b16 %v453
    %v1571 = vunpack.c.l.b16 %v454
    %v1572 = vunpack.c.l.b16 %v455
    %v1573 = vunpack.c.l.b16 %v456
    %v1574 = vunpack.c.l.b16 %v457
    %v1575 = vunpack.c.l.b16 %v458
    %v1576 = vunpack.c.l.b16 %v459
    %v1577 = vunpack.c.l.b16 %v460
    %v1578 = vunpack.c.l.b16 %v461
    %v1579 = vunpack.c.l.b16 %v462
    %v1580 = vunpack.c.l.b16 %v463
    %v1581 = vunpack.c.l.b16 %v464
    %v1582 = vunpack.c.l.b16 %v465
    %v1583 = vunpack.c.l.b16 %v466
    %v1584 = vunpack.c.l.b16 %v467
    %v1585 = vunpack.c.l.b16 %v468
    %v1586 = vunpack.c.l.b16 %v469
    %v1587 = vunpack.c.l.b16 %v470
    %v1588 = vunpack.c.l.b16 %v471
    %v1589 = vunpack.c.l.b16 %v472
    %v1590 = vunpack.c.l.b16 %v473
    %v1591 = vunpack.c.l.b16 %v474
    %v1592 = vunpack.c.l.b16 %v475
    %v1593 = vunpack.c.l.b16 %v476
    %v1594 = vunpack.c.l.b16 %v477
    %v1595 = vunpack.c.l.b16 %v478
    %v1596 = vunpack.c.l.b16 %v479
    %v1597 = vunpack.c.l.b16 %v480
    %v1598 = vunpack.c.l.b16 %v481
    %v1599 = vunpack.c.l.b16 %v482
    %v1600 = vunpack.c.l.b16 %v483
    %v1601 = vunpack.c.l.b16 %v484
    %v1602 = vunpack.c.l.b16 %v485
    %v1603 = vunpack.c.l.b16 %v486
    %v1604 = vunpack.c.l.b16 %v487
    %v1605 = vunpack.c.l.b16 %v488
    %v1606 = vunpack.c.l.b16 %v489
    %v1607 = vunpack.c.l.b16 %v490
    %v1608 = vunpack.c.l.b16 %v491
    %v1609 = vunpack.c.l.b16 %v492
    %v1610 = vunpack.c.l.b16 %v493
    %v1611 = vunpack.c.l.b16 %v494
    %v1612 = vunpack.c.l.b16 %v495
    %v1613 = vunpack.c.l.b16 %v496
    %v1614 = vunpack.c.l.b16 %v497
    %v1615 = vunpack.c.l.b16 %v498
    %v1616 = vunpack.c.l.b16 %v499
    %v1617 = vunpack.c.l.b16 %v500
    %v1618 = vunpack.c.l.b16 %v501
    %v1619 = vunpack.c.l.b16 %v502
    %v1620 = vunpack.c.l.b16 %v503
    %v1621 = vunpack.c.l.b16 %v504
    %v1622 = vunpack.c.l.b16 %v505
    %v1623 = vunpack.c.l.b16 %v506
    %v1624 = vunpack.c.l.b16 %v507
    %v1625 = vunpack.c.l.b16 %v508
    %v1626 = vunpack.c.l.b16 %v509
    %v1627 = vunpack.c.l.b16 %v510
    %v1628 = vunpack.c.l.b16 %v511
    %v1629 = vunpack.c.l.b16 %v512
    %v1630 = vunpack.c.l.b16 %v513
    %v1631 = vunpack.c.l.b16 %v514
    %v1632 = vunpack.c.l.b16 %v515
    %v1633 = vunpack.c.l.b16 %v516
    %v1634 = vunpack.c.l.b16 %v517
    %v1635 = vunpack.c.l.b16 %v518
    %v1636 = vunpack.c.l.b16 %v519
    %v1637 = vunpack.c.l.b16 %v520
    %v1638 = vunpack.c.l.b16 %v521
    %v1639 = vunpack.c.l.b16 %v522
    %v1640 = vunpack.c.l.b16 %v523
    %v1641 = vunpack.c.l.b16 %v524
    %v1642 = vunpack.c.l.b16 %v525
    %v1643 = vunpack.c.l.b16 %v526
    %v1644 = vunpack.c.l.b16 %v527
    %v1645 = vunpack.c.l.b16 %v528
    %v1646 = vunpack.c.l.b16 %v529
    %v1647 = vunpack.c.l.b16 %v530
    %v1648 = vunpack.c.l.b16 %v531
    %v1649 = vunpack.c.l.b16 %v532
    %v1650 = vunpack.c.l.b16 %v533
    %v1651 = vunpack.c.l.b16 %v534
    %v1652 = vunpack.c.l.b16 %v535
    %v1653 = vunpack.c.l.b16 %v536
    %v1654 = vunpack.c.l.b16 %v537
    %v1655 = vunpack.c.l.b16 %v538
    %v1656 = vunpack.c.l.b16 %v539
    %v1657 = vunpack.c.l.b16 %v540
    %v1658 = vunpack.c.l.b16 %v541
    %v1659 = vunpack.c.l.b16 %v542
    %v1660 = vunpack.c.l.b16 %v543
    %v1661 = vunpack.c.l.b16 %v544
    %v1662 = vunpack.c.l.b16 %v545
    %v1663 = vunpack.c.l.b16 %v546
    %v1664 = vunpack.c.l.b16 %v547
    %v1665 = vunpack.c.l.b16 %v548
    %v1666 = vunpack.c.l.b16 %v549
    %v1667 = vunpack.c.l.b16 %v550
    %v1668 = vunpack.c.l.b16 %v551
    %v1669 = vunpack.c.l.b16 %v552
    %v1670 = vunpack.c.l.b16 %v553
    %v1671 = vunpack.c.l.b16 %v554
    %v1672 = vunpack.c.l.b16 %v555
    %v1673 = vunpack.c.l.b16 %v556
    %v1674 = vunpack.c.l.b16 %v557
    %v1675 = vunpack.c.l.b16 %v558
    %v1676 = vunpack.c.l.b16 %v559
    %v1677 = vunpack.c.l.b16 %v560
    %v1678 = vunpack.c.l.b16 %v561
    %v1679 = vunpack.c.l.b16 %v562
    %v1680 = vunpack.c.l.b16 %v563
    %v1681 = vunpack.c.l.b16 %v564
    %v1682 = vunpack.c.l.b16 %v565
    %v1683 = vunpack.c.l.b16 %v566
    %v1684 = vunpack.c.l.b16 %v567
    %v1685 = vunpack.c.l.b16 %v568
    %v1686 = vunpack.c.l.b16 %v569
    %v1687 = vunpack.c.l.b16 %v570
    %v1688 = vunpack.c.l.b16 %v571
    %v1689 = vunpack.c.l.b16 %v572
    %v1690 = vunpack.c.l.b16 %v573
    %v1691 = vunpack.c.l.b16 %v574
    %v1692 = vpack.c.b16 %v1140, %v1139
    %v1693 = vpack.c.b16 %v1142, %v1141
    %v1694 = vpack.c.b16 %v1144, %v1143
    %v1695 = vpack.c.b16 %v1146, %v1145
    %v1696 = vpack.c.b16 %v1148, %v1147
    %v1697 = vpack.c.b16 %v1150, %v1149
    %v1698 = vpack.c.b16 %v1152, %v1151
    %v1699 = vpack.c.b16 %v1154, %v1153
    %v1700 = vpack.c.b16 %v1156, %v1155
    %v1701 = vpack.c.b16 %v1158, %v1157
    %v1702 = vpack.c.b16 %v1160, %v1159
    %v1703 = vpack.c.b16 %v1162, %v1161
    %v1704 = vpack.c.b16 %v1164, %v1163
    %v1705 = vpack.c.b16 %v1166, %v1165
    %v1706 = vpack.c.b16 %v1168, %v1167
    %v1707 = vpack.c.b16 %v1170, %v1169
    %v1708 = vpack.c.b16 %v1172, %v1171
    %v1709 = vpack.c.b16 %v1174, %v1173
    %v1710 = vpack.c.b16 %v1176, %v1175
    %v1711 = vpack.c.b16 %v1178, %v1177
    %v1712 = vpack.c.b16 %v1180, %v1179
    %v1713 = vpack.c.b16 %v1182, %v1181
    %v1714 = vpack.c.b16 %v1184, %v1183
    %v1715 = vpack.c.b16 %v1186, %v1185
    %v1716 = vpack.c.b16 %v1188, %v1187
    %v1717 = vpack.c.b16 %v1190, %v1189
    %v1718 = vpack.c.b16 %v1192, %v1191
    %v1719 = vpack.c.b16 %v1194, %v1193
    %v1720 = vpack.c.b16 %v1196, %v1195
    %v1721 = vpack.c.b16 %v1198, %v1197
    %v1722 = vpack.c.b16 %v1200, %v1199
    %v1723 = vpack.c.b16 %v1202, %v1201
    %v1724 = vpack.c.b16 %v1204, %v1203
    %v1725 = vpack.c.b16 %v1206, %v1205
    %v1726 = vpack.c.b16 %v1208, %v1207
    %v1727 = vpack.c.b16 %v1210, %v1209
    %v1728 = vpack.c.b16 %v1212, %v1211
    %v1729 = vpack.c.b16 %v1214, %v1213
    %v1730 = vpack.c.b16 %v1216, %v1215
    %v1731 = vpack.c.b16 %v1218, %v1217
    %v1732 = vpack.c.b16 %v1220, %v1219
    %v1733 = vpack.c.b16 %v1222, %v1221
    %v1734 = vpack.c.b16 %v1224, %v1223
    %v1735 = vpack.c.b16 %v1226, %v1225
    %v1736 = vpack.c.b16 %v1228, %v1227
    %v1737 = vpack.c.b16 %v1230, %v1229
    %v1738 = vpack.c.b16 %v1232, %v1231
    %v1739 = vpack.c.b16 %v1234, %v1233
    %v1740 = vpack.c.b16 %v1236, %v1235
    %v1741 = vpack.c.b16 %v1238, %v1237
    %v1742 = vpack.c.b16 %v1240, %v1239
    %v1743 = vpack.c.b16 %v1242, %v1241
    %v1744 = vpack.c.b16 %v1244, %v1243
    %v1745 = vpack.c.b16 %v1246, %v1245
    %v1746 = vpack.c.b16 %v1248, %v1247
    %v1747 = vpack.c.b16 %v1250, %v1249
    %v1748 = vpack.c.b16 %v1252, %v1251
    %v1749 = vpack.c.b16 %v1254, %v1253
    %v1750 = vpack.c.b16 %v1256, %v1255
    %v1751 = vpack.c.b16 %v1258, %v1257
    %v1752 = vpack.c.b16 %v1260, %v1259
    %v1753 = vpack.c.b16 %v1262, %v1261
    %v1754 = vpack.c.b16 %v1264, %v1263
    %v1755 = vpack.c.b16 %v1266, %v1265
    %v1756 = vpack.c.b16 %v1268, %v1267
    %v1757 = vpack.c.b16 %v1270, %v1269
    %v1758 = vpack.c.b16 %v1272, %v1271
    %v1759 = vpack.c.b16 %v1274, %v1273
    %v1760 = vpack.c.b16 %v1276, %v1275
    %v1761 = vpack.c.b16 %v1278, %v1277
    %v1762 = vpack.c.b16 %v1280, %v1279
    %v1763 = vpack.c.b16 %v1282, %v1281
    %v1764 = vpack.c.b16 %v1284, %v1283
    %v1765 = vpack.c.b16 %v1286, %v1285
    %v1766 = vpack.c.b16 %v1288, %v1287
    %v1767 = vpack.c.b16 %v1290, %v1289
    %v1768 = vpack.c.b16 %v1292, %v1291
    %v1769 = vpack.c.b16 %v1294, %v1293
    %v1770 = vpack.c.b16 %v1296, %v1295
    %v1771 = vpack.c.b16 %v1298, %v1297
    %v1772 = vpack.c.b16 %v1300, %v1299
    %v1773 = vpack.c.b16 %v1302, %v1301
    %v1774 = vpack.c.b16 %v1304, %v1303
    %v1775 = vpack.c.b16 %v1306, %v1305
    %v1776 = vpack.c.b16 %v1308, %v1307
    %v1777 = vpack.c.b16 %v1310, %v1309
    %v1778 = vpack.c.b16 %v1312, %v1311
    %v1779 = vpack.c.b16 %v1314, %v1313
    %v1780 = vpack.c.b16 %v1316, %v1315
    %v1781 = vpack.c.b16 %v1318, %v1317
    %v1782 = vpack.c.b16 %v1320, %v1319
    %v1783 = vpack.c.b16 %v1322, %v1321
    %v1784 = vpack.c.b16 %v1324, %v1323
    %v1785 = vpack.c.b16 %v1326, %v1325
    %v1786 = vpack.c.b16 %v1328, %v1327
    %v1787 = vpack.c.b16 %v1330, %v1329
    %v1788 = vpack.c.b16 %v1332, %v1331
    %v1789 = vpack.c.b16 %v1334, %v1333
    %v1790 = vpack.c.b16 %v1336, %v1335
    %v1791 = vpack.c.b16 %v1338, %v1337
    %v1792 = vpack.c.b16 %v1340, %v1339
    %v1793 = vpack.c.b16 %v1342, %v1341
    %v1794 = vpack.c.b16 %v1344, %v1343
    %v1795 = vpack.c.b16 %v1346, %v1345
    %v1796 = vpack.c.b16 %v1348, %v1347
    %v1797 = vpack.c.b16 %v1350, %v1349
    %v1798 = vpack.c.b16 %v1352, %v1351
    %v1799 = vpack.c.b16 %v1354, %v1353
    %v1800 = vpack.c.b16 %v1356, %v1355
    %v1801 = vpack.c.b16 %v1358, %v1357
    %v1802 = vpack.c.b16 %v1360, %v1359
    %v1803 = vpack.c.b16 %v1362, %v1361
    %v1804 = vpack.c.b16 %v1364, %v1363
    %v1805 = vpack.c.b16 %v1366, %v1365
    %v1806 = vpack.c.b16 %v1368, %v1367
    %v1807 = vpack.c.b16 %v1370, %v1369
    %v1808 = vpack.c.b16 %v1372, %v1371
    %v1809 = vpack.c.b16 %v1374, %v1373
    %v1810 = vpack.c.b16 %v1376, %v1375
    %v1811 = vpack.c.b16 %v1378, %v1377
    %v1812 = vpack.c.b16 %v1380, %v1379
    %v1813 = vpack.c.b16 %v1382, %v1381
    %v1814 = vpack.c.b16 %v1384, %v1383
    %v1815 = vpack.c.b16 %v1386, %v1385
    %v1816 = vpack.c.b16 %v1388, %v1387
    %v1817 = vpack.c.b16 %v1390, %v1389
    %v1818 = vpack.c.b16 %v1392, %v1391
    %v1819 = vpack.c.b16 %v1394, %v1393
    %v1820 = vpack.c.b16 %v1396, %v1395
    %v1821 = vpack.c.b16 %v1398, %v1397
    %v1822 = vpack.c.b16 %v1400, %v1399
    %v1823 = vpack.c.b16 %v1402, %v1401
    %v1824 = vpack.c.b16 %v1404, %v1403
    %v1825 = vpack.c.b16 %v1406, %v1405
    %v1826 = vpack.c.b16 %v1408, %v1407
    %v1827 = vpack.c.b16 %v1410, %v1409
    %v1828 = vpack.c.b16 %v1412, %v1411
    %v1829 = vpack.c.b16 %v1414, %v1413
    %v1830 = vpack.c.b16 %v1416, %v1415
    %v1831 = vpack.c.b16 %v1418, %v1417
    %v1832 = vpack.c.b16 %v1420, %v1419
    %v1833 = vpack.c.b16 %v1422, %v1421
    %v1834 = vpack.c.b16 %v1424, %v1423
    %v1835 = vpack.c.b16 %v1426, %v1425
    %v1836 = vpack.c.b16 %v1428, %v1427
    %v1837 = vpack.c.b16 %v1430, %v1429
    %v1838 = vpack.c.b16 %v1432, %v1431
    %v1839 = vpack.c.b16 %v1434, %v1433
    %v1840 = vpack.c.b16 %v1436, %v1435
    %v1841 = vpack.c.b16 %v1438, %v1437
    %v1842 = vpack.c.b16 %v1440, %v1439
    %v1843 = vpack.c.b16 %v1442, %v1441
    %v1844 = vpack.c.b16 %v1444, %v1443
    %v1845 = vpack.c.b16 %v1446, %v1445
    %v1846 = vpack.c.b16 %v1448, %v1447
    %v1847 = vpack.c.b16 %v1450, %v1449
    %v1848 = vpack.c.b16 %v1452, %v1451
    %v1849 = vpack.c.b16 %v1454, %v1453
    %v1850 = vpack.c.b16 %v1456, %v1455
    %v1851 = vpack.c.b16 %v1458, %v1457
    %v1852 = vpack.c.b16 %v1460, %v1459
    %v1853 = vpack.c.b16 %v1462, %v1461
    %v1854 = vpack.c.b16 %v1464, %v1463
    %v1855 = vpack.c.b16 %v1466, %v1465
    %v1856 = vpack.c.b16 %v1468, %v1467
    %v1857 = vpack.c.b16 %v1470, %v1469
    %v1858 = vpack.c.b16 %v1472, %v1471
    %v1859 = vpack.c.b16 %v1474, %v1473
    %v1860 = vpack.c.b16 %v1476, %v1475
    %v1861 = vpack.c.b16 %v1478, %v1477
    %v1862 = vpack.c.b16 %v1480, %v1479
    %v1863 = vpack.c.b16 %v1482, %v1481
    %v1864 = vpack.c.b16 %v1484, %v1483
    %v1865 = vpack.c.b16 %v1486, %v1485
    %v1866 = vpack.c.b16 %v1488, %v1487
    %v1867 = vpack.c.b16 %v1490, %v1489
    %v1868 = vpack.c.b16 %v1492, %v1491
    %v1869 = vpack.c.b16 %v1494, %v1493
    %v1870 = vpack.c.b16 %v1496, %v1495
    %v1871 = vpack.c.b16 %v1498, %v1497
    %v1872 = vpack.c.b16 %v1500, %v1499
    %v1873 = vpack.c.b16 %v1502, %v1501
    %v1874 = vpack.c.b16 %v1504, %v1503
    %v1875 = vpack.c.b16 %v1506, %v1505
    %v1876 = vpack.c.b16 %v1508, %v1507
    %v1877 = vpack.c.b16 %v1510, %v1509
    %v1878 = vpack.c.b16 %v1512, %v1511
    %v1879 = vpack.c.b16 %v1514, %v1513
    %v1880 = vpack.c.b16 %v1516, %v1515
    %v1881 = vpack.c.b16 %v1518, %v1517
    %v1882 = vpack.c.b16 %v1520, %v1519
    %v1883 = vpack.c.b16 %v1522, %v1521
    %v1884 = vpack.c.b16 %v1524, %v1523
    %v1885 = vpack.c.b16 %v1526, %v1525
    %v1886 = vpack.c.b16 %v1528, %v1527
    %v1887 = vpack.c.b16 %v1530, %v1529
    %v1888 = vpack.c.b16 %v1532, %v1531
    %v1889 = vpack.c.b16 %v1534, %v1533
    %v1890 = vpack.c.b16 %v1536, %v1535
    %v1891 = vpack.c.b16 %v1538, %v1537
    %v1892 = vpack.c.b16 %v1540, %v1539
    %v1893 = vpack.c.b16 %v1542, %v1541
    %v1894 = vpack.c.b16 %v1544, %v1543
    %v1895 = vpack.c.b16 %v1546, %v1545
    %v1896 = vpack.c.b16 %v1548, %v1547
    %v1897 = vpack.c.b16 %v1550, %v1549
    %v1898 = vpack.c.b16 %v1552, %v1551
    %v1899 = vpack.c.b16 %v1554, %v1553
    %v1900 = vpack.c.b16 %v1556, %v1555
    %v1901 = vpack.c.b16 %v1558, %v1557
    %v1902 = vpack.c.b16 %v1560, %v1559
    %v1903 = vpack.c.b16 %v1562, %v1561
    %v1904 = vpack.c.b16 %v1564, %v1563
    %v1905 = vpack.c.b16 %v1566, %v1565
    %v1906 = vpack.c.b16 %v1568, %v1567
    %v1907 = vpack.c.b16 %v1570, %v1569
    %v1908 = vpack.c.b16 %v1572, %v1571
    %v1909 = vpack.c.b16 %v1574, %v1573
    %v1910 = vpack.c.b16 %v1576, %v1575
    %v1911 = vpack.c.b16 %v1578, %v1577
    %v1912 = vpack.c.b16 %v1580, %v1579
    %v1913 = vpack.c.b16 %v1582, %v1581
    %v1914 = vpack.c.b16 %v1584, %v1583
    %v1915 = vpack.c.b16 %v1586, %v1585
    %v1916 = vpack.c.b16 %v1588, %v1587
    %v1917 = vpack.c.b16 %v1590, %v1589
    %v1918 = vpack.c.b16 %v1592, %v1591
    %v1919 = vpack.c.b16 %v1594, %v1593
    %v1920 = vpack.c.b16 %v1596, %v1595
    %v1921 = vpack.c.b16 %v1598, %v1597
    %v1922 = vpack.c.b16 %v1600, %v1599
    %v1923 = vpack.c.b16 %v1602, %v1601
    %v1924 = vpack.c.b16 %v1604, %v1603
    %v1925 = vpack.c.b16 %v1606, %v1605
    %v1926 = vpack.c.b16 %v1608, %v1607
    %v1927 = vpack.c.b16 %v1610, %v1609
    %v1928 = vpack.c.b16 %v1612, %v1611
    %v1929 = vpack.c.b16 %v1614, %v1613
    %v1930 = vpack.c.b16 %v1616, %v1615
    %v1931 = vpack.c.b16 %v1618, %v1617
    %v1932 = vpack.c.b16 %v1620, %v1619
    %v1933 = vpack.c.b16 %v1622, %v1621
    %v1934 = vpack.c.b16 %v1624, %v1623
    %v1935 = vpack.c.b16 %v1626, %v1625
    %v1936 = vpack.c.b16 %v1628, %v1627
    %v1937 = vpack.c.b16 %v1630, %v1629
    %v1938 = vpack.c.b16 %v1632, %v1631
    %v1939 = vpack.c.b16 %v1634, %v1633
    %v1940 = vpack.c.b16 %v1636, %v1635
    %v1941 = vpack.c.b16 %v1638, %v1637
    %v1942 = vpack.c.b16 %v1640, %v1639
    %v1943 = vpack.c.b16 %v1642, %v1641
    %v1944 = vpack.c.b16 %v1644, %v1643
    %v1945 = vpack.c.b16 %v1646, %v1645
    %v1946 = vpack.c.b16 %v1648, %v1647
    %v1947 = vpack.c.b16 %v1650, %v1649
    %v1948 = vpack.c.b16 %v1652, %v1651
    %v1949 = vpack.c.b16 %v1654, %v1653
    %v1950 = vpack.c.b16 %v1656, %v1655
    %v1951 = vpack.c.b16 %v1658, %v1657
    %v1952 = vpack.c.b16 %v1660, %v1659
    %v1953 = vpack.c.b16 %v1662, %v1661
    %v1954 = vpack.c.b16 %v1664, %v1663
    %v1955 = vpack.c.b16 %v1666, %v1665
    %v1956 = vpack.c.b16 %v1668, %v1667
    %v1957 = vpack.c.b16 %v1670, %v1669
    %v1958 = vpack.c.b16 %v1672, %v1671
    %v1959 = vpack.c.b16 %v1674, %v1673
    %v1960 = vpack.c.b16 %v1676, %v1675
    %v1961 = vpack.c.b16 %v1678, %v1677
    %v1962 = vpack.c.b16 %v1680, %v1679
    %v1963 = vpack.c.b16 %v1682, %v1681
    %v1964 = vpack.c.b16 %v1684, %v1683
    %v1965 = vpack.c.b16 %v1686, %v1685
    %v1966 = vpack.c.b16 %v1688, %v1687
    %v1967 = vpack.c.b16 %v1690, %v1689
    %v1968 = vpack.c.b16 %v1691, %v1691
    %v1973 = vunpack.c.l.b16 %v575
    %v1974 = vunpack.c.l.b16 %v576
    %v1975 = vunpack.c.l.b16 %v577
    %v1976 = vunpack.c.l.b16 %v578
    %v1977 = vpack.c.b16 %v1974, %v1973
    %v1978 = vpack.c.b16 %v1976, %v1975
    %vm1980 = vcmask 220160
    %v1982 = vsel %vm1980, %v1692, 0
    %v1985 = vsel %vm1980, %v1693, 0
    %v1988 = vsel %vm1980, %v1694, 0
    %v1991 = vsel %vm1980, %v1695, 0
    %v1994 = vsel %vm1980, %v1696, 0
    %v1997 = vsel %vm1980, %v1697, 0
    %v2000 = vsel %vm1980, %v1698, 0
    %v2003 = vsel %vm1980, %v1699, 0
    %v2006 = vsel %vm1980, %v1700, 0
    %v2009 = vsel %vm1980, %v1701, 0
    %v2012 = vsel %vm1980, %v1702, 0
    %v2015 = vsel %vm1980, %v1703, 0
    %v2018 = vsel %vm1980, %v1704, 0
    %v2021 = vsel %vm1980, %v1705, 0
    %v2024 = vsel %vm1980, %v1706, 0
    %v2027 = vsel %vm1980, %v1707, 0
    %v2030 = vsel %vm1980, %v1708, 0
    %v2033 = vsel %vm1980, %v1709, 0
    %v2036 = vsel %vm1980, %v1710, 0
    %v2039 = vsel %vm1980, %v1711, 0
    %v2042 = vsel %vm1980, %v1712, 0
    %v2045 = vsel %vm1980, %v1713, 0
    %v2048 = vsel %vm1980, %v1714, 0
    %v2051 = vsel %vm1980, %v1715, 0
    %v2054 = vsel %vm1980, %v1716, 0
    %v2057 = vsel %vm1980, %v1717, 0
    %v2060 = vsel %vm1980, %v1718, 0
    %v2063 = vsel %vm1980, %v1719, 0
    %v2066 = vsel %vm1980, %v1720, 0
    %v2069 = vsel %vm1980, %v1721, 0
    %v2072 = vsel %vm1980, %v1722, 0
    %v2075 = vsel %vm1980, %v1723, 0
    %v2078 = vsel %vm1980, %v1724, 0
    %v2081 = vsel %vm1980, %v1725, 0
    %v2084 = vsel %vm1980, %v1726, 0
    %v2087 = vsel %vm1980, %v1727, 0
    %v2090 = vsel %vm1980, %v1728, 0
    %v2093 = vsel %vm1980, %v1729, 0
    %v2096 = vsel %vm1980, %v1730, 0
    %v2099 = vsel %vm1980, %v1731, 0
    %v2102 = vsel %vm1980, %v1732, 0
    %v2105 = vsel %vm1980, %v1733, 0
    %v2108 = vsel %vm1980, %v1734, 0
    %v2111 = vsel %vm1980, %v1735, 0
    %v2114 = vsel %vm1980, %v1736, 0
    %v2117 = vsel %vm1980, %v1737, 0
    %v2120 = vsel %vm1980, %v1738, 0
    %v2123 = vsel %vm1980, %v1739, 0
    %v2126 = vsel %vm1980, %v1740, 0
    %v2129 = vsel %vm1980, %v1741, 0
    %v2132 = vsel %vm1980, %v1742, 0
    %v2135 = vsel %vm1980, %v1743, 0
    %v2138 = vsel %vm1980, %v1744, 0
    %v2141 = vsel %vm1980, %v1745, 0
    %v2144 = vsel %vm1980, %v1746, 0
    %v2147 = vsel %vm1980, %v1747, 0
    %v2150 = vsel %vm1980, %v1748, 0
    %v2153 = vsel %vm1980, %v1749, 0
    %v2156 = vsel %vm1980, %v1750, 0
    %v2159 = vsel %vm1980, %v1751, 0
    %v2162 = vsel %vm1980, %v1752, 0
    %v2165 = vsel %vm1980, %v1753, 0
    %v2168 = vsel %vm1980, %v1754, 0
    %v2171 = vsel %vm1980, %v1755, 0
    %v2174 = vsel %vm1980, %v1756, 0
    %v2177 = vsel %vm1980, %v1757, 0
    %v2180 = vsel %vm1980, %v1758, 0
    %v2183 = vsel %vm1980, %v1759, 0
    %v2186 = vsel %vm1980, %v1760, 0
    %v2189 = vsel %vm1980, %v1761, 0
    %v2192 = vsel %vm1980, %v1762, 0
    %v2195 = vsel %vm1980, %v1763, 0
    %v2198 = vsel %vm1980, %v1764, 0
    %v2201 = vsel %vm1980, %v1765, 0
    %v2204 = vsel %vm1980, %v1766, 0
    %v2207 = vsel %vm1980, %v1767, 0
    %v2210 = vsel %vm1980, %v1768, 0
    %v2213 = vsel %vm1980, %v1769, 0
    %v2216 = vsel %vm1980, %v1770, 0
    %v2219 = vsel %vm1980, %v1771, 0
    %v2222 = vsel %vm1980, %v1772, 0
    %v2225 = vsel %vm1980, %v1773, 0
    %v2228 = vsel %vm1980, %v1774, 0
    %v2231 = vsel %vm1980, %v1775, 0
    %v2234 = vsel %vm1980, %v1776, 0
    %v2237 = vsel %vm1980, %v1777, 0
    %v2240 = vsel %vm1980, %v1778, 0
    %v2243 = vsel %vm1980, %v1779, 0
    %v2246 = vsel %vm1980, %v1780, 0
    %v2249 = vsel %vm1980, %v1781, 0
    %v2252 = vsel %vm1980, %v1782, 0
    %v2255 = vsel %vm1980, %v1783, 0
    %v2258 = vsel %vm1980, %v1784, 0
    %v2261 = vsel %vm1980, %v1785, 0
    %v2264 = vsel %vm1980, %v1786, 0
    %v2267 = vsel %vm1980, %v1787, 0
    %v2270 = vsel %vm1980, %v1788, 0
    %v2273 = vsel %vm1980, %v1789, 0
    %v2276 = vsel %vm1980, %v1790, 0
    %v2279 = vsel %vm1980, %v1791, 0
    %v2282 = vsel %vm1980, %v1792, 0
    %v2285 = vsel %vm1980, %v1793, 0
    %v2288 = vsel %vm1980, %v1794, 0
    %v2291 = vsel %vm1980, %v1795, 0
    %v2294 = vsel %vm1980, %v1796, 0
    %v2297 = vsel %vm1980, %v1797, 0
    %v2300 = vsel %vm1980, %v1798, 0
    %v2303 = vsel %vm1980, %v1799, 0
    %v2306 = vsel %vm1980, %v1800, 0
    %v2309 = vsel %vm1980, %v1801, 0
    %v2312 = vsel %vm1980, %v1802, 0
    %v2315 = vsel %vm1980, %v1803, 0
    %v2318 = vsel %vm1980, %v1804, 0
    %v2321 = vsel %vm1980, %v1805, 0
    %v2324 = vsel %vm1980, %v1806, 0
    %v2327 = vsel %vm1980, %v1807, 0
    %v2330 = vsel %vm1980, %v1808, 0
    %v2333 = vsel %vm1980, %v1809, 0
    %v2336 = vsel %vm1980, %v1810, 0
    %v2339 = vsel %vm1980, %v1811, 0
    %v2342 = vsel %vm1980, %v1812, 0
    %v2345 = vsel %vm1980, %v1813, 0
    %v2348 = vsel %vm1980, %v1814, 0
    %v2351 = vsel %vm1980, %v1815, 0
    %v2354 = vsel %vm1980, %v1816, 0
    %v2357 = vsel %vm1980, %v1817, 0
    %v2360 = vsel %vm1980, %v1818, 0
    %v2363 = vsel %vm1980, %v1819, 0
    %v2366 = vsel %vm1980, %v1820, 0
    %v2369 = vsel %vm1980, %v1821, 0
    %v2372 = vsel %vm1980, %v1822, 0
    %v2375 = vsel %vm1980, %v1823, 0
    %v2378 = vsel %vm1980, %v1824, 0
    %v2381 = vsel %vm1980, %v1825, 0
    %v2384 = vsel %vm1980, %v1826, 0
    %v2387 = vsel %vm1980, %v1827, 0
    %v2390 = vsel %vm1980, %v1828, 0
    %v2393 = vsel %vm1980, %v1829, 0
    %v2396 = vsel %vm1980, %v1830, 0
    %v2399 = vsel %vm1980, %v1831, 0
    %v2402 = vsel %vm1980, %v1832, 0
    %v2405 = vsel %vm1980, %v1833, 0
    %v2408 = vsel %vm1980, %v1834, 0
    %v2411 = vsel %vm1980, %v1835, 0
    %v2414 = vsel %vm1980, %v1836, 0
    %v2417 = vsel %vm1980, %v1837, 0
    %v2420 = vsel %vm1980, %v1838, 0
    %v2423 = vsel %vm1980, %v1839, 0
    %v2426 = vsel %vm1980, %v1840, 0
    %v2429 = vsel %vm1980, %v1841, 0
    %v2432 = vsel %vm1980, %v1842, 0
    %v2435 = vsel %vm1980, %v1843, 0
    %v2438 = vsel %vm1980, %v1844, 0
    %v2441 = vsel %vm1980, %v1845, 0
    %v2444 = vsel %vm1980, %v1846, 0
    %v2447 = vsel %vm1980, %v1847, 0
    %v2450 = vsel %vm1980, %v1848, 0
    %v2453 = vsel %vm1980, %v1849, 0
    %v2456 = vsel %vm1980, %v1850, 0
    %v2459 = vsel %vm1980, %v1851, 0
    %v2462 = vsel %vm1980, %v1852, 0
    %v2465 = vsel %vm1980, %v1853, 0
    %v2468 = vsel %vm1980, %v1854, 0
    %v2471 = vsel %vm1980, %v1855, 0
    %v2474 = vsel %vm1980, %v1856, 0
    %v2477 = vsel %vm1980, %v1857, 0
    %v2480 = vsel %vm1980, %v1858, 0
    %v2483 = vsel %vm1980, %v1859, 0
    %v2486 = vsel %vm1980, %v1860, 0
    %v2489 = vsel %vm1980, %v1861, 0
    %v2492 = vsel %vm1980, %v1862, 0
    %v2495 = vsel %vm1980, %v1863, 0
    %v2498 = vsel %vm1980, %v1864, 0
    %v2501 = vsel %vm1980, %v1865, 0
    %v2504 = vsel %vm1980, %v1866, 0
    %v2507 = vsel %vm1980, %v1867, 0
    %v2510 = vsel %vm1980, %v1868, 0
    %v2513 = vsel %vm1980, %v1869, 0
    %v2516 = vsel %vm1980, %v1870, 0
    %v2519 = vsel %vm1980, %v1871, 0
    %v2522 = vsel %vm1980, %v1872, 0
    %v2525 = vsel %vm1980, %v1873, 0
    %v2528 = vsel %vm1980, %v1874, 0
    %v2531 = vsel %vm1980, %v1875, 0
    %v2534 = vsel %vm1980, %v1876, 0
    %v2537 = vsel %vm1980, %v1877, 0
    %v2540 = vsel %vm1980, %v1878, 0
    %v2543 = vsel %vm1980, %v1879, 0
    %v2546 = vsel %vm1980, %v1880, 0
    %v2549 = vsel %vm1980, %v1881, 0
    %v2552 = vsel %vm1980, %v1882, 0
    %v2555 = vsel %vm1980, %v1883, 0
    %v2558 = vsel %vm1980, %v1884, 0
    %v2561 = vsel %vm1980, %v1885, 0
    %v2564 = vsel %vm1980, %v1886, 0
    %v2567 = vsel %vm1980, %v1887, 0
    %v2570 = vsel %vm1980, %v1888, 0
    %v2573 = vsel %vm1980, %v1889, 0
    %v2576 = vsel %vm1980, %v1890, 0
    %v2579 = vsel %vm1980, %v1891, 0
    %v2582 = vsel %vm1980, %v1892, 0
    %v2585 = vsel %vm1980, %v1893, 0
    %v2588 = vsel %vm1980, %v1894, 0
    %v2591 = vsel %vm1980, %v1895, 0
    %v2594 = vsel %vm1980, %v1896, 0
    %v2597 = vsel %vm1980, %v1897, 0
    %v2600 = vsel %vm1980, %v1898, 0
    %v2603 = vsel %vm1980, %v1899, 0
    %v2606 = vsel %vm1980, %v1900, 0
    %v2609 = vsel %vm1980, %v1901, 0
    %v2612 = vsel %vm1980, %v1902, 0
    %v2615 = vsel %vm1980, %v1903, 0
    %v2618 = vsel %vm1980, %v1904, 0
    %v2621 = vsel %vm1980, %v1905, 0
    %v2624 = vsel %vm1980, %v1906, 0
    %v2627 = vsel %vm1980, %v1907, 0
    %v2630 = vsel %vm1980, %v1908, 0
    %v2633 = vsel %vm1980, %v1909, 0
    %v2636 = vsel %vm1980, %v1910, 0
    %v2639 = vsel %vm1980, %v1911, 0
    %v2642 = vsel %vm1980, %v1912, 0
    %v2645 = vsel %vm1980, %v1913, 0
    %v2648 = vsel %vm1980, %v1914, 0
    %v2651 = vsel %vm1980, %v1915, 0
    %v2654 = vsel %vm1980, %v1916, 0
    %v2657 = vsel %vm1980, %v1917, 0
    %v2660 = vsel %vm1980, %v1918, 0
    %v2663 = vsel %vm1980, %v1919, 0
    %v2666 = vsel %vm1980, %v1920, 0
    %v2669 = vsel %vm1980, %v1921, 0
    %v2672 = vsel %vm1980, %v1922, 0
    %v2675 = vsel %vm1980, %v1923, 0
    %v2678 = vsel %vm1980, %v1924, 0
    %v2681 = vsel %vm1980, %v1925, 0
    %v2684 = vsel %vm1980, %v1926, 0
    %v2687 = vsel %vm1980, %v1927, 0
    %v2690 = vsel %vm1980, %v1928, 0
    %v2693 = vsel %vm1980, %v1929, 0
    %v2696 = vsel %vm1980, %v1930, 0
    %v2699 = vsel %vm1980, %v1931, 0
    %v2702 = vsel %vm1980, %v1932, 0
    %v2705 = vsel %vm1980, %v1933, 0
    %v2708 = vsel %vm1980, %v1934, 0
    %v2711 = vsel %vm1980, %v1935, 0
    %v2714 = vsel %vm1980, %v1936, 0
    %v2717 = vsel %vm1980, %v1937, 0
    %v2720 = vsel %vm1980, %v1938, 0
    %v2723 = vsel %vm1980, %v1939, 0
    %v2726 = vsel %vm1980, %v1940, 0
    %v2729 = vsel %vm1980, %v1941, 0
    %v2732 = vsel %vm1980, %v1942, 0
    %v2735 = vsel %vm1980, %v1943, 0
    %v2738 = vsel %vm1980, %v1944, 0
    %v2741 = vsel %vm1980, %v1945, 0
    %v2744 = vsel %vm1980, %v1946, 0
    %v2747 = vsel %vm1980, %v1947, 0
    %v2750 = vsel %vm1980, %v1948, 0
    %v2753 = vsel %vm1980, %v1949, 0
    %v2756 = vsel %vm1980, %v1950, 0
    %v2759 = vsel %vm1980, %v1951, 0
    %v2762 = vsel %vm1980, %v1952, 0
    %v2765 = vsel %vm1980, %v1953, 0
    %v2768 = vsel %vm1980, %v1954, 0
    %v2771 = vsel %vm1980, %v1955, 0
    %v2774 = vsel %vm1980, %v1956, 0
    %v2777 = vsel %vm1980, %v1957, 0
    %v2780 = vsel %vm1980, %v1958, 0
    %v2783 = vsel %vm1980, %v1959, 0
    %v2786 = vsel %vm1980, %v1960, 0
    %v2789 = vsel %vm1980, %v1961, 0
    %v2792 = vsel %vm1980, %v1962, 0
    %v2795 = vsel %vm1980, %v1963, 0
    %v2798 = vsel %vm1980, %v1964, 0
    %v2801 = vsel %vm1980, %v1965, 0
    %v2804 = vsel %vm1980, %v1966, 0
    %v2807 = vsel %vm1980, %v1967, 0
    %v2810 = vsel %vm1980, %v1968, 0
    %vm2812 = vcmask 1044480
    %vm2813 = vcmask 1045504
    %v2814 = vsel %vm2812, 4294967295, 65535
    %v2815 = vsel %vm2813, %v2814, 0
    %v2817 = vand.u32 %v1978, %v2815
    %2819 = vmatprep.subr.bf16.mxu0 0
    %2820 = vmatpush1.bf16.msra.mxu0 %v1977
    %2821 = vmatprep.subr.bf16.mxu0 0
    %2822 = vmatpush1.bf16.msra.mxu0 %v2817
    %2823 = vmatprep.subr.bf16.mxu0 0
    %2824 = vmatpush1.bf16.msra.mxu0 0
    %2825 = vmatprep.subr.bf16.mxu0 0
    %2826 = vmatpush1.bf16.msra.mxu0 0
    %2827 = vmatprep.subr.bf16.mxu0 0
    %2828 = vmatpush1.bf16.msra.mxu0 0
    %2829 = vmatprep.subr.bf16.mxu0 0
    %2830 = vmatpush1.bf16.msra.mxu0 0
    %2831 = vmatprep.subr.bf16.mxu0 0
    %2832 = vmatpush1.bf16.msra.mxu0 0
    %2833 = vmatprep.subr.bf16.mxu0 0
    %2834 = vmatpush1.bf16.msra.mxu0 0
    %2835 = vmatprep.subr.bf16.mxu0 0
    %2836 = vmatpush1.bf16.msra.mxu0 0
    %2837 = vmatprep.subr.bf16.mxu0 0
    %2838 = vmatpush1.bf16.msra.mxu0 0
    %2839 = vmatprep.subr.bf16.mxu0 0
    %2840 = vmatpush1.bf16.msra.mxu0 0
    %2841 = vmatprep.subr.bf16.mxu0 0
    %2842 = vmatpush1.bf16.msra.mxu0 0
    %2843 = vmatprep.subr.bf16.mxu0 0
    %2844 = vmatpush1.bf16.msra.mxu0 0
    %2845 = vmatprep.subr.bf16.mxu0 0
    %2846 = vmatpush1.bf16.msra.mxu0 0
    %2847 = vmatprep.subr.bf16.mxu0 0
    %2848 = vmatpush1.bf16.msra.mxu0 0
    %2849 = vmatprep.subr.bf16.mxu0 0
    %2850 = vmatpush1.bf16.msra.mxu0 0
    %2851 = vmatprep.mubr.bf16.mxu0 0
    %2852 = vmatmul.mubr.bf16.gmra.mrb[0].mxu0 %v1982
    %v2853 = vpop.f32.mrb[0].mxu0
    %v2854 = vadd.f32 %v584, %v2853
    %v2855 = vpop.f32.mrb[0].mxu0
    %v2856 = vpop.f32.mrb[0].mxu0
    %v2857 = vadd.f32 %v584, %v2856
    %v2858 = vpop.f32.mrb[0].mxu0
    %2859 = vmatprep.mubr.bf16.mxu0 0
    %2860 = vmatmul.mubr.bf16.gmra.mrb[0].mxu0 %v1985
    %v2861 = vpop.f32.mrb[0].mxu0
    %v2862 = vadd.f32 %v584, %v2861
    %v2863 = vpop.f32.mrb[0].mxu0
    %v2864 = vpop.f32.mrb[0].mxu0
    %v2865 = vadd.f32 %v584, %v2864
    %v2866 = vpop.f32.mrb[0].mxu0
    %2867 = vmatprep.mubr.bf16.mxu0 0
    %2868 = vmatmul.mubr.bf16.gmra.mrb[0].mxu0 %v1988
    %v2869 = vpop.f32.mrb[0].mxu0
    %v2870 = vadd.f32 %v584, %v2869
    %v2871 = vpop.f32.mrb[0].mxu0
    %v2872 = vpop.f32.mrb[0].mxu0
    %v2873 = vadd.f32 %v584, %v2872
    %v2874 = vpop.f32.mrb[0].mxu0
    %2875 = vmatprep.mubr.bf16.mxu0 0
    %2876 = vmatmul.mubr.bf16.gmra.mrb[0].mxu0 %v1991
    %v2877 = vpop.f32.mrb[0].mxu0
    %v2878 = vadd.f32 %v584, %v2877
    %v2879 = vpop.f32.mrb[0].mxu0
    %v2880 = vpop.f32.mrb[0].mxu0
    %v2881 = vadd.f32 %v584, %v2880
    %v2882 = vpop.f32.mrb[0].mxu0
    %2883 = vmatprep.mubr.bf16.mxu0 0
    %2884 = vmatmul.mubr.bf16.gmra.mrb[0].mxu0 %v1994
    %v2885 = vpop.f32.mrb[0].mxu0
    %v2886 = vadd.f32 %v584, %v2885
    %v2887 = vpop.f32.mrb[0].mxu0
    %v2888 = vpop.f32.mrb[0].mxu0
    %v2889 = vadd.f32 %v584, %v2888
    %v2890 = vpop.f32.mrb[0].mxu0
    %2891 = vmatprep.mubr.bf16.mxu0 0
    %2892 = vmatmul.mubr.bf16.gmra.mrb[0].mxu0 %v1997
    %v2893 = vpop.f32.mrb[0].mxu0
    %v2894 = vadd.f32 %v584, %v2893
    %v2895 = vpop.f32.mrb[0].mxu0
    %v2896 = vpop.f32.mrb[0].mxu0
    %v2897 = vadd.f32 %v584, %v2896
    %v2898 = vpop.f32.mrb[0].mxu0
    %2899 = vmatprep.mubr.bf16.mxu0 0
    %2900 = vmatmul.mubr.bf16.gmra.mrb[0].mxu0 %v2000
    %v2901 = vpop.f32.mrb[0].mxu0
    %v2902 = vadd.f32 %v584, %v2901
    %v2903 = vpop.f32.mrb[0].mxu0
    %v2904 = vpop.f32.mrb[0].mxu0
    %v2905 = vadd.f32 %v584, %v2904
    %v2906 = vpop.f32.mrb[0].mxu0
    %2907 = vmatprep.mubr.bf16.mxu0 0
    %2908 = vmatmul.mubr.bf16.gmra.mrb[0].mxu0 %v2003
    %v2909 = vpop.f32.mrb[0].mxu0
    %v2910 = vadd.f32 %v584, %v2909
    %v2911 = vpop.f32.mrb[0].mxu0
    %v2912 = vpop.f32.mrb[0].mxu0
    %v2913 = vadd.f32 %v584, %v2912
    %v2914 = vpop.f32.mrb[0].mxu0
    %2915 = vmatprep.mubr.bf16.mxu0 0
    %2916 = vmatmul.mubr.bf16.gmra.mrb[0].mxu0 %v2006
    %v2917 = vpop.f32.mrb[0].mxu0
    %v2918 = vadd.f32 %v584, %v2917
    %v2919 = vpop.f32.mrb[0].mxu0
    %v2920 = vpop.f32.mrb[0].mxu0
    %v2921 = vadd.f32 %v584, %v2920
    %v2922 = vpop.f32.mrb[0].mxu0
    %2923 = vmatprep.mubr.bf16.mxu0 0
    %2924 = vmatmul.mubr.bf16.gmra.mrb[0].mxu0 %v2009
    %v2925 = vpop.f32.mrb[0].mxu0
    %v2926 = vadd.f32 %v584, %v2925
    %v2927 = vpop.f32.mrb[0].mxu0
    %v2928 = vpop.f32.mrb[0].mxu0
    %v2929 = vadd.f32 %v584, %v2928
    %v2930 = vpop.f32.mrb[0].mxu0
    %2931 = vmatprep.mubr.bf16.mxu0 0
    %2932 = vmatmul.mubr.bf16.gmra.mrb[0].mxu0 %v2012
    %v2933 = vpop.f32.mrb[0].mxu0
    %v2934 = vadd.f32 %v584, %v2933
    %v2935 = vpop.f32.mrb[0].mxu0
    %v2936 = vpop.f32.mrb[0].mxu0
    %v2937 = vadd.f32 %v584, %v2936
    %v2938 = vpop.f32.mrb[0].mxu0
    %2939 = vmatprep.mubr.bf16.mxu0 0
    %2940 = vmatmul.mubr.bf16.gmra.mrb[0].mxu0 %v2015
    %v2941 = vpop.f32.mrb[0].mxu0
    %v2942 = vadd.f32 %v584, %v2941
    %v2943 = vpop.f32.mrb[0].mxu0
    %v2944 = vpop.f32.mrb[0].mxu0
    %v2945 = vadd.f32 %v584, %v2944
    %v2946 = vpop.f32.mrb[0].mxu0
    %2947 = vmatprep.mubr.bf16.mxu0 0
    %2948 = vmatmul.mubr.bf16.gmra.mrb[0].mxu0 %v2018
    %v2949 = vpop.f32.mrb[0].mxu0
    %v2950 = vadd.f32 %v584, %v2949
    %v2951 = vpop.f32.mrb[0].mxu0
    %v2952 = vpop.f32.mrb[0].mxu0
    %v2953 = vadd.f32 %v584, %v2952
    %v2954 = vpop.f32.mrb[0].mxu0
    %2955 = vmatprep.mubr.bf16.mxu0 0
    %2956 = vmatmul.mubr.bf16.gmra.mrb[0].mxu0 %v2021
    %v2957 = vpop.f32.mrb[0].mxu0
    %v2958 = vadd.f32 %v584, %v2957
    %v2959 = vpop.f32.mrb[0].mxu0
    %v2960 = vpop.f32.mrb[0].mxu0
    %v2961 = vadd.f32 %v584, %v2960
    %v2962 = vpop.f32.mrb[0].mxu0
    %2963 = vmatprep.mubr.bf16.mxu0 0
    %2964 = vmatmul.mubr.bf16.gmra.mrb[0].mxu0 %v2024
    %v2965 = vpop.f32.mrb[0].mxu0
    %v2966 = vadd.f32 %v584, %v2965
    %v2967 = vpop.f32.mrb[0].mxu0
    %v2968 = vpop.f32.mrb[0].mxu0
    %v2969 = vadd.f32 %v584, %v2968
    %v2970 = vpop.f32.mrb[0].mxu0
    %2971 = vmatprep.mubr.bf16.mxu0 0
    %2972 = vmatmul.mubr.bf16.gmra.mrb[0].mxu0 %v2027
    %v2973 = vpop.f32.mrb[0].mxu0
    %v2974 = vadd.f32 %v584, %v2973
    %v2975 = vpop.f32.mrb[0].mxu0
    %v2976 = vpop.f32.mrb[0].mxu0
    %v2977 = vadd.f32 %v584, %v2976
    %v2978 = vpop.f32.mrb[0].mxu0
    %2979 = vmatprep.mubr.bf16.mxu0 0
    %2980 = vmatmul.mubr.bf16.gmra.mrb[0].mxu0 %v2030
    %v2981 = vpop.f32.mrb[0].mxu0
    %v2982 = vadd.f32 %v584, %v2981
    %v2983 = vpop.f32.mrb[0].mxu0
    %v2984 = vpop.f32.mrb[0].mxu0
    %v2985 = vadd.f32 %v584, %v2984
    %v2986 = vpop.f32.mrb[0].mxu0
    %2987 = vmatprep.mubr.bf16.mxu0 0
    %2988 = vmatmul.mubr.bf16.gmra.mrb[0].mxu0 %v2033
    %v2989 = vpop.f32.mrb[0].mxu0
    %v2990 = vadd.f32 %v584, %v2989
    %v2991 = vpop.f32.mrb[0].mxu0
    %v2992 = vpop.f32.mrb[0].mxu0
    %v2993 = vadd.f32 %v584, %v2992
    %v2994 = vpop.f32.mrb[0].mxu0
    %2995 = vmatprep.mubr.bf16.mxu0 0
    %2996 = vmatmul.mubr.bf16.gmra.mrb[0].mxu0 %v2036
    %v2997 = vpop.f32.mrb[0].mxu0
    %v2998 = vadd.f32 %v584, %v2997
    %v2999 = vpop.f32.mrb[0].mxu0
    %v3000 = vpop.f32.mrb[0].mxu0
    %v3001 = vadd.f32 %v584, %v3000
    %v3002 = vpop.f32.mrb[0].mxu0
    %3003 = vmatprep.mubr.bf16.mxu0 0
    %3004 = vmatmul.mubr.bf16.gmra.mrb[0].mxu0 %v2039
    %v3005 = vpop.f32.mrb[0].mxu0
    %v3006 = vadd.f32 %v584, %v3005
    %v3007 = vpop.f32.mrb[0].mxu0
    %v3008 = vpop.f32.mrb[0].mxu0
    %v3009 = vadd.f32 %v584, %v3008
    %v3010 = vpop.f32.mrb[0].mxu0
    %3011 = vmatprep.mubr.bf16.mxu0 0
    %3012 = vmatmul.mubr.bf16.gmra.mrb[0].mxu0 %v2042
    %v3013 = vpop.f32.mrb[0].mxu0
    %v3014 = vadd.f32 %v584, %v3013
    %v3015 = vpop.f32.mrb[0].mxu0
    %v3016 = vpop.f32.mrb[0].mxu0
    %v3017 = vadd.f32 %v584, %v3016
    %v3018 = vpop.f32.mrb[0].mxu0
    %3019 = vmatprep.mubr.bf16.mxu0 0
    %3020 = vmatmul.mubr.bf16.gmra.mrb[0].mxu0 %v2045
    %v3021 = vpop.f32.mrb[0].mxu0
    %v3022 = vadd.f32 %v584, %v3021
    %v3023 = vpop.f32.mrb[0].mxu0
    %v3024 = vpop.f32.mrb[0].mxu0
    %v3025 = vadd.f32 %v584, %v3024
    %v3026 = vpop.f32.mrb[0].mxu0
    %3027 = vmatprep.mubr.bf16.mxu0 0
    %3028 = vmatmul.mubr.bf16.gmra.mrb[0].mxu0 %v2048
    %v3029 = vpop.f32.mrb[0].mxu0
    %v3030 = vadd.f32 %v584, %v3029
    %v3031 = vpop.f32.mrb[0].mxu0
    %v3032 = vpop.f32.mrb[0].mxu0
    %v3033 = vadd.f32 %v584, %v3032
    %v3034 = vpop.f32.mrb[0].mxu0
    %3035 = vmatprep.mubr.bf16.mxu0 0
    %3036 = vmatmul.mubr.bf16.gmra.mrb[0].mxu0 %v2051
    %v3037 = vpop.f32.mrb[0].mxu0
    %v3038 = vadd.f32 %v584, %v3037
    %v3039 = vpop.f32.mrb[0].mxu0
    %v3040 = vpop.f32.mrb[0].mxu0
    %v3041 = vadd.f32 %v584, %v3040
    %v3042 = vpop.f32.mrb[0].mxu0
    %3043 = vmatprep.mubr.bf16.mxu0 0
    %3044 = vmatmul.mubr.bf16.gmra.mrb[0].mxu0 %v2054
    %v3045 = vpop.f32.mrb[0].mxu0
    %v3046 = vadd.f32 %v584, %v3045
    %v3047 = vpop.f32.mrb[0].mxu0
    %v3048 = vpop.f32.mrb[0].mxu0
    %v3049 = vadd.f32 %v584, %v3048
    %v3050 = vpop.f32.mrb[0].mxu0
    %3051 = vmatprep.mubr.bf16.mxu0 0
    %3052 = vmatmul.mubr.bf16.gmra.mrb[0].mxu0 %v2057
    %v3053 = vpop.f32.mrb[0].mxu0
    %v3054 = vadd.f32 %v584, %v3053
    %v3055 = vpop.f32.mrb[0].mxu0
    %v3056 = vpop.f32.mrb[0].mxu0
    %v3057 = vadd.f32 %v584, %v3056
    %v3058 = vpop.f32.mrb[0].mxu0
    %3059 = vmatprep.mubr.bf16.mxu0 0
    %3060 = vmatmul.mubr.bf16.gmra.mrb[0].mxu0 %v2060
    %v3061 = vpop.f32.mrb[0].mxu0
    %v3062 = vadd.f32 %v584, %v3061
    %v3063 = vpop.f32.mrb[0].mxu0
    %v3064 = vpop.f32.mrb[0].mxu0
    %v3065 = vadd.f32 %v584, %v3064
    %v3066 = vpop.f32.mrb[0].mxu0
    %3067 = vmatprep.mubr.bf16.mxu0 0
    %3068 = vmatmul.mubr.bf16.gmra.mrb[0].mxu0 %v2063
    %v3069 = vpop.f32.mrb[0].mxu0
    %v3070 = vadd.f32 %v584, %v3069
    %v3071 = vpop.f32.mrb[0].mxu0
    %v3072 = vpop.f32.mrb[0].mxu0
    %v3073 = vadd.f32 %v584, %v3072
    %v3074 = vpop.f32.mrb[0].mxu0
    %3075 = vmatprep.mubr.bf16.mxu0 0
    %3076 = vmatmul.mubr.bf16.gmra.mrb[0].mxu0 %v2066
    %v3077 = vpop.f32.mrb[0].mxu0
    %v3078 = vadd.f32 %v584, %v3077
    %v3079 = vpop.f32.mrb[0].mxu0
    %v3080 = vpop.f32.mrb[0].mxu0
    %v3081 = vadd.f32 %v584, %v3080
    %v3082 = vpop.f32.mrb[0].mxu0
    %3083 = vmatprep.mubr.bf16.mxu0 0
    %3084 = vmatmul.mubr.bf16.gmra.mrb[0].mxu0 %v2069
    %v3085 = vpop.f32.mrb[0].mxu0
    %v3086 = vadd.f32 %v584, %v3085
    %v3087 = vpop.f32.mrb[0].mxu0
    %v3088 = vpop.f32.mrb[0].mxu0
    %v3089 = vadd.f32 %v584, %v3088
    %v3090 = vpop.f32.mrb[0].mxu0
    %3091 = vmatprep.mubr.bf16.mxu0 0
    %3092 = vmatmul.mubr.bf16.gmra.mrb[0].mxu0 %v2072
    %v3093 = vpop.f32.mrb[0].mxu0
    %v3094 = vadd.f32 %v584, %v3093
    %v3095 = vpop.f32.mrb[0].mxu0
    %v3096 = vpop.f32.mrb[0].mxu0
    %v3097 = vadd.f32 %v584, %v3096
    %v3098 = vpop.f32.mrb[0].mxu0
    %3099 = vmatprep.mubr.bf16.mxu0 0
    %3100 = vmatmul.mubr.bf16.gmra.mrb[0].mxu0 %v2075
    %v3101 = vpop.f32.mrb[0].mxu0
    %v3102 = vadd.f32 %v584, %v3101
    %v3103 = vpop.f32.mrb[0].mxu0
    %v3104 = vpop.f32.mrb[0].mxu0
    %v3105 = vadd.f32 %v584, %v3104
    %v3106 = vpop.f32.mrb[0].mxu0
    %3107 = vmatprep.mubr.bf16.mxu0 0
    %3108 = vmatmul.mubr.bf16.gmra.mrb[0].mxu0 %v2078
    %v3109 = vpop.f32.mrb[0].mxu0
    %v3110 = vadd.f32 %v584, %v3109
    %v3111 = vpop.f32.mrb[0].mxu0
    %v3112 = vpop.f32.mrb[0].mxu0
    %v3113 = vadd.f32 %v584, %v3112
    %v3114 = vpop.f32.mrb[0].mxu0
    %3115 = vmatprep.mubr.bf16.mxu0 0
    %3116 = vmatmul.mubr.bf16.gmra.mrb[0].mxu0 %v2081
    %v3117 = vpop.f32.mrb[0].mxu0
    %v3118 = vadd.f32 %v584, %v3117
    %v3119 = vpop.f32.mrb[0].mxu0
    %v3120 = vpop.f32.mrb[0].mxu0
    %v3121 = vadd.f32 %v584, %v3120
    %v3122 = vpop.f32.mrb[0].mxu0
    %3123 = vmatprep.mubr.bf16.mxu0 0
    %3124 = vmatmul.mubr.bf16.gmra.mrb[0].mxu0 %v2084
    %v3125 = vpop.f32.mrb[0].mxu0
    %v3126 = vadd.f32 %v584, %v3125
    %v3127 = vpop.f32.mrb[0].mxu0
    %v3128 = vpop.f32.mrb[0].mxu0
    %v3129 = vadd.f32 %v584, %v3128
    %v3130 = vpop.f32.mrb[0].mxu0
    %3131 = vmatprep.mubr.bf16.mxu0 0
    %3132 = vmatmul.mubr.bf16.gmra.mrb[0].mxu0 %v2087
    %v3133 = vpop.f32.mrb[0].mxu0
    %v3134 = vadd.f32 %v584, %v3133
    %v3135 = vpop.f32.mrb[0].mxu0
    %v3136 = vpop.f32.mrb[0].mxu0
    %v3137 = vadd.f32 %v584, %v3136
    %v3138 = vpop.f32.mrb[0].mxu0
    %3139 = vmatprep.mubr.bf16.mxu0 0
    %3140 = vmatmul.mubr.bf16.gmra.mrb[0].mxu0 %v2090
    %v3141 = vpop.f32.mrb[0].mxu0
    %v3142 = vadd.f32 %v584, %v3141
    %v3143 = vpop.f32.mrb[0].mxu0
    %v3144 = vpop.f32.mrb[0].mxu0
    %v3145 = vadd.f32 %v584, %v3144
    %v3146 = vpop.f32.mrb[0].mxu0
    %3147 = vmatprep.mubr.bf16.mxu0 0
    %3148 = vmatmul.mubr.bf16.gmra.mrb[0].mxu0 %v2093
    %v3149 = vpop.f32.mrb[0].mxu0
    %v3150 = vadd.f32 %v584, %v3149
    %v3151 = vpop.f32.mrb[0].mxu0
    %v3152 = vpop.f32.mrb[0].mxu0
    %v3153 = vadd.f32 %v584, %v3152
    %v3154 = vpop.f32.mrb[0].mxu0
    %3155 = vmatprep.mubr.bf16.mxu0 0
    %3156 = vmatmul.mubr.bf16.gmra.mrb[0].mxu0 %v2096
    %v3157 = vpop.f32.mrb[0].mxu0
    %v3158 = vadd.f32 %v584, %v3157
    %v3159 = vpop.f32.mrb[0].mxu0
    %v3160 = vpop.f32.mrb[0].mxu0
    %v3161 = vadd.f32 %v584, %v3160
    %v3162 = vpop.f32.mrb[0].mxu0
    %3163 = vmatprep.mubr.bf16.mxu0 0
    %3164 = vmatmul.mubr.bf16.gmra.mrb[0].mxu0 %v2099
    %v3165 = vpop.f32.mrb[0].mxu0
    %v3166 = vadd.f32 %v584, %v3165
    %v3167 = vpop.f32.mrb[0].mxu0
    %v3168 = vpop.f32.mrb[0].mxu0
    %v3169 = vadd.f32 %v584, %v3168
    %v3170 = vpop.f32.mrb[0].mxu0
    %3171 = vmatprep.mubr.bf16.mxu0 0
    %3172 = vmatmul.mubr.bf16.gmra.mrb[0].mxu0 %v2102
    %v3173 = vpop.f32.mrb[0].mxu0
    %v3174 = vadd.f32 %v584, %v3173
    %v3175 = vpop.f32.mrb[0].mxu0
    %v3176 = vpop.f32.mrb[0].mxu0
    %v3177 = vadd.f32 %v584, %v3176
    %v3178 = vpop.f32.mrb[0].mxu0
    %3179 = vmatprep.mubr.bf16.mxu0 0
    %3180 = vmatmul.mubr.bf16.gmra.mrb[0].mxu0 %v2105
    %v3181 = vpop.f32.mrb[0].mxu0
    %v3182 = vadd.f32 %v584, %v3181
    %v3183 = vpop.f32.mrb[0].mxu0
    %v3184 = vpop.f32.mrb[0].mxu0
    %v3185 = vadd.f32 %v584, %v3184
    %v3186 = vpop.f32.mrb[0].mxu0
    %3187 = vmatprep.mubr.bf16.mxu0 0
    %3188 = vmatmul.mubr.bf16.gmra.mrb[0].mxu0 %v2108
    %v3189 = vpop.f32.mrb[0].mxu0
    %v3190 = vadd.f32 %v584, %v3189
    %v3191 = vpop.f32.mrb[0].mxu0
    %v3192 = vpop.f32.mrb[0].mxu0
    %v3193 = vadd.f32 %v584, %v3192
    %v3194 = vpop.f32.mrb[0].mxu0
    %3195 = vmatprep.mubr.bf16.mxu0 0
    %3196 = vmatmul.mubr.bf16.gmra.mrb[0].mxu0 %v2111
    %v3197 = vpop.f32.mrb[0].mxu0
    %v3198 = vadd.f32 %v584, %v3197
    %v3199 = vpop.f32.mrb[0].mxu0
    %v3200 = vpop.f32.mrb[0].mxu0
    %v3201 = vadd.f32 %v584, %v3200
    %v3202 = vpop.f32.mrb[0].mxu0
    %3203 = vmatprep.mubr.bf16.mxu0 0
    %3204 = vmatmul.mubr.bf16.gmra.mrb[0].mxu0 %v2114
    %v3205 = vpop.f32.mrb[0].mxu0
    %v3206 = vadd.f32 %v584, %v3205
    %v3207 = vpop.f32.mrb[0].mxu0
    %v3208 = vpop.f32.mrb[0].mxu0
    %v3209 = vadd.f32 %v584, %v3208
    %v3210 = vpop.f32.mrb[0].mxu0
    %3211 = vmatprep.mubr.bf16.mxu0 0
    %3212 = vmatmul.mubr.bf16.gmra.mrb[0].mxu0 %v2117
    %v3213 = vpop.f32.mrb[0].mxu0
    %v3214 = vadd.f32 %v584, %v3213
    %v3215 = vpop.f32.mrb[0].mxu0
    %v3216 = vpop.f32.mrb[0].mxu0
    %v3217 = vadd.f32 %v584, %v3216
    %v3218 = vpop.f32.mrb[0].mxu0
    %3219 = vmatprep.mubr.bf16.mxu0 0
    %3220 = vmatmul.mubr.bf16.gmra.mrb[0].mxu0 %v2120
    %v3221 = vpop.f32.mrb[0].mxu0
    %v3222 = vadd.f32 %v584, %v3221
    %v3223 = vpop.f32.mrb[0].mxu0
    %v3224 = vpop.f32.mrb[0].mxu0
    %v3225 = vadd.f32 %v584, %v3224
    %v3226 = vpop.f32.mrb[0].mxu0
    %3227 = vmatprep.mubr.bf16.mxu0 0
    %3228 = vmatmul.mubr.bf16.gmra.mrb[0].mxu0 %v2123
    %v3229 = vpop.f32.mrb[0].mxu0
    %v3230 = vadd.f32 %v584, %v3229
    %v3231 = vpop.f32.mrb[0].mxu0
    %v3232 = vpop.f32.mrb[0].mxu0
    %v3233 = vadd.f32 %v584, %v3232
    %v3234 = vpop.f32.mrb[0].mxu0
    %3235 = vmatprep.mubr.bf16.mxu0 0
    %3236 = vmatmul.mubr.bf16.gmra.mrb[0].mxu0 %v2126
    %v3237 = vpop.f32.mrb[0].mxu0
    %v3238 = vadd.f32 %v584, %v3237
    %v3239 = vpop.f32.mrb[0].mxu0
    %v3240 = vpop.f32.mrb[0].mxu0
    %v3241 = vadd.f32 %v584, %v3240
    %v3242 = vpop.f32.mrb[0].mxu0
    %3243 = vmatprep.mubr.bf16.mxu0 0
    %3244 = vmatmul.mubr.bf16.gmra.mrb[0].mxu0 %v2129
    %v3245 = vpop.f32.mrb[0].mxu0
    %v3246 = vadd.f32 %v584, %v3245
    %v3247 = vpop.f32.mrb[0].mxu0
    %v3248 = vpop.f32.mrb[0].mxu0
    %v3249 = vadd.f32 %v584, %v3248
    %v3250 = vpop.f32.mrb[0].mxu0
    %3251 = vmatprep.mubr.bf16.mxu0 0
    %3252 = vmatmul.mubr.bf16.gmra.mrb[0].mxu0 %v2132
    %v3253 = vpop.f32.mrb[0].mxu0
    %v3254 = vadd.f32 %v584, %v3253
    %v3255 = vpop.f32.mrb[0].mxu0
    %v3256 = vpop.f32.mrb[0].mxu0
    %v3257 = vadd.f32 %v584, %v3256
    %v3258 = vpop.f32.mrb[0].mxu0
    %3259 = vmatprep.mubr.bf16.mxu0 0
    %3260 = vmatmul.mubr.bf16.gmra.mrb[0].mxu0 %v2135
    %v3261 = vpop.f32.mrb[0].mxu0
    %v3262 = vadd.f32 %v584, %v3261
    %v3263 = vpop.f32.mrb[0].mxu0
    %v3264 = vpop.f32.mrb[0].mxu0
    %v3265 = vadd.f32 %v584, %v3264
    %v3266 = vpop.f32.mrb[0].mxu0
    %3267 = vmatprep.mubr.bf16.mxu0 0
    %3268 = vmatmul.mubr.bf16.gmra.mrb[0].mxu0 %v2138
    %v3269 = vpop.f32.mrb[0].mxu0
    %v3270 = vadd.f32 %v584, %v3269
    %v3271 = vpop.f32.mrb[0].mxu0
    %v3272 = vpop.f32.mrb[0].mxu0
    %v3273 = vadd.f32 %v584, %v3272
    %v3274 = vpop.f32.mrb[0].mxu0
    %3275 = vmatprep.mubr.bf16.mxu0 0
    %3276 = vmatmul.mubr.bf16.gmra.mrb[0].mxu0 %v2141
    %v3277 = vpop.f32.mrb[0].mxu0
    %v3278 = vadd.f32 %v584, %v3277
    %v3279 = vpop.f32.mrb[0].mxu0
    %v3280 = vpop.f32.mrb[0].mxu0
    %v3281 = vadd.f32 %v584, %v3280
    %v3282 = vpop.f32.mrb[0].mxu0
    %3283 = vmatprep.mubr.bf16.mxu0 0
    %3284 = vmatmul.mubr.bf16.gmra.mrb[0].mxu0 %v2144
    %v3285 = vpop.f32.mrb[0].mxu0
    %v3286 = vadd.f32 %v584, %v3285
    %v3287 = vpop.f32.mrb[0].mxu0
    %v3288 = vpop.f32.mrb[0].mxu0
    %v3289 = vadd.f32 %v584, %v3288
    %v3290 = vpop.f32.mrb[0].mxu0
    %3291 = vmatprep.mubr.bf16.mxu0 0
    %3292 = vmatmul.mubr.bf16.gmra.mrb[0].mxu0 %v2147
    %v3293 = vpop.f32.mrb[0].mxu0
    %v3294 = vadd.f32 %v584, %v3293
    %v3295 = vpop.f32.mrb[0].mxu0
    %v3296 = vpop.f32.mrb[0].mxu0
    %v3297 = vadd.f32 %v584, %v3296
    %v3298 = vpop.f32.mrb[0].mxu0
    %3299 = vmatprep.mubr.bf16.mxu0 0
    %3300 = vmatmul.mubr.bf16.gmra.mrb[0].mxu0 %v2150
    %v3301 = vpop.f32.mrb[0].mxu0
    %v3302 = vadd.f32 %v584, %v3301
    %v3303 = vpop.f32.mrb[0].mxu0
    %v3304 = vpop.f32.mrb[0].mxu0
    %v3305 = vadd.f32 %v584, %v3304
    %v3306 = vpop.f32.mrb[0].mxu0
    %3307 = vmatprep.mubr.bf16.mxu0 0
    %3308 = vmatmul.mubr.bf16.gmra.mrb[0].mxu0 %v2153
    %v3309 = vpop.f32.mrb[0].mxu0
    %v3310 = vadd.f32 %v584, %v3309
    %v3311 = vpop.f32.mrb[0].mxu0
    %v3312 = vpop.f32.mrb[0].mxu0
    %v3313 = vadd.f32 %v584, %v3312
    %v3314 = vpop.f32.mrb[0].mxu0
    %3315 = vmatprep.mubr.bf16.mxu0 0
    %3316 = vmatmul.mubr.bf16.gmra.mrb[0].mxu0 %v2156
    %v3317 = vpop.f32.mrb[0].mxu0
    %v3318 = vadd.f32 %v584, %v3317
    %v3319 = vpop.f32.mrb[0].mxu0
    %v3320 = vpop.f32.mrb[0].mxu0
    %v3321 = vadd.f32 %v584, %v3320
    %v3322 = vpop.f32.mrb[0].mxu0
    %3323 = vmatprep.mubr.bf16.mxu0 0
    %3324 = vmatmul.mubr.bf16.gmra.mrb[0].mxu0 %v2159
    %v3325 = vpop.f32.mrb[0].mxu0
    %v3326 = vadd.f32 %v584, %v3325
    %v3327 = vpop.f32.mrb[0].mxu0
    %v3328 = vpop.f32.mrb[0].mxu0
    %v3329 = vadd.f32 %v584, %v3328
    %v3330 = vpop.f32.mrb[0].mxu0
    %3331 = vmatprep.mubr.bf16.mxu0 0
    %3332 = vmatmul.mubr.bf16.gmra.mrb[0].mxu0 %v2162
    %v3333 = vpop.f32.mrb[0].mxu0
    %v3334 = vadd.f32 %v584, %v3333
    %v3335 = vpop.f32.mrb[0].mxu0
    %v3336 = vpop.f32.mrb[0].mxu0
    %v3337 = vadd.f32 %v584, %v3336
    %v3338 = vpop.f32.mrb[0].mxu0
    %3339 = vmatprep.mubr.bf16.mxu0 0
    %3340 = vmatmul.mubr.bf16.gmra.mrb[0].mxu0 %v2165
    %v3341 = vpop.f32.mrb[0].mxu0
    %v3342 = vadd.f32 %v584, %v3341
    %v3343 = vpop.f32.mrb[0].mxu0
    %v3344 = vpop.f32.mrb[0].mxu0
    %v3345 = vadd.f32 %v584, %v3344
    %v3346 = vpop.f32.mrb[0].mxu0
    %3347 = vmatprep.mubr.bf16.mxu0 0
    %3348 = vmatmul.mubr.bf16.gmra.mrb[0].mxu0 %v2168
    %v3349 = vpop.f32.mrb[0].mxu0
    %v3350 = vadd.f32 %v584, %v3349
    %v3351 = vpop.f32.mrb[0].mxu0
    %v3352 = vpop.f32.mrb[0].mxu0
    %v3353 = vadd.f32 %v584, %v3352
    %v3354 = vpop.f32.mrb[0].mxu0
    %3355 = vmatprep.mubr.bf16.mxu0 0
    %3356 = vmatmul.mubr.bf16.gmra.mrb[0].mxu0 %v2171
    %v3357 = vpop.f32.mrb[0].mxu0
    %v3358 = vadd.f32 %v584, %v3357
    %v3359 = vpop.f32.mrb[0].mxu0
    %v3360 = vpop.f32.mrb[0].mxu0
    %v3361 = vadd.f32 %v584, %v3360
    %v3362 = vpop.f32.mrb[0].mxu0
    %3363 = vmatprep.mubr.bf16.mxu0 0
    %3364 = vmatmul.mubr.bf16.gmra.mrb[0].mxu0 %v2174
    %v3365 = vpop.f32.mrb[0].mxu0
    %v3366 = vadd.f32 %v584, %v3365
    %v3367 = vpop.f32.mrb[0].mxu0
    %v3368 = vpop.f32.mrb[0].mxu0
    %v3369 = vadd.f32 %v584, %v3368
    %v3370 = vpop.f32.mrb[0].mxu0
    %3371 = vmatprep.mubr.bf16.mxu0 0
    %3372 = vmatmul.mubr.bf16.gmra.mrb[0].mxu0 %v2177
    %v3373 = vpop.f32.mrb[0].mxu0
    %v3374 = vadd.f32 %v584, %v3373
    %v3375 = vpop.f32.mrb[0].mxu0
    %v3376 = vpop.f32.mrb[0].mxu0
    %v3377 = vadd.f32 %v584, %v3376
    %v3378 = vpop.f32.mrb[0].mxu0
    %3379 = vmatprep.mubr.bf16.mxu0 0
    %3380 = vmatmul.mubr.bf16.gmra.mrb[0].mxu0 %v2180
    %v3381 = vpop.f32.mrb[0].mxu0
    %v3382 = vadd.f32 %v584, %v3381
    %v3383 = vpop.f32.mrb[0].mxu0
    %v3384 = vpop.f32.mrb[0].mxu0
    %v3385 = vadd.f32 %v584, %v3384
    %v3386 = vpop.f32.mrb[0].mxu0
    %3387 = vmatprep.mubr.bf16.mxu0 0
    %3388 = vmatmul.mubr.bf16.gmra.mrb[0].mxu0 %v2183
    %v3389 = vpop.f32.mrb[0].mxu0
    %v3390 = vadd.f32 %v584, %v3389
    %v3391 = vpop.f32.mrb[0].mxu0
    %v3392 = vpop.f32.mrb[0].mxu0
    %v3393 = vadd.f32 %v584, %v3392
    %v3394 = vpop.f32.mrb[0].mxu0
    %3395 = vmatprep.mubr.bf16.mxu0 0
    %3396 = vmatmul.mubr.bf16.gmra.mrb[0].mxu0 %v2186
    %v3397 = vpop.f32.mrb[0].mxu0
    %v3398 = vadd.f32 %v584, %v3397
    %v3399 = vpop.f32.mrb[0].mxu0
    %v3400 = vpop.f32.mrb[0].mxu0
    %v3401 = vadd.f32 %v584, %v3400
    %v3402 = vpop.f32.mrb[0].mxu0
    %3403 = vmatprep.mubr.bf16.mxu0 0
    %3404 = vmatmul.mubr.bf16.gmra.mrb[0].mxu0 %v2189
    %v3405 = vpop.f32.mrb[0].mxu0
    %v3406 = vadd.f32 %v584, %v3405
    %v3407 = vpop.f32.mrb[0].mxu0
    %v3408 = vpop.f32.mrb[0].mxu0
    %v3409 = vadd.f32 %v584, %v3408
    %v3410 = vpop.f32.mrb[0].mxu0
    %3411 = vmatprep.mubr.bf16.mxu0 0
    %3412 = vmatmul.mubr.bf16.gmra.mrb[0].mxu0 %v2192
    %v3413 = vpop.f32.mrb[0].mxu0
    %v3414 = vadd.f32 %v584, %v3413
    %v3415 = vpop.f32.mrb[0].mxu0
    %v3416 = vpop.f32.mrb[0].mxu0
    %v3417 = vadd.f32 %v584, %v3416
    %v3418 = vpop.f32.mrb[0].mxu0
    %3419 = vmatprep.mubr.bf16.mxu0 0
    %3420 = vmatmul.mubr.bf16.gmra.mrb[0].mxu0 %v2195
    %v3421 = vpop.f32.mrb[0].mxu0
    %v3422 = vadd.f32 %v584, %v3421
    %v3423 = vpop.f32.mrb[0].mxu0
    %v3424 = vpop.f32.mrb[0].mxu0
    %v3425 = vadd.f32 %v584, %v3424
    %v3426 = vpop.f32.mrb[0].mxu0
    %3427 = vmatprep.mubr.bf16.mxu0 0
    %3428 = vmatmul.mubr.bf16.gmra.mrb[0].mxu0 %v2198
    %v3429 = vpop.f32.mrb[0].mxu0
    %v3430 = vadd.f32 %v584, %v3429
    %v3431 = vpop.f32.mrb[0].mxu0
    %v3432 = vpop.f32.mrb[0].mxu0
    %v3433 = vadd.f32 %v584, %v3432
    %v3434 = vpop.f32.mrb[0].mxu0
    %3435 = vmatprep.mubr.bf16.mxu0 0
    %3436 = vmatmul.mubr.bf16.gmra.mrb[0].mxu0 %v2201
    %v3437 = vpop.f32.mrb[0].mxu0
    %v3438 = vadd.f32 %v584, %v3437
    %v3439 = vpop.f32.mrb[0].mxu0
    %v3440 = vpop.f32.mrb[0].mxu0
    %v3441 = vadd.f32 %v584, %v3440
    %v3442 = vpop.f32.mrb[0].mxu0
    %3443 = vmatprep.mubr.bf16.mxu0 0
    %3444 = vmatmul.mubr.bf16.gmra.mrb[0].mxu0 %v2204
    %v3445 = vpop.f32.mrb[0].mxu0
    %v3446 = vadd.f32 %v584, %v3445
    %v3447 = vpop.f32.mrb[0].mxu0
    %v3448 = vpop.f32.mrb[0].mxu0
    %v3449 = vadd.f32 %v584, %v3448
    %v3450 = vpop.f32.mrb[0].mxu0
    %3451 = vmatprep.mubr.bf16.mxu0 0
    %3452 = vmatmul.mubr.bf16.gmra.mrb[0].mxu0 %v2207
    %v3453 = vpop.f32.mrb[0].mxu0
    %v3454 = vadd.f32 %v584, %v3453
    %v3455 = vpop.f32.mrb[0].mxu0
    %v3456 = vpop.f32.mrb[0].mxu0
    %v3457 = vadd.f32 %v584, %v3456
    %v3458 = vpop.f32.mrb[0].mxu0
    %3459 = vmatprep.mubr.bf16.mxu0 0
    %3460 = vmatmul.mubr.bf16.gmra.mrb[0].mxu0 %v2210
    %v3461 = vpop.f32.mrb[0].mxu0
    %v3462 = vadd.f32 %v584, %v3461
    %v3463 = vpop.f32.mrb[0].mxu0
    %v3464 = vpop.f32.mrb[0].mxu0
    %v3465 = vadd.f32 %v584, %v3464
    %v3466 = vpop.f32.mrb[0].mxu0
    %3467 = vmatprep.mubr.bf16.mxu0 0
    %3468 = vmatmul.mubr.bf16.gmra.mrb[0].mxu0 %v2213
    %v3469 = vpop.f32.mrb[0].mxu0
    %v3470 = vadd.f32 %v584, %v3469
    %v3471 = vpop.f32.mrb[0].mxu0
    %v3472 = vpop.f32.mrb[0].mxu0
    %v3473 = vadd.f32 %v584, %v3472
    %v3474 = vpop.f32.mrb[0].mxu0
    %3475 = vmatprep.mubr.bf16.mxu0 0
    %3476 = vmatmul.mubr.bf16.gmra.mrb[0].mxu0 %v2216
    %v3477 = vpop.f32.mrb[0].mxu0
    %v3478 = vadd.f32 %v584, %v3477
    %v3479 = vpop.f32.mrb[0].mxu0
    %v3480 = vpop.f32.mrb[0].mxu0
    %v3481 = vadd.f32 %v584, %v3480
    %v3482 = vpop.f32.mrb[0].mxu0
    %3483 = vmatprep.mubr.bf16.mxu0 0
    %3484 = vmatmul.mubr.bf16.gmra.mrb[0].mxu0 %v2219
    %v3485 = vpop.f32.mrb[0].mxu0
    %v3486 = vadd.f32 %v584, %v3485
    %v3487 = vpop.f32.mrb[0].mxu0
    %v3488 = vpop.f32.mrb[0].mxu0
    %v3489 = vadd.f32 %v584, %v3488
    %v3490 = vpop.f32.mrb[0].mxu0
    %3491 = vmatprep.mubr.bf16.mxu0 0
    %3492 = vmatmul.mubr.bf16.gmra.mrb[0].mxu0 %v2222
    %v3493 = vpop.f32.mrb[0].mxu0
    %v3494 = vadd.f32 %v584, %v3493
    %v3495 = vpop.f32.mrb[0].mxu0
    %v3496 = vpop.f32.mrb[0].mxu0
    %v3497 = vadd.f32 %v584, %v3496
    %v3498 = vpop.f32.mrb[0].mxu0
    %3499 = vmatprep.mubr.bf16.mxu0 0
    %3500 = vmatmul.mubr.bf16.gmra.mrb[0].mxu0 %v2225
    %v3501 = vpop.f32.mrb[0].mxu0
    %v3502 = vadd.f32 %v584, %v3501
    %v3503 = vpop.f32.mrb[0].mxu0
    %v3504 = vpop.f32.mrb[0].mxu0
    %v3505 = vadd.f32 %v584, %v3504
    %v3506 = vpop.f32.mrb[0].mxu0
    %3507 = vmatprep.mubr.bf16.mxu0 0
    %3508 = vmatmul.mubr.bf16.gmra.mrb[0].mxu0 %v2228
    %v3509 = vpop.f32.mrb[0].mxu0
    %v3510 = vadd.f32 %v584, %v3509
    %v3511 = vpop.f32.mrb[0].mxu0
    %v3512 = vpop.f32.mrb[0].mxu0
    %v3513 = vadd.f32 %v584, %v3512
    %v3514 = vpop.f32.mrb[0].mxu0
    %3515 = vmatprep.mubr.bf16.mxu0 0
    %3516 = vmatmul.mubr.bf16.gmra.mrb[0].mxu0 %v2231
    %v3517 = vpop.f32.mrb[0].mxu0
    %v3518 = vadd.f32 %v584, %v3517
    %v3519 = vpop.f32.mrb[0].mxu0
    %v3520 = vpop.f32.mrb[0].mxu0
    %v3521 = vadd.f32 %v584, %v3520
    %v3522 = vpop.f32.mrb[0].mxu0
    %3523 = vmatprep.mubr.bf16.mxu0 0
    %3524 = vmatmul.mubr.bf16.gmra.mrb[0].mxu0 %v2234
    %v3525 = vpop.f32.mrb[0].mxu0
    %v3526 = vadd.f32 %v584, %v3525
    %v3527 = vpop.f32.mrb[0].mxu0
    %v3528 = vpop.f32.mrb[0].mxu0
    %v3529 = vadd.f32 %v584, %v3528
    %v3530 = vpop.f32.mrb[0].mxu0
    %3531 = vmatprep.mubr.bf16.mxu0 0
    %3532 = vmatmul.mubr.bf16.gmra.mrb[0].mxu0 %v2237
    %v3533 = vpop.f32.mrb[0].mxu0
    %v3534 = vadd.f32 %v584, %v3533
    %v3535 = vpop.f32.mrb[0].mxu0
    %v3536 = vpop.f32.mrb[0].mxu0
    %v3537 = vadd.f32 %v584, %v3536
    %v3538 = vpop.f32.mrb[0].mxu0
    %3539 = vmatprep.mubr.bf16.mxu0 0
    %3540 = vmatmul.mubr.bf16.gmra.mrb[0].mxu0 %v2240
    %v3541 = vpop.f32.mrb[0].mxu0
    %v3542 = vadd.f32 %v584, %v3541
    %v3543 = vpop.f32.mrb[0].mxu0
    %v3544 = vpop.f32.mrb[0].mxu0
    %v3545 = vadd.f32 %v584, %v3544
    %v3546 = vpop.f32.mrb[0].mxu0
    %3547 = vmatprep.mubr.bf16.mxu0 0
    %3548 = vmatmul.mubr.bf16.gmra.mrb[0].mxu0 %v2243
    %v3549 = vpop.f32.mrb[0].mxu0
    %v3550 = vadd.f32 %v584, %v3549
    %v3551 = vpop.f32.mrb[0].mxu0
    %v3552 = vpop.f32.mrb[0].mxu0
    %v3553 = vadd.f32 %v584, %v3552
    %v3554 = vpop.f32.mrb[0].mxu0
    %3555 = vmatprep.mubr.bf16.mxu0 0
    %3556 = vmatmul.mubr.bf16.gmra.mrb[0].mxu0 %v2246
    %v3557 = vpop.f32.mrb[0].mxu0
    %v3558 = vadd.f32 %v584, %v3557
    %v3559 = vpop.f32.mrb[0].mxu0
    %v3560 = vpop.f32.mrb[0].mxu0
    %v3561 = vadd.f32 %v584, %v3560
    %v3562 = vpop.f32.mrb[0].mxu0
    %3563 = vmatprep.mubr.bf16.mxu0 0
    %3564 = vmatmul.mubr.bf16.gmra.mrb[0].mxu0 %v2249
    %v3565 = vpop.f32.mrb[0].mxu0
    %v3566 = vadd.f32 %v584, %v3565
    %v3567 = vpop.f32.mrb[0].mxu0
    %v3568 = vpop.f32.mrb[0].mxu0
    %v3569 = vadd.f32 %v584, %v3568
    %v3570 = vpop.f32.mrb[0].mxu0
    %3571 = vmatprep.mubr.bf16.mxu0 0
    %3572 = vmatmul.mubr.bf16.gmra.mrb[0].mxu0 %v2252
    %v3573 = vpop.f32.mrb[0].mxu0
    %v3574 = vadd.f32 %v584, %v3573
    %v3575 = vpop.f32.mrb[0].mxu0
    %v3576 = vpop.f32.mrb[0].mxu0
    %v3577 = vadd.f32 %v584, %v3576
    %v3578 = vpop.f32.mrb[0].mxu0
    %3579 = vmatprep.mubr.bf16.mxu0 0
    %3580 = vmatmul.mubr.bf16.gmra.mrb[0].mxu0 %v2255
    %v3581 = vpop.f32.mrb[0].mxu0
    %v3582 = vadd.f32 %v584, %v3581
    %v3583 = vpop.f32.mrb[0].mxu0
    %v3584 = vpop.f32.mrb[0].mxu0
    %v3585 = vadd.f32 %v584, %v3584
    %v3586 = vpop.f32.mrb[0].mxu0
    %3587 = vmatprep.mubr.bf16.mxu0 0
    %3588 = vmatmul.mubr.bf16.gmra.mrb[0].mxu0 %v2258
    %v3589 = vpop.f32.mrb[0].mxu0
    %v3590 = vadd.f32 %v584, %v3589
    %v3591 = vpop.f32.mrb[0].mxu0
    %v3592 = vpop.f32.mrb[0].mxu0
    %v3593 = vadd.f32 %v584, %v3592
    %v3594 = vpop.f32.mrb[0].mxu0
    %3595 = vmatprep.mubr.bf16.mxu0 0
    %3596 = vmatmul.mubr.bf16.gmra.mrb[0].mxu0 %v2261
    %v3597 = vpop.f32.mrb[0].mxu0
    %v3598 = vadd.f32 %v584, %v3597
    %v3599 = vpop.f32.mrb[0].mxu0
    %v3600 = vpop.f32.mrb[0].mxu0
    %v3601 = vadd.f32 %v584, %v3600
    %v3602 = vpop.f32.mrb[0].mxu0
    %3603 = vmatprep.mubr.bf16.mxu0 0
    %3604 = vmatmul.mubr.bf16.gmra.mrb[0].mxu0 %v2264
    %v3605 = vpop.f32.mrb[0].mxu0
    %v3606 = vadd.f32 %v584, %v3605
    %v3607 = vpop.f32.mrb[0].mxu0
    %v3608 = vpop.f32.mrb[0].mxu0
    %v3609 = vadd.f32 %v584, %v3608
    %v3610 = vpop.f32.mrb[0].mxu0
    %3611 = vmatprep.mubr.bf16.mxu0 0
    %3612 = vmatmul.mubr.bf16.gmra.mrb[0].mxu0 %v2267
    %v3613 = vpop.f32.mrb[0].mxu0
    %v3614 = vadd.f32 %v584, %v3613
    %v3615 = vpop.f32.mrb[0].mxu0
    %v3616 = vpop.f32.mrb[0].mxu0
    %v3617 = vadd.f32 %v584, %v3616
    %v3618 = vpop.f32.mrb[0].mxu0
    %3619 = vmatprep.mubr.bf16.mxu0 0
    %3620 = vmatmul.mubr.bf16.gmra.mrb[0].mxu0 %v2270
    %v3621 = vpop.f32.mrb[0].mxu0
    %v3622 = vadd.f32 %v584, %v3621
    %v3623 = vpop.f32.mrb[0].mxu0
    %v3624 = vpop.f32.mrb[0].mxu0
    %v3625 = vadd.f32 %v584, %v3624
    %v3626 = vpop.f32.mrb[0].mxu0
    %3627 = vmatprep.mubr.bf16.mxu0 0
    %3628 = vmatmul.mubr.bf16.gmra.mrb[0].mxu0 %v2273
    %v3629 = vpop.f32.mrb[0].mxu0
    %v3630 = vadd.f32 %v584, %v3629
    %v3631 = vpop.f32.mrb[0].mxu0
    %v3632 = vpop.f32.mrb[0].mxu0
    %v3633 = vadd.f32 %v584, %v3632
    %v3634 = vpop.f32.mrb[0].mxu0
    %3635 = vmatprep.mubr.bf16.mxu0 0
    %3636 = vmatmul.mubr.bf16.gmra.mrb[0].mxu0 %v2276
    %v3637 = vpop.f32.mrb[0].mxu0
    %v3638 = vadd.f32 %v584, %v3637
    %v3639 = vpop.f32.mrb[0].mxu0
    %v3640 = vpop.f32.mrb[0].mxu0
    %v3641 = vadd.f32 %v584, %v3640
    %v3642 = vpop.f32.mrb[0].mxu0
    %3643 = vmatprep.mubr.bf16.mxu0 0
    %3644 = vmatmul.mubr.bf16.gmra.mrb[0].mxu0 %v2279
    %v3645 = vpop.f32.mrb[0].mxu0
    %v3646 = vadd.f32 %v584, %v3645
    %v3647 = vpop.f32.mrb[0].mxu0
    %v3648 = vpop.f32.mrb[0].mxu0
    %v3649 = vadd.f32 %v584, %v3648
    %v3650 = vpop.f32.mrb[0].mxu0
    %3651 = vmatprep.mubr.bf16.mxu0 0
    %3652 = vmatmul.mubr.bf16.gmra.mrb[0].mxu0 %v2282
    %v3653 = vpop.f32.mrb[0].mxu0
    %v3654 = vadd.f32 %v584, %v3653
    %v3655 = vpop.f32.mrb[0].mxu0
    %v3656 = vpop.f32.mrb[0].mxu0
    %v3657 = vadd.f32 %v584, %v3656
    %v3658 = vpop.f32.mrb[0].mxu0
    %3659 = vmatprep.mubr.bf16.mxu0 0
    %3660 = vmatmul.mubr.bf16.gmra.mrb[0].mxu0 %v2285
    %v3661 = vpop.f32.mrb[0].mxu0
    %v3662 = vadd.f32 %v584, %v3661
    %v3663 = vpop.f32.mrb[0].mxu0
    %v3664 = vpop.f32.mrb[0].mxu0
    %v3665 = vadd.f32 %v584, %v3664
    %v3666 = vpop.f32.mrb[0].mxu0
    %3667 = vmatprep.mubr.bf16.mxu0 0
    %3668 = vmatmul.mubr.bf16.gmra.mrb[0].mxu0 %v2288
    %v3669 = vpop.f32.mrb[0].mxu0
    %v3670 = vadd.f32 %v584, %v3669
    %v3671 = vpop.f32.mrb[0].mxu0
    %v3672 = vpop.f32.mrb[0].mxu0
    %v3673 = vadd.f32 %v584, %v3672
    %v3674 = vpop.f32.mrb[0].mxu0
    %3675 = vmatprep.mubr.bf16.mxu0 0
    %3676 = vmatmul.mubr.bf16.gmra.mrb[0].mxu0 %v2291
    %v3677 = vpop.f32.mrb[0].mxu0
    %v3678 = vadd.f32 %v584, %v3677
    %v3679 = vpop.f32.mrb[0].mxu0
    %v3680 = vpop.f32.mrb[0].mxu0
    %v3681 = vadd.f32 %v584, %v3680
    %v3682 = vpop.f32.mrb[0].mxu0
    %3683 = vmatprep.mubr.bf16.mxu0 0
    %3684 = vmatmul.mubr.bf16.gmra.mrb[0].mxu0 %v2294
    %v3685 = vpop.f32.mrb[0].mxu0
    %v3686 = vadd.f32 %v584, %v3685
    %v3687 = vpop.f32.mrb[0].mxu0
    %v3688 = vpop.f32.mrb[0].mxu0
    %v3689 = vadd.f32 %v584, %v3688
    %v3690 = vpop.f32.mrb[0].mxu0
    %3691 = vmatprep.mubr.bf16.mxu0 0
    %3692 = vmatmul.mubr.bf16.gmra.mrb[0].mxu0 %v2297
    %v3693 = vpop.f32.mrb[0].mxu0
    %v3694 = vadd.f32 %v584, %v3693
    %v3695 = vpop.f32.mrb[0].mxu0
    %v3696 = vpop.f32.mrb[0].mxu0
    %v3697 = vadd.f32 %v584, %v3696
    %v3698 = vpop.f32.mrb[0].mxu0
    %3699 = vmatprep.mubr.bf16.mxu0 0
    %3700 = vmatmul.mubr.bf16.gmra.mrb[0].mxu0 %v2300
    %v3701 = vpop.f32.mrb[0].mxu0
    %v3702 = vadd.f32 %v584, %v3701
    %v3703 = vpop.f32.mrb[0].mxu0
    %v3704 = vpop.f32.mrb[0].mxu0
    %v3705 = vadd.f32 %v584, %v3704
    %v3706 = vpop.f32.mrb[0].mxu0
    %3707 = vmatprep.mubr.bf16.mxu0 0
    %3708 = vmatmul.mubr.bf16.gmra.mrb[0].mxu0 %v2303
    %v3709 = vpop.f32.mrb[0].mxu0
    %v3710 = vadd.f32 %v584, %v3709
    %v3711 = vpop.f32.mrb[0].mxu0
    %v3712 = vpop.f32.mrb[0].mxu0
    %v3713 = vadd.f32 %v584, %v3712
    %v3714 = vpop.f32.mrb[0].mxu0
    %3715 = vmatprep.mubr.bf16.mxu0 0
    %3716 = vmatmul.mubr.bf16.gmra.mrb[0].mxu0 %v2306
    %v3717 = vpop.f32.mrb[0].mxu0
    %v3718 = vadd.f32 %v584, %v3717
    %v3719 = vpop.f32.mrb[0].mxu0
    %v3720 = vpop.f32.mrb[0].mxu0
    %v3721 = vadd.f32 %v584, %v3720
    %v3722 = vpop.f32.mrb[0].mxu0
    %3723 = vmatprep.mubr.bf16.mxu0 0
    %3724 = vmatmul.mubr.bf16.gmra.mrb[0].mxu0 %v2309
    %v3725 = vpop.f32.mrb[0].mxu0
    %v3726 = vadd.f32 %v584, %v3725
    %v3727 = vpop.f32.mrb[0].mxu0
    %v3728 = vpop.f32.mrb[0].mxu0
    %v3729 = vadd.f32 %v584, %v3728
    %v3730 = vpop.f32.mrb[0].mxu0
    %3731 = vmatprep.mubr.bf16.mxu0 0
    %3732 = vmatmul.mubr.bf16.gmra.mrb[0].mxu0 %v2312
    %v3733 = vpop.f32.mrb[0].mxu0
    %v3734 = vadd.f32 %v584, %v3733
    %v3735 = vpop.f32.mrb[0].mxu0
    %v3736 = vpop.f32.mrb[0].mxu0
    %v3737 = vadd.f32 %v584, %v3736
    %v3738 = vpop.f32.mrb[0].mxu0
    %3739 = vmatprep.mubr.bf16.mxu0 0
    %3740 = vmatmul.mubr.bf16.gmra.mrb[0].mxu0 %v2315
    %v3741 = vpop.f32.mrb[0].mxu0
    %v3742 = vadd.f32 %v584, %v3741
    %v3743 = vpop.f32.mrb[0].mxu0
    %v3744 = vpop.f32.mrb[0].mxu0
    %v3745 = vadd.f32 %v584, %v3744
    %v3746 = vpop.f32.mrb[0].mxu0
    %3747 = vmatprep.mubr.bf16.mxu0 0
    %3748 = vmatmul.mubr.bf16.gmra.mrb[0].mxu0 %v2318
    %v3749 = vpop.f32.mrb[0].mxu0
    %v3750 = vadd.f32 %v584, %v3749
    %v3751 = vpop.f32.mrb[0].mxu0
    %v3752 = vpop.f32.mrb[0].mxu0
    %v3753 = vadd.f32 %v584, %v3752
    %v3754 = vpop.f32.mrb[0].mxu0
    %3755 = vmatprep.mubr.bf16.mxu0 0
    %3756 = vmatmul.mubr.bf16.gmra.mrb[0].mxu0 %v2321
    %v3757 = vpop.f32.mrb[0].mxu0
    %v3758 = vadd.f32 %v584, %v3757
    %v3759 = vpop.f32.mrb[0].mxu0
    %v3760 = vpop.f32.mrb[0].mxu0
    %v3761 = vadd.f32 %v584, %v3760
    %v3762 = vpop.f32.mrb[0].mxu0
    %3763 = vmatprep.mubr.bf16.mxu0 0
    %3764 = vmatmul.mubr.bf16.gmra.mrb[0].mxu0 %v2324
    %v3765 = vpop.f32.mrb[0].mxu0
    %v3766 = vadd.f32 %v584, %v3765
    %v3767 = vpop.f32.mrb[0].mxu0
    %v3768 = vpop.f32.mrb[0].mxu0
    %v3769 = vadd.f32 %v584, %v3768
    %v3770 = vpop.f32.mrb[0].mxu0
    %3771 = vmatprep.mubr.bf16.mxu0 0
    %3772 = vmatmul.mubr.bf16.gmra.mrb[0].mxu0 %v2327
    %v3773 = vpop.f32.mrb[0].mxu0
    %v3774 = vadd.f32 %v584, %v3773
    %v3775 = vpop.f32.mrb[0].mxu0
    %v3776 = vpop.f32.mrb[0].mxu0
    %v3777 = vadd.f32 %v584, %v3776
    %v3778 = vpop.f32.mrb[0].mxu0
    %3779 = vmatprep.mubr.bf16.mxu0 0
    %3780 = vmatmul.mubr.bf16.gmra.mrb[0].mxu0 %v2330
    %v3781 = vpop.f32.mrb[0].mxu0
    %v3782 = vadd.f32 %v584, %v3781
    %v3783 = vpop.f32.mrb[0].mxu0
    %v3784 = vpop.f32.mrb[0].mxu0
    %v3785 = vadd.f32 %v584, %v3784
    %v3786 = vpop.f32.mrb[0].mxu0
    %3787 = vmatprep.mubr.bf16.mxu0 0
    %3788 = vmatmul.mubr.bf16.gmra.mrb[0].mxu0 %v2333
    %v3789 = vpop.f32.mrb[0].mxu0
    %v3790 = vadd.f32 %v584, %v3789
    %v3791 = vpop.f32.mrb[0].mxu0
    %v3792 = vpop.f32.mrb[0].mxu0
    %v3793 = vadd.f32 %v584, %v3792
    %v3794 = vpop.f32.mrb[0].mxu0
    %3795 = vmatprep.mubr.bf16.mxu0 0
    %3796 = vmatmul.mubr.bf16.gmra.mrb[0].mxu0 %v2336
    %v3797 = vpop.f32.mrb[0].mxu0
    %v3798 = vadd.f32 %v584, %v3797
    %v3799 = vpop.f32.mrb[0].mxu0
    %v3800 = vpop.f32.mrb[0].mxu0
    %v3801 = vadd.f32 %v584, %v3800
    %v3802 = vpop.f32.mrb[0].mxu0
    %3803 = vmatprep.mubr.bf16.mxu0 0
    %3804 = vmatmul.mubr.bf16.gmra.mrb[0].mxu0 %v2339
    %v3805 = vpop.f32.mrb[0].mxu0
    %v3806 = vadd.f32 %v584, %v3805
    %v3807 = vpop.f32.mrb[0].mxu0
    %v3808 = vpop.f32.mrb[0].mxu0
    %v3809 = vadd.f32 %v584, %v3808
    %v3810 = vpop.f32.mrb[0].mxu0
    %3811 = vmatprep.mubr.bf16.mxu0 0
    %3812 = vmatmul.mubr.bf16.gmra.mrb[0].mxu0 %v2342
    %v3813 = vpop.f32.mrb[0].mxu0
    %v3814 = vadd.f32 %v584, %v3813
    %v3815 = vpop.f32.mrb[0].mxu0
    %v3816 = vpop.f32.mrb[0].mxu0
    %v3817 = vadd.f32 %v584, %v3816
    %v3818 = vpop.f32.mrb[0].mxu0
    %3819 = vmatprep.mubr.bf16.mxu0 0
    %3820 = vmatmul.mubr.bf16.gmra.mrb[0].mxu0 %v2345
    %v3821 = vpop.f32.mrb[0].mxu0
    %v3822 = vadd.f32 %v584, %v3821
    %v3823 = vpop.f32.mrb[0].mxu0
    %v3824 = vpop.f32.mrb[0].mxu0
    %v3825 = vadd.f32 %v584, %v3824
    %v3826 = vpop.f32.mrb[0].mxu0
    %3827 = vmatprep.mubr.bf16.mxu0 0
    %3828 = vmatmul.mubr.bf16.gmra.mrb[0].mxu0 %v2348
    %v3829 = vpop.f32.mrb[0].mxu0
    %v3830 = vadd.f32 %v584, %v3829
    %v3831 = vpop.f32.mrb[0].mxu0
    %v3832 = vpop.f32.mrb[0].mxu0
    %v3833 = vadd.f32 %v584, %v3832
    %v3834 = vpop.f32.mrb[0].mxu0
    %3835 = vmatprep.mubr.bf16.mxu0 0
    %3836 = vmatmul.mubr.bf16.gmra.mrb[0].mxu0 %v2351
    %v3837 = vpop.f32.mrb[0].mxu0
    %v3838 = vadd.f32 %v584, %v3837
    %v3839 = vpop.f32.mrb[0].mxu0
    %v3840 = vpop.f32.mrb[0].mxu0
    %v3841 = vadd.f32 %v584, %v3840
    %v3842 = vpop.f32.mrb[0].mxu0
    %3843 = vmatprep.mubr.bf16.mxu0 0
    %3844 = vmatmul.mubr.bf16.gmra.mrb[0].mxu0 %v2354
    %v3845 = vpop.f32.mrb[0].mxu0
    %v3846 = vadd.f32 %v584, %v3845
    %v3847 = vpop.f32.mrb[0].mxu0
    %v3848 = vpop.f32.mrb[0].mxu0
    %v3849 = vadd.f32 %v584, %v3848
    %v3850 = vpop.f32.mrb[0].mxu0
    %3851 = vmatprep.mubr.bf16.mxu0 0
    %3852 = vmatmul.mubr.bf16.gmra.mrb[0].mxu0 %v2357
    %v3853 = vpop.f32.mrb[0].mxu0
    %v3854 = vadd.f32 %v584, %v3853
    %v3855 = vpop.f32.mrb[0].mxu0
    %v3856 = vpop.f32.mrb[0].mxu0
    %v3857 = vadd.f32 %v584, %v3856
    %v3858 = vpop.f32.mrb[0].mxu0
    %3859 = vmatprep.mubr.bf16.mxu0 0
    %3860 = vmatmul.mubr.bf16.gmra.mrb[0].mxu0 %v2360
    %v3861 = vpop.f32.mrb[0].mxu0
    %v3862 = vadd.f32 %v584, %v3861
    %v3863 = vpop.f32.mrb[0].mxu0
    %v3864 = vpop.f32.mrb[0].mxu0
    %v3865 = vadd.f32 %v584, %v3864
    %v3866 = vpop.f32.mrb[0].mxu0
    %3867 = vmatprep.mubr.bf16.mxu0 0
    %3868 = vmatmul.mubr.bf16.gmra.mrb[0].mxu0 %v2363
    %v3869 = vpop.f32.mrb[0].mxu0
    %v3870 = vadd.f32 %v584, %v3869
    %v3871 = vpop.f32.mrb[0].mxu0
    %v3872 = vpop.f32.mrb[0].mxu0
    %v3873 = vadd.f32 %v584, %v3872
    %v3874 = vpop.f32.mrb[0].mxu0
    %3875 = vmatprep.mubr.bf16.mxu0 0
    %3876 = vmatmul.mubr.bf16.gmra.mrb[0].mxu0 %v2366
    %v3877 = vpop.f32.mrb[0].mxu0
    %v3878 = vadd.f32 %v584, %v3877
    %v3879 = vpop.f32.mrb[0].mxu0
    %v3880 = vpop.f32.mrb[0].mxu0
    %v3881 = vadd.f32 %v584, %v3880
    %v3882 = vpop.f32.mrb[0].mxu0
    %3883 = vmatprep.mubr.bf16.mxu0 0
    %3884 = vmatmul.mubr.bf16.gmra.mrb[0].mxu0 %v2369
    %v3885 = vpop.f32.mrb[0].mxu0
    %v3886 = vadd.f32 %v584, %v3885
    %v3887 = vpop.f32.mrb[0].mxu0
    %v3888 = vpop.f32.mrb[0].mxu0
    %v3889 = vadd.f32 %v584, %v3888
    %v3890 = vpop.f32.mrb[0].mxu0
    %3891 = vmatprep.mubr.bf16.mxu0 0
    %3892 = vmatmul.mubr.bf16.gmra.mrb[0].mxu0 %v2372
    %v3893 = vpop.f32.mrb[0].mxu0
    %v3894 = vadd.f32 %v584, %v3893
    %v3895 = vpop.f32.mrb[0].mxu0
    %v3896 = vpop.f32.mrb[0].mxu0
    %v3897 = vadd.f32 %v584, %v3896
    %v3898 = vpop.f32.mrb[0].mxu0
    %3899 = vmatprep.mubr.bf16.mxu0 0
    %3900 = vmatmul.mubr.bf16.gmra.mrb[0].mxu0 %v2375
    %v3901 = vpop.f32.mrb[0].mxu0
    %v3902 = vadd.f32 %v584, %v3901
    %v3903 = vpop.f32.mrb[0].mxu0
    %v3904 = vpop.f32.mrb[0].mxu0
    %v3905 = vadd.f32 %v584, %v3904
    %v3906 = vpop.f32.mrb[0].mxu0
    %3907 = vmatprep.mubr.bf16.mxu0 0
    %3908 = vmatmul.mubr.bf16.gmra.mrb[0].mxu0 %v2378
    %v3909 = vpop.f32.mrb[0].mxu0
    %v3910 = vadd.f32 %v584, %v3909
    %v3911 = vpop.f32.mrb[0].mxu0
    %v3912 = vpop.f32.mrb[0].mxu0
    %v3913 = vadd.f32 %v584, %v3912
    %v3914 = vpop.f32.mrb[0].mxu0
    %3915 = vmatprep.mubr.bf16.mxu0 0
    %3916 = vmatmul.mubr.bf16.gmra.mrb[0].mxu0 %v2381
    %v3917 = vpop.f32.mrb[0].mxu0
    %v3918 = vadd.f32 %v584, %v3917
    %v3919 = vpop.f32.mrb[0].mxu0
    %v3920 = vpop.f32.mrb[0].mxu0
    %v3921 = vadd.f32 %v584, %v3920
    %v3922 = vpop.f32.mrb[0].mxu0
    %3923 = vmatprep.mubr.bf16.mxu0 0
    %3924 = vmatmul.mubr.bf16.gmra.mrb[0].mxu0 %v2384
    %v3925 = vpop.f32.mrb[0].mxu0
    %v3926 = vadd.f32 %v584, %v3925
    %v3927 = vpop.f32.mrb[0].mxu0
    %v3928 = vpop.f32.mrb[0].mxu0
    %v3929 = vadd.f32 %v584, %v3928
    %v3930 = vpop.f32.mrb[0].mxu0
    %3931 = vmatprep.mubr.bf16.mxu0 0
    %3932 = vmatmul.mubr.bf16.gmra.mrb[0].mxu0 %v2387
    %v3933 = vpop.f32.mrb[0].mxu0
    %v3934 = vadd.f32 %v584, %v3933
    %v3935 = vpop.f32.mrb[0].mxu0
    %v3936 = vpop.f32.mrb[0].mxu0
    %v3937 = vadd.f32 %v584, %v3936
    %v3938 = vpop.f32.mrb[0].mxu0
    %3939 = vmatprep.mubr.bf16.mxu0 0
    %3940 = vmatmul.mubr.bf16.gmra.mrb[0].mxu0 %v2390
    %v3941 = vpop.f32.mrb[0].mxu0
    %v3942 = vadd.f32 %v584, %v3941
    %v3943 = vpop.f32.mrb[0].mxu0
    %v3944 = vpop.f32.mrb[0].mxu0
    %v3945 = vadd.f32 %v584, %v3944
    %v3946 = vpop.f32.mrb[0].mxu0
    %3947 = vmatprep.mubr.bf16.mxu0 0
    %3948 = vmatmul.mubr.bf16.gmra.mrb[0].mxu0 %v2393
    %v3949 = vpop.f32.mrb[0].mxu0
    %v3950 = vadd.f32 %v584, %v3949
    %v3951 = vpop.f32.mrb[0].mxu0
    %v3952 = vpop.f32.mrb[0].mxu0
    %v3953 = vadd.f32 %v584, %v3952
    %v3954 = vpop.f32.mrb[0].mxu0
    %3955 = vmatprep.mubr.bf16.mxu0 0
    %3956 = vmatmul.mubr.bf16.gmra.mrb[0].mxu0 %v2396
    %v3957 = vpop.f32.mrb[0].mxu0
    %v3958 = vadd.f32 %v584, %v3957
    %v3959 = vpop.f32.mrb[0].mxu0
    %v3960 = vpop.f32.mrb[0].mxu0
    %v3961 = vadd.f32 %v584, %v3960
    %v3962 = vpop.f32.mrb[0].mxu0
    %3963 = vmatprep.mubr.bf16.mxu0 0
    %3964 = vmatmul.mubr.bf16.gmra.mrb[0].mxu0 %v2399
    %v3965 = vpop.f32.mrb[0].mxu0
    %v3966 = vadd.f32 %v584, %v3965
    %v3967 = vpop.f32.mrb[0].mxu0
    %v3968 = vpop.f32.mrb[0].mxu0
    %v3969 = vadd.f32 %v584, %v3968
    %v3970 = vpop.f32.mrb[0].mxu0
    %3971 = vmatprep.mubr.bf16.mxu0 0
    %3972 = vmatmul.mubr.bf16.gmra.mrb[0].mxu0 %v2402
    %v3973 = vpop.f32.mrb[0].mxu0
    %v3974 = vadd.f32 %v584, %v3973
    %v3975 = vpop.f32.mrb[0].mxu0
    %v3976 = vpop.f32.mrb[0].mxu0
    %v3977 = vadd.f32 %v584, %v3976
    %v3978 = vpop.f32.mrb[0].mxu0
    %3979 = vmatprep.mubr.bf16.mxu0 0
    %3980 = vmatmul.mubr.bf16.gmra.mrb[0].mxu0 %v2405
    %v3981 = vpop.f32.mrb[0].mxu0
    %v3982 = vadd.f32 %v584, %v3981
    %v3983 = vpop.f32.mrb[0].mxu0
    %v3984 = vpop.f32.mrb[0].mxu0
    %v3985 = vadd.f32 %v584, %v3984
    %v3986 = vpop.f32.mrb[0].mxu0
    %3987 = vmatprep.mubr.bf16.mxu0 0
    %3988 = vmatmul.mubr.bf16.gmra.mrb[0].mxu0 %v2408
    %v3989 = vpop.f32.mrb[0].mxu0
    %v3990 = vadd.f32 %v584, %v3989
    %v3991 = vpop.f32.mrb[0].mxu0
    %v3992 = vpop.f32.mrb[0].mxu0
    %v3993 = vadd.f32 %v584, %v3992
    %v3994 = vpop.f32.mrb[0].mxu0
    %3995 = vmatprep.mubr.bf16.mxu0 0
    %3996 = vmatmul.mubr.bf16.gmra.mrb[0].mxu0 %v2411
    %v3997 = vpop.f32.mrb[0].mxu0
    %v3998 = vadd.f32 %v584, %v3997
    %v3999 = vpop.f32.mrb[0].mxu0
    %v4000 = vpop.f32.mrb[0].mxu0
    %v4001 = vadd.f32 %v584, %v4000
    %v4002 = vpop.f32.mrb[0].mxu0
    %4003 = vmatprep.mubr.bf16.mxu0 0
    %4004 = vmatmul.mubr.bf16.gmra.mrb[0].mxu0 %v2414
    %v4005 = vpop.f32.mrb[0].mxu0
    %v4006 = vadd.f32 %v584, %v4005
    %v4007 = vpop.f32.mrb[0].mxu0
    %v4008 = vpop.f32.mrb[0].mxu0
    %v4009 = vadd.f32 %v584, %v4008
    %v4010 = vpop.f32.mrb[0].mxu0
    %4011 = vmatprep.mubr.bf16.mxu0 0
    %4012 = vmatmul.mubr.bf16.gmra.mrb[0].mxu0 %v2417
    %v4013 = vpop.f32.mrb[0].mxu0
    %v4014 = vadd.f32 %v584, %v4013
    %v4015 = vpop.f32.mrb[0].mxu0
    %v4016 = vpop.f32.mrb[0].mxu0
    %v4017 = vadd.f32 %v584, %v4016
    %v4018 = vpop.f32.mrb[0].mxu0
    %4019 = vmatprep.mubr.bf16.mxu0 0
    %4020 = vmatmul.mubr.bf16.gmra.mrb[0].mxu0 %v2420
    %v4021 = vpop.f32.mrb[0].mxu0
    %v4022 = vadd.f32 %v584, %v4021
    %v4023 = vpop.f32.mrb[0].mxu0
    %v4024 = vpop.f32.mrb[0].mxu0
    %v4025 = vadd.f32 %v584, %v4024
    %v4026 = vpop.f32.mrb[0].mxu0
    %4027 = vmatprep.mubr.bf16.mxu0 0
    %4028 = vmatmul.mubr.bf16.gmra.mrb[0].mxu0 %v2423
    %v4029 = vpop.f32.mrb[0].mxu0
    %v4030 = vadd.f32 %v584, %v4029
    %v4031 = vpop.f32.mrb[0].mxu0
    %v4032 = vpop.f32.mrb[0].mxu0
    %v4033 = vadd.f32 %v584, %v4032
    %v4034 = vpop.f32.mrb[0].mxu0
    %4035 = vmatprep.mubr.bf16.mxu0 0
    %4036 = vmatmul.mubr.bf16.gmra.mrb[0].mxu0 %v2426
    %v4037 = vpop.f32.mrb[0].mxu0
    %v4038 = vadd.f32 %v584, %v4037
    %v4039 = vpop.f32.mrb[0].mxu0
    %v4040 = vpop.f32.mrb[0].mxu0
    %v4041 = vadd.f32 %v584, %v4040
    %v4042 = vpop.f32.mrb[0].mxu0
    %4043 = vmatprep.mubr.bf16.mxu0 0
    %4044 = vmatmul.mubr.bf16.gmra.mrb[0].mxu0 %v2429
    %v4045 = vpop.f32.mrb[0].mxu0
    %v4046 = vadd.f32 %v584, %v4045
    %v4047 = vpop.f32.mrb[0].mxu0
    %v4048 = vpop.f32.mrb[0].mxu0
    %v4049 = vadd.f32 %v584, %v4048
    %v4050 = vpop.f32.mrb[0].mxu0
    %4051 = vmatprep.mubr.bf16.mxu0 0
    %4052 = vmatmul.mubr.bf16.gmra.mrb[0].mxu0 %v2432
    %v4053 = vpop.f32.mrb[0].mxu0
    %v4054 = vadd.f32 %v584, %v4053
    %v4055 = vpop.f32.mrb[0].mxu0
    %v4056 = vpop.f32.mrb[0].mxu0
    %v4057 = vadd.f32 %v584, %v4056
    %v4058 = vpop.f32.mrb[0].mxu0
    %4059 = vmatprep.mubr.bf16.mxu0 0
    %4060 = vmatmul.mubr.bf16.gmra.mrb[0].mxu0 %v2435
    %v4061 = vpop.f32.mrb[0].mxu0
    %v4062 = vadd.f32 %v584, %v4061
    %v4063 = vpop.f32.mrb[0].mxu0
    %v4064 = vpop.f32.mrb[0].mxu0
    %v4065 = vadd.f32 %v584, %v4064
    %v4066 = vpop.f32.mrb[0].mxu0
    %4067 = vmatprep.mubr.bf16.mxu0 0
    %4068 = vmatmul.mubr.bf16.gmra.mrb[0].mxu0 %v2438
    %v4069 = vpop.f32.mrb[0].mxu0
    %v4070 = vadd.f32 %v584, %v4069
    %v4071 = vpop.f32.mrb[0].mxu0
    %v4072 = vpop.f32.mrb[0].mxu0
    %v4073 = vadd.f32 %v584, %v4072
    %v4074 = vpop.f32.mrb[0].mxu0
    %4075 = vmatprep.mubr.bf16.mxu0 0
    %4076 = vmatmul.mubr.bf16.gmra.mrb[0].mxu0 %v2441
    %v4077 = vpop.f32.mrb[0].mxu0
    %v4078 = vadd.f32 %v584, %v4077
    %v4079 = vpop.f32.mrb[0].mxu0
    %v4080 = vpop.f32.mrb[0].mxu0
    %v4081 = vadd.f32 %v584, %v4080
    %v4082 = vpop.f32.mrb[0].mxu0
    %4083 = vmatprep.mubr.bf16.mxu0 0
    %4084 = vmatmul.mubr.bf16.gmra.mrb[0].mxu0 %v2444
    %v4085 = vpop.f32.mrb[0].mxu0
    %v4086 = vadd.f32 %v584, %v4085
    %v4087 = vpop.f32.mrb[0].mxu0
    %v4088 = vpop.f32.mrb[0].mxu0
    %v4089 = vadd.f32 %v584, %v4088
    %v4090 = vpop.f32.mrb[0].mxu0
    %4091 = vmatprep.mubr.bf16.mxu0 0
    %4092 = vmatmul.mubr.bf16.gmra.mrb[0].mxu0 %v2447
    %v4093 = vpop.f32.mrb[0].mxu0
    %v4094 = vadd.f32 %v584, %v4093
    %v4095 = vpop.f32.mrb[0].mxu0
    %v4096 = vpop.f32.mrb[0].mxu0
    %v4097 = vadd.f32 %v584, %v4096
    %v4098 = vpop.f32.mrb[0].mxu0
    %4099 = vmatprep.mubr.bf16.mxu0 0
    %4100 = vmatmul.mubr.bf16.gmra.mrb[0].mxu0 %v2450
    %v4101 = vpop.f32.mrb[0].mxu0
    %v4102 = vadd.f32 %v584, %v4101
    %v4103 = vpop.f32.mrb[0].mxu0
    %v4104 = vpop.f32.mrb[0].mxu0
    %v4105 = vadd.f32 %v584, %v4104
    %v4106 = vpop.f32.mrb[0].mxu0
    %4107 = vmatprep.mubr.bf16.mxu0 0
    %4108 = vmatmul.mubr.bf16.gmra.mrb[0].mxu0 %v2453
    %v4109 = vpop.f32.mrb[0].mxu0
    %v4110 = vadd.f32 %v584, %v4109
    %v4111 = vpop.f32.mrb[0].mxu0
    %v4112 = vpop.f32.mrb[0].mxu0
    %v4113 = vadd.f32 %v584, %v4112
    %v4114 = vpop.f32.mrb[0].mxu0
    %4115 = vmatprep.mubr.bf16.mxu0 0
    %4116 = vmatmul.mubr.bf16.gmra.mrb[0].mxu0 %v2456
    %v4117 = vpop.f32.mrb[0].mxu0
    %v4118 = vadd.f32 %v584, %v4117
    %v4119 = vpop.f32.mrb[0].mxu0
    %v4120 = vpop.f32.mrb[0].mxu0
    %v4121 = vadd.f32 %v584, %v4120
    %v4122 = vpop.f32.mrb[0].mxu0
    %4123 = vmatprep.mubr.bf16.mxu0 0
    %4124 = vmatmul.mubr.bf16.gmra.mrb[0].mxu0 %v2459
    %v4125 = vpop.f32.mrb[0].mxu0
    %v4126 = vadd.f32 %v584, %v4125
    %v4127 = vpop.f32.mrb[0].mxu0
    %v4128 = vpop.f32.mrb[0].mxu0
    %v4129 = vadd.f32 %v584, %v4128
    %v4130 = vpop.f32.mrb[0].mxu0
    %4131 = vmatprep.mubr.bf16.mxu0 0
    %4132 = vmatmul.mubr.bf16.gmra.mrb[0].mxu0 %v2462
    %v4133 = vpop.f32.mrb[0].mxu0
    %v4134 = vadd.f32 %v584, %v4133
    %v4135 = vpop.f32.mrb[0].mxu0
    %v4136 = vpop.f32.mrb[0].mxu0
    %v4137 = vadd.f32 %v584, %v4136
    %v4138 = vpop.f32.mrb[0].mxu0
    %4139 = vmatprep.mubr.bf16.mxu0 0
    %4140 = vmatmul.mubr.bf16.gmra.mrb[0].mxu0 %v2465
    %v4141 = vpop.f32.mrb[0].mxu0
    %v4142 = vadd.f32 %v584, %v4141
    %v4143 = vpop.f32.mrb[0].mxu0
    %v4144 = vpop.f32.mrb[0].mxu0
    %v4145 = vadd.f32 %v584, %v4144
    %v4146 = vpop.f32.mrb[0].mxu0
    %4147 = vmatprep.mubr.bf16.mxu0 0
    %4148 = vmatmul.mubr.bf16.gmra.mrb[0].mxu0 %v2468
    %v4149 = vpop.f32.mrb[0].mxu0
    %v4150 = vadd.f32 %v584, %v4149
    %v4151 = vpop.f32.mrb[0].mxu0
    %v4152 = vpop.f32.mrb[0].mxu0
    %v4153 = vadd.f32 %v584, %v4152
    %v4154 = vpop.f32.mrb[0].mxu0
    %4155 = vmatprep.mubr.bf16.mxu0 0
    %4156 = vmatmul.mubr.bf16.gmra.mrb[0].mxu0 %v2471
    %v4157 = vpop.f32.mrb[0].mxu0
    %v4158 = vadd.f32 %v584, %v4157
    %v4159 = vpop.f32.mrb[0].mxu0
    %v4160 = vpop.f32.mrb[0].mxu0
    %v4161 = vadd.f32 %v584, %v4160
    %v4162 = vpop.f32.mrb[0].mxu0
    %4163 = vmatprep.mubr.bf16.mxu0 0
    %4164 = vmatmul.mubr.bf16.gmra.mrb[0].mxu0 %v2474
    %v4165 = vpop.f32.mrb[0].mxu0
    %v4166 = vadd.f32 %v584, %v4165
    %v4167 = vpop.f32.mrb[0].mxu0
    %v4168 = vpop.f32.mrb[0].mxu0
    %v4169 = vadd.f32 %v584, %v4168
    %v4170 = vpop.f32.mrb[0].mxu0
    %4171 = vmatprep.mubr.bf16.mxu0 0
    %4172 = vmatmul.mubr.bf16.gmra.mrb[0].mxu0 %v2477
    %v4173 = vpop.f32.mrb[0].mxu0
    %v4174 = vadd.f32 %v584, %v4173
    %v4175 = vpop.f32.mrb[0].mxu0
    %v4176 = vpop.f32.mrb[0].mxu0
    %v4177 = vadd.f32 %v584, %v4176
    %v4178 = vpop.f32.mrb[0].mxu0
    %4179 = vmatprep.mubr.bf16.mxu0 0
    %4180 = vmatmul.mubr.bf16.gmra.mrb[0].mxu0 %v2480
    %v4181 = vpop.f32.mrb[0].mxu0
    %v4182 = vadd.f32 %v584, %v4181
    %v4183 = vpop.f32.mrb[0].mxu0
    %v4184 = vpop.f32.mrb[0].mxu0
    %v4185 = vadd.f32 %v584, %v4184
    %v4186 = vpop.f32.mrb[0].mxu0
    %4187 = vmatprep.mubr.bf16.mxu0 0
    %4188 = vmatmul.mubr.bf16.gmra.mrb[0].mxu0 %v2483
    %v4189 = vpop.f32.mrb[0].mxu0
    %v4190 = vadd.f32 %v584, %v4189
    %v4191 = vpop.f32.mrb[0].mxu0
    %v4192 = vpop.f32.mrb[0].mxu0
    %v4193 = vadd.f32 %v584, %v4192
    %v4194 = vpop.f32.mrb[0].mxu0
    %4195 = vmatprep.mubr.bf16.mxu0 0
    %4196 = vmatmul.mubr.bf16.gmra.mrb[0].mxu0 %v2486
    %v4197 = vpop.f32.mrb[0].mxu0
    %v4198 = vadd.f32 %v584, %v4197
    %v4199 = vpop.f32.mrb[0].mxu0
    %v4200 = vpop.f32.mrb[0].mxu0
    %v4201 = vadd.f32 %v584, %v4200
    %v4202 = vpop.f32.mrb[0].mxu0
    %4203 = vmatprep.mubr.bf16.mxu0 0
    %4204 = vmatmul.mubr.bf16.gmra.mrb[0].mxu0 %v2489
    %v4205 = vpop.f32.mrb[0].mxu0
    %v4206 = vadd.f32 %v584, %v4205
    %v4207 = vpop.f32.mrb[0].mxu0
    %v4208 = vpop.f32.mrb[0].mxu0
    %v4209 = vadd.f32 %v584, %v4208
    %v4210 = vpop.f32.mrb[0].mxu0
    %4211 = vmatprep.mubr.bf16.mxu0 0
    %4212 = vmatmul.mubr.bf16.gmra.mrb[0].mxu0 %v2492
    %v4213 = vpop.f32.mrb[0].mxu0
    %v4214 = vadd.f32 %v584, %v4213
    %v4215 = vpop.f32.mrb[0].mxu0
    %v4216 = vpop.f32.mrb[0].mxu0
    %v4217 = vadd.f32 %v584, %v4216
    %v4218 = vpop.f32.mrb[0].mxu0
    %4219 = vmatprep.mubr.bf16.mxu0 0
    %4220 = vmatmul.mubr.bf16.gmra.mrb[0].mxu0 %v2495
    %v4221 = vpop.f32.mrb[0].mxu0
    %v4222 = vadd.f32 %v584, %v4221
    %v4223 = vpop.f32.mrb[0].mxu0
    %v4224 = vpop.f32.mrb[0].mxu0
    %v4225 = vadd.f32 %v584, %v4224
    %v4226 = vpop.f32.mrb[0].mxu0
    %4227 = vmatprep.mubr.bf16.mxu0 0
    %4228 = vmatmul.mubr.bf16.gmra.mrb[0].mxu0 %v2498
    %v4229 = vpop.f32.mrb[0].mxu0
    %v4230 = vadd.f32 %v584, %v4229
    %v4231 = vpop.f32.mrb[0].mxu0
    %v4232 = vpop.f32.mrb[0].mxu0
    %v4233 = vadd.f32 %v584, %v4232
    %v4234 = vpop.f32.mrb[0].mxu0
    %4235 = vmatprep.mubr.bf16.mxu0 0
    %4236 = vmatmul.mubr.bf16.gmra.mrb[0].mxu0 %v2501
    %v4237 = vpop.f32.mrb[0].mxu0
    %v4238 = vadd.f32 %v584, %v4237
    %v4239 = vpop.f32.mrb[0].mxu0
    %v4240 = vpop.f32.mrb[0].mxu0
    %v4241 = vadd.f32 %v584, %v4240
    %v4242 = vpop.f32.mrb[0].mxu0
    %4243 = vmatprep.mubr.bf16.mxu0 0
    %4244 = vmatmul.mubr.bf16.gmra.mrb[0].mxu0 %v2504
    %v4245 = vpop.f32.mrb[0].mxu0
    %v4246 = vadd.f32 %v584, %v4245
    %v4247 = vpop.f32.mrb[0].mxu0
    %v4248 = vpop.f32.mrb[0].mxu0
    %v4249 = vadd.f32 %v584, %v4248
    %v4250 = vpop.f32.mrb[0].mxu0
    %4251 = vmatprep.mubr.bf16.mxu0 0
    %4252 = vmatmul.mubr.bf16.gmra.mrb[0].mxu0 %v2507
    %v4253 = vpop.f32.mrb[0].mxu0
    %v4254 = vadd.f32 %v584, %v4253
    %v4255 = vpop.f32.mrb[0].mxu0
    %v4256 = vpop.f32.mrb[0].mxu0
    %v4257 = vadd.f32 %v584, %v4256
    %v4258 = vpop.f32.mrb[0].mxu0
    %4259 = vmatprep.mubr.bf16.mxu0 0
    %4260 = vmatmul.mubr.bf16.gmra.mrb[0].mxu0 %v2510
    %v4261 = vpop.f32.mrb[0].mxu0
    %v4262 = vadd.f32 %v584, %v4261
    %v4263 = vpop.f32.mrb[0].mxu0
    %v4264 = vpop.f32.mrb[0].mxu0
    %v4265 = vadd.f32 %v584, %v4264
    %v4266 = vpop.f32.mrb[0].mxu0
    %4267 = vmatprep.mubr.bf16.mxu0 0
    %4268 = vmatmul.mubr.bf16.gmra.mrb[0].mxu0 %v2513
    %v4269 = vpop.f32.mrb[0].mxu0
    %v4270 = vadd.f32 %v584, %v4269
    %v4271 = vpop.f32.mrb[0].mxu0
    %v4272 = vpop.f32.mrb[0].mxu0
    %v4273 = vadd.f32 %v584, %v4272
    %v4274 = vpop.f32.mrb[0].mxu0
    %4275 = vmatprep.mubr.bf16.mxu0 0
    %4276 = vmatmul.mubr.bf16.gmra.mrb[0].mxu0 %v2516
    %v4277 = vpop.f32.mrb[0].mxu0
    %v4278 = vadd.f32 %v584, %v4277
    %v4279 = vpop.f32.mrb[0].mxu0
    %v4280 = vpop.f32.mrb[0].mxu0
    %v4281 = vadd.f32 %v584, %v4280
    %v4282 = vpop.f32.mrb[0].mxu0
    %4283 = vmatprep.mubr.bf16.mxu0 0
    %4284 = vmatmul.mubr.bf16.gmra.mrb[0].mxu0 %v2519
    %v4285 = vpop.f32.mrb[0].mxu0
    %v4286 = vadd.f32 %v584, %v4285
    %v4287 = vpop.f32.mrb[0].mxu0
    %v4288 = vpop.f32.mrb[0].mxu0
    %v4289 = vadd.f32 %v584, %v4288
    %v4290 = vpop.f32.mrb[0].mxu0
    %4291 = vmatprep.mubr.bf16.mxu0 0
    %4292 = vmatmul.mubr.bf16.gmra.mrb[0].mxu0 %v2522
    %v4293 = vpop.f32.mrb[0].mxu0
    %v4294 = vadd.f32 %v584, %v4293
    %v4295 = vpop.f32.mrb[0].mxu0
    %v4296 = vpop.f32.mrb[0].mxu0
    %v4297 = vadd.f32 %v584, %v4296
    %v4298 = vpop.f32.mrb[0].mxu0
    %4299 = vmatprep.mubr.bf16.mxu0 0
    %4300 = vmatmul.mubr.bf16.gmra.mrb[0].mxu0 %v2525
    %v4301 = vpop.f32.mrb[0].mxu0
    %v4302 = vadd.f32 %v584, %v4301
    %v4303 = vpop.f32.mrb[0].mxu0
    %v4304 = vpop.f32.mrb[0].mxu0
    %v4305 = vadd.f32 %v584, %v4304
    %v4306 = vpop.f32.mrb[0].mxu0
    %4307 = vmatprep.mubr.bf16.mxu0 0
    %4308 = vmatmul.mubr.bf16.gmra.mrb[0].mxu0 %v2528
    %v4309 = vpop.f32.mrb[0].mxu0
    %v4310 = vadd.f32 %v584, %v4309
    %v4311 = vpop.f32.mrb[0].mxu0
    %v4312 = vpop.f32.mrb[0].mxu0
    %v4313 = vadd.f32 %v584, %v4312
    %v4314 = vpop.f32.mrb[0].mxu0
    %4315 = vmatprep.mubr.bf16.mxu0 0
    %4316 = vmatmul.mubr.bf16.gmra.mrb[0].mxu0 %v2531
    %v4317 = vpop.f32.mrb[0].mxu0
    %v4318 = vadd.f32 %v584, %v4317
    %v4319 = vpop.f32.mrb[0].mxu0
    %v4320 = vpop.f32.mrb[0].mxu0
    %v4321 = vadd.f32 %v584, %v4320
    %v4322 = vpop.f32.mrb[0].mxu0
    %4323 = vmatprep.mubr.bf16.mxu0 0
    %4324 = vmatmul.mubr.bf16.gmra.mrb[0].mxu0 %v2534
    %v4325 = vpop.f32.mrb[0].mxu0
    %v4326 = vadd.f32 %v584, %v4325
    %v4327 = vpop.f32.mrb[0].mxu0
    %v4328 = vpop.f32.mrb[0].mxu0
    %v4329 = vadd.f32 %v584, %v4328
    %v4330 = vpop.f32.mrb[0].mxu0
    %4331 = vmatprep.mubr.bf16.mxu0 0
    %4332 = vmatmul.mubr.bf16.gmra.mrb[0].mxu0 %v2537
    %v4333 = vpop.f32.mrb[0].mxu0
    %v4334 = vadd.f32 %v584, %v4333
    %v4335 = vpop.f32.mrb[0].mxu0
    %v4336 = vpop.f32.mrb[0].mxu0
    %v4337 = vadd.f32 %v584, %v4336
    %v4338 = vpop.f32.mrb[0].mxu0
    %4339 = vmatprep.mubr.bf16.mxu0 0
    %4340 = vmatmul.mubr.bf16.gmra.mrb[0].mxu0 %v2540
    %v4341 = vpop.f32.mrb[0].mxu0
    %v4342 = vadd.f32 %v584, %v4341
    %v4343 = vpop.f32.mrb[0].mxu0
    %v4344 = vpop.f32.mrb[0].mxu0
    %v4345 = vadd.f32 %v584, %v4344
    %v4346 = vpop.f32.mrb[0].mxu0
    %4347 = vmatprep.mubr.bf16.mxu0 0
    %4348 = vmatmul.mubr.bf16.gmra.mrb[0].mxu0 %v2543
    %v4349 = vpop.f32.mrb[0].mxu0
    %v4350 = vadd.f32 %v584, %v4349
    %v4351 = vpop.f32.mrb[0].mxu0
    %v4352 = vpop.f32.mrb[0].mxu0
    %v4353 = vadd.f32 %v584, %v4352
    %v4354 = vpop.f32.mrb[0].mxu0
    %4355 = vmatprep.mubr.bf16.mxu0 0
    %4356 = vmatmul.mubr.bf16.gmra.mrb[0].mxu0 %v2546
    %v4357 = vpop.f32.mrb[0].mxu0
    %v4358 = vadd.f32 %v584, %v4357
    %v4359 = vpop.f32.mrb[0].mxu0
    %v4360 = vpop.f32.mrb[0].mxu0
    %v4361 = vadd.f32 %v584, %v4360
    %v4362 = vpop.f32.mrb[0].mxu0
    %4363 = vmatprep.mubr.bf16.mxu0 0
    %4364 = vmatmul.mubr.bf16.gmra.mrb[0].mxu0 %v2549
    %v4365 = vpop.f32.mrb[0].mxu0
    %v4366 = vadd.f32 %v584, %v4365
    %v4367 = vpop.f32.mrb[0].mxu0
    %v4368 = vpop.f32.mrb[0].mxu0
    %v4369 = vadd.f32 %v584, %v4368
    %v4370 = vpop.f32.mrb[0].mxu0
    %4371 = vmatprep.mubr.bf16.mxu0 0
    %4372 = vmatmul.mubr.bf16.gmra.mrb[0].mxu0 %v2552
    %v4373 = vpop.f32.mrb[0].mxu0
    %v4374 = vadd.f32 %v584, %v4373
    %v4375 = vpop.f32.mrb[0].mxu0
    %v4376 = vpop.f32.mrb[0].mxu0
    %v4377 = vadd.f32 %v584, %v4376
    %v4378 = vpop.f32.mrb[0].mxu0
    %4379 = vmatprep.mubr.bf16.mxu0 0
    %4380 = vmatmul.mubr.bf16.gmra.mrb[0].mxu0 %v2555
    %v4381 = vpop.f32.mrb[0].mxu0
    %v4382 = vadd.f32 %v584, %v4381
    %v4383 = vpop.f32.mrb[0].mxu0
    %v4384 = vpop.f32.mrb[0].mxu0
    %v4385 = vadd.f32 %v584, %v4384
    %v4386 = vpop.f32.mrb[0].mxu0
    %4387 = vmatprep.mubr.bf16.mxu0 0
    %4388 = vmatmul.mubr.bf16.gmra.mrb[0].mxu0 %v2558
    %v4389 = vpop.f32.mrb[0].mxu0
    %v4390 = vadd.f32 %v584, %v4389
    %v4391 = vpop.f32.mrb[0].mxu0
    %v4392 = vpop.f32.mrb[0].mxu0
    %v4393 = vadd.f32 %v584, %v4392
    %v4394 = vpop.f32.mrb[0].mxu0
    %4395 = vmatprep.mubr.bf16.mxu0 0
    %4396 = vmatmul.mubr.bf16.gmra.mrb[0].mxu0 %v2561
    %v4397 = vpop.f32.mrb[0].mxu0
    %v4398 = vadd.f32 %v584, %v4397
    %v4399 = vpop.f32.mrb[0].mxu0
    %v4400 = vpop.f32.mrb[0].mxu0
    %v4401 = vadd.f32 %v584, %v4400
    %v4402 = vpop.f32.mrb[0].mxu0
    %4403 = vmatprep.mubr.bf16.mxu0 0
    %4404 = vmatmul.mubr.bf16.gmra.mrb[0].mxu0 %v2564
    %v4405 = vpop.f32.mrb[0].mxu0
    %v4406 = vadd.f32 %v584, %v4405
    %v4407 = vpop.f32.mrb[0].mxu0
    %v4408 = vpop.f32.mrb[0].mxu0
    %v4409 = vadd.f32 %v584, %v4408
    %v4410 = vpop.f32.mrb[0].mxu0
    %4411 = vmatprep.mubr.bf16.mxu0 0
    %4412 = vmatmul.mubr.bf16.gmra.mrb[0].mxu0 %v2567
    %v4413 = vpop.f32.mrb[0].mxu0
    %v4414 = vadd.f32 %v584, %v4413
    %v4415 = vpop.f32.mrb[0].mxu0
    %v4416 = vpop.f32.mrb[0].mxu0
    %v4417 = vadd.f32 %v584, %v4416
    %v4418 = vpop.f32.mrb[0].mxu0
    %4419 = vmatprep.mubr.bf16.mxu0 0
    %4420 = vmatmul.mubr.bf16.gmra.mrb[0].mxu0 %v2570
    %v4421 = vpop.f32.mrb[0].mxu0
    %v4422 = vadd.f32 %v584, %v4421
    %v4423 = vpop.f32.mrb[0].mxu0
    %v4424 = vpop.f32.mrb[0].mxu0
    %v4425 = vadd.f32 %v584, %v4424
    %v4426 = vpop.f32.mrb[0].mxu0
    %4427 = vmatprep.mubr.bf16.mxu0 0
    %4428 = vmatmul.mubr.bf16.gmra.mrb[0].mxu0 %v2573
    %v4429 = vpop.f32.mrb[0].mxu0
    %v4430 = vadd.f32 %v584, %v4429
    %v4431 = vpop.f32.mrb[0].mxu0
    %v4432 = vpop.f32.mrb[0].mxu0
    %v4433 = vadd.f32 %v584, %v4432
    %v4434 = vpop.f32.mrb[0].mxu0
    %4435 = vmatprep.mubr.bf16.mxu0 0
    %4436 = vmatmul.mubr.bf16.gmra.mrb[0].mxu0 %v2576
    %v4437 = vpop.f32.mrb[0].mxu0
    %v4438 = vadd.f32 %v584, %v4437
    %v4439 = vpop.f32.mrb[0].mxu0
    %v4440 = vpop.f32.mrb[0].mxu0
    %v4441 = vadd.f32 %v584, %v4440
    %v4442 = vpop.f32.mrb[0].mxu0
    %4443 = vmatprep.mubr.bf16.mxu0 0
    %4444 = vmatmul.mubr.bf16.gmra.mrb[0].mxu0 %v2579
    %v4445 = vpop.f32.mrb[0].mxu0
    %v4446 = vadd.f32 %v584, %v4445
    %v4447 = vpop.f32.mrb[0].mxu0
    %v4448 = vpop.f32.mrb[0].mxu0
    %v4449 = vadd.f32 %v584, %v4448
    %v4450 = vpop.f32.mrb[0].mxu0
    %4451 = vmatprep.mubr.bf16.mxu0 0
    %4452 = vmatmul.mubr.bf16.gmra.mrb[0].mxu0 %v2582
    %v4453 = vpop.f32.mrb[0].mxu0
    %v4454 = vadd.f32 %v584, %v4453
    %v4455 = vpop.f32.mrb[0].mxu0
    %v4456 = vpop.f32.mrb[0].mxu0
    %v4457 = vadd.f32 %v584, %v4456
    %v4458 = vpop.f32.mrb[0].mxu0
    %4459 = vmatprep.mubr.bf16.mxu0 0
    %4460 = vmatmul.mubr.bf16.gmra.mrb[0].mxu0 %v2585
    %v4461 = vpop.f32.mrb[0].mxu0
    %v4462 = vadd.f32 %v584, %v4461
    %v4463 = vpop.f32.mrb[0].mxu0
    %v4464 = vpop.f32.mrb[0].mxu0
    %v4465 = vadd.f32 %v584, %v4464
    %v4466 = vpop.f32.mrb[0].mxu0
    %4467 = vmatprep.mubr.bf16.mxu0 0
    %4468 = vmatmul.mubr.bf16.gmra.mrb[0].mxu0 %v2588
    %v4469 = vpop.f32.mrb[0].mxu0
    %v4470 = vadd.f32 %v584, %v4469
    %v4471 = vpop.f32.mrb[0].mxu0
    %v4472 = vpop.f32.mrb[0].mxu0
    %v4473 = vadd.f32 %v584, %v4472
    %v4474 = vpop.f32.mrb[0].mxu0
    %4475 = vmatprep.mubr.bf16.mxu0 0
    %4476 = vmatmul.mubr.bf16.gmra.mrb[0].mxu0 %v2591
    %v4477 = vpop.f32.mrb[0].mxu0
    %v4478 = vadd.f32 %v584, %v4477
    %v4479 = vpop.f32.mrb[0].mxu0
    %v4480 = vpop.f32.mrb[0].mxu0
    %v4481 = vadd.f32 %v584, %v4480
    %v4482 = vpop.f32.mrb[0].mxu0
    %4483 = vmatprep.mubr.bf16.mxu0 0
    %4484 = vmatmul.mubr.bf16.gmra.mrb[0].mxu0 %v2594
    %v4485 = vpop.f32.mrb[0].mxu0
    %v4486 = vadd.f32 %v584, %v4485
    %v4487 = vpop.f32.mrb[0].mxu0
    %v4488 = vpop.f32.mrb[0].mxu0
    %v4489 = vadd.f32 %v584, %v4488
    %v4490 = vpop.f32.mrb[0].mxu0
    %4491 = vmatprep.mubr.bf16.mxu0 0
    %4492 = vmatmul.mubr.bf16.gmra.mrb[0].mxu0 %v2597
    %v4493 = vpop.f32.mrb[0].mxu0
    %v4494 = vadd.f32 %v584, %v4493
    %v4495 = vpop.f32.mrb[0].mxu0
    %v4496 = vpop.f32.mrb[0].mxu0
    %v4497 = vadd.f32 %v584, %v4496
    %v4498 = vpop.f32.mrb[0].mxu0
    %4499 = vmatprep.mubr.bf16.mxu0 0
    %4500 = vmatmul.mubr.bf16.gmra.mrb[0].mxu0 %v2600
    %v4501 = vpop.f32.mrb[0].mxu0
    %v4502 = vadd.f32 %v584, %v4501
    %v4503 = vpop.f32.mrb[0].mxu0
    %v4504 = vpop.f32.mrb[0].mxu0
    %v4505 = vadd.f32 %v584, %v4504
    %v4506 = vpop.f32.mrb[0].mxu0
    %4507 = vmatprep.mubr.bf16.mxu0 0
    %4508 = vmatmul.mubr.bf16.gmra.mrb[0].mxu0 %v2603
    %v4509 = vpop.f32.mrb[0].mxu0
    %v4510 = vadd.f32 %v584, %v4509
    %v4511 = vpop.f32.mrb[0].mxu0
    %v4512 = vpop.f32.mrb[0].mxu0
    %v4513 = vadd.f32 %v584, %v4512
    %v4514 = vpop.f32.mrb[0].mxu0
    %4515 = vmatprep.mubr.bf16.mxu0 0
    %4516 = vmatmul.mubr.bf16.gmra.mrb[0].mxu0 %v2606
    %v4517 = vpop.f32.mrb[0].mxu0
    %v4518 = vadd.f32 %v584, %v4517
    %v4519 = vpop.f32.mrb[0].mxu0
    %v4520 = vpop.f32.mrb[0].mxu0
    %v4521 = vadd.f32 %v584, %v4520
    %v4522 = vpop.f32.mrb[0].mxu0
    %4523 = vmatprep.mubr.bf16.mxu0 0
    %4524 = vmatmul.mubr.bf16.gmra.mrb[0].mxu0 %v2609
    %v4525 = vpop.f32.mrb[0].mxu0
    %v4526 = vadd.f32 %v584, %v4525
    %v4527 = vpop.f32.mrb[0].mxu0
    %v4528 = vpop.f32.mrb[0].mxu0
    %v4529 = vadd.f32 %v584, %v4528
    %v4530 = vpop.f32.mrb[0].mxu0
    %4531 = vmatprep.mubr.bf16.mxu0 0
    %4532 = vmatmul.mubr.bf16.gmra.mrb[0].mxu0 %v2612
    %v4533 = vpop.f32.mrb[0].mxu0
    %v4534 = vadd.f32 %v584, %v4533
    %v4535 = vpop.f32.mrb[0].mxu0
    %v4536 = vpop.f32.mrb[0].mxu0
    %v4537 = vadd.f32 %v584, %v4536
    %v4538 = vpop.f32.mrb[0].mxu0
    %4539 = vmatprep.mubr.bf16.mxu0 0
    %4540 = vmatmul.mubr.bf16.gmra.mrb[0].mxu0 %v2615
    %v4541 = vpop.f32.mrb[0].mxu0
    %v4542 = vadd.f32 %v584, %v4541
    %v4543 = vpop.f32.mrb[0].mxu0
    %v4544 = vpop.f32.mrb[0].mxu0
    %v4545 = vadd.f32 %v584, %v4544
    %v4546 = vpop.f32.mrb[0].mxu0
    %4547 = vmatprep.mubr.bf16.mxu0 0
    %4548 = vmatmul.mubr.bf16.gmra.mrb[0].mxu0 %v2618
    %v4549 = vpop.f32.mrb[0].mxu0
    %v4550 = vadd.f32 %v584, %v4549
    %v4551 = vpop.f32.mrb[0].mxu0
    %v4552 = vpop.f32.mrb[0].mxu0
    %v4553 = vadd.f32 %v584, %v4552
    %v4554 = vpop.f32.mrb[0].mxu0
    %4555 = vmatprep.mubr.bf16.mxu0 0
    %4556 = vmatmul.mubr.bf16.gmra.mrb[0].mxu0 %v2621
    %v4557 = vpop.f32.mrb[0].mxu0
    %v4558 = vadd.f32 %v584, %v4557
    %v4559 = vpop.f32.mrb[0].mxu0
    %v4560 = vpop.f32.mrb[0].mxu0
    %v4561 = vadd.f32 %v584, %v4560
    %v4562 = vpop.f32.mrb[0].mxu0
    %4563 = vmatprep.mubr.bf16.mxu0 0
    %4564 = vmatmul.mubr.bf16.gmra.mrb[0].mxu0 %v2624
    %v4565 = vpop.f32.mrb[0].mxu0
    %v4566 = vadd.f32 %v584, %v4565
    %v4567 = vpop.f32.mrb[0].mxu0
    %v4568 = vpop.f32.mrb[0].mxu0
    %v4569 = vadd.f32 %v584, %v4568
    %v4570 = vpop.f32.mrb[0].mxu0
    %4571 = vmatprep.mubr.bf16.mxu0 0
    %4572 = vmatmul.mubr.bf16.gmra.mrb[0].mxu0 %v2627
    %v4573 = vpop.f32.mrb[0].mxu0
    %v4574 = vadd.f32 %v584, %v4573
    %v4575 = vpop.f32.mrb[0].mxu0
    %v4576 = vpop.f32.mrb[0].mxu0
    %v4577 = vadd.f32 %v584, %v4576
    %v4578 = vpop.f32.mrb[0].mxu0
    %4579 = vmatprep.mubr.bf16.mxu0 0
    %4580 = vmatmul.mubr.bf16.gmra.mrb[0].mxu0 %v2630
    %v4581 = vpop.f32.mrb[0].mxu0
    %v4582 = vadd.f32 %v584, %v4581
    %v4583 = vpop.f32.mrb[0].mxu0
    %v4584 = vpop.f32.mrb[0].mxu0
    %v4585 = vadd.f32 %v584, %v4584
    %v4586 = vpop.f32.mrb[0].mxu0
    %4587 = vmatprep.mubr.bf16.mxu0 0
    %4588 = vmatmul.mubr.bf16.gmra.mrb[0].mxu0 %v2633
    %v4589 = vpop.f32.mrb[0].mxu0
    %v4590 = vadd.f32 %v584, %v4589
    %v4591 = vpop.f32.mrb[0].mxu0
    %v4592 = vpop.f32.mrb[0].mxu0
    %v4593 = vadd.f32 %v584, %v4592
    %v4594 = vpop.f32.mrb[0].mxu0
    %4595 = vmatprep.mubr.bf16.mxu0 0
    %4596 = vmatmul.mubr.bf16.gmra.mrb[0].mxu0 %v2636
    %v4597 = vpop.f32.mrb[0].mxu0
    %v4598 = vadd.f32 %v584, %v4597
    %v4599 = vpop.f32.mrb[0].mxu0
    %v4600 = vpop.f32.mrb[0].mxu0
    %v4601 = vadd.f32 %v584, %v4600
    %v4602 = vpop.f32.mrb[0].mxu0
    %4603 = vmatprep.mubr.bf16.mxu0 0
    %4604 = vmatmul.mubr.bf16.gmra.mrb[0].mxu0 %v2639
    %v4605 = vpop.f32.mrb[0].mxu0
    %v4606 = vadd.f32 %v584, %v4605
    %v4607 = vpop.f32.mrb[0].mxu0
    %v4608 = vpop.f32.mrb[0].mxu0
    %v4609 = vadd.f32 %v584, %v4608
    %v4610 = vpop.f32.mrb[0].mxu0
    %4611 = vmatprep.mubr.bf16.mxu0 0
    %4612 = vmatmul.mubr.bf16.gmra.mrb[0].mxu0 %v2642
    %v4613 = vpop.f32.mrb[0].mxu0
    %v4614 = vadd.f32 %v584, %v4613
    %v4615 = vpop.f32.mrb[0].mxu0
    %v4616 = vpop.f32.mrb[0].mxu0
    %v4617 = vadd.f32 %v584, %v4616
    %v4618 = vpop.f32.mrb[0].mxu0
    %4619 = vmatprep.mubr.bf16.mxu0 0
    %4620 = vmatmul.mubr.bf16.gmra.mrb[0].mxu0 %v2645
    %v4621 = vpop.f32.mrb[0].mxu0
    %v4622 = vadd.f32 %v584, %v4621
    %v4623 = vpop.f32.mrb[0].mxu0
    %v4624 = vpop.f32.mrb[0].mxu0
    %v4625 = vadd.f32 %v584, %v4624
    %v4626 = vpop.f32.mrb[0].mxu0
    %4627 = vmatprep.mubr.bf16.mxu0 0
    %4628 = vmatmul.mubr.bf16.gmra.mrb[0].mxu0 %v2648
    %v4629 = vpop.f32.mrb[0].mxu0
    %v4630 = vadd.f32 %v584, %v4629
    %v4631 = vpop.f32.mrb[0].mxu0
    %v4632 = vpop.f32.mrb[0].mxu0
    %v4633 = vadd.f32 %v584, %v4632
    %v4634 = vpop.f32.mrb[0].mxu0
    %4635 = vmatprep.mubr.bf16.mxu0 0
    %4636 = vmatmul.mubr.bf16.gmra.mrb[0].mxu0 %v2651
    %v4637 = vpop.f32.mrb[0].mxu0
    %v4638 = vadd.f32 %v584, %v4637
    %v4639 = vpop.f32.mrb[0].mxu0
    %v4640 = vpop.f32.mrb[0].mxu0
    %v4641 = vadd.f32 %v584, %v4640
    %v4642 = vpop.f32.mrb[0].mxu0
    %4643 = vmatprep.mubr.bf16.mxu0 0
    %4644 = vmatmul.mubr.bf16.gmra.mrb[0].mxu0 %v2654
    %v4645 = vpop.f32.mrb[0].mxu0
    %v4646 = vadd.f32 %v584, %v4645
    %v4647 = vpop.f32.mrb[0].mxu0
    %v4648 = vpop.f32.mrb[0].mxu0
    %v4649 = vadd.f32 %v584, %v4648
    %v4650 = vpop.f32.mrb[0].mxu0
    %4651 = vmatprep.mubr.bf16.mxu0 0
    %4652 = vmatmul.mubr.bf16.gmra.mrb[0].mxu0 %v2657
    %v4653 = vpop.f32.mrb[0].mxu0
    %v4654 = vadd.f32 %v584, %v4653
    %v4655 = vpop.f32.mrb[0].mxu0
    %v4656 = vpop.f32.mrb[0].mxu0
    %v4657 = vadd.f32 %v584, %v4656
    %v4658 = vpop.f32.mrb[0].mxu0
    %4659 = vmatprep.mubr.bf16.mxu0 0
    %4660 = vmatmul.mubr.bf16.gmra.mrb[0].mxu0 %v2660
    %v4661 = vpop.f32.mrb[0].mxu0
    %v4662 = vadd.f32 %v584, %v4661
    %v4663 = vpop.f32.mrb[0].mxu0
    %v4664 = vpop.f32.mrb[0].mxu0
    %v4665 = vadd.f32 %v584, %v4664
    %v4666 = vpop.f32.mrb[0].mxu0
    %4667 = vmatprep.mubr.bf16.mxu0 0
    %4668 = vmatmul.mubr.bf16.gmra.mrb[0].mxu0 %v2663
    %v4669 = vpop.f32.mrb[0].mxu0
    %v4670 = vadd.f32 %v584, %v4669
    %v4671 = vpop.f32.mrb[0].mxu0
    %v4672 = vpop.f32.mrb[0].mxu0
    %v4673 = vadd.f32 %v584, %v4672
    %v4674 = vpop.f32.mrb[0].mxu0
    %4675 = vmatprep.mubr.bf16.mxu0 0
    %4676 = vmatmul.mubr.bf16.gmra.mrb[0].mxu0 %v2666
    %v4677 = vpop.f32.mrb[0].mxu0
    %v4678 = vadd.f32 %v584, %v4677
    %v4679 = vpop.f32.mrb[0].mxu0
    %v4680 = vpop.f32.mrb[0].mxu0
    %v4681 = vadd.f32 %v584, %v4680
    %v4682 = vpop.f32.mrb[0].mxu0
    %4683 = vmatprep.mubr.bf16.mxu0 0
    %4684 = vmatmul.mubr.bf16.gmra.mrb[0].mxu0 %v2669
    %v4685 = vpop.f32.mrb[0].mxu0
    %v4686 = vadd.f32 %v584, %v4685
    %v4687 = vpop.f32.mrb[0].mxu0
    %v4688 = vpop.f32.mrb[0].mxu0
    %v4689 = vadd.f32 %v584, %v4688
    %v4690 = vpop.f32.mrb[0].mxu0
    %4691 = vmatprep.mubr.bf16.mxu0 0
    %4692 = vmatmul.mubr.bf16.gmra.mrb[0].mxu0 %v2672
    %v4693 = vpop.f32.mrb[0].mxu0
    %v4694 = vadd.f32 %v584, %v4693
    %v4695 = vpop.f32.mrb[0].mxu0
    %v4696 = vpop.f32.mrb[0].mxu0
    %v4697 = vadd.f32 %v584, %v4696
    %v4698 = vpop.f32.mrb[0].mxu0
    %4699 = vmatprep.mubr.bf16.mxu0 0
    %4700 = vmatmul.mubr.bf16.gmra.mrb[0].mxu0 %v2675
    %v4701 = vpop.f32.mrb[0].mxu0
    %v4702 = vadd.f32 %v584, %v4701
    %v4703 = vpop.f32.mrb[0].mxu0
    %v4704 = vpop.f32.mrb[0].mxu0
    %v4705 = vadd.f32 %v584, %v4704
    %v4706 = vpop.f32.mrb[0].mxu0
    %4707 = vmatprep.mubr.bf16.mxu0 0
    %4708 = vmatmul.mubr.bf16.gmra.mrb[0].mxu0 %v2678
    %v4709 = vpop.f32.mrb[0].mxu0
    %v4710 = vadd.f32 %v584, %v4709
    %v4711 = vpop.f32.mrb[0].mxu0
    %v4712 = vpop.f32.mrb[0].mxu0
    %v4713 = vadd.f32 %v584, %v4712
    %v4714 = vpop.f32.mrb[0].mxu0
    %4715 = vmatprep.mubr.bf16.mxu0 0
    %4716 = vmatmul.mubr.bf16.gmra.mrb[0].mxu0 %v2681
    %v4717 = vpop.f32.mrb[0].mxu0
    %v4718 = vadd.f32 %v584, %v4717
    %v4719 = vpop.f32.mrb[0].mxu0
    %v4720 = vpop.f32.mrb[0].mxu0
    %v4721 = vadd.f32 %v584, %v4720
    %v4722 = vpop.f32.mrb[0].mxu0
    %4723 = vmatprep.mubr.bf16.mxu0 0
    %4724 = vmatmul.mubr.bf16.gmra.mrb[0].mxu0 %v2684
    %v4725 = vpop.f32.mrb[0].mxu0
    %v4726 = vadd.f32 %v584, %v4725
    %v4727 = vpop.f32.mrb[0].mxu0
    %v4728 = vpop.f32.mrb[0].mxu0
    %v4729 = vadd.f32 %v584, %v4728
    %v4730 = vpop.f32.mrb[0].mxu0
    %4731 = vmatprep.mubr.bf16.mxu0 0
    %4732 = vmatmul.mubr.bf16.gmra.mrb[0].mxu0 %v2687
    %v4733 = vpop.f32.mrb[0].mxu0
    %v4734 = vadd.f32 %v584, %v4733
    %v4735 = vpop.f32.mrb[0].mxu0
    %v4736 = vpop.f32.mrb[0].mxu0
    %v4737 = vadd.f32 %v584, %v4736
    %v4738 = vpop.f32.mrb[0].mxu0
    %4739 = vmatprep.mubr.bf16.mxu0 0
    %4740 = vmatmul.mubr.bf16.gmra.mrb[0].mxu0 %v2690
    %v4741 = vpop.f32.mrb[0].mxu0
    %v4742 = vadd.f32 %v584, %v4741
    %v4743 = vpop.f32.mrb[0].mxu0
    %v4744 = vpop.f32.mrb[0].mxu0
    %v4745 = vadd.f32 %v584, %v4744
    %v4746 = vpop.f32.mrb[0].mxu0
    %4747 = vmatprep.mubr.bf16.mxu0 0
    %4748 = vmatmul.mubr.bf16.gmra.mrb[0].mxu0 %v2693
    %v4749 = vpop.f32.mrb[0].mxu0
    %v4750 = vadd.f32 %v584, %v4749
    %v4751 = vpop.f32.mrb[0].mxu0
    %v4752 = vpop.f32.mrb[0].mxu0
    %v4753 = vadd.f32 %v584, %v4752
    %v4754 = vpop.f32.mrb[0].mxu0
    %4755 = vmatprep.mubr.bf16.mxu0 0
    %4756 = vmatmul.mubr.bf16.gmra.mrb[0].mxu0 %v2696
    %v4757 = vpop.f32.mrb[0].mxu0
    %v4758 = vadd.f32 %v584, %v4757
    %v4759 = vpop.f32.mrb[0].mxu0
    %v4760 = vpop.f32.mrb[0].mxu0
    %v4761 = vadd.f32 %v584, %v4760
    %v4762 = vpop.f32.mrb[0].mxu0
    %4763 = vmatprep.mubr.bf16.mxu0 0
    %4764 = vmatmul.mubr.bf16.gmra.mrb[0].mxu0 %v2699
    %v4765 = vpop.f32.mrb[0].mxu0
    %v4766 = vadd.f32 %v584, %v4765
    %v4767 = vpop.f32.mrb[0].mxu0
    %v4768 = vpop.f32.mrb[0].mxu0
    %v4769 = vadd.f32 %v584, %v4768
    %v4770 = vpop.f32.mrb[0].mxu0
    %4771 = vmatprep.mubr.bf16.mxu0 0
    %4772 = vmatmul.mubr.bf16.gmra.mrb[0].mxu0 %v2702
    %v4773 = vpop.f32.mrb[0].mxu0
    %v4774 = vadd.f32 %v584, %v4773
    %v4775 = vpop.f32.mrb[0].mxu0
    %v4776 = vpop.f32.mrb[0].mxu0
    %v4777 = vadd.f32 %v584, %v4776
    %v4778 = vpop.f32.mrb[0].mxu0
    %4779 = vmatprep.mubr.bf16.mxu0 0
    %4780 = vmatmul.mubr.bf16.gmra.mrb[0].mxu0 %v2705
    %v4781 = vpop.f32.mrb[0].mxu0
    %v4782 = vadd.f32 %v584, %v4781
    %v4783 = vpop.f32.mrb[0].mxu0
    %v4784 = vpop.f32.mrb[0].mxu0
    %v4785 = vadd.f32 %v584, %v4784
    %v4786 = vpop.f32.mrb[0].mxu0
    %4787 = vmatprep.mubr.bf16.mxu0 0
    %4788 = vmatmul.mubr.bf16.gmra.mrb[0].mxu0 %v2708
    %v4789 = vpop.f32.mrb[0].mxu0
    %v4790 = vadd.f32 %v584, %v4789
    %v4791 = vpop.f32.mrb[0].mxu0
    %v4792 = vpop.f32.mrb[0].mxu0
    %v4793 = vadd.f32 %v584, %v4792
    %v4794 = vpop.f32.mrb[0].mxu0
    %4795 = vmatprep.mubr.bf16.mxu0 0
    %4796 = vmatmul.mubr.bf16.gmra.mrb[0].mxu0 %v2711
    %v4797 = vpop.f32.mrb[0].mxu0
    %v4798 = vadd.f32 %v584, %v4797
    %v4799 = vpop.f32.mrb[0].mxu0
    %v4800 = vpop.f32.mrb[0].mxu0
    %v4801 = vadd.f32 %v584, %v4800
    %v4802 = vpop.f32.mrb[0].mxu0
    %4803 = vmatprep.mubr.bf16.mxu0 0
    %4804 = vmatmul.mubr.bf16.gmra.mrb[0].mxu0 %v2714
    %v4805 = vpop.f32.mrb[0].mxu0
    %v4806 = vadd.f32 %v584, %v4805
    %v4807 = vpop.f32.mrb[0].mxu0
    %v4808 = vpop.f32.mrb[0].mxu0
    %v4809 = vadd.f32 %v584, %v4808
    %v4810 = vpop.f32.mrb[0].mxu0
    %4811 = vmatprep.mubr.bf16.mxu0 0
    %4812 = vmatmul.mubr.bf16.gmra.mrb[0].mxu0 %v2717
    %v4813 = vpop.f32.mrb[0].mxu0
    %v4814 = vadd.f32 %v584, %v4813
    %v4815 = vpop.f32.mrb[0].mxu0
    %v4816 = vpop.f32.mrb[0].mxu0
    %v4817 = vadd.f32 %v584, %v4816
    %v4818 = vpop.f32.mrb[0].mxu0
    %4819 = vmatprep.mubr.bf16.mxu0 0
    %4820 = vmatmul.mubr.bf16.gmra.mrb[0].mxu0 %v2720
    %v4821 = vpop.f32.mrb[0].mxu0
    %v4822 = vadd.f32 %v584, %v4821
    %v4823 = vpop.f32.mrb[0].mxu0
    %v4824 = vpop.f32.mrb[0].mxu0
    %v4825 = vadd.f32 %v584, %v4824
    %v4826 = vpop.f32.mrb[0].mxu0
    %4827 = vmatprep.mubr.bf16.mxu0 0
    %4828 = vmatmul.mubr.bf16.gmra.mrb[0].mxu0 %v2723
    %v4829 = vpop.f32.mrb[0].mxu0
    %v4830 = vadd.f32 %v584, %v4829
    %v4831 = vpop.f32.mrb[0].mxu0
    %v4832 = vpop.f32.mrb[0].mxu0
    %v4833 = vadd.f32 %v584, %v4832
    %v4834 = vpop.f32.mrb[0].mxu0
    %4835 = vmatprep.mubr.bf16.mxu0 0
    %4836 = vmatmul.mubr.bf16.gmra.mrb[0].mxu0 %v2726
    %v4837 = vpop.f32.mrb[0].mxu0
    %v4838 = vadd.f32 %v584, %v4837
    %v4839 = vpop.f32.mrb[0].mxu0
    %v4840 = vpop.f32.mrb[0].mxu0
    %v4841 = vadd.f32 %v584, %v4840
    %v4842 = vpop.f32.mrb[0].mxu0
    %4843 = vmatprep.mubr.bf16.mxu0 0
    %4844 = vmatmul.mubr.bf16.gmra.mrb[0].mxu0 %v2729
    %v4845 = vpop.f32.mrb[0].mxu0
    %v4846 = vadd.f32 %v584, %v4845
    %v4847 = vpop.f32.mrb[0].mxu0
    %v4848 = vpop.f32.mrb[0].mxu0
    %v4849 = vadd.f32 %v584, %v4848
    %v4850 = vpop.f32.mrb[0].mxu0
    %4851 = vmatprep.mubr.bf16.mxu0 0
    %4852 = vmatmul.mubr.bf16.gmra.mrb[0].mxu0 %v2732
    %v4853 = vpop.f32.mrb[0].mxu0
    %v4854 = vadd.f32 %v584, %v4853
    %v4855 = vpop.f32.mrb[0].mxu0
    %v4856 = vpop.f32.mrb[0].mxu0
    %v4857 = vadd.f32 %v584, %v4856
    %v4858 = vpop.f32.mrb[0].mxu0
    %4859 = vmatprep.mubr.bf16.mxu0 0
    %4860 = vmatmul.mubr.bf16.gmra.mrb[0].mxu0 %v2735
    %v4861 = vpop.f32.mrb[0].mxu0
    %v4862 = vadd.f32 %v584, %v4861
    %v4863 = vpop.f32.mrb[0].mxu0
    %v4864 = vpop.f32.mrb[0].mxu0
    %v4865 = vadd.f32 %v584, %v4864
    %v4866 = vpop.f32.mrb[0].mxu0
    %4867 = vmatprep.mubr.bf16.mxu0 0
    %4868 = vmatmul.mubr.bf16.gmra.mrb[0].mxu0 %v2738
    %v4869 = vpop.f32.mrb[0].mxu0
    %v4870 = vadd.f32 %v584, %v4869
    %v4871 = vpop.f32.mrb[0].mxu0
    %v4872 = vpop.f32.mrb[0].mxu0
    %v4873 = vadd.f32 %v584, %v4872
    %v4874 = vpop.f32.mrb[0].mxu0
    %4875 = vmatprep.mubr.bf16.mxu0 0
    %4876 = vmatmul.mubr.bf16.gmra.mrb[0].mxu0 %v2741
    %v4877 = vpop.f32.mrb[0].mxu0
    %v4878 = vadd.f32 %v584, %v4877
    %v4879 = vpop.f32.mrb[0].mxu0
    %v4880 = vpop.f32.mrb[0].mxu0
    %v4881 = vadd.f32 %v584, %v4880
    %v4882 = vpop.f32.mrb[0].mxu0
    %4883 = vmatprep.mubr.bf16.mxu0 0
    %4884 = vmatmul.mubr.bf16.gmra.mrb[0].mxu0 %v2744
    %v4885 = vpop.f32.mrb[0].mxu0
    %v4886 = vadd.f32 %v584, %v4885
    %v4887 = vpop.f32.mrb[0].mxu0
    %v4888 = vpop.f32.mrb[0].mxu0
    %v4889 = vadd.f32 %v584, %v4888
    %v4890 = vpop.f32.mrb[0].mxu0
    %4891 = vmatprep.mubr.bf16.mxu0 0
    %4892 = vmatmul.mubr.bf16.gmra.mrb[0].mxu0 %v2747
    %v4893 = vpop.f32.mrb[0].mxu0
    %v4894 = vadd.f32 %v584, %v4893
    %v4895 = vpop.f32.mrb[0].mxu0
    %v4896 = vpop.f32.mrb[0].mxu0
    %v4897 = vadd.f32 %v584, %v4896
    %v4898 = vpop.f32.mrb[0].mxu0
    %4899 = vmatprep.mubr.bf16.mxu0 0
    %4900 = vmatmul.mubr.bf16.gmra.mrb[0].mxu0 %v2750
    %v4901 = vpop.f32.mrb[0].mxu0
    %v4902 = vadd.f32 %v584, %v4901
    %v4903 = vpop.f32.mrb[0].mxu0
    %v4904 = vpop.f32.mrb[0].mxu0
    %v4905 = vadd.f32 %v584, %v4904
    %v4906 = vpop.f32.mrb[0].mxu0
    %4907 = vmatprep.mubr.bf16.mxu0 0
    %4908 = vmatmul.mubr.bf16.gmra.mrb[0].mxu0 %v2753
    %v4909 = vpop.f32.mrb[0].mxu0
    %v4910 = vadd.f32 %v584, %v4909
    %v4911 = vpop.f32.mrb[0].mxu0
    %v4912 = vpop.f32.mrb[0].mxu0
    %v4913 = vadd.f32 %v584, %v4912
    %v4914 = vpop.f32.mrb[0].mxu0
    %4915 = vmatprep.mubr.bf16.mxu0 0
    %4916 = vmatmul.mubr.bf16.gmra.mrb[0].mxu0 %v2756
    %v4917 = vpop.f32.mrb[0].mxu0
    %v4918 = vadd.f32 %v584, %v4917
    %v4919 = vpop.f32.mrb[0].mxu0
    %v4920 = vpop.f32.mrb[0].mxu0
    %v4921 = vadd.f32 %v584, %v4920
    %v4922 = vpop.f32.mrb[0].mxu0
    %4923 = vmatprep.mubr.bf16.mxu0 0
    %4924 = vmatmul.mubr.bf16.gmra.mrb[0].mxu0 %v2759
    %v4925 = vpop.f32.mrb[0].mxu0
    %v4926 = vadd.f32 %v584, %v4925
    %v4927 = vpop.f32.mrb[0].mxu0
    %v4928 = vpop.f32.mrb[0].mxu0
    %v4929 = vadd.f32 %v584, %v4928
    %v4930 = vpop.f32.mrb[0].mxu0
    %4931 = vmatprep.mubr.bf16.mxu0 0
    %4932 = vmatmul.mubr.bf16.gmra.mrb[0].mxu0 %v2762
    %v4933 = vpop.f32.mrb[0].mxu0
    %v4934 = vadd.f32 %v584, %v4933
    %v4935 = vpop.f32.mrb[0].mxu0
    %v4936 = vpop.f32.mrb[0].mxu0
    %v4937 = vadd.f32 %v584, %v4936
    %v4938 = vpop.f32.mrb[0].mxu0
    %4939 = vmatprep.mubr.bf16.mxu0 0
    %4940 = vmatmul.mubr.bf16.gmra.mrb[0].mxu0 %v2765
    %v4941 = vpop.f32.mrb[0].mxu0
    %v4942 = vadd.f32 %v584, %v4941
    %v4943 = vpop.f32.mrb[0].mxu0
    %v4944 = vpop.f32.mrb[0].mxu0
    %v4945 = vadd.f32 %v584, %v4944
    %v4946 = vpop.f32.mrb[0].mxu0
    %4947 = vmatprep.mubr.bf16.mxu0 0
    %4948 = vmatmul.mubr.bf16.gmra.mrb[0].mxu0 %v2768
    %v4949 = vpop.f32.mrb[0].mxu0
    %v4950 = vadd.f32 %v584, %v4949
    %v4951 = vpop.f32.mrb[0].mxu0
    %v4952 = vpop.f32.mrb[0].mxu0
    %v4953 = vadd.f32 %v584, %v4952
    %v4954 = vpop.f32.mrb[0].mxu0
    %4955 = vmatprep.mubr.bf16.mxu0 0
    %4956 = vmatmul.mubr.bf16.gmra.mrb[0].mxu0 %v2771
    %v4957 = vpop.f32.mrb[0].mxu0
    %v4958 = vadd.f32 %v584, %v4957
    %v4959 = vpop.f32.mrb[0].mxu0
    %v4960 = vpop.f32.mrb[0].mxu0
    %v4961 = vadd.f32 %v584, %v4960
    %v4962 = vpop.f32.mrb[0].mxu0
    %4963 = vmatprep.mubr.bf16.mxu0 0
    %4964 = vmatmul.mubr.bf16.gmra.mrb[0].mxu0 %v2774
    %v4965 = vpop.f32.mrb[0].mxu0
    %v4966 = vadd.f32 %v584, %v4965
    %v4967 = vpop.f32.mrb[0].mxu0
    %v4968 = vpop.f32.mrb[0].mxu0
    %v4969 = vadd.f32 %v584, %v4968
    %v4970 = vpop.f32.mrb[0].mxu0
    %4971 = vmatprep.mubr.bf16.mxu0 0
    %4972 = vmatmul.mubr.bf16.gmra.mrb[0].mxu0 %v2777
    %v4973 = vpop.f32.mrb[0].mxu0
    %v4974 = vadd.f32 %v584, %v4973
    %v4975 = vpop.f32.mrb[0].mxu0
    %v4976 = vpop.f32.mrb[0].mxu0
    %v4977 = vadd.f32 %v584, %v4976
    %v4978 = vpop.f32.mrb[0].mxu0
    %4979 = vmatprep.mubr.bf16.mxu0 0
    %4980 = vmatmul.mubr.bf16.gmra.mrb[0].mxu0 %v2780
    %v4981 = vpop.f32.mrb[0].mxu0
    %v4982 = vadd.f32 %v584, %v4981
    %v4983 = vpop.f32.mrb[0].mxu0
    %v4984 = vpop.f32.mrb[0].mxu0
    %v4985 = vadd.f32 %v584, %v4984
    %v4986 = vpop.f32.mrb[0].mxu0
    %4987 = vmatprep.mubr.bf16.mxu0 0
    %4988 = vmatmul.mubr.bf16.gmra.mrb[0].mxu0 %v2783
    %v4989 = vpop.f32.mrb[0].mxu0
    %v4990 = vadd.f32 %v584, %v4989
    %v4991 = vpop.f32.mrb[0].mxu0
    %v4992 = vpop.f32.mrb[0].mxu0
    %v4993 = vadd.f32 %v584, %v4992
    %v4994 = vpop.f32.mrb[0].mxu0
    %4995 = vmatprep.mubr.bf16.mxu0 0
    %4996 = vmatmul.mubr.bf16.gmra.mrb[0].mxu0 %v2786
    %v4997 = vpop.f32.mrb[0].mxu0
    %v4998 = vadd.f32 %v584, %v4997
    %v4999 = vpop.f32.mrb[0].mxu0
    %v5000 = vpop.f32.mrb[0].mxu0
    %v5001 = vadd.f32 %v584, %v5000
    %v5002 = vpop.f32.mrb[0].mxu0
    %5003 = vmatprep.mubr.bf16.mxu0 0
    %5004 = vmatmul.mubr.bf16.gmra.mrb[0].mxu0 %v2789
    %v5005 = vpop.f32.mrb[0].mxu0
    %v5006 = vadd.f32 %v584, %v5005
    %v5007 = vpop.f32.mrb[0].mxu0
    %v5008 = vpop.f32.mrb[0].mxu0
    %v5009 = vadd.f32 %v584, %v5008
    %v5010 = vpop.f32.mrb[0].mxu0
    %5011 = vmatprep.mubr.bf16.mxu0 0
    %5012 = vmatmul.mubr.bf16.gmra.mrb[0].mxu0 %v2792
    %v5013 = vpop.f32.mrb[0].mxu0
    %v5014 = vadd.f32 %v584, %v5013
    %v5015 = vpop.f32.mrb[0].mxu0
    %v5016 = vpop.f32.mrb[0].mxu0
    %v5017 = vadd.f32 %v584, %v5016
    %v5018 = vpop.f32.mrb[0].mxu0
    %5019 = vmatprep.mubr.bf16.mxu0 0
    %5020 = vmatmul.mubr.bf16.gmra.mrb[0].mxu0 %v2795
    %v5021 = vpop.f32.mrb[0].mxu0
    %v5022 = vadd.f32 %v584, %v5021
    %v5023 = vpop.f32.mrb[0].mxu0
    %v5024 = vpop.f32.mrb[0].mxu0
    %v5025 = vadd.f32 %v584, %v5024
    %v5026 = vpop.f32.mrb[0].mxu0
    %5027 = vmatprep.mubr.bf16.mxu0 0
    %5028 = vmatmul.mubr.bf16.gmra.mrb[0].mxu0 %v2798
    %v5029 = vpop.f32.mrb[0].mxu0
    %v5030 = vadd.f32 %v584, %v5029
    %v5031 = vpop.f32.mrb[0].mxu0
    %v5032 = vpop.f32.mrb[0].mxu0
    %v5033 = vadd.f32 %v584, %v5032
    %v5034 = vpop.f32.mrb[0].mxu0
    %5035 = vmatprep.mubr.bf16.mxu0 0
    %5036 = vmatmul.mubr.bf16.gmra.mrb[0].mxu0 %v2801
    %v5037 = vpop.f32.mrb[0].mxu0
    %v5038 = vadd.f32 %v584, %v5037
    %v5039 = vpop.f32.mrb[0].mxu0
    %v5040 = vpop.f32.mrb[0].mxu0
    %v5041 = vadd.f32 %v584, %v5040
    %v5042 = vpop.f32.mrb[0].mxu0
    %5043 = vmatprep.mubr.bf16.mxu0 0
    %5044 = vmatmul.mubr.bf16.gmra.mrb[0].mxu0 %v2804
    %v5045 = vpop.f32.mrb[0].mxu0
    %v5046 = vadd.f32 %v584, %v5045
    %v5047 = vpop.f32.mrb[0].mxu0
    %v5048 = vpop.f32.mrb[0].mxu0
    %v5049 = vadd.f32 %v584, %v5048
    %v5050 = vpop.f32.mrb[0].mxu0
    %5051 = vmatprep.mubr.bf16.mxu0 0
    %5052 = vmatmul.mubr.bf16.gmra.mrb[0].mxu0 %v2807
    %v5053 = vpop.f32.mrb[0].mxu0
    %v5054 = vadd.f32 %v584, %v5053
    %v5055 = vpop.f32.mrb[0].mxu0
    %v5056 = vpop.f32.mrb[0].mxu0
    %v5057 = vadd.f32 %v584, %v5056
    %v5058 = vpop.f32.mrb[0].mxu0
    %5059 = vmatprep.mubr.bf16.mxu0 0
    %5060 = vmatmul.mubr.bf16.gmra.mrb[0].mxu0 %v2810
    %v5061 = vpop.f32.mrb[0].mxu0
    %v5062 = vadd.f32 %v584, %v5061
    %v5063 = vpop.f32.mrb[0].mxu0
    %v5064 = vpop.f32.mrb[0].mxu0
    %v5065 = vpop.f32.mrb[0].mxu0
    %5066 = vdwg.mxu0
    %vm5067 = vcmp.ge.f32.partialorder %v2854, 0.0
    %vm5068 = vcmp.ge.f32.partialorder %v2857, 0.0
    %vm5069 = vcmp.ge.f32.partialorder %v2862, 0.0
    %vm5070 = vcmp.ge.f32.partialorder %v2865, 0.0
    %vm5071 = vcmp.ge.f32.partialorder %v2870, 0.0
    %vm5072 = vcmp.ge.f32.partialorder %v2873, 0.0
    %vm5073 = vcmp.ge.f32.partialorder %v2878, 0.0
    %vm5074 = vcmp.ge.f32.partialorder %v2881, 0.0
    %vm5075 = vcmp.ge.f32.partialorder %v2886, 0.0
    %vm5076 = vcmp.ge.f32.partialorder %v2889, 0.0
    %vm5077 = vcmp.ge.f32.partialorder %v2894, 0.0
    %vm5078 = vcmp.ge.f32.partialorder %v2897, 0.0
    %vm5079 = vcmp.ge.f32.partialorder %v2902, 0.0
    %vm5080 = vcmp.ge.f32.partialorder %v2905, 0.0
    %vm5081 = vcmp.ge.f32.partialorder %v2910, 0.0
    %vm5082 = vcmp.ge.f32.partialorder %v2913, 0.0
    %vm5083 = vcmp.ge.f32.partialorder %v2918, 0.0
    %vm5084 = vcmp.ge.f32.partialorder %v2921, 0.0
    %vm5085 = vcmp.ge.f32.partialorder %v2926, 0.0
    %vm5086 = vcmp.ge.f32.partialorder %v2929, 0.0
    %vm5087 = vcmp.ge.f32.partialorder %v2934, 0.0
    %vm5088 = vcmp.ge.f32.partialorder %v2937, 0.0
    %vm5089 = vcmp.ge.f32.partialorder %v2942, 0.0
    %vm5090 = vcmp.ge.f32.partialorder %v2945, 0.0
    %vm5091 = vcmp.ge.f32.partialorder %v2950, 0.0
    %vm5092 = vcmp.ge.f32.partialorder %v2953, 0.0
    %vm5093 = vcmp.ge.f32.partialorder %v2958, 0.0
    %vm5094 = vcmp.ge.f32.partialorder %v2961, 0.0
    %vm5095 = vcmp.ge.f32.partialorder %v2966, 0.0
    %vm5096 = vcmp.ge.f32.partialorder %v2969, 0.0
    %vm5097 = vcmp.ge.f32.partialorder %v2974, 0.0
    %vm5098 = vcmp.ge.f32.partialorder %v2977, 0.0
    %vm5099 = vcmp.ge.f32.partialorder %v2982, 0.0
    %vm5100 = vcmp.ge.f32.partialorder %v2985, 0.0
    %vm5101 = vcmp.ge.f32.partialorder %v2990, 0.0
    %vm5102 = vcmp.ge.f32.partialorder %v2993, 0.0
    %vm5103 = vcmp.ge.f32.partialorder %v2998, 0.0
    %vm5104 = vcmp.ge.f32.partialorder %v3001, 0.0
    %vm5105 = vcmp.ge.f32.partialorder %v3006, 0.0
    %vm5106 = vcmp.ge.f32.partialorder %v3009, 0.0
    %vm5107 = vcmp.ge.f32.partialorder %v3014, 0.0
    %vm5108 = vcmp.ge.f32.partialorder %v3017, 0.0
    %vm5109 = vcmp.ge.f32.partialorder %v3022, 0.0
    %vm5110 = vcmp.ge.f32.partialorder %v3025, 0.0
    %vm5111 = vcmp.ge.f32.partialorder %v3030, 0.0
    %vm5112 = vcmp.ge.f32.partialorder %v3033, 0.0
    %vm5113 = vcmp.ge.f32.partialorder %v3038, 0.0
    %vm5114 = vcmp.ge.f32.partialorder %v3041, 0.0
    %vm5115 = vcmp.ge.f32.partialorder %v3046, 0.0
    %vm5116 = vcmp.ge.f32.partialorder %v3049, 0.0
    %vm5117 = vcmp.ge.f32.partialorder %v3054, 0.0
    %vm5118 = vcmp.ge.f32.partialorder %v3057, 0.0
    %vm5119 = vcmp.ge.f32.partialorder %v3062, 0.0
    %vm5120 = vcmp.ge.f32.partialorder %v3065, 0.0
    %vm5121 = vcmp.ge.f32.partialorder %v3070, 0.0
    %vm5122 = vcmp.ge.f32.partialorder %v3073, 0.0
    %vm5123 = vcmp.ge.f32.partialorder %v3078, 0.0
    %vm5124 = vcmp.ge.f32.partialorder %v3081, 0.0
    %vm5125 = vcmp.ge.f32.partialorder %v3086, 0.0
    %vm5126 = vcmp.ge.f32.partialorder %v3089, 0.0
    %vm5127 = vcmp.ge.f32.partialorder %v3094, 0.0
    %vm5128 = vcmp.ge.f32.partialorder %v3097, 0.0
    %vm5129 = vcmp.ge.f32.partialorder %v3102, 0.0
    %vm5130 = vcmp.ge.f32.partialorder %v3105, 0.0
    %vm5131 = vcmp.ge.f32.partialorder %v3110, 0.0
    %vm5132 = vcmp.ge.f32.partialorder %v3113, 0.0
    %vm5133 = vcmp.ge.f32.partialorder %v3118, 0.0
    %vm5134 = vcmp.ge.f32.partialorder %v3121, 0.0
    %vm5135 = vcmp.ge.f32.partialorder %v3126, 0.0
    %vm5136 = vcmp.ge.f32.partialorder %v3129, 0.0
    %vm5137 = vcmp.ge.f32.partialorder %v3134, 0.0
    %vm5138 = vcmp.ge.f32.partialorder %v3137, 0.0
    %vm5139 = vcmp.ge.f32.partialorder %v3142, 0.0
    %vm5140 = vcmp.ge.f32.partialorder %v3145, 0.0
    %vm5141 = vcmp.ge.f32.partialorder %v3150, 0.0
    %vm5142 = vcmp.ge.f32.partialorder %v3153, 0.0
    %vm5143 = vcmp.ge.f32.partialorder %v3158, 0.0
    %vm5144 = vcmp.ge.f32.partialorder %v3161, 0.0
    %vm5145 = vcmp.ge.f32.partialorder %v3166, 0.0
    %vm5146 = vcmp.ge.f32.partialorder %v3169, 0.0
    %vm5147 = vcmp.ge.f32.partialorder %v3174, 0.0
    %vm5148 = vcmp.ge.f32.partialorder %v3177, 0.0
    %vm5149 = vcmp.ge.f32.partialorder %v3182, 0.0
    %vm5150 = vcmp.ge.f32.partialorder %v3185, 0.0
    %vm5151 = vcmp.ge.f32.partialorder %v3190, 0.0
    %vm5152 = vcmp.ge.f32.partialorder %v3193, 0.0
    %vm5153 = vcmp.ge.f32.partialorder %v3198, 0.0
    %vm5154 = vcmp.ge.f32.partialorder %v3201, 0.0
    %vm5155 = vcmp.ge.f32.partialorder %v3206, 0.0
    %vm5156 = vcmp.ge.f32.partialorder %v3209, 0.0
    %vm5157 = vcmp.ge.f32.partialorder %v3214, 0.0
    %vm5158 = vcmp.ge.f32.partialorder %v3217, 0.0
    %vm5159 = vcmp.ge.f32.partialorder %v3222, 0.0
    %vm5160 = vcmp.ge.f32.partialorder %v3225, 0.0
    %vm5161 = vcmp.ge.f32.partialorder %v3230, 0.0
    %vm5162 = vcmp.ge.f32.partialorder %v3233, 0.0
    %vm5163 = vcmp.ge.f32.partialorder %v3238, 0.0
    %vm5164 = vcmp.ge.f32.partialorder %v3241, 0.0
    %vm5165 = vcmp.ge.f32.partialorder %v3246, 0.0
    %vm5166 = vcmp.ge.f32.partialorder %v3249, 0.0
    %vm5167 = vcmp.ge.f32.partialorder %v3254, 0.0
    %vm5168 = vcmp.ge.f32.partialorder %v3257, 0.0
    %vm5169 = vcmp.ge.f32.partialorder %v3262, 0.0
    %vm5170 = vcmp.ge.f32.partialorder %v3265, 0.0
    %vm5171 = vcmp.ge.f32.partialorder %v3270, 0.0
    %vm5172 = vcmp.ge.f32.partialorder %v3273, 0.0
    %vm5173 = vcmp.ge.f32.partialorder %v3278, 0.0
    %vm5174 = vcmp.ge.f32.partialorder %v3281, 0.0
    %vm5175 = vcmp.ge.f32.partialorder %v3286, 0.0
    %vm5176 = vcmp.ge.f32.partialorder %v3289, 0.0
    %vm5177 = vcmp.ge.f32.partialorder %v3294, 0.0
    %vm5178 = vcmp.ge.f32.partialorder %v3297, 0.0
    %vm5179 = vcmp.ge.f32.partialorder %v3302, 0.0
    %vm5180 = vcmp.ge.f32.partialorder %v3305, 0.0
    %vm5181 = vcmp.ge.f32.partialorder %v3310, 0.0
    %vm5182 = vcmp.ge.f32.partialorder %v3313, 0.0
    %vm5183 = vcmp.ge.f32.partialorder %v3318, 0.0
    %vm5184 = vcmp.ge.f32.partialorder %v3321, 0.0
    %vm5185 = vcmp.ge.f32.partialorder %v3326, 0.0
    %vm5186 = vcmp.ge.f32.partialorder %v3329, 0.0
    %vm5187 = vcmp.ge.f32.partialorder %v3334, 0.0
    %vm5188 = vcmp.ge.f32.partialorder %v3337, 0.0
    %vm5189 = vcmp.ge.f32.partialorder %v3342, 0.0
    %vm5190 = vcmp.ge.f32.partialorder %v3345, 0.0
    %vm5191 = vcmp.ge.f32.partialorder %v3350, 0.0
    %vm5192 = vcmp.ge.f32.partialorder %v3353, 0.0
    %vm5193 = vcmp.ge.f32.partialorder %v3358, 0.0
    %vm5194 = vcmp.ge.f32.partialorder %v3361, 0.0
    %vm5195 = vcmp.ge.f32.partialorder %v3366, 0.0
    %vm5196 = vcmp.ge.f32.partialorder %v3369, 0.0
    %vm5197 = vcmp.ge.f32.partialorder %v3374, 0.0
    %vm5198 = vcmp.ge.f32.partialorder %v3377, 0.0
    %vm5199 = vcmp.ge.f32.partialorder %v3382, 0.0
    %vm5200 = vcmp.ge.f32.partialorder %v3385, 0.0
    %vm5201 = vcmp.ge.f32.partialorder %v3390, 0.0
    %vm5202 = vcmp.ge.f32.partialorder %v3393, 0.0
    %vm5203 = vcmp.ge.f32.partialorder %v3398, 0.0
    %vm5204 = vcmp.ge.f32.partialorder %v3401, 0.0
    %vm5205 = vcmp.ge.f32.partialorder %v3406, 0.0
    %vm5206 = vcmp.ge.f32.partialorder %v3409, 0.0
    %vm5207 = vcmp.ge.f32.partialorder %v3414, 0.0
    %vm5208 = vcmp.ge.f32.partialorder %v3417, 0.0
    %vm5209 = vcmp.ge.f32.partialorder %v3422, 0.0
    %vm5210 = vcmp.ge.f32.partialorder %v3425, 0.0
    %vm5211 = vcmp.ge.f32.partialorder %v3430, 0.0
    %vm5212 = vcmp.ge.f32.partialorder %v3433, 0.0
    %vm5213 = vcmp.ge.f32.partialorder %v3438, 0.0
    %vm5214 = vcmp.ge.f32.partialorder %v3441, 0.0
    %vm5215 = vcmp.ge.f32.partialorder %v3446, 0.0
    %vm5216 = vcmp.ge.f32.partialorder %v3449, 0.0
    %vm5217 = vcmp.ge.f32.partialorder %v3454, 0.0
    %vm5218 = vcmp.ge.f32.partialorder %v3457, 0.0
    %vm5219 = vcmp.ge.f32.partialorder %v3462, 0.0
    %vm5220 = vcmp.ge.f32.partialorder %v3465, 0.0
    %vm5221 = vcmp.ge.f32.partialorder %v3470, 0.0
    %vm5222 = vcmp.ge.f32.partialorder %v3473, 0.0
    %vm5223 = vcmp.ge.f32.partialorder %v3478, 0.0
    %vm5224 = vcmp.ge.f32.partialorder %v3481, 0.0
    %vm5225 = vcmp.ge.f32.partialorder %v3486, 0.0
    %vm5226 = vcmp.ge.f32.partialorder %v3489, 0.0
    %vm5227 = vcmp.ge.f32.partialorder %v3494, 0.0
    %vm5228 = vcmp.ge.f32.partialorder %v3497, 0.0
    %vm5229 = vcmp.ge.f32.partialorder %v3502, 0.0
    %vm5230 = vcmp.ge.f32.partialorder %v3505, 0.0
    %vm5231 = vcmp.ge.f32.partialorder %v3510, 0.0
    %vm5232 = vcmp.ge.f32.partialorder %v3513, 0.0
    %vm5233 = vcmp.ge.f32.partialorder %v3518, 0.0
    %vm5234 = vcmp.ge.f32.partialorder %v3521, 0.0
    %vm5235 = vcmp.ge.f32.partialorder %v3526, 0.0
    %vm5236 = vcmp.ge.f32.partialorder %v3529, 0.0
    %vm5237 = vcmp.ge.f32.partialorder %v3534, 0.0
    %vm5238 = vcmp.ge.f32.partialorder %v3537, 0.0
    %vm5239 = vcmp.ge.f32.partialorder %v3542, 0.0
    %vm5240 = vcmp.ge.f32.partialorder %v3545, 0.0
    %vm5241 = vcmp.ge.f32.partialorder %v3550, 0.0
    %vm5242 = vcmp.ge.f32.partialorder %v3553, 0.0
    %vm5243 = vcmp.ge.f32.partialorder %v3558, 0.0
    %vm5244 = vcmp.ge.f32.partialorder %v3561, 0.0
    %vm5245 = vcmp.ge.f32.partialorder %v3566, 0.0
    %vm5246 = vcmp.ge.f32.partialorder %v3569, 0.0
    %vm5247 = vcmp.ge.f32.partialorder %v3574, 0.0
    %vm5248 = vcmp.ge.f32.partialorder %v3577, 0.0
    %vm5249 = vcmp.ge.f32.partialorder %v3582, 0.0
    %vm5250 = vcmp.ge.f32.partialorder %v3585, 0.0
    %vm5251 = vcmp.ge.f32.partialorder %v3590, 0.0
    %vm5252 = vcmp.ge.f32.partialorder %v3593, 0.0
    %vm5253 = vcmp.ge.f32.partialorder %v3598, 0.0
    %vm5254 = vcmp.ge.f32.partialorder %v3601, 0.0
    %vm5255 = vcmp.ge.f32.partialorder %v3606, 0.0
    %vm5256 = vcmp.ge.f32.partialorder %v3609, 0.0
    %vm5257 = vcmp.ge.f32.partialorder %v3614, 0.0
    %vm5258 = vcmp.ge.f32.partialorder %v3617, 0.0
    %vm5259 = vcmp.ge.f32.partialorder %v3622, 0.0
    %vm5260 = vcmp.ge.f32.partialorder %v3625, 0.0
    %vm5261 = vcmp.ge.f32.partialorder %v3630, 0.0
    %vm5262 = vcmp.ge.f32.partialorder %v3633, 0.0
    %vm5263 = vcmp.ge.f32.partialorder %v3638, 0.0
    %vm5264 = vcmp.ge.f32.partialorder %v3641, 0.0
    %vm5265 = vcmp.ge.f32.partialorder %v3646, 0.0
    %vm5266 = vcmp.ge.f32.partialorder %v3649, 0.0
    %vm5267 = vcmp.ge.f32.partialorder %v3654, 0.0
    %vm5268 = vcmp.ge.f32.partialorder %v3657, 0.0
    %vm5269 = vcmp.ge.f32.partialorder %v3662, 0.0
    %vm5270 = vcmp.ge.f32.partialorder %v3665, 0.0
    %vm5271 = vcmp.ge.f32.partialorder %v3670, 0.0
    %vm5272 = vcmp.ge.f32.partialorder %v3673, 0.0
    %vm5273 = vcmp.ge.f32.partialorder %v3678, 0.0
    %vm5274 = vcmp.ge.f32.partialorder %v3681, 0.0
    %vm5275 = vcmp.ge.f32.partialorder %v3686, 0.0
    %vm5276 = vcmp.ge.f32.partialorder %v3689, 0.0
    %vm5277 = vcmp.ge.f32.partialorder %v3694, 0.0
    %vm5278 = vcmp.ge.f32.partialorder %v3697, 0.0
    %vm5279 = vcmp.ge.f32.partialorder %v3702, 0.0
    %vm5280 = vcmp.ge.f32.partialorder %v3705, 0.0
    %vm5281 = vcmp.ge.f32.partialorder %v3710, 0.0
    %vm5282 = vcmp.ge.f32.partialorder %v3713, 0.0
    %vm5283 = vcmp.ge.f32.partialorder %v3718, 0.0
    %vm5284 = vcmp.ge.f32.partialorder %v3721, 0.0
    %vm5285 = vcmp.ge.f32.partialorder %v3726, 0.0
    %vm5286 = vcmp.ge.f32.partialorder %v3729, 0.0
    %vm5287 = vcmp.ge.f32.partialorder %v3734, 0.0
    %vm5288 = vcmp.ge.f32.partialorder %v3737, 0.0
    %vm5289 = vcmp.ge.f32.partialorder %v3742, 0.0
    %vm5290 = vcmp.ge.f32.partialorder %v3745, 0.0
    %vm5291 = vcmp.ge.f32.partialorder %v3750, 0.0
    %vm5292 = vcmp.ge.f32.partialorder %v3753, 0.0
    %vm5293 = vcmp.ge.f32.partialorder %v3758, 0.0
    %vm5294 = vcmp.ge.f32.partialorder %v3761, 0.0
    %vm5295 = vcmp.ge.f32.partialorder %v3766, 0.0
    %vm5296 = vcmp.ge.f32.partialorder %v3769, 0.0
    %vm5297 = vcmp.ge.f32.partialorder %v3774, 0.0
    %vm5298 = vcmp.ge.f32.partialorder %v3777, 0.0
    %vm5299 = vcmp.ge.f32.partialorder %v3782, 0.0
    %vm5300 = vcmp.ge.f32.partialorder %v3785, 0.0
    %vm5301 = vcmp.ge.f32.partialorder %v3790, 0.0
    %vm5302 = vcmp.ge.f32.partialorder %v3793, 0.0
    %vm5303 = vcmp.ge.f32.partialorder %v3798, 0.0
    %vm5304 = vcmp.ge.f32.partialorder %v3801, 0.0
    %vm5305 = vcmp.ge.f32.partialorder %v3806, 0.0
    %vm5306 = vcmp.ge.f32.partialorder %v3809, 0.0
    %vm5307 = vcmp.ge.f32.partialorder %v3814, 0.0
    %vm5308 = vcmp.ge.f32.partialorder %v3817, 0.0
    %vm5309 = vcmp.ge.f32.partialorder %v3822, 0.0
    %vm5310 = vcmp.ge.f32.partialorder %v3825, 0.0
    %vm5311 = vcmp.ge.f32.partialorder %v3830, 0.0
    %vm5312 = vcmp.ge.f32.partialorder %v3833, 0.0
    %vm5313 = vcmp.ge.f32.partialorder %v3838, 0.0
    %vm5314 = vcmp.ge.f32.partialorder %v3841, 0.0
    %vm5315 = vcmp.ge.f32.partialorder %v3846, 0.0
    %vm5316 = vcmp.ge.f32.partialorder %v3849, 0.0
    %vm5317 = vcmp.ge.f32.partialorder %v3854, 0.0
    %vm5318 = vcmp.ge.f32.partialorder %v3857, 0.0
    %vm5319 = vcmp.ge.f32.partialorder %v3862, 0.0
    %vm5320 = vcmp.ge.f32.partialorder %v3865, 0.0
    %vm5321 = vcmp.ge.f32.partialorder %v3870, 0.0
    %vm5322 = vcmp.ge.f32.partialorder %v3873, 0.0
    %vm5323 = vcmp.ge.f32.partialorder %v3878, 0.0
    %vm5324 = vcmp.ge.f32.partialorder %v3881, 0.0
    %vm5325 = vcmp.ge.f32.partialorder %v3886, 0.0
    %vm5326 = vcmp.ge.f32.partialorder %v3889, 0.0
    %vm5327 = vcmp.ge.f32.partialorder %v3894, 0.0
    %vm5328 = vcmp.ge.f32.partialorder %v3897, 0.0
    %vm5329 = vcmp.ge.f32.partialorder %v3902, 0.0
    %vm5330 = vcmp.ge.f32.partialorder %v3905, 0.0
    %vm5331 = vcmp.ge.f32.partialorder %v3910, 0.0
    %vm5332 = vcmp.ge.f32.partialorder %v3913, 0.0
    %vm5333 = vcmp.ge.f32.partialorder %v3918, 0.0
    %vm5334 = vcmp.ge.f32.partialorder %v3921, 0.0
    %vm5335 = vcmp.ge.f32.partialorder %v3926, 0.0
    %vm5336 = vcmp.ge.f32.partialorder %v3929, 0.0
    %vm5337 = vcmp.ge.f32.partialorder %v3934, 0.0
    %vm5338 = vcmp.ge.f32.partialorder %v3937, 0.0
    %vm5339 = vcmp.ge.f32.partialorder %v3942, 0.0
    %vm5340 = vcmp.ge.f32.partialorder %v3945, 0.0
    %vm5341 = vcmp.ge.f32.partialorder %v3950, 0.0
    %vm5342 = vcmp.ge.f32.partialorder %v3953, 0.0
    %vm5343 = vcmp.ge.f32.partialorder %v3958, 0.0
    %vm5344 = vcmp.ge.f32.partialorder %v3961, 0.0
    %vm5345 = vcmp.ge.f32.partialorder %v3966, 0.0
    %vm5346 = vcmp.ge.f32.partialorder %v3969, 0.0
    %vm5347 = vcmp.ge.f32.partialorder %v3974, 0.0
    %vm5348 = vcmp.ge.f32.partialorder %v3977, 0.0
    %vm5349 = vcmp.ge.f32.partialorder %v3982, 0.0
    %vm5350 = vcmp.ge.f32.partialorder %v3985, 0.0
    %vm5351 = vcmp.ge.f32.partialorder %v3990, 0.0
    %vm5352 = vcmp.ge.f32.partialorder %v3993, 0.0
    %vm5353 = vcmp.ge.f32.partialorder %v3998, 0.0
    %vm5354 = vcmp.ge.f32.partialorder %v4001, 0.0
    %vm5355 = vcmp.ge.f32.partialorder %v4006, 0.0
    %vm5356 = vcmp.ge.f32.partialorder %v4009, 0.0
    %vm5357 = vcmp.ge.f32.partialorder %v4014, 0.0
    %vm5358 = vcmp.ge.f32.partialorder %v4017, 0.0
    %vm5359 = vcmp.ge.f32.partialorder %v4022, 0.0
    %vm5360 = vcmp.ge.f32.partialorder %v4025, 0.0
    %vm5361 = vcmp.ge.f32.partialorder %v4030, 0.0
    %vm5362 = vcmp.ge.f32.partialorder %v4033, 0.0
    %vm5363 = vcmp.ge.f32.partialorder %v4038, 0.0
    %vm5364 = vcmp.ge.f32.partialorder %v4041, 0.0
    %vm5365 = vcmp.ge.f32.partialorder %v4046, 0.0
    %vm5366 = vcmp.ge.f32.partialorder %v4049, 0.0
    %vm5367 = vcmp.ge.f32.partialorder %v4054, 0.0
    %vm5368 = vcmp.ge.f32.partialorder %v4057, 0.0
    %vm5369 = vcmp.ge.f32.partialorder %v4062, 0.0
    %vm5370 = vcmp.ge.f32.partialorder %v4065, 0.0
    %vm5371 = vcmp.ge.f32.partialorder %v4070, 0.0
    %vm5372 = vcmp.ge.f32.partialorder %v4073, 0.0
    %vm5373 = vcmp.ge.f32.partialorder %v4078, 0.0
    %vm5374 = vcmp.ge.f32.partialorder %v4081, 0.0
    %vm5375 = vcmp.ge.f32.partialorder %v4086, 0.0
    %vm5376 = vcmp.ge.f32.partialorder %v4089, 0.0
    %vm5377 = vcmp.ge.f32.partialorder %v4094, 0.0
    %vm5378 = vcmp.ge.f32.partialorder %v4097, 0.0
    %vm5379 = vcmp.ge.f32.partialorder %v4102, 0.0
    %vm5380 = vcmp.ge.f32.partialorder %v4105, 0.0
    %vm5381 = vcmp.ge.f32.partialorder %v4110, 0.0
    %vm5382 = vcmp.ge.f32.partialorder %v4113, 0.0
    %vm5383 = vcmp.ge.f32.partialorder %v4118, 0.0
    %vm5384 = vcmp.ge.f32.partialorder %v4121, 0.0
    %vm5385 = vcmp.ge.f32.partialorder %v4126, 0.0
    %vm5386 = vcmp.ge.f32.partialorder %v4129, 0.0
    %vm5387 = vcmp.ge.f32.partialorder %v4134, 0.0
    %vm5388 = vcmp.ge.f32.partialorder %v4137, 0.0
    %vm5389 = vcmp.ge.f32.partialorder %v4142, 0.0
    %vm5390 = vcmp.ge.f32.partialorder %v4145, 0.0
    %vm5391 = vcmp.ge.f32.partialorder %v4150, 0.0
    %vm5392 = vcmp.ge.f32.partialorder %v4153, 0.0
    %vm5393 = vcmp.ge.f32.partialorder %v4158, 0.0
    %vm5394 = vcmp.ge.f32.partialorder %v4161, 0.0
    %vm5395 = vcmp.ge.f32.partialorder %v4166, 0.0
    %vm5396 = vcmp.ge.f32.partialorder %v4169, 0.0
    %vm5397 = vcmp.ge.f32.partialorder %v4174, 0.0
    %vm5398 = vcmp.ge.f32.partialorder %v4177, 0.0
    %vm5399 = vcmp.ge.f32.partialorder %v4182, 0.0
    %vm5400 = vcmp.ge.f32.partialorder %v4185, 0.0
    %vm5401 = vcmp.ge.f32.partialorder %v4190, 0.0
    %vm5402 = vcmp.ge.f32.partialorder %v4193, 0.0
    %vm5403 = vcmp.ge.f32.partialorder %v4198, 0.0
    %vm5404 = vcmp.ge.f32.partialorder %v4201, 0.0
    %vm5405 = vcmp.ge.f32.partialorder %v4206, 0.0
    %vm5406 = vcmp.ge.f32.partialorder %v4209, 0.0
    %vm5407 = vcmp.ge.f32.partialorder %v4214, 0.0
    %vm5408 = vcmp.ge.f32.partialorder %v4217, 0.0
    %vm5409 = vcmp.ge.f32.partialorder %v4222, 0.0
    %vm5410 = vcmp.ge.f32.partialorder %v4225, 0.0
    %vm5411 = vcmp.ge.f32.partialorder %v4230, 0.0
    %vm5412 = vcmp.ge.f32.partialorder %v4233, 0.0
    %vm5413 = vcmp.ge.f32.partialorder %v4238, 0.0
    %vm5414 = vcmp.ge.f32.partialorder %v4241, 0.0
    %vm5415 = vcmp.ge.f32.partialorder %v4246, 0.0
    %vm5416 = vcmp.ge.f32.partialorder %v4249, 0.0
    %vm5417 = vcmp.ge.f32.partialorder %v4254, 0.0
    %vm5418 = vcmp.ge.f32.partialorder %v4257, 0.0
    %vm5419 = vcmp.ge.f32.partialorder %v4262, 0.0
    %vm5420 = vcmp.ge.f32.partialorder %v4265, 0.0
    %vm5421 = vcmp.ge.f32.partialorder %v4270, 0.0
    %vm5422 = vcmp.ge.f32.partialorder %v4273, 0.0
    %vm5423 = vcmp.ge.f32.partialorder %v4278, 0.0
    %vm5424 = vcmp.ge.f32.partialorder %v4281, 0.0
    %vm5425 = vcmp.ge.f32.partialorder %v4286, 0.0
    %vm5426 = vcmp.ge.f32.partialorder %v4289, 0.0
    %vm5427 = vcmp.ge.f32.partialorder %v4294, 0.0
    %vm5428 = vcmp.ge.f32.partialorder %v4297, 0.0
    %vm5429 = vcmp.ge.f32.partialorder %v4302, 0.0
    %vm5430 = vcmp.ge.f32.partialorder %v4305, 0.0
    %vm5431 = vcmp.ge.f32.partialorder %v4310, 0.0
    %vm5432 = vcmp.ge.f32.partialorder %v4313, 0.0
    %vm5433 = vcmp.ge.f32.partialorder %v4318, 0.0
    %vm5434 = vcmp.ge.f32.partialorder %v4321, 0.0
    %vm5435 = vcmp.ge.f32.partialorder %v4326, 0.0
    %vm5436 = vcmp.ge.f32.partialorder %v4329, 0.0
    %vm5437 = vcmp.ge.f32.partialorder %v4334, 0.0
    %vm5438 = vcmp.ge.f32.partialorder %v4337, 0.0
    %vm5439 = vcmp.ge.f32.partialorder %v4342, 0.0
    %vm5440 = vcmp.ge.f32.partialorder %v4345, 0.0
    %vm5441 = vcmp.ge.f32.partialorder %v4350, 0.0
    %vm5442 = vcmp.ge.f32.partialorder %v4353, 0.0
    %vm5443 = vcmp.ge.f32.partialorder %v4358, 0.0
    %vm5444 = vcmp.ge.f32.partialorder %v4361, 0.0
    %vm5445 = vcmp.ge.f32.partialorder %v4366, 0.0
    %vm5446 = vcmp.ge.f32.partialorder %v4369, 0.0
    %vm5447 = vcmp.ge.f32.partialorder %v4374, 0.0
    %vm5448 = vcmp.ge.f32.partialorder %v4377, 0.0
    %vm5449 = vcmp.ge.f32.partialorder %v4382, 0.0
    %vm5450 = vcmp.ge.f32.partialorder %v4385, 0.0
    %vm5451 = vcmp.ge.f32.partialorder %v4390, 0.0
    %vm5452 = vcmp.ge.f32.partialorder %v4393, 0.0
    %vm5453 = vcmp.ge.f32.partialorder %v4398, 0.0
    %vm5454 = vcmp.ge.f32.partialorder %v4401, 0.0
    %vm5455 = vcmp.ge.f32.partialorder %v4406, 0.0
    %vm5456 = vcmp.ge.f32.partialorder %v4409, 0.0
    %vm5457 = vcmp.ge.f32.partialorder %v4414, 0.0
    %vm5458 = vcmp.ge.f32.partialorder %v4417, 0.0
    %vm5459 = vcmp.ge.f32.partialorder %v4422, 0.0
    %vm5460 = vcmp.ge.f32.partialorder %v4425, 0.0
    %vm5461 = vcmp.ge.f32.partialorder %v4430, 0.0
    %vm5462 = vcmp.ge.f32.partialorder %v4433, 0.0
    %vm5463 = vcmp.ge.f32.partialorder %v4438, 0.0
    %vm5464 = vcmp.ge.f32.partialorder %v4441, 0.0
    %vm5465 = vcmp.ge.f32.partialorder %v4446, 0.0
    %vm5466 = vcmp.ge.f32.partialorder %v4449, 0.0
    %vm5467 = vcmp.ge.f32.partialorder %v4454, 0.0
    %vm5468 = vcmp.ge.f32.partialorder %v4457, 0.0
    %vm5469 = vcmp.ge.f32.partialorder %v4462, 0.0
    %vm5470 = vcmp.ge.f32.partialorder %v4465, 0.0
    %vm5471 = vcmp.ge.f32.partialorder %v4470, 0.0
    %vm5472 = vcmp.ge.f32.partialorder %v4473, 0.0
    %vm5473 = vcmp.ge.f32.partialorder %v4478, 0.0
    %vm5474 = vcmp.ge.f32.partialorder %v4481, 0.0
    %vm5475 = vcmp.ge.f32.partialorder %v4486, 0.0
    %vm5476 = vcmp.ge.f32.partialorder %v4489, 0.0
    %vm5477 = vcmp.ge.f32.partialorder %v4494, 0.0
    %vm5478 = vcmp.ge.f32.partialorder %v4497, 0.0
    %vm5479 = vcmp.ge.f32.partialorder %v4502, 0.0
    %vm5480 = vcmp.ge.f32.partialorder %v4505, 0.0
    %vm5481 = vcmp.ge.f32.partialorder %v4510, 0.0
    %vm5482 = vcmp.ge.f32.partialorder %v4513, 0.0
    %vm5483 = vcmp.ge.f32.partialorder %v4518, 0.0
    %vm5484 = vcmp.ge.f32.partialorder %v4521, 0.0
    %vm5485 = vcmp.ge.f32.partialorder %v4526, 0.0
    %vm5486 = vcmp.ge.f32.partialorder %v4529, 0.0
    %vm5487 = vcmp.ge.f32.partialorder %v4534, 0.0
    %vm5488 = vcmp.ge.f32.partialorder %v4537, 0.0
    %vm5489 = vcmp.ge.f32.partialorder %v4542, 0.0
    %vm5490 = vcmp.ge.f32.partialorder %v4545, 0.0
    %vm5491 = vcmp.ge.f32.partialorder %v4550, 0.0
    %vm5492 = vcmp.ge.f32.partialorder %v4553, 0.0
    %vm5493 = vcmp.ge.f32.partialorder %v4558, 0.0
    %vm5494 = vcmp.ge.f32.partialorder %v4561, 0.0
    %vm5495 = vcmp.ge.f32.partialorder %v4566, 0.0
    %vm5496 = vcmp.ge.f32.partialorder %v4569, 0.0
    %vm5497 = vcmp.ge.f32.partialorder %v4574, 0.0
    %vm5498 = vcmp.ge.f32.partialorder %v4577, 0.0
    %vm5499 = vcmp.ge.f32.partialorder %v4582, 0.0
    %vm5500 = vcmp.ge.f32.partialorder %v4585, 0.0
    %vm5501 = vcmp.ge.f32.partialorder %v4590, 0.0
    %vm5502 = vcmp.ge.f32.partialorder %v4593, 0.0
    %vm5503 = vcmp.ge.f32.partialorder %v4598, 0.0
    %vm5504 = vcmp.ge.f32.partialorder %v4601, 0.0
    %vm5505 = vcmp.ge.f32.partialorder %v4606, 0.0
    %vm5506 = vcmp.ge.f32.partialorder %v4609, 0.0
    %vm5507 = vcmp.ge.f32.partialorder %v4614, 0.0
    %vm5508 = vcmp.ge.f32.partialorder %v4617, 0.0
    %vm5509 = vcmp.ge.f32.partialorder %v4622, 0.0
    %vm5510 = vcmp.ge.f32.partialorder %v4625, 0.0
    %vm5511 = vcmp.ge.f32.partialorder %v4630, 0.0
    %vm5512 = vcmp.ge.f32.partialorder %v4633, 0.0
    %vm5513 = vcmp.ge.f32.partialorder %v4638, 0.0
    %vm5514 = vcmp.ge.f32.partialorder %v4641, 0.0
    %vm5515 = vcmp.ge.f32.partialorder %v4646, 0.0
    %vm5516 = vcmp.ge.f32.partialorder %v4649, 0.0
    %vm5517 = vcmp.ge.f32.partialorder %v4654, 0.0
    %vm5518 = vcmp.ge.f32.partialorder %v4657, 0.0
    %vm5519 = vcmp.ge.f32.partialorder %v4662, 0.0
    %vm5520 = vcmp.ge.f32.partialorder %v4665, 0.0
    %vm5521 = vcmp.ge.f32.partialorder %v4670, 0.0
    %vm5522 = vcmp.ge.f32.partialorder %v4673, 0.0
    %vm5523 = vcmp.ge.f32.partialorder %v4678, 0.0
    %vm5524 = vcmp.ge.f32.partialorder %v4681, 0.0
    %vm5525 = vcmp.ge.f32.partialorder %v4686, 0.0
    %vm5526 = vcmp.ge.f32.partialorder %v4689, 0.0
    %vm5527 = vcmp.ge.f32.partialorder %v4694, 0.0
    %vm5528 = vcmp.ge.f32.partialorder %v4697, 0.0
    %vm5529 = vcmp.ge.f32.partialorder %v4702, 0.0
    %vm5530 = vcmp.ge.f32.partialorder %v4705, 0.0
    %vm5531 = vcmp.ge.f32.partialorder %v4710, 0.0
    %vm5532 = vcmp.ge.f32.partialorder %v4713, 0.0
    %vm5533 = vcmp.ge.f32.partialorder %v4718, 0.0
    %vm5534 = vcmp.ge.f32.partialorder %v4721, 0.0
    %vm5535 = vcmp.ge.f32.partialorder %v4726, 0.0
    %vm5536 = vcmp.ge.f32.partialorder %v4729, 0.0
    %vm5537 = vcmp.ge.f32.partialorder %v4734, 0.0
    %vm5538 = vcmp.ge.f32.partialorder %v4737, 0.0
    %vm5539 = vcmp.ge.f32.partialorder %v4742, 0.0
    %vm5540 = vcmp.ge.f32.partialorder %v4745, 0.0
    %vm5541 = vcmp.ge.f32.partialorder %v4750, 0.0
    %vm5542 = vcmp.ge.f32.partialorder %v4753, 0.0
    %vm5543 = vcmp.ge.f32.partialorder %v4758, 0.0
    %vm5544 = vcmp.ge.f32.partialorder %v4761, 0.0
    %vm5545 = vcmp.ge.f32.partialorder %v4766, 0.0
    %vm5546 = vcmp.ge.f32.partialorder %v4769, 0.0
    %vm5547 = vcmp.ge.f32.partialorder %v4774, 0.0
    %vm5548 = vcmp.ge.f32.partialorder %v4777, 0.0
    %vm5549 = vcmp.ge.f32.partialorder %v4782, 0.0
    %vm5550 = vcmp.ge.f32.partialorder %v4785, 0.0
    %vm5551 = vcmp.ge.f32.partialorder %v4790, 0.0
    %vm5552 = vcmp.ge.f32.partialorder %v4793, 0.0
    %vm5553 = vcmp.ge.f32.partialorder %v4798, 0.0
    %vm5554 = vcmp.ge.f32.partialorder %v4801, 0.0
    %vm5555 = vcmp.ge.f32.partialorder %v4806, 0.0
    %vm5556 = vcmp.ge.f32.partialorder %v4809, 0.0
    %vm5557 = vcmp.ge.f32.partialorder %v4814, 0.0
    %vm5558 = vcmp.ge.f32.partialorder %v4817, 0.0
    %vm5559 = vcmp.ge.f32.partialorder %v4822, 0.0
    %vm5560 = vcmp.ge.f32.partialorder %v4825, 0.0
    %vm5561 = vcmp.ge.f32.partialorder %v4830, 0.0
    %vm5562 = vcmp.ge.f32.partialorder %v4833, 0.0
    %vm5563 = vcmp.ge.f32.partialorder %v4838, 0.0
    %vm5564 = vcmp.ge.f32.partialorder %v4841, 0.0
    %vm5565 = vcmp.ge.f32.partialorder %v4846, 0.0
    %vm5566 = vcmp.ge.f32.partialorder %v4849, 0.0
    %vm5567 = vcmp.ge.f32.partialorder %v4854, 0.0
    %vm5568 = vcmp.ge.f32.partialorder %v4857, 0.0
    %vm5569 = vcmp.ge.f32.partialorder %v4862, 0.0
    %vm5570 = vcmp.ge.f32.partialorder %v4865, 0.0
    %vm5571 = vcmp.ge.f32.partialorder %v4870, 0.0
    %vm5572 = vcmp.ge.f32.partialorder %v4873, 0.0
    %vm5573 = vcmp.ge.f32.partialorder %v4878, 0.0
    %vm5574 = vcmp.ge.f32.partialorder %v4881, 0.0
    %vm5575 = vcmp.ge.f32.partialorder %v4886, 0.0
    %vm5576 = vcmp.ge.f32.partialorder %v4889, 0.0
    %vm5577 = vcmp.ge.f32.partialorder %v4894, 0.0
    %vm5578 = vcmp.ge.f32.partialorder %v4897, 0.0
    %vm5579 = vcmp.ge.f32.partialorder %v4902, 0.0
    %vm5580 = vcmp.ge.f32.partialorder %v4905, 0.0
    %vm5581 = vcmp.ge.f32.partialorder %v4910, 0.0
    %vm5582 = vcmp.ge.f32.partialorder %v4913, 0.0
    %vm5583 = vcmp.ge.f32.partialorder %v4918, 0.0
    %vm5584 = vcmp.ge.f32.partialorder %v4921, 0.0
    %vm5585 = vcmp.ge.f32.partialorder %v4926, 0.0
    %vm5586 = vcmp.ge.f32.partialorder %v4929, 0.0
    %vm5587 = vcmp.ge.f32.partialorder %v4934, 0.0
    %vm5588 = vcmp.ge.f32.partialorder %v4937, 0.0
    %vm5589 = vcmp.ge.f32.partialorder %v4942, 0.0
    %vm5590 = vcmp.ge.f32.partialorder %v4945, 0.0
    %vm5591 = vcmp.ge.f32.partialorder %v4950, 0.0
    %vm5592 = vcmp.ge.f32.partialorder %v4953, 0.0
    %vm5593 = vcmp.ge.f32.partialorder %v4958, 0.0
    %vm5594 = vcmp.ge.f32.partialorder %v4961, 0.0
    %vm5595 = vcmp.ge.f32.partialorder %v4966, 0.0
    %vm5596 = vcmp.ge.f32.partialorder %v4969, 0.0
    %vm5597 = vcmp.ge.f32.partialorder %v4974, 0.0
    %vm5598 = vcmp.ge.f32.partialorder %v4977, 0.0
    %vm5599 = vcmp.ge.f32.partialorder %v4982, 0.0
    %vm5600 = vcmp.ge.f32.partialorder %v4985, 0.0
    %vm5601 = vcmp.ge.f32.partialorder %v4990, 0.0
    %vm5602 = vcmp.ge.f32.partialorder %v4993, 0.0
    %vm5603 = vcmp.ge.f32.partialorder %v4998, 0.0
    %vm5604 = vcmp.ge.f32.partialorder %v5001, 0.0
    %vm5605 = vcmp.ge.f32.partialorder %v5006, 0.0
    %vm5606 = vcmp.ge.f32.partialorder %v5009, 0.0
    %vm5607 = vcmp.ge.f32.partialorder %v5014, 0.0
    %vm5608 = vcmp.ge.f32.partialorder %v5017, 0.0
    %vm5609 = vcmp.ge.f32.partialorder %v5022, 0.0
    %vm5610 = vcmp.ge.f32.partialorder %v5025, 0.0
    %vm5611 = vcmp.ge.f32.partialorder %v5030, 0.0
    %vm5612 = vcmp.ge.f32.partialorder %v5033, 0.0
    %vm5613 = vcmp.ge.f32.partialorder %v5038, 0.0
    %vm5614 = vcmp.ge.f32.partialorder %v5041, 0.0
    %vm5615 = vcmp.ge.f32.partialorder %v5046, 0.0
    %vm5616 = vcmp.ge.f32.partialorder %v5049, 0.0
    %vm5617 = vcmp.ge.f32.partialorder %v5054, 0.0
    %vm5618 = vcmp.ge.f32.partialorder %v5057, 0.0
    %vm5619 = vcmp.ge.f32.partialorder %v5062, 0.0
    %v5620 = vmul.f32 %v2854, 0.01
    %v5621 = vmul.f32 %v2857, 0.01
    %v5622 = vmul.f32 %v2862, 0.01
    %v5623 = vmul.f32 %v2865, 0.01
    %v5624 = vmul.f32 %v2870, 0.01
    %v5625 = vmul.f32 %v2873, 0.01
    %v5626 = vmul.f32 %v2878, 0.01
    %v5627 = vmul.f32 %v2881, 0.01
    %v5628 = vmul.f32 %v2886, 0.01
    %v5629 = vmul.f32 %v2889, 0.01
    %v5630 = vmul.f32 %v2894, 0.01
    %v5631 = vmul.f32 %v2897, 0.01
    %v5632 = vmul.f32 %v2902, 0.01
    %v5633 = vmul.f32 %v2905, 0.01
    %v5634 = vmul.f32 %v2910, 0.01
    %v5635 = vmul.f32 %v2913, 0.01
    %v5636 = vmul.f32 %v2918, 0.01
    %v5637 = vmul.f32 %v2921, 0.01
    %v5638 = vmul.f32 %v2926, 0.01
    %v5639 = vmul.f32 %v2929, 0.01
    %v5640 = vmul.f32 %v2934, 0.01
    %v5641 = vmul.f32 %v2937, 0.01
    %v5642 = vmul.f32 %v2942, 0.01
    %v5643 = vmul.f32 %v2945, 0.01
    %v5644 = vmul.f32 %v2950, 0.01
    %v5645 = vmul.f32 %v2953, 0.01
    %v5646 = vmul.f32 %v2958, 0.01
    %v5647 = vmul.f32 %v2961, 0.01
    %v5648 = vmul.f32 %v2966, 0.01
    %v5649 = vmul.f32 %v2969, 0.01
    %v5650 = vmul.f32 %v2974, 0.01
    %v5651 = vmul.f32 %v2977, 0.01
    %v5652 = vmul.f32 %v2982, 0.01
    %v5653 = vmul.f32 %v2985, 0.01
    %v5654 = vmul.f32 %v2990, 0.01
    %v5655 = vmul.f32 %v2993, 0.01
    %v5656 = vmul.f32 %v2998, 0.01
    %v5657 = vmul.f32 %v3001, 0.01
    %v5658 = vmul.f32 %v3006, 0.01
    %v5659 = vmul.f32 %v3009, 0.01
    %v5660 = vmul.f32 %v3014, 0.01
    %v5661 = vmul.f32 %v3017, 0.01
    %v5662 = vmul.f32 %v3022, 0.01
    %v5663 = vmul.f32 %v3025, 0.01
    %v5664 = vmul.f32 %v3030, 0.01
    %v5665 = vmul.f32 %v3033, 0.01
    %v5666 = vmul.f32 %v3038, 0.01
    %v5667 = vmul.f32 %v3041, 0.01
    %v5668 = vmul.f32 %v3046, 0.01
    %v5669 = vmul.f32 %v3049, 0.01
    %v5670 = vmul.f32 %v3054, 0.01
    %v5671 = vmul.f32 %v3057, 0.01
    %v5672 = vmul.f32 %v3062, 0.01
    %v5673 = vmul.f32 %v3065, 0.01
    %v5674 = vmul.f32 %v3070, 0.01
    %v5675 = vmul.f32 %v3073, 0.01
    %v5676 = vmul.f32 %v3078, 0.01
    %v5677 = vmul.f32 %v3081, 0.01
    %v5678 = vmul.f32 %v3086, 0.01
    %v5679 = vmul.f32 %v3089, 0.01
    %v5680 = vmul.f32 %v3094, 0.01
    %v5681 = vmul.f32 %v3097, 0.01
    %v5682 = vmul.f32 %v3102, 0.01
    %v5683 = vmul.f32 %v3105, 0.01
    %v5684 = vmul.f32 %v3110, 0.01
    %v5685 = vmul.f32 %v3113, 0.01
    %v5686 = vmul.f32 %v3118, 0.01
    %v5687 = vmul.f32 %v3121, 0.01
    %v5688 = vmul.f32 %v3126, 0.01
    %v5689 = vmul.f32 %v3129, 0.01
    %v5690 = vmul.f32 %v3134, 0.01
    %v5691 = vmul.f32 %v3137, 0.01
    %v5692 = vmul.f32 %v3142, 0.01
    %v5693 = vmul.f32 %v3145, 0.01
    %v5694 = vmul.f32 %v3150, 0.01
    %v5695 = vmul.f32 %v3153, 0.01
    %v5696 = vmul.f32 %v3158, 0.01
    %v5697 = vmul.f32 %v3161, 0.01
    %v5698 = vmul.f32 %v3166, 0.01
    %v5699 = vmul.f32 %v3169, 0.01
    %v5700 = vmul.f32 %v3174, 0.01
    %v5701 = vmul.f32 %v3177, 0.01
    %v5702 = vmul.f32 %v3182, 0.01
    %v5703 = vmul.f32 %v3185, 0.01
    %v5704 = vmul.f32 %v3190, 0.01
    %v5705 = vmul.f32 %v3193, 0.01
    %v5706 = vmul.f32 %v3198, 0.01
    %v5707 = vmul.f32 %v3201, 0.01
    %v5708 = vmul.f32 %v3206, 0.01
    %v5709 = vmul.f32 %v3209, 0.01
    %v5710 = vmul.f32 %v3214, 0.01
    %v5711 = vmul.f32 %v3217, 0.01
    %v5712 = vmul.f32 %v3222, 0.01
    %v5713 = vmul.f32 %v3225, 0.01
    %v5714 = vmul.f32 %v3230, 0.01
    %v5715 = vmul.f32 %v3233, 0.01
    %v5716 = vmul.f32 %v3238, 0.01
    %v5717 = vmul.f32 %v3241, 0.01
    %v5718 = vmul.f32 %v3246, 0.01
    %v5719 = vmul.f32 %v3249, 0.01
    %v5720 = vmul.f32 %v3254, 0.01
    %v5721 = vmul.f32 %v3257, 0.01
    %v5722 = vmul.f32 %v3262, 0.01
    %v5723 = vmul.f32 %v3265, 0.01
    %v5724 = vmul.f32 %v3270, 0.01
    %v5725 = vmul.f32 %v3273, 0.01
    %v5726 = vmul.f32 %v3278, 0.01
    %v5727 = vmul.f32 %v3281, 0.01
    %v5728 = vmul.f32 %v3286, 0.01
    %v5729 = vmul.f32 %v3289, 0.01
    %v5730 = vmul.f32 %v3294, 0.01
    %v5731 = vmul.f32 %v3297, 0.01
    %v5732 = vmul.f32 %v3302, 0.01
    %v5733 = vmul.f32 %v3305, 0.01
    %v5734 = vmul.f32 %v3310, 0.01
    %v5735 = vmul.f32 %v3313, 0.01
    %v5736 = vmul.f32 %v3318, 0.01
    %v5737 = vmul.f32 %v3321, 0.01
    %v5738 = vmul.f32 %v3326, 0.01
    %v5739 = vmul.f32 %v3329, 0.01
    %v5740 = vmul.f32 %v3334, 0.01
    %v5741 = vmul.f32 %v3337, 0.01
    %v5742 = vmul.f32 %v3342, 0.01
    %v5743 = vmul.f32 %v3345, 0.01
    %v5744 = vmul.f32 %v3350, 0.01
    %v5745 = vmul.f32 %v3353, 0.01
    %v5746 = vmul.f32 %v3358, 0.01
    %v5747 = vmul.f32 %v3361, 0.01
    %v5748 = vmul.f32 %v3366, 0.01
    %v5749 = vmul.f32 %v3369, 0.01
    %v5750 = vmul.f32 %v3374, 0.01
    %v5751 = vmul.f32 %v3377, 0.01
    %v5752 = vmul.f32 %v3382, 0.01
    %v5753 = vmul.f32 %v3385, 0.01
    %v5754 = vmul.f32 %v3390, 0.01
    %v5755 = vmul.f32 %v3393, 0.01
    %v5756 = vmul.f32 %v3398, 0.01
    %v5757 = vmul.f32 %v3401, 0.01
    %v5758 = vmul.f32 %v3406, 0.01
    %v5759 = vmul.f32 %v3409, 0.01
    %v5760 = vmul.f32 %v3414, 0.01
    %v5761 = vmul.f32 %v3417, 0.01
    %v5762 = vmul.f32 %v3422, 0.01
    %v5763 = vmul.f32 %v3425, 0.01
    %v5764 = vmul.f32 %v3430, 0.01
    %v5765 = vmul.f32 %v3433, 0.01
    %v5766 = vmul.f32 %v3438, 0.01
    %v5767 = vmul.f32 %v3441, 0.01
    %v5768 = vmul.f32 %v3446, 0.01
    %v5769 = vmul.f32 %v3449, 0.01
    %v5770 = vmul.f32 %v3454, 0.01
    %v5771 = vmul.f32 %v3457, 0.01
    %v5772 = vmul.f32 %v3462, 0.01
    %v5773 = vmul.f32 %v3465, 0.01
    %v5774 = vmul.f32 %v3470, 0.01
    %v5775 = vmul.f32 %v3473, 0.01
    %v5776 = vmul.f32 %v3478, 0.01
    %v5777 = vmul.f32 %v3481, 0.01
    %v5778 = vmul.f32 %v3486, 0.01
    %v5779 = vmul.f32 %v3489, 0.01
    %v5780 = vmul.f32 %v3494, 0.01
    %v5781 = vmul.f32 %v3497, 0.01
    %v5782 = vmul.f32 %v3502, 0.01
    %v5783 = vmul.f32 %v3505, 0.01
    %v5784 = vmul.f32 %v3510, 0.01
    %v5785 = vmul.f32 %v3513, 0.01
    %v5786 = vmul.f32 %v3518, 0.01
    %v5787 = vmul.f32 %v3521, 0.01
    %v5788 = vmul.f32 %v3526, 0.01
    %v5789 = vmul.f32 %v3529, 0.01
    %v5790 = vmul.f32 %v3534, 0.01
    %v5791 = vmul.f32 %v3537, 0.01
    %v5792 = vmul.f32 %v3542, 0.01
    %v5793 = vmul.f32 %v3545, 0.01
    %v5794 = vmul.f32 %v3550, 0.01
    %v5795 = vmul.f32 %v3553, 0.01
    %v5796 = vmul.f32 %v3558, 0.01
    %v5797 = vmul.f32 %v3561, 0.01
    %v5798 = vmul.f32 %v3566, 0.01
    %v5799 = vmul.f32 %v3569, 0.01
    %v5800 = vmul.f32 %v3574, 0.01
    %v5801 = vmul.f32 %v3577, 0.01
    %v5802 = vmul.f32 %v3582, 0.01
    %v5803 = vmul.f32 %v3585, 0.01
    %v5804 = vmul.f32 %v3590, 0.01
    %v5805 = vmul.f32 %v3593, 0.01
    %v5806 = vmul.f32 %v3598, 0.01
    %v5807 = vmul.f32 %v3601, 0.01
    %v5808 = vmul.f32 %v3606, 0.01
    %v5809 = vmul.f32 %v3609, 0.01
    %v5810 = vmul.f32 %v3614, 0.01
    %v5811 = vmul.f32 %v3617, 0.01
    %v5812 = vmul.f32 %v3622, 0.01
    %v5813 = vmul.f32 %v3625, 0.01
    %v5814 = vmul.f32 %v3630, 0.01
    %v5815 = vmul.f32 %v3633, 0.01
    %v5816 = vmul.f32 %v3638, 0.01
    %v5817 = vmul.f32 %v3641, 0.01
    %v5818 = vmul.f32 %v3646, 0.01
    %v5819 = vmul.f32 %v3649, 0.01
    %v5820 = vmul.f32 %v3654, 0.01
    %v5821 = vmul.f32 %v3657, 0.01
    %v5822 = vmul.f32 %v3662, 0.01
    %v5823 = vmul.f32 %v3665, 0.01
    %v5824 = vmul.f32 %v3670, 0.01
    %v5825 = vmul.f32 %v3673, 0.01
    %v5826 = vmul.f32 %v3678, 0.01
    %v5827 = vmul.f32 %v3681, 0.01
    %v5828 = vmul.f32 %v3686, 0.01
    %v5829 = vmul.f32 %v3689, 0.01
    %v5830 = vmul.f32 %v3694, 0.01
    %v5831 = vmul.f32 %v3697, 0.01
    %v5832 = vmul.f32 %v3702, 0.01
    %v5833 = vmul.f32 %v3705, 0.01
    %v5834 = vmul.f32 %v3710, 0.01
    %v5835 = vmul.f32 %v3713, 0.01
    %v5836 = vmul.f32 %v3718, 0.01
    %v5837 = vmul.f32 %v3721, 0.01
    %v5838 = vmul.f32 %v3726, 0.01
    %v5839 = vmul.f32 %v3729, 0.01
    %v5840 = vmul.f32 %v3734, 0.01
    %v5841 = vmul.f32 %v3737, 0.01
    %v5842 = vmul.f32 %v3742, 0.01
    %v5843 = vmul.f32 %v3745, 0.01
    %v5844 = vmul.f32 %v3750, 0.01
    %v5845 = vmul.f32 %v3753, 0.01
    %v5846 = vmul.f32 %v3758, 0.01
    %v5847 = vmul.f32 %v3761, 0.01
    %v5848 = vmul.f32 %v3766, 0.01
    %v5849 = vmul.f32 %v3769, 0.01
    %v5850 = vmul.f32 %v3774, 0.01
    %v5851 = vmul.f32 %v3777, 0.01
    %v5852 = vmul.f32 %v3782, 0.01
    %v5853 = vmul.f32 %v3785, 0.01
    %v5854 = vmul.f32 %v3790, 0.01
    %v5855 = vmul.f32 %v3793, 0.01
    %v5856 = vmul.f32 %v3798, 0.01
    %v5857 = vmul.f32 %v3801, 0.01
    %v5858 = vmul.f32 %v3806, 0.01
    %v5859 = vmul.f32 %v3809, 0.01
    %v5860 = vmul.f32 %v3814, 0.01
    %v5861 = vmul.f32 %v3817, 0.01
    %v5862 = vmul.f32 %v3822, 0.01
    %v5863 = vmul.f32 %v3825, 0.01
    %v5864 = vmul.f32 %v3830, 0.01
    %v5865 = vmul.f32 %v3833, 0.01
    %v5866 = vmul.f32 %v3838, 0.01
    %v5867 = vmul.f32 %v3841, 0.01
    %v5868 = vmul.f32 %v3846, 0.01
    %v5869 = vmul.f32 %v3849, 0.01
    %v5870 = vmul.f32 %v3854, 0.01
    %v5871 = vmul.f32 %v3857, 0.01
    %v5872 = vmul.f32 %v3862, 0.01
    %v5873 = vmul.f32 %v3865, 0.01
    %v5874 = vmul.f32 %v3870, 0.01
    %v5875 = vmul.f32 %v3873, 0.01
    %v5876 = vmul.f32 %v3878, 0.01
    %v5877 = vmul.f32 %v3881, 0.01
    %v5878 = vmul.f32 %v3886, 0.01
    %v5879 = vmul.f32 %v3889, 0.01
    %v5880 = vmul.f32 %v3894, 0.01
    %v5881 = vmul.f32 %v3897, 0.01
    %v5882 = vmul.f32 %v3902, 0.01
    %v5883 = vmul.f32 %v3905, 0.01
    %v5884 = vmul.f32 %v3910, 0.01
    %v5885 = vmul.f32 %v3913, 0.01
    %v5886 = vmul.f32 %v3918, 0.01
    %v5887 = vmul.f32 %v3921, 0.01
    %v5888 = vmul.f32 %v3926, 0.01
    %v5889 = vmul.f32 %v3929, 0.01
    %v5890 = vmul.f32 %v3934, 0.01
    %v5891 = vmul.f32 %v3937, 0.01
    %v5892 = vmul.f32 %v3942, 0.01
    %v5893 = vmul.f32 %v3945, 0.01
    %v5894 = vmul.f32 %v3950, 0.01
    %v5895 = vmul.f32 %v3953, 0.01
    %v5896 = vmul.f32 %v3958, 0.01
    %v5897 = vmul.f32 %v3961, 0.01
    %v5898 = vmul.f32 %v3966, 0.01
    %v5899 = vmul.f32 %v3969, 0.01
    %v5900 = vmul.f32 %v3974, 0.01
    %v5901 = vmul.f32 %v3977, 0.01
    %v5902 = vmul.f32 %v3982, 0.01
    %v5903 = vmul.f32 %v3985, 0.01
    %v5904 = vmul.f32 %v3990, 0.01
    %v5905 = vmul.f32 %v3993, 0.01
    %v5906 = vmul.f32 %v3998, 0.01
    %v5907 = vmul.f32 %v4001, 0.01
    %v5908 = vmul.f32 %v4006, 0.01
    %v5909 = vmul.f32 %v4009, 0.01
    %v5910 = vmul.f32 %v4014, 0.01
    %v5911 = vmul.f32 %v4017, 0.01
    %v5912 = vmul.f32 %v4022, 0.01
    %v5913 = vmul.f32 %v4025, 0.01
    %v5914 = vmul.f32 %v4030, 0.01
    %v5915 = vmul.f32 %v4033, 0.01
    %v5916 = vmul.f32 %v4038, 0.01
    %v5917 = vmul.f32 %v4041, 0.01
    %v5918 = vmul.f32 %v4046, 0.01
    %v5919 = vmul.f32 %v4049, 0.01
    %v5920 = vmul.f32 %v4054, 0.01
    %v5921 = vmul.f32 %v4057, 0.01
    %v5922 = vmul.f32 %v4062, 0.01
    %v5923 = vmul.f32 %v4065, 0.01
    %v5924 = vmul.f32 %v4070, 0.01
    %v5925 = vmul.f32 %v4073, 0.01
    %v5926 = vmul.f32 %v4078, 0.01
    %v5927 = vmul.f32 %v4081, 0.01
    %v5928 = vmul.f32 %v4086, 0.01
    %v5929 = vmul.f32 %v4089, 0.01
    %v5930 = vmul.f32 %v4094, 0.01
    %v5931 = vmul.f32 %v4097, 0.01
    %v5932 = vmul.f32 %v4102, 0.01
    %v5933 = vmul.f32 %v4105, 0.01
    %v5934 = vmul.f32 %v4110, 0.01
    %v5935 = vmul.f32 %v4113, 0.01
    %v5936 = vmul.f32 %v4118, 0.01
    %v5937 = vmul.f32 %v4121, 0.01
    %v5938 = vmul.f32 %v4126, 0.01
    %v5939 = vmul.f32 %v4129, 0.01
    %v5940 = vmul.f32 %v4134, 0.01
    %v5941 = vmul.f32 %v4137, 0.01
    %v5942 = vmul.f32 %v4142, 0.01
    %v5943 = vmul.f32 %v4145, 0.01
    %v5944 = vmul.f32 %v4150, 0.01
    %v5945 = vmul.f32 %v4153, 0.01
    %v5946 = vmul.f32 %v4158, 0.01
    %v5947 = vmul.f32 %v4161, 0.01
    %v5948 = vmul.f32 %v4166, 0.01
    %v5949 = vmul.f32 %v4169, 0.01
    %v5950 = vmul.f32 %v4174, 0.01
    %v5951 = vmul.f32 %v4177, 0.01
    %v5952 = vmul.f32 %v4182, 0.01
    %v5953 = vmul.f32 %v4185, 0.01
    %v5954 = vmul.f32 %v4190, 0.01
    %v5955 = vmul.f32 %v4193, 0.01
    %v5956 = vmul.f32 %v4198, 0.01
    %v5957 = vmul.f32 %v4201, 0.01
    %v5958 = vmul.f32 %v4206, 0.01
    %v5959 = vmul.f32 %v4209, 0.01
    %v5960 = vmul.f32 %v4214, 0.01
    %v5961 = vmul.f32 %v4217, 0.01
    %v5962 = vmul.f32 %v4222, 0.01
    %v5963 = vmul.f32 %v4225, 0.01
    %v5964 = vmul.f32 %v4230, 0.01
    %v5965 = vmul.f32 %v4233, 0.01
    %v5966 = vmul.f32 %v4238, 0.01
    %v5967 = vmul.f32 %v4241, 0.01
    %v5968 = vmul.f32 %v4246, 0.01
    %v5969 = vmul.f32 %v4249, 0.01
    %v5970 = vmul.f32 %v4254, 0.01
    %v5971 = vmul.f32 %v4257, 0.01
    %v5972 = vmul.f32 %v4262, 0.01
    %v5973 = vmul.f32 %v4265, 0.01
    %v5974 = vmul.f32 %v4270, 0.01
    %v5975 = vmul.f32 %v4273, 0.01
    %v5976 = vmul.f32 %v4278, 0.01
    %v5977 = vmul.f32 %v4281, 0.01
    %v5978 = vmul.f32 %v4286, 0.01
    %v5979 = vmul.f32 %v4289, 0.01
    %v5980 = vmul.f32 %v4294, 0.01
    %v5981 = vmul.f32 %v4297, 0.01
    %v5982 = vmul.f32 %v4302, 0.01
    %v5983 = vmul.f32 %v4305, 0.01
    %v5984 = vmul.f32 %v4310, 0.01
    %v5985 = vmul.f32 %v4313, 0.01
    %v5986 = vmul.f32 %v4318, 0.01
    %v5987 = vmul.f32 %v4321, 0.01
    %v5988 = vmul.f32 %v4326, 0.01
    %v5989 = vmul.f32 %v4329, 0.01
    %v5990 = vmul.f32 %v4334, 0.01
    %v5991 = vmul.f32 %v4337, 0.01
    %v5992 = vmul.f32 %v4342, 0.01
    %v5993 = vmul.f32 %v4345, 0.01
    %v5994 = vmul.f32 %v4350, 0.01
    %v5995 = vmul.f32 %v4353, 0.01
    %v5996 = vmul.f32 %v4358, 0.01
    %v5997 = vmul.f32 %v4361, 0.01
    %v5998 = vmul.f32 %v4366, 0.01
    %v5999 = vmul.f32 %v4369, 0.01
    %v6000 = vmul.f32 %v4374, 0.01
    %v6001 = vmul.f32 %v4377, 0.01
    %v6002 = vmul.f32 %v4382, 0.01
    %v6003 = vmul.f32 %v4385, 0.01
    %v6004 = vmul.f32 %v4390, 0.01
    %v6005 = vmul.f32 %v4393, 0.01
    %v6006 = vmul.f32 %v4398, 0.01
    %v6007 = vmul.f32 %v4401, 0.01
    %v6008 = vmul.f32 %v4406, 0.01
    %v6009 = vmul.f32 %v4409, 0.01
    %v6010 = vmul.f32 %v4414, 0.01
    %v6011 = vmul.f32 %v4417, 0.01
    %v6012 = vmul.f32 %v4422, 0.01
    %v6013 = vmul.f32 %v4425, 0.01
    %v6014 = vmul.f32 %v4430, 0.01
    %v6015 = vmul.f32 %v4433, 0.01
    %v6016 = vmul.f32 %v4438, 0.01
    %v6017 = vmul.f32 %v4441, 0.01
    %v6018 = vmul.f32 %v4446, 0.01
    %v6019 = vmul.f32 %v4449, 0.01
    %v6020 = vmul.f32 %v4454, 0.01
    %v6021 = vmul.f32 %v4457, 0.01
    %v6022 = vmul.f32 %v4462, 0.01
    %v6023 = vmul.f32 %v4465, 0.01
    %v6024 = vmul.f32 %v4470, 0.01
    %v6025 = vmul.f32 %v4473, 0.01
    %v6026 = vmul.f32 %v4478, 0.01
    %v6027 = vmul.f32 %v4481, 0.01
    %v6028 = vmul.f32 %v4486, 0.01
    %v6029 = vmul.f32 %v4489, 0.01
    %v6030 = vmul.f32 %v4494, 0.01
    %v6031 = vmul.f32 %v4497, 0.01
    %v6032 = vmul.f32 %v4502, 0.01
    %v6033 = vmul.f32 %v4505, 0.01
    %v6034 = vmul.f32 %v4510, 0.01
    %v6035 = vmul.f32 %v4513, 0.01
    %v6036 = vmul.f32 %v4518, 0.01
    %v6037 = vmul.f32 %v4521, 0.01
    %v6038 = vmul.f32 %v4526, 0.01
    %v6039 = vmul.f32 %v4529, 0.01
    %v6040 = vmul.f32 %v4534, 0.01
    %v6041 = vmul.f32 %v4537, 0.01
    %v6042 = vmul.f32 %v4542, 0.01
    %v6043 = vmul.f32 %v4545, 0.01
    %v6044 = vmul.f32 %v4550, 0.01
    %v6045 = vmul.f32 %v4553, 0.01
    %v6046 = vmul.f32 %v4558, 0.01
    %v6047 = vmul.f32 %v4561, 0.01
    %v6048 = vmul.f32 %v4566, 0.01
    %v6049 = vmul.f32 %v4569, 0.01
    %v6050 = vmul.f32 %v4574, 0.01
    %v6051 = vmul.f32 %v4577, 0.01
    %v6052 = vmul.f32 %v4582, 0.01
    %v6053 = vmul.f32 %v4585, 0.01
    %v6054 = vmul.f32 %v4590, 0.01
    %v6055 = vmul.f32 %v4593, 0.01
    %v6056 = vmul.f32 %v4598, 0.01
    %v6057 = vmul.f32 %v4601, 0.01
    %v6058 = vmul.f32 %v4606, 0.01
    %v6059 = vmul.f32 %v4609, 0.01
    %v6060 = vmul.f32 %v4614, 0.01
    %v6061 = vmul.f32 %v4617, 0.01
    %v6062 = vmul.f32 %v4622, 0.01
    %v6063 = vmul.f32 %v4625, 0.01
    %v6064 = vmul.f32 %v4630, 0.01
    %v6065 = vmul.f32 %v4633, 0.01
    %v6066 = vmul.f32 %v4638, 0.01
    %v6067 = vmul.f32 %v4641, 0.01
    %v6068 = vmul.f32 %v4646, 0.01
    %v6069 = vmul.f32 %v4649, 0.01
    %v6070 = vmul.f32 %v4654, 0.01
    %v6071 = vmul.f32 %v4657, 0.01
    %v6072 = vmul.f32 %v4662, 0.01
    %v6073 = vmul.f32 %v4665, 0.01
    %v6074 = vmul.f32 %v4670, 0.01
    %v6075 = vmul.f32 %v4673, 0.01
    %v6076 = vmul.f32 %v4678, 0.01
    %v6077 = vmul.f32 %v4681, 0.01
    %v6078 = vmul.f32 %v4686, 0.01
    %v6079 = vmul.f32 %v4689, 0.01
    %v6080 = vmul.f32 %v4694, 0.01
    %v6081 = vmul.f32 %v4697, 0.01
    %v6082 = vmul.f32 %v4702, 0.01
    %v6083 = vmul.f32 %v4705, 0.01
    %v6084 = vmul.f32 %v4710, 0.01
    %v6085 = vmul.f32 %v4713, 0.01
    %v6086 = vmul.f32 %v4718, 0.01
    %v6087 = vmul.f32 %v4721, 0.01
    %v6088 = vmul.f32 %v4726, 0.01
    %v6089 = vmul.f32 %v4729, 0.01
    %v6090 = vmul.f32 %v4734, 0.01
    %v6091 = vmul.f32 %v4737, 0.01
    %v6092 = vmul.f32 %v4742, 0.01
    %v6093 = vmul.f32 %v4745, 0.01
    %v6094 = vmul.f32 %v4750, 0.01
    %v6095 = vmul.f32 %v4753, 0.01
    %v6096 = vmul.f32 %v4758, 0.01
    %v6097 = vmul.f32 %v4761, 0.01
    %v6098 = vmul.f32 %v4766, 0.01
    %v6099 = vmul.f32 %v4769, 0.01
    %v6100 = vmul.f32 %v4774, 0.01
    %v6101 = vmul.f32 %v4777, 0.01
    %v6102 = vmul.f32 %v4782, 0.01
    %v6103 = vmul.f32 %v4785, 0.01
    %v6104 = vmul.f32 %v4790, 0.01
    %v6105 = vmul.f32 %v4793, 0.01
    %v6106 = vmul.f32 %v4798, 0.01
    %v6107 = vmul.f32 %v4801, 0.01
    %v6108 = vmul.f32 %v4806, 0.01
    %v6109 = vmul.f32 %v4809, 0.01
    %v6110 = vmul.f32 %v4814, 0.01
    %v6111 = vmul.f32 %v4817, 0.01
    %v6112 = vmul.f32 %v4822, 0.01
    %v6113 = vmul.f32 %v4825, 0.01
    %v6114 = vmul.f32 %v4830, 0.01
    %v6115 = vmul.f32 %v4833, 0.01
    %v6116 = vmul.f32 %v4838, 0.01
    %v6117 = vmul.f32 %v4841, 0.01
    %v6118 = vmul.f32 %v4846, 0.01
    %v6119 = vmul.f32 %v4849, 0.01
    %v6120 = vmul.f32 %v4854, 0.01
    %v6121 = vmul.f32 %v4857, 0.01
    %v6122 = vmul.f32 %v4862, 0.01
    %v6123 = vmul.f32 %v4865, 0.01
    %v6124 = vmul.f32 %v4870, 0.01
    %v6125 = vmul.f32 %v4873, 0.01
    %v6126 = vmul.f32 %v4878, 0.01
    %v6127 = vmul.f32 %v4881, 0.01
    %v6128 = vmul.f32 %v4886, 0.01
    %v6129 = vmul.f32 %v4889, 0.01
    %v6130 = vmul.f32 %v4894, 0.01
    %v6131 = vmul.f32 %v4897, 0.01
    %v6132 = vmul.f32 %v4902, 0.01
    %v6133 = vmul.f32 %v4905, 0.01
    %v6134 = vmul.f32 %v4910, 0.01
    %v6135 = vmul.f32 %v4913, 0.01
    %v6136 = vmul.f32 %v4918, 0.01
    %v6137 = vmul.f32 %v4921, 0.01
    %v6138 = vmul.f32 %v4926, 0.01
    %v6139 = vmul.f32 %v4929, 0.01
    %v6140 = vmul.f32 %v4934, 0.01
    %v6141 = vmul.f32 %v4937, 0.01
    %v6142 = vmul.f32 %v4942, 0.01
    %v6143 = vmul.f32 %v4945, 0.01
    %v6144 = vmul.f32 %v4950, 0.01
    %v6145 = vmul.f32 %v4953, 0.01
    %v6146 = vmul.f32 %v4958, 0.01
    %v6147 = vmul.f32 %v4961, 0.01
    %v6148 = vmul.f32 %v4966, 0.01
    %v6149 = vmul.f32 %v4969, 0.01
    %v6150 = vmul.f32 %v4974, 0.01
    %v6151 = vmul.f32 %v4977, 0.01
    %v6152 = vmul.f32 %v4982, 0.01
    %v6153 = vmul.f32 %v4985, 0.01
    %v6154 = vmul.f32 %v4990, 0.01
    %v6155 = vmul.f32 %v4993, 0.01
    %v6156 = vmul.f32 %v4998, 0.01
    %v6157 = vmul.f32 %v5001, 0.01
    %v6158 = vmul.f32 %v5006, 0.01
    %v6159 = vmul.f32 %v5009, 0.01
    %v6160 = vmul.f32 %v5014, 0.01
    %v6161 = vmul.f32 %v5017, 0.01
    %v6162 = vmul.f32 %v5022, 0.01
    %v6163 = vmul.f32 %v5025, 0.01
    %v6164 = vmul.f32 %v5030, 0.01
    %v6165 = vmul.f32 %v5033, 0.01
    %v6166 = vmul.f32 %v5038, 0.01
    %v6167 = vmul.f32 %v5041, 0.01
    %v6168 = vmul.f32 %v5046, 0.01
    %v6169 = vmul.f32 %v5049, 0.01
    %v6170 = vmul.f32 %v5054, 0.01
    %v6171 = vmul.f32 %v5057, 0.01
    %v6172 = vmul.f32 %v5062, 0.01
    %v6173 = vsel %vm5067, %v2854, %v5620
    %v6174 = vsel %vm5068, %v2857, %v5621
    %v6175 = vsel %vm5069, %v2862, %v5622
    %v6176 = vsel %vm5070, %v2865, %v5623
    %v6177 = vsel %vm5071, %v2870, %v5624
    %v6178 = vsel %vm5072, %v2873, %v5625
    %v6179 = vsel %vm5073, %v2878, %v5626
    %v6180 = vsel %vm5074, %v2881, %v5627
    %v6181 = vsel %vm5075, %v2886, %v5628
    %v6182 = vsel %vm5076, %v2889, %v5629
    %v6183 = vsel %vm5077, %v2894, %v5630
    %v6184 = vsel %vm5078, %v2897, %v5631
    %v6185 = vsel %vm5079, %v2902, %v5632
    %v6186 = vsel %vm5080, %v2905, %v5633
    %v6187 = vsel %vm5081, %v2910, %v5634
    %v6188 = vsel %vm5082, %v2913, %v5635
    %v6189 = vsel %vm5083, %v2918, %v5636
    %v6190 = vsel %vm5084, %v2921, %v5637
    %v6191 = vsel %vm5085, %v2926, %v5638
    %v6192 = vsel %vm5086, %v2929, %v5639
    %v6193 = vsel %vm5087, %v2934, %v5640
    %v6194 = vsel %vm5088, %v2937, %v5641
    %v6195 = vsel %vm5089, %v2942, %v5642
    %v6196 = vsel %vm5090, %v2945, %v5643
    %v6197 = vsel %vm5091, %v2950, %v5644
    %v6198 = vsel %vm5092, %v2953, %v5645
    %v6199 = vsel %vm5093, %v2958, %v5646
    %v6200 = vsel %vm5094, %v2961, %v5647
    %v6201 = vsel %vm5095, %v2966, %v5648
    %v6202 = vsel %vm5096, %v2969, %v5649
    %v6203 = vsel %vm5097, %v2974, %v5650
    %v6204 = vsel %vm5098, %v2977, %v5651
    %v6205 = vsel %vm5099, %v2982, %v5652
    %v6206 = vsel %vm5100, %v2985, %v5653
    %v6207 = vsel %vm5101, %v2990, %v5654
    %v6208 = vsel %vm5102, %v2993, %v5655
    %v6209 = vsel %vm5103, %v2998, %v5656
    %v6210 = vsel %vm5104, %v3001, %v5657
    %v6211 = vsel %vm5105, %v3006, %v5658
    %v6212 = vsel %vm5106, %v3009, %v5659
    %v6213 = vsel %vm5107, %v3014, %v5660
    %v6214 = vsel %vm5108, %v3017, %v5661
    %v6215 = vsel %vm5109, %v3022, %v5662
    %v6216 = vsel %vm5110, %v3025, %v5663
    %v6217 = vsel %vm5111, %v3030, %v5664
    %v6218 = vsel %vm5112, %v3033, %v5665
    %v6219 = vsel %vm5113, %v3038, %v5666
    %v6220 = vsel %vm5114, %v3041, %v5667
    %v6221 = vsel %vm5115, %v3046, %v5668
    %v6222 = vsel %vm5116, %v3049, %v5669
    %v6223 = vsel %vm5117, %v3054, %v5670
    %v6224 = vsel %vm5118, %v3057, %v5671
    %v6225 = vsel %vm5119, %v3062, %v5672
    %v6226 = vsel %vm5120, %v3065, %v5673
    %v6227 = vsel %vm5121, %v3070, %v5674
    %v6228 = vsel %vm5122, %v3073, %v5675
    %v6229 = vsel %vm5123, %v3078, %v5676
    %v6230 = vsel %vm5124, %v3081, %v5677
    %v6231 = vsel %vm5125, %v3086, %v5678
    %v6232 = vsel %vm5126, %v3089, %v5679
    %v6233 = vsel %vm5127, %v3094, %v5680
    %v6234 = vsel %vm5128, %v3097, %v5681
    %v6235 = vsel %vm5129, %v3102, %v5682
    %v6236 = vsel %vm5130, %v3105, %v5683
    %v6237 = vsel %vm5131, %v3110, %v5684
    %v6238 = vsel %vm5132, %v3113, %v5685
    %v6239 = vsel %vm5133, %v3118, %v5686
    %v6240 = vsel %vm5134, %v3121, %v5687
    %v6241 = vsel %vm5135, %v3126, %v5688
    %v6242 = vsel %vm5136, %v3129, %v5689
    %v6243 = vsel %vm5137, %v3134, %v5690
    %v6244 = vsel %vm5138, %v3137, %v5691
    %v6245 = vsel %vm5139, %v3142, %v5692
    %v6246 = vsel %vm5140, %v3145, %v5693
    %v6247 = vsel %vm5141, %v3150, %v5694
    %v6248 = vsel %vm5142, %v3153, %v5695
    %v6249 = vsel %vm5143, %v3158, %v5696
    %v6250 = vsel %vm5144, %v3161, %v5697
    %v6251 = vsel %vm5145, %v3166, %v5698
    %v6252 = vsel %vm5146, %v3169, %v5699
    %v6253 = vsel %vm5147, %v3174, %v5700
    %v6254 = vsel %vm5148, %v3177, %v5701
    %v6255 = vsel %vm5149, %v3182, %v5702
    %v6256 = vsel %vm5150, %v3185, %v5703
    %v6257 = vsel %vm5151, %v3190, %v5704
    %v6258 = vsel %vm5152, %v3193, %v5705
    %v6259 = vsel %vm5153, %v3198, %v5706
    %v6260 = vsel %vm5154, %v3201, %v5707
    %v6261 = vsel %vm5155, %v3206, %v5708
    %v6262 = vsel %vm5156, %v3209, %v5709
    %v6263 = vsel %vm5157, %v3214, %v5710
    %v6264 = vsel %vm5158, %v3217, %v5711
    %v6265 = vsel %vm5159, %v3222, %v5712
    %v6266 = vsel %vm5160, %v3225, %v5713
    %v6267 = vsel %vm5161, %v3230, %v5714
    %v6268 = vsel %vm5162, %v3233, %v5715
    %v6269 = vsel %vm5163, %v3238, %v5716
    %v6270 = vsel %vm5164, %v3241, %v5717
    %v6271 = vsel %vm5165, %v3246, %v5718
    %v6272 = vsel %vm5166, %v3249, %v5719
    %v6273 = vsel %vm5167, %v3254, %v5720
    %v6274 = vsel %vm5168, %v3257, %v5721
    %v6275 = vsel %vm5169, %v3262, %v5722
    %v6276 = vsel %vm5170, %v3265, %v5723
    %v6277 = vsel %vm5171, %v3270, %v5724
    %v6278 = vsel %vm5172, %v3273, %v5725
    %v6279 = vsel %vm5173, %v3278, %v5726
    %v6280 = vsel %vm5174, %v3281, %v5727
    %v6281 = vsel %vm5175, %v3286, %v5728
    %v6282 = vsel %vm5176, %v3289, %v5729
    %v6283 = vsel %vm5177, %v3294, %v5730
    %v6284 = vsel %vm5178, %v3297, %v5731
    %v6285 = vsel %vm5179, %v3302, %v5732
    %v6286 = vsel %vm5180, %v3305, %v5733
    %v6287 = vsel %vm5181, %v3310, %v5734
    %v6288 = vsel %vm5182, %v3313, %v5735
    %v6289 = vsel %vm5183, %v3318, %v5736
    %v6290 = vsel %vm5184, %v3321, %v5737
    %v6291 = vsel %vm5185, %v3326, %v5738
    %v6292 = vsel %vm5186, %v3329, %v5739
    %v6293 = vsel %vm5187, %v3334, %v5740
    %v6294 = vsel %vm5188, %v3337, %v5741
    %v6295 = vsel %vm5189, %v3342, %v5742
    %v6296 = vsel %vm5190, %v3345, %v5743
    %v6297 = vsel %vm5191, %v3350, %v5744
    %v6298 = vsel %vm5192, %v3353, %v5745
    %v6299 = vsel %vm5193, %v3358, %v5746
    %v6300 = vsel %vm5194, %v3361, %v5747
    %v6301 = vsel %vm5195, %v3366, %v5748
    %v6302 = vsel %vm5196, %v3369, %v5749
    %v6303 = vsel %vm5197, %v3374, %v5750
    %v6304 = vsel %vm5198, %v3377, %v5751
    %v6305 = vsel %vm5199, %v3382, %v5752
    %v6306 = vsel %vm5200, %v3385, %v5753
    %v6307 = vsel %vm5201, %v3390, %v5754
    %v6308 = vsel %vm5202, %v3393, %v5755
    %v6309 = vsel %vm5203, %v3398, %v5756
    %v6310 = vsel %vm5204, %v3401, %v5757
    %v6311 = vsel %vm5205, %v3406, %v5758
    %v6312 = vsel %vm5206, %v3409, %v5759
    %v6313 = vsel %vm5207, %v3414, %v5760
    %v6314 = vsel %vm5208, %v3417, %v5761
    %v6315 = vsel %vm5209, %v3422, %v5762
    %v6316 = vsel %vm5210, %v3425, %v5763
    %v6317 = vsel %vm5211, %v3430, %v5764
    %v6318 = vsel %vm5212, %v3433, %v5765
    %v6319 = vsel %vm5213, %v3438, %v5766
    %v6320 = vsel %vm5214, %v3441, %v5767
    %v6321 = vsel %vm5215, %v3446, %v5768
    %v6322 = vsel %vm5216, %v3449, %v5769
    %v6323 = vsel %vm5217, %v3454, %v5770
    %v6324 = vsel %vm5218, %v3457, %v5771
    %v6325 = vsel %vm5219, %v3462, %v5772
    %v6326 = vsel %vm5220, %v3465, %v5773
    %v6327 = vsel %vm5221, %v3470, %v5774
    %v6328 = vsel %vm5222, %v3473, %v5775
    %v6329 = vsel %vm5223, %v3478, %v5776
    %v6330 = vsel %vm5224, %v3481, %v5777
    %v6331 = vsel %vm5225, %v3486, %v5778
    %v6332 = vsel %vm5226, %v3489, %v5779
    %v6333 = vsel %vm5227, %v3494, %v5780
    %v6334 = vsel %vm5228, %v3497, %v5781
    %v6335 = vsel %vm5229, %v3502, %v5782
    %v6336 = vsel %vm5230, %v3505, %v5783
    %v6337 = vsel %vm5231, %v3510, %v5784
    %v6338 = vsel %vm5232, %v3513, %v5785
    %v6339 = vsel %vm5233, %v3518, %v5786
    %v6340 = vsel %vm5234, %v3521, %v5787
    %v6341 = vsel %vm5235, %v3526, %v5788
    %v6342 = vsel %vm5236, %v3529, %v5789
    %v6343 = vsel %vm5237, %v3534, %v5790
    %v6344 = vsel %vm5238, %v3537, %v5791
    %v6345 = vsel %vm5239, %v3542, %v5792
    %v6346 = vsel %vm5240, %v3545, %v5793
    %v6347 = vsel %vm5241, %v3550, %v5794
    %v6348 = vsel %vm5242, %v3553, %v5795
    %v6349 = vsel %vm5243, %v3558, %v5796
    %v6350 = vsel %vm5244, %v3561, %v5797
    %v6351 = vsel %vm5245, %v3566, %v5798
    %v6352 = vsel %vm5246, %v3569, %v5799
    %v6353 = vsel %vm5247, %v3574, %v5800
    %v6354 = vsel %vm5248, %v3577, %v5801
    %v6355 = vsel %vm5249, %v3582, %v5802
    %v6356 = vsel %vm5250, %v3585, %v5803
    %v6357 = vsel %vm5251, %v3590, %v5804
    %v6358 = vsel %vm5252, %v3593, %v5805
    %v6359 = vsel %vm5253, %v3598, %v5806
    %v6360 = vsel %vm5254, %v3601, %v5807
    %v6361 = vsel %vm5255, %v3606, %v5808
    %v6362 = vsel %vm5256, %v3609, %v5809
    %v6363 = vsel %vm5257, %v3614, %v5810
    %v6364 = vsel %vm5258, %v3617, %v5811
    %v6365 = vsel %vm5259, %v3622, %v5812
    %v6366 = vsel %vm5260, %v3625, %v5813
    %v6367 = vsel %vm5261, %v3630, %v5814
    %v6368 = vsel %vm5262, %v3633, %v5815
    %v6369 = vsel %vm5263, %v3638, %v5816
    %v6370 = vsel %vm5264, %v3641, %v5817
    %v6371 = vsel %vm5265, %v3646, %v5818
    %v6372 = vsel %vm5266, %v3649, %v5819
    %v6373 = vsel %vm5267, %v3654, %v5820
    %v6374 = vsel %vm5268, %v3657, %v5821
    %v6375 = vsel %vm5269, %v3662, %v5822
    %v6376 = vsel %vm5270, %v3665, %v5823
    %v6377 = vsel %vm5271, %v3670, %v5824
    %v6378 = vsel %vm5272, %v3673, %v5825
    %v6379 = vsel %vm5273, %v3678, %v5826
    %v6380 = vsel %vm5274, %v3681, %v5827
    %v6381 = vsel %vm5275, %v3686, %v5828
    %v6382 = vsel %vm5276, %v3689, %v5829
    %v6383 = vsel %vm5277, %v3694, %v5830
    %v6384 = vsel %vm5278, %v3697, %v5831
    %v6385 = vsel %vm5279, %v3702, %v5832
    %v6386 = vsel %vm5280, %v3705, %v5833
    %v6387 = vsel %vm5281, %v3710, %v5834
    %v6388 = vsel %vm5282, %v3713, %v5835
    %v6389 = vsel %vm5283, %v3718, %v5836
    %v6390 = vsel %vm5284, %v3721, %v5837
    %v6391 = vsel %vm5285, %v3726, %v5838
    %v6392 = vsel %vm5286, %v3729, %v5839
    %v6393 = vsel %vm5287, %v3734, %v5840
    %v6394 = vsel %vm5288, %v3737, %v5841
    %v6395 = vsel %vm5289, %v3742, %v5842
    %v6396 = vsel %vm5290, %v3745, %v5843
    %v6397 = vsel %vm5291, %v3750, %v5844
    %v6398 = vsel %vm5292, %v3753, %v5845
    %v6399 = vsel %vm5293, %v3758, %v5846
    %v6400 = vsel %vm5294, %v3761, %v5847
    %v6401 = vsel %vm5295, %v3766, %v5848
    %v6402 = vsel %vm5296, %v3769, %v5849
    %v6403 = vsel %vm5297, %v3774, %v5850
    %v6404 = vsel %vm5298, %v3777, %v5851
    %v6405 = vsel %vm5299, %v3782, %v5852
    %v6406 = vsel %vm5300, %v3785, %v5853
    %v6407 = vsel %vm5301, %v3790, %v5854
    %v6408 = vsel %vm5302, %v3793, %v5855
    %v6409 = vsel %vm5303, %v3798, %v5856
    %v6410 = vsel %vm5304, %v3801, %v5857
    %v6411 = vsel %vm5305, %v3806, %v5858
    %v6412 = vsel %vm5306, %v3809, %v5859
    %v6413 = vsel %vm5307, %v3814, %v5860
    %v6414 = vsel %vm5308, %v3817, %v5861
    %v6415 = vsel %vm5309, %v3822, %v5862
    %v6416 = vsel %vm5310, %v3825, %v5863
    %v6417 = vsel %vm5311, %v3830, %v5864
    %v6418 = vsel %vm5312, %v3833, %v5865
    %v6419 = vsel %vm5313, %v3838, %v5866
    %v6420 = vsel %vm5314, %v3841, %v5867
    %v6421 = vsel %vm5315, %v3846, %v5868
    %v6422 = vsel %vm5316, %v3849, %v5869
    %v6423 = vsel %vm5317, %v3854, %v5870
    %v6424 = vsel %vm5318, %v3857, %v5871
    %v6425 = vsel %vm5319, %v3862, %v5872
    %v6426 = vsel %vm5320, %v3865, %v5873
    %v6427 = vsel %vm5321, %v3870, %v5874
    %v6428 = vsel %vm5322, %v3873, %v5875
    %v6429 = vsel %vm5323, %v3878, %v5876
    %v6430 = vsel %vm5324, %v3881, %v5877
    %v6431 = vsel %vm5325, %v3886, %v5878
    %v6432 = vsel %vm5326, %v3889, %v5879
    %v6433 = vsel %vm5327, %v3894, %v5880
    %v6434 = vsel %vm5328, %v3897, %v5881
    %v6435 = vsel %vm5329, %v3902, %v5882
    %v6436 = vsel %vm5330, %v3905, %v5883
    %v6437 = vsel %vm5331, %v3910, %v5884
    %v6438 = vsel %vm5332, %v3913, %v5885
    %v6439 = vsel %vm5333, %v3918, %v5886
    %v6440 = vsel %vm5334, %v3921, %v5887
    %v6441 = vsel %vm5335, %v3926, %v5888
    %v6442 = vsel %vm5336, %v3929, %v5889
    %v6443 = vsel %vm5337, %v3934, %v5890
    %v6444 = vsel %vm5338, %v3937, %v5891
    %v6445 = vsel %vm5339, %v3942, %v5892
    %v6446 = vsel %vm5340, %v3945, %v5893
    %v6447 = vsel %vm5341, %v3950, %v5894
    %v6448 = vsel %vm5342, %v3953, %v5895
    %v6449 = vsel %vm5343, %v3958, %v5896
    %v6450 = vsel %vm5344, %v3961, %v5897
    %v6451 = vsel %vm5345, %v3966, %v5898
    %v6452 = vsel %vm5346, %v3969, %v5899
    %v6453 = vsel %vm5347, %v3974, %v5900
    %v6454 = vsel %vm5348, %v3977, %v5901
    %v6455 = vsel %vm5349, %v3982, %v5902
    %v6456 = vsel %vm5350, %v3985, %v5903
    %v6457 = vsel %vm5351, %v3990, %v5904
    %v6458 = vsel %vm5352, %v3993, %v5905
    %v6459 = vsel %vm5353, %v3998, %v5906
    %v6460 = vsel %vm5354, %v4001, %v5907
    %v6461 = vsel %vm5355, %v4006, %v5908
    %v6462 = vsel %vm5356, %v4009, %v5909
    %v6463 = vsel %vm5357, %v4014, %v5910
    %v6464 = vsel %vm5358, %v4017, %v5911
    %v6465 = vsel %vm5359, %v4022, %v5912
    %v6466 = vsel %vm5360, %v4025, %v5913
    %v6467 = vsel %vm5361, %v4030, %v5914
    %v6468 = vsel %vm5362, %v4033, %v5915
    %v6469 = vsel %vm5363, %v4038, %v5916
    %v6470 = vsel %vm5364, %v4041, %v5917
    %v6471 = vsel %vm5365, %v4046, %v5918
    %v6472 = vsel %vm5366, %v4049, %v5919
    %v6473 = vsel %vm5367, %v4054, %v5920
    %v6474 = vsel %vm5368, %v4057, %v5921
    %v6475 = vsel %vm5369, %v4062, %v5922
    %v6476 = vsel %vm5370, %v4065, %v5923
    %v6477 = vsel %vm5371, %v4070, %v5924
    %v6478 = vsel %vm5372, %v4073, %v5925
    %v6479 = vsel %vm5373, %v4078, %v5926
    %v6480 = vsel %vm5374, %v4081, %v5927
    %v6481 = vsel %vm5375, %v4086, %v5928
    %v6482 = vsel %vm5376, %v4089, %v5929
    %v6483 = vsel %vm5377, %v4094, %v5930
    %v6484 = vsel %vm5378, %v4097, %v5931
    %v6485 = vsel %vm5379, %v4102, %v5932
    %v6486 = vsel %vm5380, %v4105, %v5933
    %v6487 = vsel %vm5381, %v4110, %v5934
    %v6488 = vsel %vm5382, %v4113, %v5935
    %v6489 = vsel %vm5383, %v4118, %v5936
    %v6490 = vsel %vm5384, %v4121, %v5937
    %v6491 = vsel %vm5385, %v4126, %v5938
    %v6492 = vsel %vm5386, %v4129, %v5939
    %v6493 = vsel %vm5387, %v4134, %v5940
    %v6494 = vsel %vm5388, %v4137, %v5941
    %v6495 = vsel %vm5389, %v4142, %v5942
    %v6496 = vsel %vm5390, %v4145, %v5943
    %v6497 = vsel %vm5391, %v4150, %v5944
    %v6498 = vsel %vm5392, %v4153, %v5945
    %v6499 = vsel %vm5393, %v4158, %v5946
    %v6500 = vsel %vm5394, %v4161, %v5947
    %v6501 = vsel %vm5395, %v4166, %v5948
    %v6502 = vsel %vm5396, %v4169, %v5949
    %v6503 = vsel %vm5397, %v4174, %v5950
    %v6504 = vsel %vm5398, %v4177, %v5951
    %v6505 = vsel %vm5399, %v4182, %v5952
    %v6506 = vsel %vm5400, %v4185, %v5953
    %v6507 = vsel %vm5401, %v4190, %v5954
    %v6508 = vsel %vm5402, %v4193, %v5955
    %v6509 = vsel %vm5403, %v4198, %v5956
    %v6510 = vsel %vm5404, %v4201, %v5957
    %v6511 = vsel %vm5405, %v4206, %v5958
    %v6512 = vsel %vm5406, %v4209, %v5959
    %v6513 = vsel %vm5407, %v4214, %v5960
    %v6514 = vsel %vm5408, %v4217, %v5961
    %v6515 = vsel %vm5409, %v4222, %v5962
    %v6516 = vsel %vm5410, %v4225, %v5963
    %v6517 = vsel %vm5411, %v4230, %v5964
    %v6518 = vsel %vm5412, %v4233, %v5965
    %v6519 = vsel %vm5413, %v4238, %v5966
    %v6520 = vsel %vm5414, %v4241, %v5967
    %v6521 = vsel %vm5415, %v4246, %v5968
    %v6522 = vsel %vm5416, %v4249, %v5969
    %v6523 = vsel %vm5417, %v4254, %v5970
    %v6524 = vsel %vm5418, %v4257, %v5971
    %v6525 = vsel %vm5419, %v4262, %v5972
    %v6526 = vsel %vm5420, %v4265, %v5973
    %v6527 = vsel %vm5421, %v4270, %v5974
    %v6528 = vsel %vm5422, %v4273, %v5975
    %v6529 = vsel %vm5423, %v4278, %v5976
    %v6530 = vsel %vm5424, %v4281, %v5977
    %v6531 = vsel %vm5425, %v4286, %v5978
    %v6532 = vsel %vm5426, %v4289, %v5979
    %v6533 = vsel %vm5427, %v4294, %v5980
    %v6534 = vsel %vm5428, %v4297, %v5981
    %v6535 = vsel %vm5429, %v4302, %v5982
    %v6536 = vsel %vm5430, %v4305, %v5983
    %v6537 = vsel %vm5431, %v4310, %v5984
    %v6538 = vsel %vm5432, %v4313, %v5985
    %v6539 = vsel %vm5433, %v4318, %v5986
    %v6540 = vsel %vm5434, %v4321, %v5987
    %v6541 = vsel %vm5435, %v4326, %v5988
    %v6542 = vsel %vm5436, %v4329, %v5989
    %v6543 = vsel %vm5437, %v4334, %v5990
    %v6544 = vsel %vm5438, %v4337, %v5991
    %v6545 = vsel %vm5439, %v4342, %v5992
    %v6546 = vsel %vm5440, %v4345, %v5993
    %v6547 = vsel %vm5441, %v4350, %v5994
    %v6548 = vsel %vm5442, %v4353, %v5995
    %v6549 = vsel %vm5443, %v4358, %v5996
    %v6550 = vsel %vm5444, %v4361, %v5997
    %v6551 = vsel %vm5445, %v4366, %v5998
    %v6552 = vsel %vm5446, %v4369, %v5999
    %v6553 = vsel %vm5447, %v4374, %v6000
    %v6554 = vsel %vm5448, %v4377, %v6001
    %v6555 = vsel %vm5449, %v4382, %v6002
    %v6556 = vsel %vm5450, %v4385, %v6003
    %v6557 = vsel %vm5451, %v4390, %v6004
    %v6558 = vsel %vm5452, %v4393, %v6005
    %v6559 = vsel %vm5453, %v4398, %v6006
    %v6560 = vsel %vm5454, %v4401, %v6007
    %v6561 = vsel %vm5455, %v4406, %v6008
    %v6562 = vsel %vm5456, %v4409, %v6009
    %v6563 = vsel %vm5457, %v4414, %v6010
    %v6564 = vsel %vm5458, %v4417, %v6011
    %v6565 = vsel %vm5459, %v4422, %v6012
    %v6566 = vsel %vm5460, %v4425, %v6013
    %v6567 = vsel %vm5461, %v4430, %v6014
    %v6568 = vsel %vm5462, %v4433, %v6015
    %v6569 = vsel %vm5463, %v4438, %v6016
    %v6570 = vsel %vm5464, %v4441, %v6017
    %v6571 = vsel %vm5465, %v4446, %v6018
    %v6572 = vsel %vm5466, %v4449, %v6019
    %v6573 = vsel %vm5467, %v4454, %v6020
    %v6574 = vsel %vm5468, %v4457, %v6021
    %v6575 = vsel %vm5469, %v4462, %v6022
    %v6576 = vsel %vm5470, %v4465, %v6023
    %v6577 = vsel %vm5471, %v4470, %v6024
    %v6578 = vsel %vm5472, %v4473, %v6025
    %v6579 = vsel %vm5473, %v4478, %v6026
    %v6580 = vsel %vm5474, %v4481, %v6027
    %v6581 = vsel %vm5475, %v4486, %v6028
    %v6582 = vsel %vm5476, %v4489, %v6029
    %v6583 = vsel %vm5477, %v4494, %v6030
    %v6584 = vsel %vm5478, %v4497, %v6031
    %v6585 = vsel %vm5479, %v4502, %v6032
    %v6586 = vsel %vm5480, %v4505, %v6033
    %v6587 = vsel %vm5481, %v4510, %v6034
    %v6588 = vsel %vm5482, %v4513, %v6035
    %v6589 = vsel %vm5483, %v4518, %v6036
    %v6590 = vsel %vm5484, %v4521, %v6037
    %v6591 = vsel %vm5485, %v4526, %v6038
    %v6592 = vsel %vm5486, %v4529, %v6039
    %v6593 = vsel %vm5487, %v4534, %v6040
    %v6594 = vsel %vm5488, %v4537, %v6041
    %v6595 = vsel %vm5489, %v4542, %v6042
    %v6596 = vsel %vm5490, %v4545, %v6043
    %v6597 = vsel %vm5491, %v4550, %v6044
    %v6598 = vsel %vm5492, %v4553, %v6045
    %v6599 = vsel %vm5493, %v4558, %v6046
    %v6600 = vsel %vm5494, %v4561, %v6047
    %v6601 = vsel %vm5495, %v4566, %v6048
    %v6602 = vsel %vm5496, %v4569, %v6049
    %v6603 = vsel %vm5497, %v4574, %v6050
    %v6604 = vsel %vm5498, %v4577, %v6051
    %v6605 = vsel %vm5499, %v4582, %v6052
    %v6606 = vsel %vm5500, %v4585, %v6053
    %v6607 = vsel %vm5501, %v4590, %v6054
    %v6608 = vsel %vm5502, %v4593, %v6055
    %v6609 = vsel %vm5503, %v4598, %v6056
    %v6610 = vsel %vm5504, %v4601, %v6057
    %v6611 = vsel %vm5505, %v4606, %v6058
    %v6612 = vsel %vm5506, %v4609, %v6059
    %v6613 = vsel %vm5507, %v4614, %v6060
    %v6614 = vsel %vm5508, %v4617, %v6061
    %v6615 = vsel %vm5509, %v4622, %v6062
    %v6616 = vsel %vm5510, %v4625, %v6063
    %v6617 = vsel %vm5511, %v4630, %v6064
    %v6618 = vsel %vm5512, %v4633, %v6065
    %v6619 = vsel %vm5513, %v4638, %v6066
    %v6620 = vsel %vm5514, %v4641, %v6067
    %v6621 = vsel %vm5515, %v4646, %v6068
    %v6622 = vsel %vm5516, %v4649, %v6069
    %v6623 = vsel %vm5517, %v4654, %v6070
    %v6624 = vsel %vm5518, %v4657, %v6071
    %v6625 = vsel %vm5519, %v4662, %v6072
    %v6626 = vsel %vm5520, %v4665, %v6073
    %v6627 = vsel %vm5521, %v4670, %v6074
    %v6628 = vsel %vm5522, %v4673, %v6075
    %v6629 = vsel %vm5523, %v4678, %v6076
    %v6630 = vsel %vm5524, %v4681, %v6077
    %v6631 = vsel %vm5525, %v4686, %v6078
    %v6632 = vsel %vm5526, %v4689, %v6079
    %v6633 = vsel %vm5527, %v4694, %v6080
    %v6634 = vsel %vm5528, %v4697, %v6081
    %v6635 = vsel %vm5529, %v4702, %v6082
    %v6636 = vsel %vm5530, %v4705, %v6083
    %v6637 = vsel %vm5531, %v4710, %v6084
    %v6638 = vsel %vm5532, %v4713, %v6085
    %v6639 = vsel %vm5533, %v4718, %v6086
    %v6640 = vsel %vm5534, %v4721, %v6087
    %v6641 = vsel %vm5535, %v4726, %v6088
    %v6642 = vsel %vm5536, %v4729, %v6089
    %v6643 = vsel %vm5537, %v4734, %v6090
    %v6644 = vsel %vm5538, %v4737, %v6091
    %v6645 = vsel %vm5539, %v4742, %v6092
    %v6646 = vsel %vm5540, %v4745, %v6093
    %v6647 = vsel %vm5541, %v4750, %v6094
    %v6648 = vsel %vm5542, %v4753, %v6095
    %v6649 = vsel %vm5543, %v4758, %v6096
    %v6650 = vsel %vm5544, %v4761, %v6097
    %v6651 = vsel %vm5545, %v4766, %v6098
    %v6652 = vsel %vm5546, %v4769, %v6099
    %v6653 = vsel %vm5547, %v4774, %v6100
    %v6654 = vsel %vm5548, %v4777, %v6101
    %v6655 = vsel %vm5549, %v4782, %v6102
    %v6656 = vsel %vm5550, %v4785, %v6103
    %v6657 = vsel %vm5551, %v4790, %v6104
    %v6658 = vsel %vm5552, %v4793, %v6105
    %v6659 = vsel %vm5553, %v4798, %v6106
    %v6660 = vsel %vm5554, %v4801, %v6107
    %v6661 = vsel %vm5555, %v4806, %v6108
    %v6662 = vsel %vm5556, %v4809, %v6109
    %v6663 = vsel %vm5557, %v4814, %v6110
    %v6664 = vsel %vm5558, %v4817, %v6111
    %v6665 = vsel %vm5559, %v4822, %v6112
    %v6666 = vsel %vm5560, %v4825, %v6113
    %v6667 = vsel %vm5561, %v4830, %v6114
    %v6668 = vsel %vm5562, %v4833, %v6115
    %v6669 = vsel %vm5563, %v4838, %v6116
    %v6670 = vsel %vm5564, %v4841, %v6117
    %v6671 = vsel %vm5565, %v4846, %v6118
    %v6672 = vsel %vm5566, %v4849, %v6119
    %v6673 = vsel %vm5567, %v4854, %v6120
    %v6674 = vsel %vm5568, %v4857, %v6121
    %v6675 = vsel %vm5569, %v4862, %v6122
    %v6676 = vsel %vm5570, %v4865, %v6123
    %v6677 = vsel %vm5571, %v4870, %v6124
    %v6678 = vsel %vm5572, %v4873, %v6125
    %v6679 = vsel %vm5573, %v4878, %v6126
    %v6680 = vsel %vm5574, %v4881, %v6127
    %v6681 = vsel %vm5575, %v4886, %v6128
    %v6682 = vsel %vm5576, %v4889, %v6129
    %v6683 = vsel %vm5577, %v4894, %v6130
    %v6684 = vsel %vm5578, %v4897, %v6131
    %v6685 = vsel %vm5579, %v4902, %v6132
    %v6686 = vsel %vm5580, %v4905, %v6133
    %v6687 = vsel %vm5581, %v4910, %v6134
    %v6688 = vsel %vm5582, %v4913, %v6135
    %v6689 = vsel %vm5583, %v4918, %v6136
    %v6690 = vsel %vm5584, %v4921, %v6137
    %v6691 = vsel %vm5585, %v4926, %v6138
    %v6692 = vsel %vm5586, %v4929, %v6139
    %v6693 = vsel %vm5587, %v4934, %v6140
    %v6694 = vsel %vm5588, %v4937, %v6141
    %v6695 = vsel %vm5589, %v4942, %v6142
    %v6696 = vsel %vm5590, %v4945, %v6143
    %v6697 = vsel %vm5591, %v4950, %v6144
    %v6698 = vsel %vm5592, %v4953, %v6145
    %v6699 = vsel %vm5593, %v4958, %v6146
    %v6700 = vsel %vm5594, %v4961, %v6147
    %v6701 = vsel %vm5595, %v4966, %v6148
    %v6702 = vsel %vm5596, %v4969, %v6149
    %v6703 = vsel %vm5597, %v4974, %v6150
    %v6704 = vsel %vm5598, %v4977, %v6151
    %v6705 = vsel %vm5599, %v4982, %v6152
    %v6706 = vsel %vm5600, %v4985, %v6153
    %v6707 = vsel %vm5601, %v4990, %v6154
    %v6708 = vsel %vm5602, %v4993, %v6155
    %v6709 = vsel %vm5603, %v4998, %v6156
    %v6710 = vsel %vm5604, %v5001, %v6157
    %v6711 = vsel %vm5605, %v5006, %v6158
    %v6712 = vsel %vm5606, %v5009, %v6159
    %v6713 = vsel %vm5607, %v5014, %v6160
    %v6714 = vsel %vm5608, %v5017, %v6161
    %v6715 = vsel %vm5609, %v5022, %v6162
    %v6716 = vsel %vm5610, %v5025, %v6163
    %v6717 = vsel %vm5611, %v5030, %v6164
    %v6718 = vsel %vm5612, %v5033, %v6165
    %v6719 = vsel %vm5613, %v5038, %v6166
    %v6720 = vsel %vm5614, %v5041, %v6167
    %v6721 = vsel %vm5615, %v5046, %v6168
    %v6722 = vsel %vm5616, %v5049, %v6169
    %v6723 = vsel %vm5617, %v5054, %v6170
    %v6724 = vsel %vm5618, %v5057, %v6171
    %v6725 = vsel %vm5619, %v5062, %v6172
    %v6726 = vadd.f32 %v6173, %v6174
    %v6727 = vadd.f32 %v6726, %v6175
    %v6728 = vadd.f32 %v6727, %v6176
    %v6729 = vadd.f32 %v6728, %v6177
    %v6730 = vadd.f32 %v6729, %v6178
    %v6731 = vadd.f32 %v6730, %v6179
    %v6732 = vadd.f32 %v6731, %v6180
    %v6733 = vadd.f32 %v6732, %v6181
    %v6734 = vadd.f32 %v6733, %v6182
    %v6735 = vadd.f32 %v6734, %v6183
    %v6736 = vadd.f32 %v6735, %v6184
    %v6737 = vadd.f32 %v6736, %v6185
    %v6738 = vadd.f32 %v6737, %v6186
    %v6739 = vadd.f32 %v6738, %v6187
    %v6740 = vadd.f32 %v6739, %v6188
    %v6741 = vadd.f32 %v6740, %v6189
    %v6742 = vadd.f32 %v6741, %v6190
    %v6743 = vadd.f32 %v6742, %v6191
    %v6744 = vadd.f32 %v6743, %v6192
    %v6745 = vadd.f32 %v6744, %v6193
    %v6746 = vadd.f32 %v6745, %v6194
    %v6747 = vadd.f32 %v6746, %v6195
    %v6748 = vadd.f32 %v6747, %v6196
    %v6749 = vadd.f32 %v6748, %v6197
    %v6750 = vadd.f32 %v6749, %v6198
    %v6751 = vadd.f32 %v6750, %v6199
    %v6752 = vadd.f32 %v6751, %v6200
    %v6753 = vadd.f32 %v6752, %v6201
    %v6754 = vadd.f32 %v6753, %v6202
    %v6755 = vadd.f32 %v6754, %v6203
    %v6756 = vadd.f32 %v6755, %v6204
    %v6757 = vadd.f32 %v6756, %v6205
    %v6758 = vadd.f32 %v6757, %v6206
    %v6759 = vadd.f32 %v6758, %v6207
    %v6760 = vadd.f32 %v6759, %v6208
    %v6761 = vadd.f32 %v6760, %v6209
    %v6762 = vadd.f32 %v6761, %v6210
    %v6763 = vadd.f32 %v6762, %v6211
    %v6764 = vadd.f32 %v6763, %v6212
    %v6765 = vadd.f32 %v6764, %v6213
    %v6766 = vadd.f32 %v6765, %v6214
    %v6767 = vadd.f32 %v6766, %v6215
    %v6768 = vadd.f32 %v6767, %v6216
    %v6769 = vadd.f32 %v6768, %v6217
    %v6770 = vadd.f32 %v6769, %v6218
    %v6771 = vadd.f32 %v6770, %v6219
    %v6772 = vadd.f32 %v6771, %v6220
    %v6773 = vadd.f32 %v6772, %v6221
    %v6774 = vadd.f32 %v6773, %v6222
    %v6775 = vadd.f32 %v6774, %v6223
    %v6776 = vadd.f32 %v6775, %v6224
    %v6777 = vadd.f32 %v6776, %v6225
    %v6778 = vadd.f32 %v6777, %v6226
    %v6779 = vadd.f32 %v6778, %v6227
    %v6780 = vadd.f32 %v6779, %v6228
    %v6781 = vadd.f32 %v6780, %v6229
    %v6782 = vadd.f32 %v6781, %v6230
    %v6783 = vadd.f32 %v6782, %v6231
    %v6784 = vadd.f32 %v6783, %v6232
    %v6785 = vadd.f32 %v6784, %v6233
    %v6786 = vadd.f32 %v6785, %v6234
    %v6787 = vadd.f32 %v6786, %v6235
    %v6788 = vadd.f32 %v6787, %v6236
    %v6789 = vadd.f32 %v6788, %v6237
    %v6790 = vadd.f32 %v6789, %v6238
    %v6791 = vadd.f32 %v6790, %v6239
    %v6792 = vadd.f32 %v6791, %v6240
    %v6793 = vadd.f32 %v6792, %v6241
    %v6794 = vadd.f32 %v6793, %v6242
    %v6795 = vadd.f32 %v6794, %v6243
    %v6796 = vadd.f32 %v6795, %v6244
    %v6797 = vadd.f32 %v6796, %v6245
    %v6798 = vadd.f32 %v6797, %v6246
    %v6799 = vadd.f32 %v6798, %v6247
    %v6800 = vadd.f32 %v6799, %v6248
    %v6801 = vadd.f32 %v6800, %v6249
    %v6802 = vadd.f32 %v6801, %v6250
    %v6803 = vadd.f32 %v6802, %v6251
    %v6804 = vadd.f32 %v6803, %v6252
    %v6805 = vadd.f32 %v6804, %v6253
    %v6806 = vadd.f32 %v6805, %v6254
    %v6807 = vadd.f32 %v6806, %v6255
    %v6808 = vadd.f32 %v6807, %v6256
    %v6809 = vadd.f32 %v6808, %v6257
    %v6810 = vadd.f32 %v6809, %v6258
    %v6811 = vadd.f32 %v6810, %v6259
    %v6812 = vadd.f32 %v6811, %v6260
    %v6813 = vadd.f32 %v6812, %v6261
    %v6814 = vadd.f32 %v6813, %v6262
    %v6815 = vadd.f32 %v6814, %v6263
    %v6816 = vadd.f32 %v6815, %v6264
    %v6817 = vadd.f32 %v6816, %v6265
    %v6818 = vadd.f32 %v6817, %v6266
    %v6819 = vadd.f32 %v6818, %v6267
    %v6820 = vadd.f32 %v6819, %v6268
    %v6821 = vadd.f32 %v6820, %v6269
    %v6822 = vadd.f32 %v6821, %v6270
    %v6823 = vadd.f32 %v6822, %v6271
    %v6824 = vadd.f32 %v6823, %v6272
    %v6825 = vadd.f32 %v6824, %v6273
    %v6826 = vadd.f32 %v6825, %v6274
    %v6827 = vadd.f32 %v6826, %v6275
    %v6828 = vadd.f32 %v6827, %v6276
    %v6829 = vadd.f32 %v6828, %v6277
    %v6830 = vadd.f32 %v6829, %v6278
    %v6831 = vadd.f32 %v6830, %v6279
    %v6832 = vadd.f32 %v6831, %v6280
    %v6833 = vadd.f32 %v6832, %v6281
    %v6834 = vadd.f32 %v6833, %v6282
    %v6835 = vadd.f32 %v6834, %v6283
    %v6836 = vadd.f32 %v6835, %v6284
    %v6837 = vadd.f32 %v6836, %v6285
    %v6838 = vadd.f32 %v6837, %v6286
    %v6839 = vadd.f32 %v6838, %v6287
    %v6840 = vadd.f32 %v6839, %v6288
    %v6841 = vadd.f32 %v6840, %v6289
    %v6842 = vadd.f32 %v6841, %v6290
    %v6843 = vadd.f32 %v6842, %v6291
    %v6844 = vadd.f32 %v6843, %v6292
    %v6845 = vadd.f32 %v6844, %v6293
    %v6846 = vadd.f32 %v6845, %v6294
    %v6847 = vadd.f32 %v6846, %v6295
    %v6848 = vadd.f32 %v6847, %v6296
    %v6849 = vadd.f32 %v6848, %v6297
    %v6850 = vadd.f32 %v6849, %v6298
    %v6851 = vadd.f32 %v6850, %v6299
    %v6852 = vadd.f32 %v6851, %v6300
    %v6853 = vadd.f32 %v6852, %v6301
    %v6854 = vadd.f32 %v6853, %v6302
    %v6855 = vadd.f32 %v6854, %v6303
    %v6856 = vadd.f32 %v6855, %v6304
    %v6857 = vadd.f32 %v6856, %v6305
    %v6858 = vadd.f32 %v6857, %v6306
    %v6859 = vadd.f32 %v6858, %v6307
    %v6860 = vadd.f32 %v6859, %v6308
    %v6861 = vadd.f32 %v6860, %v6309
    %v6862 = vadd.f32 %v6861, %v6310
    %v6863 = vadd.f32 %v6862, %v6311
    %v6864 = vadd.f32 %v6863, %v6312
    %v6865 = vadd.f32 %v6864, %v6313
    %v6866 = vadd.f32 %v6865, %v6314
    %v6867 = vadd.f32 %v6866, %v6315
    %v6868 = vadd.f32 %v6867, %v6316
    %v6869 = vadd.f32 %v6868, %v6317
    %v6870 = vadd.f32 %v6869, %v6318
    %v6871 = vadd.f32 %v6870, %v6319
    %v6872 = vadd.f32 %v6871, %v6320
    %v6873 = vadd.f32 %v6872, %v6321
    %v6874 = vadd.f32 %v6873, %v6322
    %v6875 = vadd.f32 %v6874, %v6323
    %v6876 = vadd.f32 %v6875, %v6324
    %v6877 = vadd.f32 %v6876, %v6325
    %v6878 = vadd.f32 %v6877, %v6326
    %v6879 = vadd.f32 %v6878, %v6327
    %v6880 = vadd.f32 %v6879, %v6328
    %v6881 = vadd.f32 %v6880, %v6329
    %v6882 = vadd.f32 %v6881, %v6330
    %v6883 = vadd.f32 %v6882, %v6331
    %v6884 = vadd.f32 %v6883, %v6332
    %v6885 = vadd.f32 %v6884, %v6333
    %v6886 = vadd.f32 %v6885, %v6334
    %v6887 = vadd.f32 %v6886, %v6335
    %v6888 = vadd.f32 %v6887, %v6336
    %v6889 = vadd.f32 %v6888, %v6337
    %v6890 = vadd.f32 %v6889, %v6338
    %v6891 = vadd.f32 %v6890, %v6339
    %v6892 = vadd.f32 %v6891, %v6340
    %v6893 = vadd.f32 %v6892, %v6341
    %v6894 = vadd.f32 %v6893, %v6342
    %v6895 = vadd.f32 %v6894, %v6343
    %v6896 = vadd.f32 %v6895, %v6344
    %v6897 = vadd.f32 %v6896, %v6345
    %v6898 = vadd.f32 %v6897, %v6346
    %v6899 = vadd.f32 %v6898, %v6347
    %v6900 = vadd.f32 %v6899, %v6348
    %v6901 = vadd.f32 %v6900, %v6349
    %v6902 = vadd.f32 %v6901, %v6350
    %v6903 = vadd.f32 %v6902, %v6351
    %v6904 = vadd.f32 %v6903, %v6352
    %v6905 = vadd.f32 %v6904, %v6353
    %v6906 = vadd.f32 %v6905, %v6354
    %v6907 = vadd.f32 %v6906, %v6355
    %v6908 = vadd.f32 %v6907, %v6356
    %v6909 = vadd.f32 %v6908, %v6357
    %v6910 = vadd.f32 %v6909, %v6358
    %v6911 = vadd.f32 %v6910, %v6359
    %v6912 = vadd.f32 %v6911, %v6360
    %v6913 = vadd.f32 %v6912, %v6361
    %v6914 = vadd.f32 %v6913, %v6362
    %v6915 = vadd.f32 %v6914, %v6363
    %v6916 = vadd.f32 %v6915, %v6364
    %v6917 = vadd.f32 %v6916, %v6365
    %v6918 = vadd.f32 %v6917, %v6366
    %v6919 = vadd.f32 %v6918, %v6367
    %v6920 = vadd.f32 %v6919, %v6368
    %v6921 = vadd.f32 %v6920, %v6369
    %v6922 = vadd.f32 %v6921, %v6370
    %v6923 = vadd.f32 %v6922, %v6371
    %v6924 = vadd.f32 %v6923, %v6372
    %v6925 = vadd.f32 %v6924, %v6373
    %v6926 = vadd.f32 %v6925, %v6374
    %v6927 = vadd.f32 %v6926, %v6375
    %v6928 = vadd.f32 %v6927, %v6376
    %v6929 = vadd.f32 %v6928, %v6377
    %v6930 = vadd.f32 %v6929, %v6378
    %v6931 = vadd.f32 %v6930, %v6379
    %v6932 = vadd.f32 %v6931, %v6380
    %v6933 = vadd.f32 %v6932, %v6381
    %v6934 = vadd.f32 %v6933, %v6382
    %v6935 = vadd.f32 %v6934, %v6383
    %v6936 = vadd.f32 %v6935, %v6384
    %v6937 = vadd.f32 %v6936, %v6385
    %v6938 = vadd.f32 %v6937, %v6386
    %v6939 = vadd.f32 %v6938, %v6387
    %v6940 = vadd.f32 %v6939, %v6388
    %v6941 = vadd.f32 %v6940, %v6389
    %v6942 = vadd.f32 %v6941, %v6390
    %v6943 = vadd.f32 %v6942, %v6391
    %v6944 = vadd.f32 %v6943, %v6392
    %v6945 = vadd.f32 %v6944, %v6393
    %v6946 = vadd.f32 %v6945, %v6394
    %v6947 = vadd.f32 %v6946, %v6395
    %v6948 = vadd.f32 %v6947, %v6396
    %v6949 = vadd.f32 %v6948, %v6397
    %v6950 = vadd.f32 %v6949, %v6398
    %v6951 = vadd.f32 %v6950, %v6399
    %v6952 = vadd.f32 %v6951, %v6400
    %v6953 = vadd.f32 %v6952, %v6401
    %v6954 = vadd.f32 %v6953, %v6402
    %v6955 = vadd.f32 %v6954, %v6403
    %v6956 = vadd.f32 %v6955, %v6404
    %v6957 = vadd.f32 %v6956, %v6405
    %v6958 = vadd.f32 %v6957, %v6406
    %v6959 = vadd.f32 %v6958, %v6407
    %v6960 = vadd.f32 %v6959, %v6408
    %v6961 = vadd.f32 %v6960, %v6409
    %v6962 = vadd.f32 %v6961, %v6410
    %v6963 = vadd.f32 %v6962, %v6411
    %v6964 = vadd.f32 %v6963, %v6412
    %v6965 = vadd.f32 %v6964, %v6413
    %v6966 = vadd.f32 %v6965, %v6414
    %v6967 = vadd.f32 %v6966, %v6415
    %v6968 = vadd.f32 %v6967, %v6416
    %v6969 = vadd.f32 %v6968, %v6417
    %v6970 = vadd.f32 %v6969, %v6418
    %v6971 = vadd.f32 %v6970, %v6419
    %v6972 = vadd.f32 %v6971, %v6420
    %v6973 = vadd.f32 %v6972, %v6421
    %v6974 = vadd.f32 %v6973, %v6422
    %v6975 = vadd.f32 %v6974, %v6423
    %v6976 = vadd.f32 %v6975, %v6424
    %v6977 = vadd.f32 %v6976, %v6425
    %v6978 = vadd.f32 %v6977, %v6426
    %v6979 = vadd.f32 %v6978, %v6427
    %v6980 = vadd.f32 %v6979, %v6428
    %v6981 = vadd.f32 %v6980, %v6429
    %v6982 = vadd.f32 %v6981, %v6430
    %v6983 = vadd.f32 %v6982, %v6431
    %v6984 = vadd.f32 %v6983, %v6432
    %v6985 = vadd.f32 %v6984, %v6433
    %v6986 = vadd.f32 %v6985, %v6434
    %v6987 = vadd.f32 %v6986, %v6435
    %v6988 = vadd.f32 %v6987, %v6436
    %v6989 = vadd.f32 %v6988, %v6437
    %v6990 = vadd.f32 %v6989, %v6438
    %v6991 = vadd.f32 %v6990, %v6439
    %v6992 = vadd.f32 %v6991, %v6440
    %v6993 = vadd.f32 %v6992, %v6441
    %v6994 = vadd.f32 %v6993, %v6442
    %v6995 = vadd.f32 %v6994, %v6443
    %v6996 = vadd.f32 %v6995, %v6444
    %v6997 = vadd.f32 %v6996, %v6445
    %v6998 = vadd.f32 %v6997, %v6446
    %v6999 = vadd.f32 %v6998, %v6447
    %v7000 = vadd.f32 %v6999, %v6448
    %v7001 = vadd.f32 %v7000, %v6449
    %v7002 = vadd.f32 %v7001, %v6450
    %v7003 = vadd.f32 %v7002, %v6451
    %v7004 = vadd.f32 %v7003, %v6452
    %v7005 = vadd.f32 %v7004, %v6453
    %v7006 = vadd.f32 %v7005, %v6454
    %v7007 = vadd.f32 %v7006, %v6455
    %v7008 = vadd.f32 %v7007, %v6456
    %v7009 = vadd.f32 %v7008, %v6457
    %v7010 = vadd.f32 %v7009, %v6458
    %v7011 = vadd.f32 %v7010, %v6459
    %v7012 = vadd.f32 %v7011, %v6460
    %v7013 = vadd.f32 %v7012, %v6461
    %v7014 = vadd.f32 %v7013, %v6462
    %v7015 = vadd.f32 %v7014, %v6463
    %v7016 = vadd.f32 %v7015, %v6464
    %v7017 = vadd.f32 %v7016, %v6465
    %v7018 = vadd.f32 %v7017, %v6466
    %v7019 = vadd.f32 %v7018, %v6467
    %v7020 = vadd.f32 %v7019, %v6468
    %v7021 = vadd.f32 %v7020, %v6469
    %v7022 = vadd.f32 %v7021, %v6470
    %v7023 = vadd.f32 %v7022, %v6471
    %v7024 = vadd.f32 %v7023, %v6472
    %v7025 = vadd.f32 %v7024, %v6473
    %v7026 = vadd.f32 %v7025, %v6474
    %v7027 = vadd.f32 %v7026, %v6475
    %v7028 = vadd.f32 %v7027, %v6476
    %v7029 = vadd.f32 %v7028, %v6477
    %v7030 = vadd.f32 %v7029, %v6478
    %v7031 = vadd.f32 %v7030, %v6479
    %v7032 = vadd.f32 %v7031, %v6480
    %v7033 = vadd.f32 %v7032, %v6481
    %v7034 = vadd.f32 %v7033, %v6482
    %v7035 = vadd.f32 %v7034, %v6483
    %v7036 = vadd.f32 %v7035, %v6484
    %v7037 = vadd.f32 %v7036, %v6485
    %v7038 = vadd.f32 %v7037, %v6486
    %v7039 = vadd.f32 %v7038, %v6487
    %v7040 = vadd.f32 %v7039, %v6488
    %v7041 = vadd.f32 %v7040, %v6489
    %v7042 = vadd.f32 %v7041, %v6490
    %v7043 = vadd.f32 %v7042, %v6491
    %v7044 = vadd.f32 %v7043, %v6492
    %v7045 = vadd.f32 %v7044, %v6493
    %v7046 = vadd.f32 %v7045, %v6494
    %v7047 = vadd.f32 %v7046, %v6495
    %v7048 = vadd.f32 %v7047, %v6496
    %v7049 = vadd.f32 %v7048, %v6497
    %v7050 = vadd.f32 %v7049, %v6498
    %v7051 = vadd.f32 %v7050, %v6499
    %v7052 = vadd.f32 %v7051, %v6500
    %v7053 = vadd.f32 %v7052, %v6501
    %v7054 = vadd.f32 %v7053, %v6502
    %v7055 = vadd.f32 %v7054, %v6503
    %v7056 = vadd.f32 %v7055, %v6504
    %v7057 = vadd.f32 %v7056, %v6505
    %v7058 = vadd.f32 %v7057, %v6506
    %v7059 = vadd.f32 %v7058, %v6507
    %v7060 = vadd.f32 %v7059, %v6508
    %v7061 = vadd.f32 %v7060, %v6509
    %v7062 = vadd.f32 %v7061, %v6510
    %v7063 = vadd.f32 %v7062, %v6511
    %v7064 = vadd.f32 %v7063, %v6512
    %v7065 = vadd.f32 %v7064, %v6513
    %v7066 = vadd.f32 %v7065, %v6514
    %v7067 = vadd.f32 %v7066, %v6515
    %v7068 = vadd.f32 %v7067, %v6516
    %v7069 = vadd.f32 %v7068, %v6517
    %v7070 = vadd.f32 %v7069, %v6518
    %v7071 = vadd.f32 %v7070, %v6519
    %v7072 = vadd.f32 %v7071, %v6520
    %v7073 = vadd.f32 %v7072, %v6521
    %v7074 = vadd.f32 %v7073, %v6522
    %v7075 = vadd.f32 %v7074, %v6523
    %v7076 = vadd.f32 %v7075, %v6524
    %v7077 = vadd.f32 %v7076, %v6525
    %v7078 = vadd.f32 %v7077, %v6526
    %v7079 = vadd.f32 %v7078, %v6527
    %v7080 = vadd.f32 %v7079, %v6528
    %v7081 = vadd.f32 %v7080, %v6529
    %v7082 = vadd.f32 %v7081, %v6530
    %v7083 = vadd.f32 %v7082, %v6531
    %v7084 = vadd.f32 %v7083, %v6532
    %v7085 = vadd.f32 %v7084, %v6533
    %v7086 = vadd.f32 %v7085, %v6534
    %v7087 = vadd.f32 %v7086, %v6535
    %v7088 = vadd.f32 %v7087, %v6536
    %v7089 = vadd.f32 %v7088, %v6537
    %v7090 = vadd.f32 %v7089, %v6538
    %v7091 = vadd.f32 %v7090, %v6539
    %v7092 = vadd.f32 %v7091, %v6540
    %v7093 = vadd.f32 %v7092, %v6541
    %v7094 = vadd.f32 %v7093, %v6542
    %v7095 = vadd.f32 %v7094, %v6543
    %v7096 = vadd.f32 %v7095, %v6544
    %v7097 = vadd.f32 %v7096, %v6545
    %v7098 = vadd.f32 %v7097, %v6546
    %v7099 = vadd.f32 %v7098, %v6547
    %v7100 = vadd.f32 %v7099, %v6548
    %v7101 = vadd.f32 %v7100, %v6549
    %v7102 = vadd.f32 %v7101, %v6550
    %v7103 = vadd.f32 %v7102, %v6551
    %v7104 = vadd.f32 %v7103, %v6552
    %v7105 = vadd.f32 %v7104, %v6553
    %v7106 = vadd.f32 %v7105, %v6554
    %v7107 = vadd.f32 %v7106, %v6555
    %v7108 = vadd.f32 %v7107, %v6556
    %v7109 = vadd.f32 %v7108, %v6557
    %v7110 = vadd.f32 %v7109, %v6558
    %v7111 = vadd.f32 %v7110, %v6559
    %v7112 = vadd.f32 %v7111, %v6560
    %v7113 = vadd.f32 %v7112, %v6561
    %v7114 = vadd.f32 %v7113, %v6562
    %v7115 = vadd.f32 %v7114, %v6563
    %v7116 = vadd.f32 %v7115, %v6564
    %v7117 = vadd.f32 %v7116, %v6565
    %v7118 = vadd.f32 %v7117, %v6566
    %v7119 = vadd.f32 %v7118, %v6567
    %v7120 = vadd.f32 %v7119, %v6568
    %v7121 = vadd.f32 %v7120, %v6569
    %v7122 = vadd.f32 %v7121, %v6570
    %v7123 = vadd.f32 %v7122, %v6571
    %v7124 = vadd.f32 %v7123, %v6572
    %v7125 = vadd.f32 %v7124, %v6573
    %v7126 = vadd.f32 %v7125, %v6574
    %v7127 = vadd.f32 %v7126, %v6575
    %v7128 = vadd.f32 %v7127, %v6576
    %v7129 = vadd.f32 %v7128, %v6577
    %v7130 = vadd.f32 %v7129, %v6578
    %v7131 = vadd.f32 %v7130, %v6579
    %v7132 = vadd.f32 %v7131, %v6580
    %v7133 = vadd.f32 %v7132, %v6581
    %v7134 = vadd.f32 %v7133, %v6582
    %v7135 = vadd.f32 %v7134, %v6583
    %v7136 = vadd.f32 %v7135, %v6584
    %v7137 = vadd.f32 %v7136, %v6585
    %v7138 = vadd.f32 %v7137, %v6586
    %v7139 = vadd.f32 %v7138, %v6587
    %v7140 = vadd.f32 %v7139, %v6588
    %v7141 = vadd.f32 %v7140, %v6589
    %v7142 = vadd.f32 %v7141, %v6590
    %v7143 = vadd.f32 %v7142, %v6591
    %v7144 = vadd.f32 %v7143, %v6592
    %v7145 = vadd.f32 %v7144, %v6593
    %v7146 = vadd.f32 %v7145, %v6594
    %v7147 = vadd.f32 %v7146, %v6595
    %v7148 = vadd.f32 %v7147, %v6596
    %v7149 = vadd.f32 %v7148, %v6597
    %v7150 = vadd.f32 %v7149, %v6598
    %v7151 = vadd.f32 %v7150, %v6599
    %v7152 = vadd.f32 %v7151, %v6600
    %v7153 = vadd.f32 %v7152, %v6601
    %v7154 = vadd.f32 %v7153, %v6602
    %v7155 = vadd.f32 %v7154, %v6603
    %v7156 = vadd.f32 %v7155, %v6604
    %v7157 = vadd.f32 %v7156, %v6605
    %v7158 = vadd.f32 %v7157, %v6606
    %v7159 = vadd.f32 %v7158, %v6607
    %v7160 = vadd.f32 %v7159, %v6608
    %v7161 = vadd.f32 %v7160, %v6609
    %v7162 = vadd.f32 %v7161, %v6610
    %v7163 = vadd.f32 %v7162, %v6611
    %v7164 = vadd.f32 %v7163, %v6612
    %v7165 = vadd.f32 %v7164, %v6613
    %v7166 = vadd.f32 %v7165, %v6614
    %v7167 = vadd.f32 %v7166, %v6615
    %v7168 = vadd.f32 %v7167, %v6616
    %v7169 = vadd.f32 %v7168, %v6617
    %v7170 = vadd.f32 %v7169, %v6618
    %v7171 = vadd.f32 %v7170, %v6619
    %v7172 = vadd.f32 %v7171, %v6620
    %v7173 = vadd.f32 %v7172, %v6621
    %v7174 = vadd.f32 %v7173, %v6622
    %v7175 = vadd.f32 %v7174, %v6623
    %v7176 = vadd.f32 %v7175, %v6624
    %v7177 = vadd.f32 %v7176, %v6625
    %v7178 = vadd.f32 %v7177, %v6626
    %v7179 = vadd.f32 %v7178, %v6627
    %v7180 = vadd.f32 %v7179, %v6628
    %v7181 = vadd.f32 %v7180, %v6629
    %v7182 = vadd.f32 %v7181, %v6630
    %v7183 = vadd.f32 %v7182, %v6631
    %v7184 = vadd.f32 %v7183, %v6632
    %v7185 = vadd.f32 %v7184, %v6633
    %v7186 = vadd.f32 %v7185, %v6634
    %v7187 = vadd.f32 %v7186, %v6635
    %v7188 = vadd.f32 %v7187, %v6636
    %v7189 = vadd.f32 %v7188, %v6637
    %v7190 = vadd.f32 %v7189, %v6638
    %v7191 = vadd.f32 %v7190, %v6639
    %v7192 = vadd.f32 %v7191, %v6640
    %v7193 = vadd.f32 %v7192, %v6641
    %v7194 = vadd.f32 %v7193, %v6642
    %v7195 = vadd.f32 %v7194, %v6643
    %v7196 = vadd.f32 %v7195, %v6644
    %v7197 = vadd.f32 %v7196, %v6645
    %v7198 = vadd.f32 %v7197, %v6646
    %v7199 = vadd.f32 %v7198, %v6647
    %v7200 = vadd.f32 %v7199, %v6648
    %v7201 = vadd.f32 %v7200, %v6649
    %v7202 = vadd.f32 %v7201, %v6650
    %v7203 = vadd.f32 %v7202, %v6651
    %v7204 = vadd.f32 %v7203, %v6652
    %v7205 = vadd.f32 %v7204, %v6653
    %v7206 = vadd.f32 %v7205, %v6654
    %v7207 = vadd.f32 %v7206, %v6655
    %v7208 = vadd.f32 %v7207, %v6656
    %v7209 = vadd.f32 %v7208, %v6657
    %v7210 = vadd.f32 %v7209, %v6658
    %v7211 = vadd.f32 %v7210, %v6659
    %v7212 = vadd.f32 %v7211, %v6660
    %v7213 = vadd.f32 %v7212, %v6661
    %v7214 = vadd.f32 %v7213, %v6662
    %v7215 = vadd.f32 %v7214, %v6663
    %v7216 = vadd.f32 %v7215, %v6664
    %v7217 = vadd.f32 %v7216, %v6665
    %v7218 = vadd.f32 %v7217, %v6666
    %v7219 = vadd.f32 %v7218, %v6667
    %v7220 = vadd.f32 %v7219, %v6668
    %v7221 = vadd.f32 %v7220, %v6669
    %v7222 = vadd.f32 %v7221, %v6670
    %v7223 = vadd.f32 %v7222, %v6671
    %v7224 = vadd.f32 %v7223, %v6672
    %v7225 = vadd.f32 %v7224, %v6673
    %v7226 = vadd.f32 %v7225, %v6674
    %v7227 = vadd.f32 %v7226, %v6675
    %v7228 = vadd.f32 %v7227, %v6676
    %v7229 = vadd.f32 %v7228, %v6677
    %v7230 = vadd.f32 %v7229, %v6678
    %v7231 = vadd.f32 %v7230, %v6679
    %v7232 = vadd.f32 %v7231, %v6680
    %v7233 = vadd.f32 %v7232, %v6681
    %v7234 = vadd.f32 %v7233, %v6682
    %v7235 = vadd.f32 %v7234, %v6683
    %v7236 = vadd.f32 %v7235, %v6684
    %v7237 = vadd.f32 %v7236, %v6685
    %v7238 = vadd.f32 %v7237, %v6686
    %v7239 = vadd.f32 %v7238, %v6687
    %v7240 = vadd.f32 %v7239, %v6688
    %v7241 = vadd.f32 %v7240, %v6689
    %v7242 = vadd.f32 %v7241, %v6690
    %v7243 = vadd.f32 %v7242, %v6691
    %v7244 = vadd.f32 %v7243, %v6692
    %v7245 = vadd.f32 %v7244, %v6693
    %v7246 = vadd.f32 %v7245, %v6694
    %v7247 = vadd.f32 %v7246, %v6695
    %v7248 = vadd.f32 %v7247, %v6696
    %v7249 = vadd.f32 %v7248, %v6697
    %v7250 = vadd.f32 %v7249, %v6698
    %v7251 = vadd.f32 %v7250, %v6699
    %v7252 = vadd.f32 %v7251, %v6700
    %v7253 = vadd.f32 %v7252, %v6701
    %v7254 = vadd.f32 %v7253, %v6702
    %v7255 = vadd.f32 %v7254, %v6703
    %v7256 = vadd.f32 %v7255, %v6704
    %v7257 = vadd.f32 %v7256, %v6705
    %v7258 = vadd.f32 %v7257, %v6706
    %v7259 = vadd.f32 %v7258, %v6707
    %v7260 = vadd.f32 %v7259, %v6708
    %v7261 = vadd.f32 %v7260, %v6709
    %v7262 = vadd.f32 %v7261, %v6710
    %v7263 = vadd.f32 %v7262, %v6711
    %v7264 = vadd.f32 %v7263, %v6712
    %v7265 = vadd.f32 %v7264, %v6713
    %v7266 = vadd.f32 %v7265, %v6714
    %v7267 = vadd.f32 %v7266, %v6715
    %v7268 = vadd.f32 %v7267, %v6716
    %v7269 = vadd.f32 %v7268, %v6717
    %v7270 = vadd.f32 %v7269, %v6718
    %v7271 = vadd.f32 %v7270, %v6719
    %v7272 = vadd.f32 %v7271, %v6720
    %v7273 = vadd.f32 %v7272, %v6721
    %v7274 = vadd.f32 %v7273, %v6722
    %v7275 = vadd.f32 %v7274, %v6723
    %v7276 = vadd.f32 %v7275, %v6724
    %vm7277 = vcmask 1041408
    %v7278 = vsel %vm7277, %v6725, 0.0
    %v7279 = vadd.f32 %v7276, %v7278
    %v7280 = vrot.slane %v7279, 4
    %v7281 = vadd.f32 %v7279, %v7280
    %v7282 = vrot.slane %v7281, 2
    %v7283 = vadd.f32 %v7281, %v7282
    %v7284 = vrot.slane %v7283, 1
    %v7285 = vadd.f32 %v7283, %v7284
    %v7286 = vrcp.pop 4418.0
    %v7287 = vmul.f32 %v7285, %v7286
    %v7288 = vsub.f32 %v6173, %v7287
    %v7289 = vsub.f32 %v6174, %v7287
    %v7290 = vsub.f32 %v6175, %v7287
    %v7291 = vsub.f32 %v6176, %v7287
    %v7292 = vsub.f32 %v6177, %v7287
    %v7293 = vsub.f32 %v6178, %v7287
    %v7294 = vsub.f32 %v6179, %v7287
    %v7295 = vsub.f32 %v6180, %v7287
    %v7296 = vsub.f32 %v6181, %v7287
    %v7297 = vsub.f32 %v6182, %v7287
    %v7298 = vsub.f32 %v6183, %v7287
    %v7299 = vsub.f32 %v6184, %v7287
    %v7300 = vsub.f32 %v6185, %v7287
    %v7301 = vsub.f32 %v6186, %v7287
    %v7302 = vsub.f32 %v6187, %v7287
    %v7303 = vsub.f32 %v6188, %v7287
    %v7304 = vsub.f32 %v6189, %v7287
    %v7305 = vsub.f32 %v6190, %v7287
    %v7306 = vsub.f32 %v6191, %v7287
    %v7307 = vsub.f32 %v6192, %v7287
    %v7308 = vsub.f32 %v6193, %v7287
    %v7309 = vsub.f32 %v6194, %v7287
    %v7310 = vsub.f32 %v6195, %v7287
    %v7311 = vsub.f32 %v6196, %v7287
    %v7312 = vsub.f32 %v6197, %v7287
    %v7313 = vsub.f32 %v6198, %v7287
    %v7314 = vsub.f32 %v6199, %v7287
    %v7315 = vsub.f32 %v6200, %v7287
    %v7316 = vsub.f32 %v6201, %v7287
    %v7317 = vsub.f32 %v6202, %v7287
    %v7318 = vsub.f32 %v6203, %v7287
    %v7319 = vsub.f32 %v6204, %v7287
    %v7320 = vsub.f32 %v6205, %v7287
    %v7321 = vsub.f32 %v6206, %v7287
    %v7322 = vsub.f32 %v6207, %v7287
    %v7323 = vsub.f32 %v6208, %v7287
    %v7324 = vsub.f32 %v6209, %v7287
    %v7325 = vsub.f32 %v6210, %v7287
    %v7326 = vsub.f32 %v6211, %v7287
    %v7327 = vsub.f32 %v6212, %v7287
    %v7328 = vsub.f32 %v6213, %v7287
    %v7329 = vsub.f32 %v6214, %v7287
    %v7330 = vsub.f32 %v6215, %v7287
    %v7331 = vsub.f32 %v6216, %v7287
    %v7332 = vsub.f32 %v6217, %v7287
    %v7333 = vsub.f32 %v6218, %v7287
    %v7334 = vsub.f32 %v6219, %v7287
    %v7335 = vsub.f32 %v6220, %v7287
    %v7336 = vsub.f32 %v6221, %v7287
    %v7337 = vsub.f32 %v6222, %v7287
    %v7338 = vsub.f32 %v6223, %v7287
    %v7339 = vsub.f32 %v6224, %v7287
    %v7340 = vsub.f32 %v6225, %v7287
    %v7341 = vsub.f32 %v6226, %v7287
    %v7342 = vsub.f32 %v6227, %v7287
    %v7343 = vsub.f32 %v6228, %v7287
    %v7344 = vsub.f32 %v6229, %v7287
    %v7345 = vsub.f32 %v6230, %v7287
    %v7346 = vsub.f32 %v6231, %v7287
    %v7347 = vsub.f32 %v6232, %v7287
    %v7348 = vsub.f32 %v6233, %v7287
    %v7349 = vsub.f32 %v6234, %v7287
    %v7350 = vsub.f32 %v6235, %v7287
    %v7351 = vsub.f32 %v6236, %v7287
    %v7352 = vsub.f32 %v6237, %v7287
    %v7353 = vsub.f32 %v6238, %v7287
    %v7354 = vsub.f32 %v6239, %v7287
    %v7355 = vsub.f32 %v6240, %v7287
    %v7356 = vsub.f32 %v6241, %v7287
    %v7357 = vsub.f32 %v6242, %v7287
    %v7358 = vsub.f32 %v6243, %v7287
    %v7359 = vsub.f32 %v6244, %v7287
    %v7360 = vsub.f32 %v6245, %v7287
    %v7361 = vsub.f32 %v6246, %v7287
    %v7362 = vsub.f32 %v6247, %v7287
    %v7363 = vsub.f32 %v6248, %v7287
    %v7364 = vsub.f32 %v6249, %v7287
    %v7365 = vsub.f32 %v6250, %v7287
    %v7366 = vsub.f32 %v6251, %v7287
    %v7367 = vsub.f32 %v6252, %v7287
    %v7368 = vsub.f32 %v6253, %v7287
    %v7369 = vsub.f32 %v6254, %v7287
    %v7370 = vsub.f32 %v6255, %v7287
    %v7371 = vsub.f32 %v6256, %v7287
    %v7372 = vsub.f32 %v6257, %v7287
    %v7373 = vsub.f32 %v6258, %v7287
    %v7374 = vsub.f32 %v6259, %v7287
    %v7375 = vsub.f32 %v6260, %v7287
    %v7376 = vsub.f32 %v6261, %v7287
    %v7377 = vsub.f32 %v6262, %v7287
    %v7378 = vsub.f32 %v6263, %v7287
    %v7379 = vsub.f32 %v6264, %v7287
    %v7380 = vsub.f32 %v6265, %v7287
    %v7381 = vsub.f32 %v6266, %v7287
    %v7382 = vsub.f32 %v6267, %v7287
    %v7383 = vsub.f32 %v6268, %v7287
    %v7384 = vsub.f32 %v6269, %v7287
    %v7385 = vsub.f32 %v6270, %v7287
    %v7386 = vsub.f32 %v6271, %v7287
    %v7387 = vsub.f32 %v6272, %v7287
    %v7388 = vsub.f32 %v6273, %v7287
    %v7389 = vsub.f32 %v6274, %v7287
    %v7390 = vsub.f32 %v6275, %v7287
    %v7391 = vsub.f32 %v6276, %v7287
    %v7392 = vsub.f32 %v6277, %v7287
    %v7393 = vsub.f32 %v6278, %v7287
    %v7394 = vsub.f32 %v6279, %v7287
    %v7395 = vsub.f32 %v6280, %v7287
    %v7396 = vsub.f32 %v6281, %v7287
    %v7397 = vsub.f32 %v6282, %v7287
    %v7398 = vsub.f32 %v6283, %v7287
    %v7399 = vsub.f32 %v6284, %v7287
    %v7400 = vsub.f32 %v6285, %v7287
    %v7401 = vsub.f32 %v6286, %v7287
    %v7402 = vsub.f32 %v6287, %v7287
    %v7403 = vsub.f32 %v6288, %v7287
    %v7404 = vsub.f32 %v6289, %v7287
    %v7405 = vsub.f32 %v6290, %v7287
    %v7406 = vsub.f32 %v6291, %v7287
    %v7407 = vsub.f32 %v6292, %v7287
    %v7408 = vsub.f32 %v6293, %v7287
    %v7409 = vsub.f32 %v6294, %v7287
    %v7410 = vsub.f32 %v6295, %v7287
    %v7411 = vsub.f32 %v6296, %v7287
    %v7412 = vsub.f32 %v6297, %v7287
    %v7413 = vsub.f32 %v6298, %v7287
    %v7414 = vsub.f32 %v6299, %v7287
    %v7415 = vsub.f32 %v6300, %v7287
    %v7416 = vsub.f32 %v6301, %v7287
    %v7417 = vsub.f32 %v6302, %v7287
    %v7418 = vsub.f32 %v6303, %v7287
    %v7419 = vsub.f32 %v6304, %v7287
    %v7420 = vsub.f32 %v6305, %v7287
    %v7421 = vsub.f32 %v6306, %v7287
    %v7422 = vsub.f32 %v6307, %v7287
    %v7423 = vsub.f32 %v6308, %v7287
    %v7424 = vsub.f32 %v6309, %v7287
    %v7425 = vsub.f32 %v6310, %v7287
    %v7426 = vsub.f32 %v6311, %v7287
    %v7427 = vsub.f32 %v6312, %v7287
    %v7428 = vsub.f32 %v6313, %v7287
    %v7429 = vsub.f32 %v6314, %v7287
    %v7430 = vsub.f32 %v6315, %v7287
    %v7431 = vsub.f32 %v6316, %v7287
    %v7432 = vsub.f32 %v6317, %v7287
    %v7433 = vsub.f32 %v6318, %v7287
    %v7434 = vsub.f32 %v6319, %v7287
    %v7435 = vsub.f32 %v6320, %v7287
    %v7436 = vsub.f32 %v6321, %v7287
    %v7437 = vsub.f32 %v6322, %v7287
    %v7438 = vsub.f32 %v6323, %v7287
    %v7439 = vsub.f32 %v6324, %v7287
    %v7440 = vsub.f32 %v6325, %v7287
    %v7441 = vsub.f32 %v6326, %v7287
    %v7442 = vsub.f32 %v6327, %v7287
    %v7443 = vsub.f32 %v6328, %v7287
    %v7444 = vsub.f32 %v6329, %v7287
    %v7445 = vsub.f32 %v6330, %v7287
    %v7446 = vsub.f32 %v6331, %v7287
    %v7447 = vsub.f32 %v6332, %v7287
    %v7448 = vsub.f32 %v6333, %v7287
    %v7449 = vsub.f32 %v6334, %v7287
    %v7450 = vsub.f32 %v6335, %v7287
    %v7451 = vsub.f32 %v6336, %v7287
    %v7452 = vsub.f32 %v6337, %v7287
    %v7453 = vsub.f32 %v6338, %v7287
    %v7454 = vsub.f32 %v6339, %v7287
    %v7455 = vsub.f32 %v6340, %v7287
    %v7456 = vsub.f32 %v6341, %v7287
    %v7457 = vsub.f32 %v6342, %v7287
    %v7458 = vsub.f32 %v6343, %v7287
    %v7459 = vsub.f32 %v6344, %v7287
    %v7460 = vsub.f32 %v6345, %v7287
    %v7461 = vsub.f32 %v6346, %v7287
    %v7462 = vsub.f32 %v6347, %v7287
    %v7463 = vsub.f32 %v6348, %v7287
    %v7464 = vsub.f32 %v6349, %v7287
    %v7465 = vsub.f32 %v6350, %v7287
    %v7466 = vsub.f32 %v6351, %v7287
    %v7467 = vsub.f32 %v6352, %v7287
    %v7468 = vsub.f32 %v6353, %v7287
    %v7469 = vsub.f32 %v6354, %v7287
    %v7470 = vsub.f32 %v6355, %v7287
    %v7471 = vsub.f32 %v6356, %v7287
    %v7472 = vsub.f32 %v6357, %v7287
    %v7473 = vsub.f32 %v6358, %v7287
    %v7474 = vsub.f32 %v6359, %v7287
    %v7475 = vsub.f32 %v6360, %v7287
    %v7476 = vsub.f32 %v6361, %v7287
    %v7477 = vsub.f32 %v6362, %v7287
    %v7478 = vsub.f32 %v6363, %v7287
    %v7479 = vsub.f32 %v6364, %v7287
    %v7480 = vsub.f32 %v6365, %v7287
    %v7481 = vsub.f32 %v6366, %v7287
    %v7482 = vsub.f32 %v6367, %v7287
    %v7483 = vsub.f32 %v6368, %v7287
    %v7484 = vsub.f32 %v6369, %v7287
    %v7485 = vsub.f32 %v6370, %v7287
    %v7486 = vsub.f32 %v6371, %v7287
    %v7487 = vsub.f32 %v6372, %v7287
    %v7488 = vsub.f32 %v6373, %v7287
    %v7489 = vsub.f32 %v6374, %v7287
    %v7490 = vsub.f32 %v6375, %v7287
    %v7491 = vsub.f32 %v6376, %v7287
    %v7492 = vsub.f32 %v6377, %v7287
    %v7493 = vsub.f32 %v6378, %v7287
    %v7494 = vsub.f32 %v6379, %v7287
    %v7495 = vsub.f32 %v6380, %v7287
    %v7496 = vsub.f32 %v6381, %v7287
    %v7497 = vsub.f32 %v6382, %v7287
    %v7498 = vsub.f32 %v6383, %v7287
    %v7499 = vsub.f32 %v6384, %v7287
    %v7500 = vsub.f32 %v6385, %v7287
    %v7501 = vsub.f32 %v6386, %v7287
    %v7502 = vsub.f32 %v6387, %v7287
    %v7503 = vsub.f32 %v6388, %v7287
    %v7504 = vsub.f32 %v6389, %v7287
    %v7505 = vsub.f32 %v6390, %v7287
    %v7506 = vsub.f32 %v6391, %v7287
    %v7507 = vsub.f32 %v6392, %v7287
    %v7508 = vsub.f32 %v6393, %v7287
    %v7509 = vsub.f32 %v6394, %v7287
    %v7510 = vsub.f32 %v6395, %v7287
    %v7511 = vsub.f32 %v6396, %v7287
    %v7512 = vsub.f32 %v6397, %v7287
    %v7513 = vsub.f32 %v6398, %v7287
    %v7514 = vsub.f32 %v6399, %v7287
    %v7515 = vsub.f32 %v6400, %v7287
    %v7516 = vsub.f32 %v6401, %v7287
    %v7517 = vsub.f32 %v6402, %v7287
    %v7518 = vsub.f32 %v6403, %v7287
    %v7519 = vsub.f32 %v6404, %v7287
    %v7520 = vsub.f32 %v6405, %v7287
    %v7521 = vsub.f32 %v6406, %v7287
    %v7522 = vsub.f32 %v6407, %v7287
    %v7523 = vsub.f32 %v6408, %v7287
    %v7524 = vsub.f32 %v6409, %v7287
    %v7525 = vsub.f32 %v6410, %v7287
    %v7526 = vsub.f32 %v6411, %v7287
    %v7527 = vsub.f32 %v6412, %v7287
    %v7528 = vsub.f32 %v6413, %v7287
    %v7529 = vsub.f32 %v6414, %v7287
    %v7530 = vsub.f32 %v6415, %v7287
    %v7531 = vsub.f32 %v6416, %v7287
    %v7532 = vsub.f32 %v6417, %v7287
    %v7533 = vsub.f32 %v6418, %v7287
    %v7534 = vsub.f32 %v6419, %v7287
    %v7535 = vsub.f32 %v6420, %v7287
    %v7536 = vsub.f32 %v6421, %v7287
    %v7537 = vsub.f32 %v6422, %v7287
    %v7538 = vsub.f32 %v6423, %v7287
    %v7539 = vsub.f32 %v6424, %v7287
    %v7540 = vsub.f32 %v6425, %v7287
    %v7541 = vsub.f32 %v6426, %v7287
    %v7542 = vsub.f32 %v6427, %v7287
    %v7543 = vsub.f32 %v6428, %v7287
    %v7544 = vsub.f32 %v6429, %v7287
    %v7545 = vsub.f32 %v6430, %v7287
    %v7546 = vsub.f32 %v6431, %v7287
    %v7547 = vsub.f32 %v6432, %v7287
    %v7548 = vsub.f32 %v6433, %v7287
    %v7549 = vsub.f32 %v6434, %v7287
    %v7550 = vsub.f32 %v6435, %v7287
    %v7551 = vsub.f32 %v6436, %v7287
    %v7552 = vsub.f32 %v6437, %v7287
    %v7553 = vsub.f32 %v6438, %v7287
    %v7554 = vsub.f32 %v6439, %v7287
    %v7555 = vsub.f32 %v6440, %v7287
    %v7556 = vsub.f32 %v6441, %v7287
    %v7557 = vsub.f32 %v6442, %v7287
    %v7558 = vsub.f32 %v6443, %v7287
    %v7559 = vsub.f32 %v6444, %v7287
    %v7560 = vsub.f32 %v6445, %v7287
    %v7561 = vsub.f32 %v6446, %v7287
    %v7562 = vsub.f32 %v6447, %v7287
    %v7563 = vsub.f32 %v6448, %v7287
    %v7564 = vsub.f32 %v6449, %v7287
    %v7565 = vsub.f32 %v6450, %v7287
    %v7566 = vsub.f32 %v6451, %v7287
    %v7567 = vsub.f32 %v6452, %v7287
    %v7568 = vsub.f32 %v6453, %v7287
    %v7569 = vsub.f32 %v6454, %v7287
    %v7570 = vsub.f32 %v6455, %v7287
    %v7571 = vsub.f32 %v6456, %v7287
    %v7572 = vsub.f32 %v6457, %v7287
    %v7573 = vsub.f32 %v6458, %v7287
    %v7574 = vsub.f32 %v6459, %v7287
    %v7575 = vsub.f32 %v6460, %v7287
    %v7576 = vsub.f32 %v6461, %v7287
    %v7577 = vsub.f32 %v6462, %v7287
    %v7578 = vsub.f32 %v6463, %v7287
    %v7579 = vsub.f32 %v6464, %v7287
    %v7580 = vsub.f32 %v6465, %v7287
    %v7581 = vsub.f32 %v6466, %v7287
    %v7582 = vsub.f32 %v6467, %v7287
    %v7583 = vsub.f32 %v6468, %v7287
    %v7584 = vsub.f32 %v6469, %v7287
    %v7585 = vsub.f32 %v6470, %v7287
    %v7586 = vsub.f32 %v6471, %v7287
    %v7587 = vsub.f32 %v6472, %v7287
    %v7588 = vsub.f32 %v6473, %v7287
    %v7589 = vsub.f32 %v6474, %v7287
    %v7590 = vsub.f32 %v6475, %v7287
    %v7591 = vsub.f32 %v6476, %v7287
    %v7592 = vsub.f32 %v6477, %v7287
    %v7593 = vsub.f32 %v6478, %v7287
    %v7594 = vsub.f32 %v6479, %v7287
    %v7595 = vsub.f32 %v6480, %v7287
    %v7596 = vsub.f32 %v6481, %v7287
    %v7597 = vsub.f32 %v6482, %v7287
    %v7598 = vsub.f32 %v6483, %v7287
    %v7599 = vsub.f32 %v6484, %v7287
    %v7600 = vsub.f32 %v6485, %v7287
    %v7601 = vsub.f32 %v6486, %v7287
    %v7602 = vsub.f32 %v6487, %v7287
    %v7603 = vsub.f32 %v6488, %v7287
    %v7604 = vsub.f32 %v6489, %v7287
    %v7605 = vsub.f32 %v6490, %v7287
    %v7606 = vsub.f32 %v6491, %v7287
    %v7607 = vsub.f32 %v6492, %v7287
    %v7608 = vsub.f32 %v6493, %v7287
    %v7609 = vsub.f32 %v6494, %v7287
    %v7610 = vsub.f32 %v6495, %v7287
    %v7611 = vsub.f32 %v6496, %v7287
    %v7612 = vsub.f32 %v6497, %v7287
    %v7613 = vsub.f32 %v6498, %v7287
    %v7614 = vsub.f32 %v6499, %v7287
    %v7615 = vsub.f32 %v6500, %v7287
    %v7616 = vsub.f32 %v6501, %v7287
    %v7617 = vsub.f32 %v6502, %v7287
    %v7618 = vsub.f32 %v6503, %v7287
    %v7619 = vsub.f32 %v6504, %v7287
    %v7620 = vsub.f32 %v6505, %v7287
    %v7621 = vsub.f32 %v6506, %v7287
    %v7622 = vsub.f32 %v6507, %v7287
    %v7623 = vsub.f32 %v6508, %v7287
    %v7624 = vsub.f32 %v6509, %v7287
    %v7625 = vsub.f32 %v6510, %v7287
    %v7626 = vsub.f32 %v6511, %v7287
    %v7627 = vsub.f32 %v6512, %v7287
    %v7628 = vsub.f32 %v6513, %v7287
    %v7629 = vsub.f32 %v6514, %v7287
    %v7630 = vsub.f32 %v6515, %v7287
    %v7631 = vsub.f32 %v6516, %v7287
    %v7632 = vsub.f32 %v6517, %v7287
    %v7633 = vsub.f32 %v6518, %v7287
    %v7634 = vsub.f32 %v6519, %v7287
    %v7635 = vsub.f32 %v6520, %v7287
    %v7636 = vsub.f32 %v6521, %v7287
    %v7637 = vsub.f32 %v6522, %v7287
    %v7638 = vsub.f32 %v6523, %v7287
    %v7639 = vsub.f32 %v6524, %v7287
    %v7640 = vsub.f32 %v6525, %v7287
    %v7641 = vsub.f32 %v6526, %v7287
    %v7642 = vsub.f32 %v6527, %v7287
    %v7643 = vsub.f32 %v6528, %v7287
    %v7644 = vsub.f32 %v6529, %v7287
    %v7645 = vsub.f32 %v6530, %v7287
    %v7646 = vsub.f32 %v6531, %v7287
    %v7647 = vsub.f32 %v6532, %v7287
    %v7648 = vsub.f32 %v6533, %v7287
    %v7649 = vsub.f32 %v6534, %v7287
    %v7650 = vsub.f32 %v6535, %v7287
    %v7651 = vsub.f32 %v6536, %v7287
    %v7652 = vsub.f32 %v6537, %v7287
    %v7653 = vsub.f32 %v6538, %v7287
    %v7654 = vsub.f32 %v6539, %v7287
    %v7655 = vsub.f32 %v6540, %v7287
    %v7656 = vsub.f32 %v6541, %v7287
    %v7657 = vsub.f32 %v6542, %v7287
    %v7658 = vsub.f32 %v6543, %v7287
    %v7659 = vsub.f32 %v6544, %v7287
    %v7660 = vsub.f32 %v6545, %v7287
    %v7661 = vsub.f32 %v6546, %v7287
    %v7662 = vsub.f32 %v6547, %v7287
    %v7663 = vsub.f32 %v6548, %v7287
    %v7664 = vsub.f32 %v6549, %v7287
    %v7665 = vsub.f32 %v6550, %v7287
    %v7666 = vsub.f32 %v6551, %v7287
    %v7667 = vsub.f32 %v6552, %v7287
    %v7668 = vsub.f32 %v6553, %v7287
    %v7669 = vsub.f32 %v6554, %v7287
    %v7670 = vsub.f32 %v6555, %v7287
    %v7671 = vsub.f32 %v6556, %v7287
    %v7672 = vsub.f32 %v6557, %v7287
    %v7673 = vsub.f32 %v6558, %v7287
    %v7674 = vsub.f32 %v6559, %v7287
    %v7675 = vsub.f32 %v6560, %v7287
    %v7676 = vsub.f32 %v6561, %v7287
    %v7677 = vsub.f32 %v6562, %v7287
    %v7678 = vsub.f32 %v6563, %v7287
    %v7679 = vsub.f32 %v6564, %v7287
    %v7680 = vsub.f32 %v6565, %v7287
    %v7681 = vsub.f32 %v6566, %v7287
    %v7682 = vsub.f32 %v6567, %v7287
    %v7683 = vsub.f32 %v6568, %v7287
    %v7684 = vsub.f32 %v6569, %v7287
    %v7685 = vsub.f32 %v6570, %v7287
    %v7686 = vsub.f32 %v6571, %v7287
    %v7687 = vsub.f32 %v6572, %v7287
    %v7688 = vsub.f32 %v6573, %v7287
    %v7689 = vsub.f32 %v6574, %v7287
    %v7690 = vsub.f32 %v6575, %v7287
    %v7691 = vsub.f32 %v6576, %v7287
    %v7692 = vsub.f32 %v6577, %v7287
    %v7693 = vsub.f32 %v6578, %v7287
    %v7694 = vsub.f32 %v6579, %v7287
    %v7695 = vsub.f32 %v6580, %v7287
    %v7696 = vsub.f32 %v6581, %v7287
    %v7697 = vsub.f32 %v6582, %v7287
    %v7698 = vsub.f32 %v6583, %v7287
    %v7699 = vsub.f32 %v6584, %v7287
    %v7700 = vsub.f32 %v6585, %v7287
    %v7701 = vsub.f32 %v6586, %v7287
    %v7702 = vsub.f32 %v6587, %v7287
    %v7703 = vsub.f32 %v6588, %v7287
    %v7704 = vsub.f32 %v6589, %v7287
    %v7705 = vsub.f32 %v6590, %v7287
    %v7706 = vsub.f32 %v6591, %v7287
    %v7707 = vsub.f32 %v6592, %v7287
    %v7708 = vsub.f32 %v6593, %v7287
    %v7709 = vsub.f32 %v6594, %v7287
    %v7710 = vsub.f32 %v6595, %v7287
    %v7711 = vsub.f32 %v6596, %v7287
    %v7712 = vsub.f32 %v6597, %v7287
    %v7713 = vsub.f32 %v6598, %v7287
    %v7714 = vsub.f32 %v6599, %v7287
    %v7715 = vsub.f32 %v6600, %v7287
    %v7716 = vsub.f32 %v6601, %v7287
    %v7717 = vsub.f32 %v6602, %v7287
    %v7718 = vsub.f32 %v6603, %v7287
    %v7719 = vsub.f32 %v6604, %v7287
    %v7720 = vsub.f32 %v6605, %v7287
    %v7721 = vsub.f32 %v6606, %v7287
    %v7722 = vsub.f32 %v6607, %v7287
    %v7723 = vsub.f32 %v6608, %v7287
    %v7724 = vsub.f32 %v6609, %v7287
    %v7725 = vsub.f32 %v6610, %v7287
    %v7726 = vsub.f32 %v6611, %v7287
    %v7727 = vsub.f32 %v6612, %v7287
    %v7728 = vsub.f32 %v6613, %v7287
    %v7729 = vsub.f32 %v6614, %v7287
    %v7730 = vsub.f32 %v6615, %v7287
    %v7731 = vsub.f32 %v6616, %v7287
    %v7732 = vsub.f32 %v6617, %v7287
    %v7733 = vsub.f32 %v6618, %v7287
    %v7734 = vsub.f32 %v6619, %v7287
    %v7735 = vsub.f32 %v6620, %v7287
    %v7736 = vsub.f32 %v6621, %v7287
    %v7737 = vsub.f32 %v6622, %v7287
    %v7738 = vsub.f32 %v6623, %v7287
    %v7739 = vsub.f32 %v6624, %v7287
    %v7740 = vsub.f32 %v6625, %v7287
    %v7741 = vsub.f32 %v6626, %v7287
    %v7742 = vsub.f32 %v6627, %v7287
    %v7743 = vsub.f32 %v6628, %v7287
    %v7744 = vsub.f32 %v6629, %v7287
    %v7745 = vsub.f32 %v6630, %v7287
    %v7746 = vsub.f32 %v6631, %v7287
    %v7747 = vsub.f32 %v6632, %v7287
    %v7748 = vsub.f32 %v6633, %v7287
    %v7749 = vsub.f32 %v6634, %v7287
    %v7750 = vsub.f32 %v6635, %v7287
    %v7751 = vsub.f32 %v6636, %v7287
    %v7752 = vsub.f32 %v6637, %v7287
    %v7753 = vsub.f32 %v6638, %v7287
    %v7754 = vsub.f32 %v6639, %v7287
    %v7755 = vsub.f32 %v6640, %v7287
    %v7756 = vsub.f32 %v6641, %v7287
    %v7757 = vsub.f32 %v6642, %v7287
    %v7758 = vsub.f32 %v6643, %v7287
    %v7759 = vsub.f32 %v6644, %v7287
    %v7760 = vsub.f32 %v6645, %v7287
    %v7761 = vsub.f32 %v6646, %v7287
    %v7762 = vsub.f32 %v6647, %v7287
    %v7763 = vsub.f32 %v6648, %v7287
    %v7764 = vsub.f32 %v6649, %v7287
    %v7765 = vsub.f32 %v6650, %v7287
    %v7766 = vsub.f32 %v6651, %v7287
    %v7767 = vsub.f32 %v6652, %v7287
    %v7768 = vsub.f32 %v6653, %v7287
    %v7769 = vsub.f32 %v6654, %v7287
    %v7770 = vsub.f32 %v6655, %v7287
    %v7771 = vsub.f32 %v6656, %v7287
    %v7772 = vsub.f32 %v6657, %v7287
    %v7773 = vsub.f32 %v6658, %v7287
    %v7774 = vsub.f32 %v6659, %v7287
    %v7775 = vsub.f32 %v6660, %v7287
    %v7776 = vsub.f32 %v6661, %v7287
    %v7777 = vsub.f32 %v6662, %v7287
    %v7778 = vsub.f32 %v6663, %v7287
    %v7779 = vsub.f32 %v6664, %v7287
    %v7780 = vsub.f32 %v6665, %v7287
    %v7781 = vsub.f32 %v6666, %v7287
    %v7782 = vsub.f32 %v6667, %v7287
    %v7783 = vsub.f32 %v6668, %v7287
    %v7784 = vsub.f32 %v6669, %v7287
    %v7785 = vsub.f32 %v6670, %v7287
    %v7786 = vsub.f32 %v6671, %v7287
    %v7787 = vsub.f32 %v6672, %v7287
    %v7788 = vsub.f32 %v6673, %v7287
    %v7789 = vsub.f32 %v6674, %v7287
    %v7790 = vsub.f32 %v6675, %v7287
    %v7791 = vsub.f32 %v6676, %v7287
    %v7792 = vsub.f32 %v6677, %v7287
    %v7793 = vsub.f32 %v6678, %v7287
    %v7794 = vsub.f32 %v6679, %v7287
    %v7795 = vsub.f32 %v6680, %v7287
    %v7796 = vsub.f32 %v6681, %v7287
    %v7797 = vsub.f32 %v6682, %v7287
    %v7798 = vsub.f32 %v6683, %v7287
    %v7799 = vsub.f32 %v6684, %v7287
    %v7800 = vsub.f32 %v6685, %v7287
    %v7801 = vsub.f32 %v6686, %v7287
    %v7802 = vsub.f32 %v6687, %v7287
    %v7803 = vsub.f32 %v6688, %v7287
    %v7804 = vsub.f32 %v6689, %v7287
    %v7805 = vsub.f32 %v6690, %v7287
    %v7806 = vsub.f32 %v6691, %v7287
    %v7807 = vsub.f32 %v6692, %v7287
    %v7808 = vsub.f32 %v6693, %v7287
    %v7809 = vsub.f32 %v6694, %v7287
    %v7810 = vsub.f32 %v6695, %v7287
    %v7811 = vsub.f32 %v6696, %v7287
    %v7812 = vsub.f32 %v6697, %v7287
    %v7813 = vsub.f32 %v6698, %v7287
    %v7814 = vsub.f32 %v6699, %v7287
    %v7815 = vsub.f32 %v6700, %v7287
    %v7816 = vsub.f32 %v6701, %v7287
    %v7817 = vsub.f32 %v6702, %v7287
    %v7818 = vsub.f32 %v6703, %v7287
    %v7819 = vsub.f32 %v6704, %v7287
    %v7820 = vsub.f32 %v6705, %v7287
    %v7821 = vsub.f32 %v6706, %v7287
    %v7822 = vsub.f32 %v6707, %v7287
    %v7823 = vsub.f32 %v6708, %v7287
    %v7824 = vsub.f32 %v6709, %v7287
    %v7825 = vsub.f32 %v6710, %v7287
    %v7826 = vsub.f32 %v6711, %v7287
    %v7827 = vsub.f32 %v6712, %v7287
    %v7828 = vsub.f32 %v6713, %v7287
    %v7829 = vsub.f32 %v6714, %v7287
    %v7830 = vsub.f32 %v6715, %v7287
    %v7831 = vsub.f32 %v6716, %v7287
    %v7832 = vsub.f32 %v6717, %v7287
    %v7833 = vsub.f32 %v6718, %v7287
    %v7834 = vsub.f32 %v6719, %v7287
    %v7835 = vsub.f32 %v6720, %v7287
    %v7836 = vsub.f32 %v6721, %v7287
    %v7837 = vsub.f32 %v6722, %v7287
    %v7838 = vsub.f32 %v6723, %v7287
    %v7839 = vsub.f32 %v6724, %v7287
    %v7840 = vsub.f32 %v6725, %v7287
    %v7841 = vmul.f32 %v7288, %v7288
    %v7842 = vmul.f32 %v7289, %v7289
    %v7843 = vmul.f32 %v7290, %v7290
    %v7844 = vmul.f32 %v7291, %v7291
    %v7845 = vmul.f32 %v7292, %v7292
    %v7846 = vmul.f32 %v7293, %v7293
    %v7847 = vmul.f32 %v7294, %v7294
    %v7848 = vmul.f32 %v7295, %v7295
    %v7849 = vmul.f32 %v7296, %v7296
    %v7850 = vmul.f32 %v7297, %v7297
    %v7851 = vmul.f32 %v7298, %v7298
    %v7852 = vmul.f32 %v7299, %v7299
    %v7853 = vmul.f32 %v7300, %v7300
    %v7854 = vmul.f32 %v7301, %v7301
    %v7855 = vmul.f32 %v7302, %v7302
    %v7856 = vmul.f32 %v7303, %v7303
    %v7857 = vmul.f32 %v7304, %v7304
    %v7858 = vmul.f32 %v7305, %v7305
    %v7859 = vmul.f32 %v7306, %v7306
    %v7860 = vmul.f32 %v7307, %v7307
    %v7861 = vmul.f32 %v7308, %v7308
    %v7862 = vmul.f32 %v7309, %v7309
    %v7863 = vmul.f32 %v7310, %v7310
    %v7864 = vmul.f32 %v7311, %v7311
    %v7865 = vmul.f32 %v7312, %v7312
    %v7866 = vmul.f32 %v7313, %v7313
    %v7867 = vmul.f32 %v7314, %v7314
    %v7868 = vmul.f32 %v7315, %v7315
    %v7869 = vmul.f32 %v7316, %v7316
    %v7870 = vmul.f32 %v7317, %v7317
    %v7871 = vmul.f32 %v7318, %v7318
    %v7872 = vmul.f32 %v7319, %v7319
    %v7873 = vmul.f32 %v7320, %v7320
    %v7874 = vmul.f32 %v7321, %v7321
    %v7875 = vmul.f32 %v7322, %v7322
    %v7876 = vmul.f32 %v7323, %v7323
    %v7877 = vmul.f32 %v7324, %v7324
    %v7878 = vmul.f32 %v7325, %v7325
    %v7879 = vmul.f32 %v7326, %v7326
    %v7880 = vmul.f32 %v7327, %v7327
    %v7881 = vmul.f32 %v7328, %v7328
    %v7882 = vmul.f32 %v7329, %v7329
    %v7883 = vmul.f32 %v7330, %v7330
    %v7884 = vmul.f32 %v7331, %v7331
    %v7885 = vmul.f32 %v7332, %v7332
    %v7886 = vmul.f32 %v7333, %v7333
    %v7887 = vmul.f32 %v7334, %v7334
    %v7888 = vmul.f32 %v7335, %v7335
    %v7889 = vmul.f32 %v7336, %v7336
    %v7890 = vmul.f32 %v7337, %v7337
    %v7891 = vmul.f32 %v7338, %v7338
    %v7892 = vmul.f32 %v7339, %v7339
    %v7893 = vmul.f32 %v7340, %v7340
    %v7894 = vmul.f32 %v7341, %v7341
    %v7895 = vmul.f32 %v7342, %v7342
    %v7896 = vmul.f32 %v7343, %v7343
    %v7897 = vmul.f32 %v7344, %v7344
    %v7898 = vmul.f32 %v7345, %v7345
    %v7899 = vmul.f32 %v7346, %v7346
    %v7900 = vmul.f32 %v7347, %v7347
    %v7901 = vmul.f32 %v7348, %v7348
    %v7902 = vmul.f32 %v7349, %v7349
    %v7903 = vmul.f32 %v7350, %v7350
    %v7904 = vmul.f32 %v7351, %v7351
    %v7905 = vmul.f32 %v7352, %v7352
    %v7906 = vmul.f32 %v7353, %v7353
    %v7907 = vmul.f32 %v7354, %v7354
    %v7908 = vmul.f32 %v7355, %v7355
    %v7909 = vmul.f32 %v7356, %v7356
    %v7910 = vmul.f32 %v7357, %v7357
    %v7911 = vmul.f32 %v7358, %v7358
    %v7912 = vmul.f32 %v7359, %v7359
    %v7913 = vmul.f32 %v7360, %v7360
    %v7914 = vmul.f32 %v7361, %v7361
    %v7915 = vmul.f32 %v7362, %v7362
    %v7916 = vmul.f32 %v7363, %v7363
    %v7917 = vmul.f32 %v7364, %v7364
    %v7918 = vmul.f32 %v7365, %v7365
    %v7919 = vmul.f32 %v7366, %v7366
    %v7920 = vmul.f32 %v7367, %v7367
    %v7921 = vmul.f32 %v7368, %v7368
    %v7922 = vmul.f32 %v7369, %v7369
    %v7923 = vmul.f32 %v7370, %v7370
    %v7924 = vmul.f32 %v7371, %v7371
    %v7925 = vmul.f32 %v7372, %v7372
    %v7926 = vmul.f32 %v7373, %v7373
    %v7927 = vmul.f32 %v7374, %v7374
    %v7928 = vmul.f32 %v7375, %v7375
    %v7929 = vmul.f32 %v7376, %v7376
    %v7930 = vmul.f32 %v7377, %v7377
    %v7931 = vmul.f32 %v7378, %v7378
    %v7932 = vmul.f32 %v7379, %v7379
    %v7933 = vmul.f32 %v7380, %v7380
    %v7934 = vmul.f32 %v7381, %v7381
    %v7935 = vmul.f32 %v7382, %v7382
    %v7936 = vmul.f32 %v7383, %v7383
    %v7937 = vmul.f32 %v7384, %v7384
    %v7938 = vmul.f32 %v7385, %v7385
    %v7939 = vmul.f32 %v7386, %v7386
    %v7940 = vmul.f32 %v7387, %v7387
    %v7941 = vmul.f32 %v7388, %v7388
    %v7942 = vmul.f32 %v7389, %v7389
    %v7943 = vmul.f32 %v7390, %v7390
    %v7944 = vmul.f32 %v7391, %v7391
    %v7945 = vmul.f32 %v7392, %v7392
    %v7946 = vmul.f32 %v7393, %v7393
    %v7947 = vmul.f32 %v7394, %v7394
    %v7948 = vmul.f32 %v7395, %v7395
    %v7949 = vmul.f32 %v7396, %v7396
    %v7950 = vmul.f32 %v7397, %v7397
    %v7951 = vmul.f32 %v7398, %v7398
    %v7952 = vmul.f32 %v7399, %v7399
    %v7953 = vmul.f32 %v7400, %v7400
    %v7954 = vmul.f32 %v7401, %v7401
    %v7955 = vmul.f32 %v7402, %v7402
    %v7956 = vmul.f32 %v7403, %v7403
    %v7957 = vmul.f32 %v7404, %v7404
    %v7958 = vmul.f32 %v7405, %v7405
    %v7959 = vmul.f32 %v7406, %v7406
    %v7960 = vmul.f32 %v7407, %v7407
    %v7961 = vmul.f32 %v7408, %v7408
    %v7962 = vmul.f32 %v7409, %v7409
    %v7963 = vmul.f32 %v7410, %v7410
    %v7964 = vmul.f32 %v7411, %v7411
    %v7965 = vmul.f32 %v7412, %v7412
    %v7966 = vmul.f32 %v7413, %v7413
    %v7967 = vmul.f32 %v7414, %v7414
    %v7968 = vmul.f32 %v7415, %v7415
    %v7969 = vmul.f32 %v7416, %v7416
    %v7970 = vmul.f32 %v7417, %v7417
    %v7971 = vmul.f32 %v7418, %v7418
    %v7972 = vmul.f32 %v7419, %v7419
    %v7973 = vmul.f32 %v7420, %v7420
    %v7974 = vmul.f32 %v7421, %v7421
    %v7975 = vmul.f32 %v7422, %v7422
    %v7976 = vmul.f32 %v7423, %v7423
    %v7977 = vmul.f32 %v7424, %v7424
    %v7978 = vmul.f32 %v7425, %v7425
    %v7979 = vmul.f32 %v7426, %v7426
    %v7980 = vmul.f32 %v7427, %v7427
    %v7981 = vmul.f32 %v7428, %v7428
    %v7982 = vmul.f32 %v7429, %v7429
    %v7983 = vmul.f32 %v7430, %v7430
    %v7984 = vmul.f32 %v7431, %v7431
    %v7985 = vmul.f32 %v7432, %v7432
    %v7986 = vmul.f32 %v7433, %v7433
    %v7987 = vmul.f32 %v7434, %v7434
    %v7988 = vmul.f32 %v7435, %v7435
    %v7989 = vmul.f32 %v7436, %v7436
    %v7990 = vmul.f32 %v7437, %v7437
    %v7991 = vmul.f32 %v7438, %v7438
    %v7992 = vmul.f32 %v7439, %v7439
    %v7993 = vmul.f32 %v7440, %v7440
    %v7994 = vmul.f32 %v7441, %v7441
    %v7995 = vmul.f32 %v7442, %v7442
    %v7996 = vmul.f32 %v7443, %v7443
    %v7997 = vmul.f32 %v7444, %v7444
    %v7998 = vmul.f32 %v7445, %v7445
    %v7999 = vmul.f32 %v7446, %v7446
    %v8000 = vmul.f32 %v7447, %v7447
    %v8001 = vmul.f32 %v7448, %v7448
    %v8002 = vmul.f32 %v7449, %v7449
    %v8003 = vmul.f32 %v7450, %v7450
    %v8004 = vmul.f32 %v7451, %v7451
    %v8005 = vmul.f32 %v7452, %v7452
    %v8006 = vmul.f32 %v7453, %v7453
    %v8007 = vmul.f32 %v7454, %v7454
    %v8008 = vmul.f32 %v7455, %v7455
    %v8009 = vmul.f32 %v7456, %v7456
    %v8010 = vmul.f32 %v7457, %v7457
    %v8011 = vmul.f32 %v7458, %v7458
    %v8012 = vmul.f32 %v7459, %v7459
    %v8013 = vmul.f32 %v7460, %v7460
    %v8014 = vmul.f32 %v7461, %v7461
    %v8015 = vmul.f32 %v7462, %v7462
    %v8016 = vmul.f32 %v7463, %v7463
    %v8017 = vmul.f32 %v7464, %v7464
    %v8018 = vmul.f32 %v7465, %v7465
    %v8019 = vmul.f32 %v7466, %v7466
    %v8020 = vmul.f32 %v7467, %v7467
    %v8021 = vmul.f32 %v7468, %v7468
    %v8022 = vmul.f32 %v7469, %v7469
    %v8023 = vmul.f32 %v7470, %v7470
    %v8024 = vmul.f32 %v7471, %v7471
    %v8025 = vmul.f32 %v7472, %v7472
    %v8026 = vmul.f32 %v7473, %v7473
    %v8027 = vmul.f32 %v7474, %v7474
    %v8028 = vmul.f32 %v7475, %v7475
    %v8029 = vmul.f32 %v7476, %v7476
    %v8030 = vmul.f32 %v7477, %v7477
    %v8031 = vmul.f32 %v7478, %v7478
    %v8032 = vmul.f32 %v7479, %v7479
    %v8033 = vmul.f32 %v7480, %v7480
    %v8034 = vmul.f32 %v7481, %v7481
    %v8035 = vmul.f32 %v7482, %v7482
    %v8036 = vmul.f32 %v7483, %v7483
    %v8037 = vmul.f32 %v7484, %v7484
    %v8038 = vmul.f32 %v7485, %v7485
    %v8039 = vmul.f32 %v7486, %v7486
    %v8040 = vmul.f32 %v7487, %v7487
    %v8041 = vmul.f32 %v7488, %v7488
    %v8042 = vmul.f32 %v7489, %v7489
    %v8043 = vmul.f32 %v7490, %v7490
    %v8044 = vmul.f32 %v7491, %v7491
    %v8045 = vmul.f32 %v7492, %v7492
    %v8046 = vmul.f32 %v7493, %v7493
    %v8047 = vmul.f32 %v7494, %v7494
    %v8048 = vmul.f32 %v7495, %v7495
    %v8049 = vmul.f32 %v7496, %v7496
    %v8050 = vmul.f32 %v7497, %v7497
    %v8051 = vmul.f32 %v7498, %v7498
    %v8052 = vmul.f32 %v7499, %v7499
    %v8053 = vmul.f32 %v7500, %v7500
    %v8054 = vmul.f32 %v7501, %v7501
    %v8055 = vmul.f32 %v7502, %v7502
    %v8056 = vmul.f32 %v7503, %v7503
    %v8057 = vmul.f32 %v7504, %v7504
    %v8058 = vmul.f32 %v7505, %v7505
    %v8059 = vmul.f32 %v7506, %v7506
    %v8060 = vmul.f32 %v7507, %v7507
    %v8061 = vmul.f32 %v7508, %v7508
    %v8062 = vmul.f32 %v7509, %v7509
    %v8063 = vmul.f32 %v7510, %v7510
    %v8064 = vmul.f32 %v7511, %v7511
    %v8065 = vmul.f32 %v7512, %v7512
    %v8066 = vmul.f32 %v7513, %v7513
    %v8067 = vmul.f32 %v7514, %v7514
    %v8068 = vmul.f32 %v7515, %v7515
    %v8069 = vmul.f32 %v7516, %v7516
    %v8070 = vmul.f32 %v7517, %v7517
    %v8071 = vmul.f32 %v7518, %v7518
    %v8072 = vmul.f32 %v7519, %v7519
    %v8073 = vmul.f32 %v7520, %v7520
    %v8074 = vmul.f32 %v7521, %v7521
    %v8075 = vmul.f32 %v7522, %v7522
    %v8076 = vmul.f32 %v7523, %v7523
    %v8077 = vmul.f32 %v7524, %v7524
    %v8078 = vmul.f32 %v7525, %v7525
    %v8079 = vmul.f32 %v7526, %v7526
    %v8080 = vmul.f32 %v7527, %v7527
    %v8081 = vmul.f32 %v7528, %v7528
    %v8082 = vmul.f32 %v7529, %v7529
    %v8083 = vmul.f32 %v7530, %v7530
    %v8084 = vmul.f32 %v7531, %v7531
    %v8085 = vmul.f32 %v7532, %v7532
    %v8086 = vmul.f32 %v7533, %v7533
    %v8087 = vmul.f32 %v7534, %v7534
    %v8088 = vmul.f32 %v7535, %v7535
    %v8089 = vmul.f32 %v7536, %v7536
    %v8090 = vmul.f32 %v7537, %v7537
    %v8091 = vmul.f32 %v7538, %v7538
    %v8092 = vmul.f32 %v7539, %v7539
    %v8093 = vmul.f32 %v7540, %v7540
    %v8094 = vmul.f32 %v7541, %v7541
    %v8095 = vmul.f32 %v7542, %v7542
    %v8096 = vmul.f32 %v7543, %v7543
    %v8097 = vmul.f32 %v7544, %v7544
    %v8098 = vmul.f32 %v7545, %v7545
    %v8099 = vmul.f32 %v7546, %v7546
    %v8100 = vmul.f32 %v7547, %v7547
    %v8101 = vmul.f32 %v7548, %v7548
    %v8102 = vmul.f32 %v7549, %v7549
    %v8103 = vmul.f32 %v7550, %v7550
    %v8104 = vmul.f32 %v7551, %v7551
    %v8105 = vmul.f32 %v7552, %v7552
    %v8106 = vmul.f32 %v7553, %v7553
    %v8107 = vmul.f32 %v7554, %v7554
    %v8108 = vmul.f32 %v7555, %v7555
    %v8109 = vmul.f32 %v7556, %v7556
    %v8110 = vmul.f32 %v7557, %v7557
    %v8111 = vmul.f32 %v7558, %v7558
    %v8112 = vmul.f32 %v7559, %v7559
    %v8113 = vmul.f32 %v7560, %v7560
    %v8114 = vmul.f32 %v7561, %v7561
    %v8115 = vmul.f32 %v7562, %v7562
    %v8116 = vmul.f32 %v7563, %v7563
    %v8117 = vmul.f32 %v7564, %v7564
    %v8118 = vmul.f32 %v7565, %v7565
    %v8119 = vmul.f32 %v7566, %v7566
    %v8120 = vmul.f32 %v7567, %v7567
    %v8121 = vmul.f32 %v7568, %v7568
    %v8122 = vmul.f32 %v7569, %v7569
    %v8123 = vmul.f32 %v7570, %v7570
    %v8124 = vmul.f32 %v7571, %v7571
    %v8125 = vmul.f32 %v7572, %v7572
    %v8126 = vmul.f32 %v7573, %v7573
    %v8127 = vmul.f32 %v7574, %v7574
    %v8128 = vmul.f32 %v7575, %v7575
    %v8129 = vmul.f32 %v7576, %v7576
    %v8130 = vmul.f32 %v7577, %v7577
    %v8131 = vmul.f32 %v7578, %v7578
    %v8132 = vmul.f32 %v7579, %v7579
    %v8133 = vmul.f32 %v7580, %v7580
    %v8134 = vmul.f32 %v7581, %v7581
    %v8135 = vmul.f32 %v7582, %v7582
    %v8136 = vmul.f32 %v7583, %v7583
    %v8137 = vmul.f32 %v7584, %v7584
    %v8138 = vmul.f32 %v7585, %v7585
    %v8139 = vmul.f32 %v7586, %v7586
    %v8140 = vmul.f32 %v7587, %v7587
    %v8141 = vmul.f32 %v7588, %v7588
    %v8142 = vmul.f32 %v7589, %v7589
    %v8143 = vmul.f32 %v7590, %v7590
    %v8144 = vmul.f32 %v7591, %v7591
    %v8145 = vmul.f32 %v7592, %v7592
    %v8146 = vmul.f32 %v7593, %v7593
    %v8147 = vmul.f32 %v7594, %v7594
    %v8148 = vmul.f32 %v7595, %v7595
    %v8149 = vmul.f32 %v7596, %v7596
    %v8150 = vmul.f32 %v7597, %v7597
    %v8151 = vmul.f32 %v7598, %v7598
    %v8152 = vmul.f32 %v7599, %v7599
    %v8153 = vmul.f32 %v7600, %v7600
    %v8154 = vmul.f32 %v7601, %v7601
    %v8155 = vmul.f32 %v7602, %v7602
    %v8156 = vmul.f32 %v7603, %v7603
    %v8157 = vmul.f32 %v7604, %v7604
    %v8158 = vmul.f32 %v7605, %v7605
    %v8159 = vmul.f32 %v7606, %v7606
    %v8160 = vmul.f32 %v7607, %v7607
    %v8161 = vmul.f32 %v7608, %v7608
    %v8162 = vmul.f32 %v7609, %v7609
    %v8163 = vmul.f32 %v7610, %v7610
    %v8164 = vmul.f32 %v7611, %v7611
    %v8165 = vmul.f32 %v7612, %v7612
    %v8166 = vmul.f32 %v7613, %v7613
    %v8167 = vmul.f32 %v7614, %v7614
    %v8168 = vmul.f32 %v7615, %v7615
    %v8169 = vmul.f32 %v7616, %v7616
    %v8170 = vmul.f32 %v7617, %v7617
    %v8171 = vmul.f32 %v7618, %v7618
    %v8172 = vmul.f32 %v7619, %v7619
    %v8173 = vmul.f32 %v7620, %v7620
    %v8174 = vmul.f32 %v7621, %v7621
    %v8175 = vmul.f32 %v7622, %v7622
    %v8176 = vmul.f32 %v7623, %v7623
    %v8177 = vmul.f32 %v7624, %v7624
    %v8178 = vmul.f32 %v7625, %v7625
    %v8179 = vmul.f32 %v7626, %v7626
    %v8180 = vmul.f32 %v7627, %v7627
    %v8181 = vmul.f32 %v7628, %v7628
    %v8182 = vmul.f32 %v7629, %v7629
    %v8183 = vmul.f32 %v7630, %v7630
    %v8184 = vmul.f32 %v7631, %v7631
    %v8185 = vmul.f32 %v7632, %v7632
    %v8186 = vmul.f32 %v7633, %v7633
    %v8187 = vmul.f32 %v7634, %v7634
    %v8188 = vmul.f32 %v7635, %v7635
    %v8189 = vmul.f32 %v7636, %v7636
    %v8190 = vmul.f32 %v7637, %v7637
    %v8191 = vmul.f32 %v7638, %v7638
    %v8192 = vmul.f32 %v7639, %v7639
    %v8193 = vmul.f32 %v7640, %v7640
    %v8194 = vmul.f32 %v7641, %v7641
    %v8195 = vmul.f32 %v7642, %v7642
    %v8196 = vmul.f32 %v7643, %v7643
    %v8197 = vmul.f32 %v7644, %v7644
    %v8198 = vmul.f32 %v7645, %v7645
    %v8199 = vmul.f32 %v7646, %v7646
    %v8200 = vmul.f32 %v7647, %v7647
    %v8201 = vmul.f32 %v7648, %v7648
    %v8202 = vmul.f32 %v7649, %v7649
    %v8203 = vmul.f32 %v7650, %v7650
    %v8204 = vmul.f32 %v7651, %v7651
    %v8205 = vmul.f32 %v7652, %v7652
    %v8206 = vmul.f32 %v7653, %v7653
    %v8207 = vmul.f32 %v7654, %v7654
    %v8208 = vmul.f32 %v7655, %v7655
    %v8209 = vmul.f32 %v7656, %v7656
    %v8210 = vmul.f32 %v7657, %v7657
    %v8211 = vmul.f32 %v7658, %v7658
    %v8212 = vmul.f32 %v7659, %v7659
    %v8213 = vmul.f32 %v7660, %v7660
    %v8214 = vmul.f32 %v7661, %v7661
    %v8215 = vmul.f32 %v7662, %v7662
    %v8216 = vmul.f32 %v7663, %v7663
    %v8217 = vmul.f32 %v7664, %v7664
    %v8218 = vmul.f32 %v7665, %v7665
    %v8219 = vmul.f32 %v7666, %v7666
    %v8220 = vmul.f32 %v7667, %v7667
    %v8221 = vmul.f32 %v7668, %v7668
    %v8222 = vmul.f32 %v7669, %v7669
    %v8223 = vmul.f32 %v7670, %v7670
    %v8224 = vmul.f32 %v7671, %v7671
    %v8225 = vmul.f32 %v7672, %v7672
    %v8226 = vmul.f32 %v7673, %v7673
    %v8227 = vmul.f32 %v7674, %v7674
    %v8228 = vmul.f32 %v7675, %v7675
    %v8229 = vmul.f32 %v7676, %v7676
    %v8230 = vmul.f32 %v7677, %v7677
    %v8231 = vmul.f32 %v7678, %v7678
    %v8232 = vmul.f32 %v7679, %v7679
    %v8233 = vmul.f32 %v7680, %v7680
    %v8234 = vmul.f32 %v7681, %v7681
    %v8235 = vmul.f32 %v7682, %v7682
    %v8236 = vmul.f32 %v7683, %v7683
    %v8237 = vmul.f32 %v7684, %v7684
    %v8238 = vmul.f32 %v7685, %v7685
    %v8239 = vmul.f32 %v7686, %v7686
    %v8240 = vmul.f32 %v7687, %v7687
    %v8241 = vmul.f32 %v7688, %v7688
    %v8242 = vmul.f32 %v7689, %v7689
    %v8243 = vmul.f32 %v7690, %v7690
    %v8244 = vmul.f32 %v7691, %v7691
    %v8245 = vmul.f32 %v7692, %v7692
    %v8246 = vmul.f32 %v7693, %v7693
    %v8247 = vmul.f32 %v7694, %v7694
    %v8248 = vmul.f32 %v7695, %v7695
    %v8249 = vmul.f32 %v7696, %v7696
    %v8250 = vmul.f32 %v7697, %v7697
    %v8251 = vmul.f32 %v7698, %v7698
    %v8252 = vmul.f32 %v7699, %v7699
    %v8253 = vmul.f32 %v7700, %v7700
    %v8254 = vmul.f32 %v7701, %v7701
    %v8255 = vmul.f32 %v7702, %v7702
    %v8256 = vmul.f32 %v7703, %v7703
    %v8257 = vmul.f32 %v7704, %v7704
    %v8258 = vmul.f32 %v7705, %v7705
    %v8259 = vmul.f32 %v7706, %v7706
    %v8260 = vmul.f32 %v7707, %v7707
    %v8261 = vmul.f32 %v7708, %v7708
    %v8262 = vmul.f32 %v7709, %v7709
    %v8263 = vmul.f32 %v7710, %v7710
    %v8264 = vmul.f32 %v7711, %v7711
    %v8265 = vmul.f32 %v7712, %v7712
    %v8266 = vmul.f32 %v7713, %v7713
    %v8267 = vmul.f32 %v7714, %v7714
    %v8268 = vmul.f32 %v7715, %v7715
    %v8269 = vmul.f32 %v7716, %v7716
    %v8270 = vmul.f32 %v7717, %v7717
    %v8271 = vmul.f32 %v7718, %v7718
    %v8272 = vmul.f32 %v7719, %v7719
    %v8273 = vmul.f32 %v7720, %v7720
    %v8274 = vmul.f32 %v7721, %v7721
    %v8275 = vmul.f32 %v7722, %v7722
    %v8276 = vmul.f32 %v7723, %v7723
    %v8277 = vmul.f32 %v7724, %v7724
    %v8278 = vmul.f32 %v7725, %v7725
    %v8279 = vmul.f32 %v7726, %v7726
    %v8280 = vmul.f32 %v7727, %v7727
    %v8281 = vmul.f32 %v7728, %v7728
    %v8282 = vmul.f32 %v7729, %v7729
    %v8283 = vmul.f32 %v7730, %v7730
    %v8284 = vmul.f32 %v7731, %v7731
    %v8285 = vmul.f32 %v7732, %v7732
    %v8286 = vmul.f32 %v7733, %v7733
    %v8287 = vmul.f32 %v7734, %v7734
    %v8288 = vmul.f32 %v7735, %v7735
    %v8289 = vmul.f32 %v7736, %v7736
    %v8290 = vmul.f32 %v7737, %v7737
    %v8291 = vmul.f32 %v7738, %v7738
    %v8292 = vmul.f32 %v7739, %v7739
    %v8293 = vmul.f32 %v7740, %v7740
    %v8294 = vmul.f32 %v7741, %v7741
    %v8295 = vmul.f32 %v7742, %v7742
    %v8296 = vmul.f32 %v7743, %v7743
    %v8297 = vmul.f32 %v7744, %v7744
    %v8298 = vmul.f32 %v7745, %v7745
    %v8299 = vmul.f32 %v7746, %v7746
    %v8300 = vmul.f32 %v7747, %v7747
    %v8301 = vmul.f32 %v7748, %v7748
    %v8302 = vmul.f32 %v7749, %v7749
    %v8303 = vmul.f32 %v7750, %v7750
    %v8304 = vmul.f32 %v7751, %v7751
    %v8305 = vmul.f32 %v7752, %v7752
    %v8306 = vmul.f32 %v7753, %v7753
    %v8307 = vmul.f32 %v7754, %v7754
    %v8308 = vmul.f32 %v7755, %v7755
    %v8309 = vmul.f32 %v7756, %v7756
    %v8310 = vmul.f32 %v7757, %v7757
    %v8311 = vmul.f32 %v7758, %v7758
    %v8312 = vmul.f32 %v7759, %v7759
    %v8313 = vmul.f32 %v7760, %v7760
    %v8314 = vmul.f32 %v7761, %v7761
    %v8315 = vmul.f32 %v7762, %v7762
    %v8316 = vmul.f32 %v7763, %v7763
    %v8317 = vmul.f32 %v7764, %v7764
    %v8318 = vmul.f32 %v7765, %v7765
    %v8319 = vmul.f32 %v7766, %v7766
    %v8320 = vmul.f32 %v7767, %v7767
    %v8321 = vmul.f32 %v7768, %v7768
    %v8322 = vmul.f32 %v7769, %v7769
    %v8323 = vmul.f32 %v7770, %v7770
    %v8324 = vmul.f32 %v7771, %v7771
    %v8325 = vmul.f32 %v7772, %v7772
    %v8326 = vmul.f32 %v7773, %v7773
    %v8327 = vmul.f32 %v7774, %v7774
    %v8328 = vmul.f32 %v7775, %v7775
    %v8329 = vmul.f32 %v7776, %v7776
    %v8330 = vmul.f32 %v7777, %v7777
    %v8331 = vmul.f32 %v7778, %v7778
    %v8332 = vmul.f32 %v7779, %v7779
    %v8333 = vmul.f32 %v7780, %v7780
    %v8334 = vmul.f32 %v7781, %v7781
    %v8335 = vmul.f32 %v7782, %v7782
    %v8336 = vmul.f32 %v7783, %v7783
    %v8337 = vmul.f32 %v7784, %v7784
    %v8338 = vmul.f32 %v7785, %v7785
    %v8339 = vmul.f32 %v7786, %v7786
    %v8340 = vmul.f32 %v7787, %v7787
    %v8341 = vmul.f32 %v7788, %v7788
    %v8342 = vmul.f32 %v7789, %v7789
    %v8343 = vmul.f32 %v7790, %v7790
    %v8344 = vmul.f32 %v7791, %v7791
    %v8345 = vmul.f32 %v7792, %v7792
    %v8346 = vmul.f32 %v7793, %v7793
    %v8347 = vmul.f32 %v7794, %v7794
    %v8348 = vmul.f32 %v7795, %v7795
    %v8349 = vmul.f32 %v7796, %v7796
    %v8350 = vmul.f32 %v7797, %v7797
    %v8351 = vmul.f32 %v7798, %v7798
    %v8352 = vmul.f32 %v7799, %v7799
    %v8353 = vmul.f32 %v7800, %v7800
    %v8354 = vmul.f32 %v7801, %v7801
    %v8355 = vmul.f32 %v7802, %v7802
    %v8356 = vmul.f32 %v7803, %v7803
    %v8357 = vmul.f32 %v7804, %v7804
    %v8358 = vmul.f32 %v7805, %v7805
    %v8359 = vmul.f32 %v7806, %v7806
    %v8360 = vmul.f32 %v7807, %v7807
    %v8361 = vmul.f32 %v7808, %v7808
    %v8362 = vmul.f32 %v7809, %v7809
    %v8363 = vmul.f32 %v7810, %v7810
    %v8364 = vmul.f32 %v7811, %v7811
    %v8365 = vmul.f32 %v7812, %v7812
    %v8366 = vmul.f32 %v7813, %v7813
    %v8367 = vmul.f32 %v7814, %v7814
    %v8368 = vmul.f32 %v7815, %v7815
    %v8369 = vmul.f32 %v7816, %v7816
    %v8370 = vmul.f32 %v7817, %v7817
    %v8371 = vmul.f32 %v7818, %v7818
    %v8372 = vmul.f32 %v7819, %v7819
    %v8373 = vmul.f32 %v7820, %v7820
    %v8374 = vmul.f32 %v7821, %v7821
    %v8375 = vmul.f32 %v7822, %v7822
    %v8376 = vmul.f32 %v7823, %v7823
    %v8377 = vmul.f32 %v7824, %v7824
    %v8378 = vmul.f32 %v7825, %v7825
    %v8379 = vmul.f32 %v7826, %v7826
    %v8380 = vmul.f32 %v7827, %v7827
    %v8381 = vmul.f32 %v7828, %v7828
    %v8382 = vmul.f32 %v7829, %v7829
    %v8383 = vmul.f32 %v7830, %v7830
    %v8384 = vmul.f32 %v7831, %v7831
    %v8385 = vmul.f32 %v7832, %v7832
    %v8386 = vmul.f32 %v7833, %v7833
    %v8387 = vmul.f32 %v7834, %v7834
    %v8388 = vmul.f32 %v7835, %v7835
    %v8389 = vmul.f32 %v7836, %v7836
    %v8390 = vmul.f32 %v7837, %v7837
    %v8391 = vmul.f32 %v7838, %v7838
    %v8392 = vmul.f32 %v7839, %v7839
    %v8393 = vmul.f32 %v7840, %v7840
    %v8394 = vadd.f32 %v7841, %v7842
    %v8395 = vadd.f32 %v8394, %v7843
    %v8396 = vadd.f32 %v8395, %v7844
    %v8397 = vadd.f32 %v8396, %v7845
    %v8398 = vadd.f32 %v8397, %v7846
    %v8399 = vadd.f32 %v8398, %v7847
    %v8400 = vadd.f32 %v8399, %v7848
    %v8401 = vadd.f32 %v8400, %v7849
    %v8402 = vadd.f32 %v8401, %v7850
    %v8403 = vadd.f32 %v8402, %v7851
    %v8404 = vadd.f32 %v8403, %v7852
    %v8405 = vadd.f32 %v8404, %v7853
    %v8406 = vadd.f32 %v8405, %v7854
    %v8407 = vadd.f32 %v8406, %v7855
    %v8408 = vadd.f32 %v8407, %v7856
    %v8409 = vadd.f32 %v8408, %v7857
    %v8410 = vadd.f32 %v8409, %v7858
    %v8411 = vadd.f32 %v8410, %v7859
    %v8412 = vadd.f32 %v8411, %v7860
    %v8413 = vadd.f32 %v8412, %v7861
    %v8414 = vadd.f32 %v8413, %v7862
    %v8415 = vadd.f32 %v8414, %v7863
    %v8416 = vadd.f32 %v8415, %v7864
    %v8417 = vadd.f32 %v8416, %v7865
    %v8418 = vadd.f32 %v8417, %v7866
    %v8419 = vadd.f32 %v8418, %v7867
    %v8420 = vadd.f32 %v8419, %v7868
    %v8421 = vadd.f32 %v8420, %v7869
    %v8422 = vadd.f32 %v8421, %v7870
    %v8423 = vadd.f32 %v8422, %v7871
    %v8424 = vadd.f32 %v8423, %v7872
    %v8425 = vadd.f32 %v8424, %v7873
    %v8426 = vadd.f32 %v8425, %v7874
    %v8427 = vadd.f32 %v8426, %v7875
    %v8428 = vadd.f32 %v8427, %v7876
    %v8429 = vadd.f32 %v8428, %v7877
    %v8430 = vadd.f32 %v8429, %v7878
    %v8431 = vadd.f32 %v8430, %v7879
    %v8432 = vadd.f32 %v8431, %v7880
    %v8433 = vadd.f32 %v8432, %v7881
    %v8434 = vadd.f32 %v8433, %v7882
    %v8435 = vadd.f32 %v8434, %v7883
    %v8436 = vadd.f32 %v8435, %v7884
    %v8437 = vadd.f32 %v8436, %v7885
    %v8438 = vadd.f32 %v8437, %v7886
    %v8439 = vadd.f32 %v8438, %v7887
    %v8440 = vadd.f32 %v8439, %v7888
    %v8441 = vadd.f32 %v8440, %v7889
    %v8442 = vadd.f32 %v8441, %v7890
    %v8443 = vadd.f32 %v8442, %v7891
    %v8444 = vadd.f32 %v8443, %v7892
    %v8445 = vadd.f32 %v8444, %v7893
    %v8446 = vadd.f32 %v8445, %v7894
    %v8447 = vadd.f32 %v8446, %v7895
    %v8448 = vadd.f32 %v8447, %v7896
    %v8449 = vadd.f32 %v8448, %v7897
    %v8450 = vadd.f32 %v8449, %v7898
    %v8451 = vadd.f32 %v8450, %v7899
    %v8452 = vadd.f32 %v8451, %v7900
    %v8453 = vadd.f32 %v8452, %v7901
    %v8454 = vadd.f32 %v8453, %v7902
    %v8455 = vadd.f32 %v8454, %v7903
    %v8456 = vadd.f32 %v8455, %v7904
    %v8457 = vadd.f32 %v8456, %v7905
    %v8458 = vadd.f32 %v8457, %v7906
    %v8459 = vadd.f32 %v8458, %v7907
    %v8460 = vadd.f32 %v8459, %v7908
    %v8461 = vadd.f32 %v8460, %v7909
    %v8462 = vadd.f32 %v8461, %v7910
    %v8463 = vadd.f32 %v8462, %v7911
    %v8464 = vadd.f32 %v8463, %v7912
    %v8465 = vadd.f32 %v8464, %v7913
    %v8466 = vadd.f32 %v8465, %v7914
    %v8467 = vadd.f32 %v8466, %v7915
    %v8468 = vadd.f32 %v8467, %v7916
    %v8469 = vadd.f32 %v8468, %v7917
    %v8470 = vadd.f32 %v8469, %v7918
    %v8471 = vadd.f32 %v8470, %v7919
    %v8472 = vadd.f32 %v8471, %v7920
    %v8473 = vadd.f32 %v8472, %v7921
    %v8474 = vadd.f32 %v8473, %v7922
    %v8475 = vadd.f32 %v8474, %v7923
    %v8476 = vadd.f32 %v8475, %v7924
    %v8477 = vadd.f32 %v8476, %v7925
    %v8478 = vadd.f32 %v8477, %v7926
    %v8479 = vadd.f32 %v8478, %v7927
    %v8480 = vadd.f32 %v8479, %v7928
    %v8481 = vadd.f32 %v8480, %v7929
    %v8482 = vadd.f32 %v8481, %v7930
    %v8483 = vadd.f32 %v8482, %v7931
    %v8484 = vadd.f32 %v8483, %v7932
    %v8485 = vadd.f32 %v8484, %v7933
    %v8486 = vadd.f32 %v8485, %v7934
    %v8487 = vadd.f32 %v8486, %v7935
    %v8488 = vadd.f32 %v8487, %v7936
    %v8489 = vadd.f32 %v8488, %v7937
    %v8490 = vadd.f32 %v8489, %v7938
    %v8491 = vadd.f32 %v8490, %v7939
    %v8492 = vadd.f32 %v8491, %v7940
    %v8493 = vadd.f32 %v8492, %v7941
    %v8494 = vadd.f32 %v8493, %v7942
    %v8495 = vadd.f32 %v8494, %v7943
    %v8496 = vadd.f32 %v8495, %v7944
    %v8497 = vadd.f32 %v8496, %v7945
    %v8498 = vadd.f32 %v8497, %v7946
    %v8499 = vadd.f32 %v8498, %v7947
    %v8500 = vadd.f32 %v8499, %v7948
    %v8501 = vadd.f32 %v8500, %v7949
    %v8502 = vadd.f32 %v8501, %v7950
    %v8503 = vadd.f32 %v8502, %v7951
    %v8504 = vadd.f32 %v8503, %v7952
    %v8505 = vadd.f32 %v8504, %v7953
    %v8506 = vadd.f32 %v8505, %v7954
    %v8507 = vadd.f32 %v8506, %v7955
    %v8508 = vadd.f32 %v8507, %v7956
    %v8509 = vadd.f32 %v8508, %v7957
    %v8510 = vadd.f32 %v8509, %v7958
    %v8511 = vadd.f32 %v8510, %v7959
    %v8512 = vadd.f32 %v8511, %v7960
    %v8513 = vadd.f32 %v8512, %v7961
    %v8514 = vadd.f32 %v8513, %v7962
    %v8515 = vadd.f32 %v8514, %v7963
    %v8516 = vadd.f32 %v8515, %v7964
    %v8517 = vadd.f32 %v8516, %v7965
    %v8518 = vadd.f32 %v8517, %v7966
    %v8519 = vadd.f32 %v8518, %v7967
    %v8520 = vadd.f32 %v8519, %v7968
    %v8521 = vadd.f32 %v8520, %v7969
    %v8522 = vadd.f32 %v8521, %v7970
    %v8523 = vadd.f32 %v8522, %v7971
    %v8524 = vadd.f32 %v8523, %v7972
    %v8525 = vadd.f32 %v8524, %v7973
    %v8526 = vadd.f32 %v8525, %v7974
    %v8527 = vadd.f32 %v8526, %v7975
    %v8528 = vadd.f32 %v8527, %v7976
    %v8529 = vadd.f32 %v8528, %v7977
    %v8530 = vadd.f32 %v8529, %v7978
    %v8531 = vadd.f32 %v8530, %v7979
    %v8532 = vadd.f32 %v8531, %v7980
    %v8533 = vadd.f32 %v8532, %v7981
    %v8534 = vadd.f32 %v8533, %v7982
    %v8535 = vadd.f32 %v8534, %v7983
    %v8536 = vadd.f32 %v8535, %v7984
    %v8537 = vadd.f32 %v8536, %v7985
    %v8538 = vadd.f32 %v8537, %v7986
    %v8539 = vadd.f32 %v8538, %v7987
    %v8540 = vadd.f32 %v8539, %v7988
    %v8541 = vadd.f32 %v8540, %v7989
    %v8542 = vadd.f32 %v8541, %v7990
    %v8543 = vadd.f32 %v8542, %v7991
    %v8544 = vadd.f32 %v8543, %v7992
    %v8545 = vadd.f32 %v8544, %v7993
    %v8546 = vadd.f32 %v8545, %v7994
    %v8547 = vadd.f32 %v8546, %v7995
    %v8548 = vadd.f32 %v8547, %v7996
    %v8549 = vadd.f32 %v8548, %v7997
    %v8550 = vadd.f32 %v8549, %v7998
    %v8551 = vadd.f32 %v8550, %v7999
    %v8552 = vadd.f32 %v8551, %v8000
    %v8553 = vadd.f32 %v8552, %v8001
    %v8554 = vadd.f32 %v8553, %v8002
    %v8555 = vadd.f32 %v8554, %v8003
    %v8556 = vadd.f32 %v8555, %v8004
    %v8557 = vadd.f32 %v8556, %v8005
    %v8558 = vadd.f32 %v8557, %v8006
    %v8559 = vadd.f32 %v8558, %v8007
    %v8560 = vadd.f32 %v8559, %v8008
    %v8561 = vadd.f32 %v8560, %v8009
    %v8562 = vadd.f32 %v8561, %v8010
    %v8563 = vadd.f32 %v8562, %v8011
    %v8564 = vadd.f32 %v8563, %v8012
    %v8565 = vadd.f32 %v8564, %v8013
    %v8566 = vadd.f32 %v8565, %v8014
    %v8567 = vadd.f32 %v8566, %v8015
    %v8568 = vadd.f32 %v8567, %v8016
    %v8569 = vadd.f32 %v8568, %v8017
    %v8570 = vadd.f32 %v8569, %v8018
    %v8571 = vadd.f32 %v8570, %v8019
    %v8572 = vadd.f32 %v8571, %v8020
    %v8573 = vadd.f32 %v8572, %v8021
    %v8574 = vadd.f32 %v8573, %v8022
    %v8575 = vadd.f32 %v8574, %v8023
    %v8576 = vadd.f32 %v8575, %v8024
    %v8577 = vadd.f32 %v8576, %v8025
    %v8578 = vadd.f32 %v8577, %v8026
    %v8579 = vadd.f32 %v8578, %v8027
    %v8580 = vadd.f32 %v8579, %v8028
    %v8581 = vadd.f32 %v8580, %v8029
    %v8582 = vadd.f32 %v8581, %v8030
    %v8583 = vadd.f32 %v8582, %v8031
    %v8584 = vadd.f32 %v8583, %v8032
    %v8585 = vadd.f32 %v8584, %v8033
    %v8586 = vadd.f32 %v8585, %v8034
    %v8587 = vadd.f32 %v8586, %v8035
    %v8588 = vadd.f32 %v8587, %v8036
    %v8589 = vadd.f32 %v8588, %v8037
    %v8590 = vadd.f32 %v8589, %v8038
    %v8591 = vadd.f32 %v8590, %v8039
    %v8592 = vadd.f32 %v8591, %v8040
    %v8593 = vadd.f32 %v8592, %v8041
    %v8594 = vadd.f32 %v8593, %v8042
    %v8595 = vadd.f32 %v8594, %v8043
    %v8596 = vadd.f32 %v8595, %v8044
    %v8597 = vadd.f32 %v8596, %v8045
    %v8598 = vadd.f32 %v8597, %v8046
    %v8599 = vadd.f32 %v8598, %v8047
    %v8600 = vadd.f32 %v8599, %v8048
    %v8601 = vadd.f32 %v8600, %v8049
    %v8602 = vadd.f32 %v8601, %v8050
    %v8603 = vadd.f32 %v8602, %v8051
    %v8604 = vadd.f32 %v8603, %v8052
    %v8605 = vadd.f32 %v8604, %v8053
    %v8606 = vadd.f32 %v8605, %v8054
    %v8607 = vadd.f32 %v8606, %v8055
    %v8608 = vadd.f32 %v8607, %v8056
    %v8609 = vadd.f32 %v8608, %v8057
    %v8610 = vadd.f32 %v8609, %v8058
    %v8611 = vadd.f32 %v8610, %v8059
    %v8612 = vadd.f32 %v8611, %v8060
    %v8613 = vadd.f32 %v8612, %v8061
    %v8614 = vadd.f32 %v8613, %v8062
    %v8615 = vadd.f32 %v8614, %v8063
    %v8616 = vadd.f32 %v8615, %v8064
    %v8617 = vadd.f32 %v8616, %v8065
    %v8618 = vadd.f32 %v8617, %v8066
    %v8619 = vadd.f32 %v8618, %v8067
    %v8620 = vadd.f32 %v8619, %v8068
    %v8621 = vadd.f32 %v8620, %v8069
    %v8622 = vadd.f32 %v8621, %v8070
    %v8623 = vadd.f32 %v8622, %v8071
    %v8624 = vadd.f32 %v8623, %v8072
    %v8625 = vadd.f32 %v8624, %v8073
    %v8626 = vadd.f32 %v8625, %v8074
    %v8627 = vadd.f32 %v8626, %v8075
    %v8628 = vadd.f32 %v8627, %v8076
    %v8629 = vadd.f32 %v8628, %v8077
    %v8630 = vadd.f32 %v8629, %v8078
    %v8631 = vadd.f32 %v8630, %v8079
    %v8632 = vadd.f32 %v8631, %v8080
    %v8633 = vadd.f32 %v8632, %v8081
    %v8634 = vadd.f32 %v8633, %v8082
    %v8635 = vadd.f32 %v8634, %v8083
    %v8636 = vadd.f32 %v8635, %v8084
    %v8637 = vadd.f32 %v8636, %v8085
    %v8638 = vadd.f32 %v8637, %v8086
    %v8639 = vadd.f32 %v8638, %v8087
    %v8640 = vadd.f32 %v8639, %v8088
    %v8641 = vadd.f32 %v8640, %v8089
    %v8642 = vadd.f32 %v8641, %v8090
    %v8643 = vadd.f32 %v8642, %v8091
    %v8644 = vadd.f32 %v8643, %v8092
    %v8645 = vadd.f32 %v8644, %v8093
    %v8646 = vadd.f32 %v8645, %v8094
    %v8647 = vadd.f32 %v8646, %v8095
    %v8648 = vadd.f32 %v8647, %v8096
    %v8649 = vadd.f32 %v8648, %v8097
    %v8650 = vadd.f32 %v8649, %v8098
    %v8651 = vadd.f32 %v8650, %v8099
    %v8652 = vadd.f32 %v8651, %v8100
    %v8653 = vadd.f32 %v8652, %v8101
    %v8654 = vadd.f32 %v8653, %v8102
    %v8655 = vadd.f32 %v8654, %v8103
    %v8656 = vadd.f32 %v8655, %v8104
    %v8657 = vadd.f32 %v8656, %v8105
    %v8658 = vadd.f32 %v8657, %v8106
    %v8659 = vadd.f32 %v8658, %v8107
    %v8660 = vadd.f32 %v8659, %v8108
    %v8661 = vadd.f32 %v8660, %v8109
    %v8662 = vadd.f32 %v8661, %v8110
    %v8663 = vadd.f32 %v8662, %v8111
    %v8664 = vadd.f32 %v8663, %v8112
    %v8665 = vadd.f32 %v8664, %v8113
    %v8666 = vadd.f32 %v8665, %v8114
    %v8667 = vadd.f32 %v8666, %v8115
    %v8668 = vadd.f32 %v8667, %v8116
    %v8669 = vadd.f32 %v8668, %v8117
    %v8670 = vadd.f32 %v8669, %v8118
    %v8671 = vadd.f32 %v8670, %v8119
    %v8672 = vadd.f32 %v8671, %v8120
    %v8673 = vadd.f32 %v8672, %v8121
    %v8674 = vadd.f32 %v8673, %v8122
    %v8675 = vadd.f32 %v8674, %v8123
    %v8676 = vadd.f32 %v8675, %v8124
    %v8677 = vadd.f32 %v8676, %v8125
    %v8678 = vadd.f32 %v8677, %v8126
    %v8679 = vadd.f32 %v8678, %v8127
    %v8680 = vadd.f32 %v8679, %v8128
    %v8681 = vadd.f32 %v8680, %v8129
    %v8682 = vadd.f32 %v8681, %v8130
    %v8683 = vadd.f32 %v8682, %v8131
    %v8684 = vadd.f32 %v8683, %v8132
    %v8685 = vadd.f32 %v8684, %v8133
    %v8686 = vadd.f32 %v8685, %v8134
    %v8687 = vadd.f32 %v8686, %v8135
    %v8688 = vadd.f32 %v8687, %v8136
    %v8689 = vadd.f32 %v8688, %v8137
    %v8690 = vadd.f32 %v8689, %v8138
    %v8691 = vadd.f32 %v8690, %v8139
    %v8692 = vadd.f32 %v8691, %v8140
    %v8693 = vadd.f32 %v8692, %v8141
    %v8694 = vadd.f32 %v8693, %v8142
    %v8695 = vadd.f32 %v8694, %v8143
    %v8696 = vadd.f32 %v8695, %v8144
    %v8697 = vadd.f32 %v8696, %v8145
    %v8698 = vadd.f32 %v8697, %v8146
    %v8699 = vadd.f32 %v8698, %v8147
    %v8700 = vadd.f32 %v8699, %v8148
    %v8701 = vadd.f32 %v8700, %v8149
    %v8702 = vadd.f32 %v8701, %v8150
    %v8703 = vadd.f32 %v8702, %v8151
    %v8704 = vadd.f32 %v8703, %v8152
    %v8705 = vadd.f32 %v8704, %v8153
    %v8706 = vadd.f32 %v8705, %v8154
    %v8707 = vadd.f32 %v8706, %v8155
    %v8708 = vadd.f32 %v8707, %v8156
    %v8709 = vadd.f32 %v8708, %v8157
    %v8710 = vadd.f32 %v8709, %v8158
    %v8711 = vadd.f32 %v8710, %v8159
    %v8712 = vadd.f32 %v8711, %v8160
    %v8713 = vadd.f32 %v8712, %v8161
    %v8714 = vadd.f32 %v8713, %v8162
    %v8715 = vadd.f32 %v8714, %v8163
    %v8716 = vadd.f32 %v8715, %v8164
    %v8717 = vadd.f32 %v8716, %v8165
    %v8718 = vadd.f32 %v8717, %v8166
    %v8719 = vadd.f32 %v8718, %v8167
    %v8720 = vadd.f32 %v8719, %v8168
    %v8721 = vadd.f32 %v8720, %v8169
    %v8722 = vadd.f32 %v8721, %v8170
    %v8723 = vadd.f32 %v8722, %v8171
    %v8724 = vadd.f32 %v8723, %v8172
    %v8725 = vadd.f32 %v8724, %v8173
    %v8726 = vadd.f32 %v8725, %v8174
    %v8727 = vadd.f32 %v8726, %v8175
    %v8728 = vadd.f32 %v8727, %v8176
    %v8729 = vadd.f32 %v8728, %v8177
    %v8730 = vadd.f32 %v8729, %v8178
    %v8731 = vadd.f32 %v8730, %v8179
    %v8732 = vadd.f32 %v8731, %v8180
    %v8733 = vadd.f32 %v8732, %v8181
    %v8734 = vadd.f32 %v8733, %v8182
    %v8735 = vadd.f32 %v8734, %v8183
    %v8736 = vadd.f32 %v8735, %v8184
    %v8737 = vadd.f32 %v8736, %v8185
    %v8738 = vadd.f32 %v8737, %v8186
    %v8739 = vadd.f32 %v8738, %v8187
    %v8740 = vadd.f32 %v8739, %v8188
    %v8741 = vadd.f32 %v8740, %v8189
    %v8742 = vadd.f32 %v8741, %v8190
    %v8743 = vadd.f32 %v8742, %v8191
    %v8744 = vadd.f32 %v8743, %v8192
    %v8745 = vadd.f32 %v8744, %v8193
    %v8746 = vadd.f32 %v8745, %v8194
    %v8747 = vadd.f32 %v8746, %v8195
    %v8748 = vadd.f32 %v8747, %v8196
    %v8749 = vadd.f32 %v8748, %v8197
    %v8750 = vadd.f32 %v8749, %v8198
    %v8751 = vadd.f32 %v8750, %v8199
    %v8752 = vadd.f32 %v8751, %v8200
    %v8753 = vadd.f32 %v8752, %v8201
    %v8754 = vadd.f32 %v8753, %v8202
    %v8755 = vadd.f32 %v8754, %v8203
    %v8756 = vadd.f32 %v8755, %v8204
    %v8757 = vadd.f32 %v8756, %v8205
    %v8758 = vadd.f32 %v8757, %v8206
    %v8759 = vadd.f32 %v8758, %v8207
    %v8760 = vadd.f32 %v8759, %v8208
    %v8761 = vadd.f32 %v8760, %v8209
    %v8762 = vadd.f32 %v8761, %v8210
    %v8763 = vadd.f32 %v8762, %v8211
    %v8764 = vadd.f32 %v8763, %v8212
    %v8765 = vadd.f32 %v8764, %v8213
    %v8766 = vadd.f32 %v8765, %v8214
    %v8767 = vadd.f32 %v8766, %v8215
    %v8768 = vadd.f32 %v8767, %v8216
    %v8769 = vadd.f32 %v8768, %v8217
    %v8770 = vadd.f32 %v8769, %v8218
    %v8771 = vadd.f32 %v8770, %v8219
    %v8772 = vadd.f32 %v8771, %v8220
    %v8773 = vadd.f32 %v8772, %v8221
    %v8774 = vadd.f32 %v8773, %v8222
    %v8775 = vadd.f32 %v8774, %v8223
    %v8776 = vadd.f32 %v8775, %v8224
    %v8777 = vadd.f32 %v8776, %v8225
    %v8778 = vadd.f32 %v8777, %v8226
    %v8779 = vadd.f32 %v8778, %v8227
    %v8780 = vadd.f32 %v8779, %v8228
    %v8781 = vadd.f32 %v8780, %v8229
    %v8782 = vadd.f32 %v8781, %v8230
    %v8783 = vadd.f32 %v8782, %v8231
    %v8784 = vadd.f32 %v8783, %v8232
    %v8785 = vadd.f32 %v8784, %v8233
    %v8786 = vadd.f32 %v8785, %v8234
    %v8787 = vadd.f32 %v8786, %v8235
    %v8788 = vadd.f32 %v8787, %v8236
    %v8789 = vadd.f32 %v8788, %v8237
    %v8790 = vadd.f32 %v8789, %v8238
    %v8791 = vadd.f32 %v8790, %v8239
    %v8792 = vadd.f32 %v8791, %v8240
    %v8793 = vadd.f32 %v8792, %v8241
    %v8794 = vadd.f32 %v8793, %v8242
    %v8795 = vadd.f32 %v8794, %v8243
    %v8796 = vadd.f32 %v8795, %v8244
    %v8797 = vadd.f32 %v8796, %v8245
    %v8798 = vadd.f32 %v8797, %v8246
    %v8799 = vadd.f32 %v8798, %v8247
    %v8800 = vadd.f32 %v8799, %v8248
    %v8801 = vadd.f32 %v8800, %v8249
    %v8802 = vadd.f32 %v8801, %v8250
    %v8803 = vadd.f32 %v8802, %v8251
    %v8804 = vadd.f32 %v8803, %v8252
    %v8805 = vadd.f32 %v8804, %v8253
    %v8806 = vadd.f32 %v8805, %v8254
    %v8807 = vadd.f32 %v8806, %v8255
    %v8808 = vadd.f32 %v8807, %v8256
    %v8809 = vadd.f32 %v8808, %v8257
    %v8810 = vadd.f32 %v8809, %v8258
    %v8811 = vadd.f32 %v8810, %v8259
    %v8812 = vadd.f32 %v8811, %v8260
    %v8813 = vadd.f32 %v8812, %v8261
    %v8814 = vadd.f32 %v8813, %v8262
    %v8815 = vadd.f32 %v8814, %v8263
    %v8816 = vadd.f32 %v8815, %v8264
    %v8817 = vadd.f32 %v8816, %v8265
    %v8818 = vadd.f32 %v8817, %v8266
    %v8819 = vadd.f32 %v8818, %v8267
    %v8820 = vadd.f32 %v8819, %v8268
    %v8821 = vadd.f32 %v8820, %v8269
    %v8822 = vadd.f32 %v8821, %v8270
    %v8823 = vadd.f32 %v8822, %v8271
    %v8824 = vadd.f32 %v8823, %v8272
    %v8825 = vadd.f32 %v8824, %v8273
    %v8826 = vadd.f32 %v8825, %v8274
    %v8827 = vadd.f32 %v8826, %v8275
    %v8828 = vadd.f32 %v8827, %v8276
    %v8829 = vadd.f32 %v8828, %v8277
    %v8830 = vadd.f32 %v8829, %v8278
    %v8831 = vadd.f32 %v8830, %v8279
    %v8832 = vadd.f32 %v8831, %v8280
    %v8833 = vadd.f32 %v8832, %v8281
    %v8834 = vadd.f32 %v8833, %v8282
    %v8835 = vadd.f32 %v8834, %v8283
    %v8836 = vadd.f32 %v8835, %v8284
    %v8837 = vadd.f32 %v8836, %v8285
    %v8838 = vadd.f32 %v8837, %v8286
    %v8839 = vadd.f32 %v8838, %v8287
    %v8840 = vadd.f32 %v8839, %v8288
    %v8841 = vadd.f32 %v8840, %v8289
    %v8842 = vadd.f32 %v8841, %v8290
    %v8843 = vadd.f32 %v8842, %v8291
    %v8844 = vadd.f32 %v8843, %v8292
    %v8845 = vadd.f32 %v8844, %v8293
    %v8846 = vadd.f32 %v8845, %v8294
    %v8847 = vadd.f32 %v8846, %v8295
    %v8848 = vadd.f32 %v8847, %v8296
    %v8849 = vadd.f32 %v8848, %v8297
    %v8850 = vadd.f32 %v8849, %v8298
    %v8851 = vadd.f32 %v8850, %v8299
    %v8852 = vadd.f32 %v8851, %v8300
    %v8853 = vadd.f32 %v8852, %v8301
    %v8854 = vadd.f32 %v8853, %v8302
    %v8855 = vadd.f32 %v8854, %v8303
    %v8856 = vadd.f32 %v8855, %v8304
    %v8857 = vadd.f32 %v8856, %v8305
    %v8858 = vadd.f32 %v8857, %v8306
    %v8859 = vadd.f32 %v8858, %v8307
    %v8860 = vadd.f32 %v8859, %v8308
    %v8861 = vadd.f32 %v8860, %v8309
    %v8862 = vadd.f32 %v8861, %v8310
    %v8863 = vadd.f32 %v8862, %v8311
    %v8864 = vadd.f32 %v8863, %v8312
    %v8865 = vadd.f32 %v8864, %v8313
    %v8866 = vadd.f32 %v8865, %v8314
    %v8867 = vadd.f32 %v8866, %v8315
    %v8868 = vadd.f32 %v8867, %v8316
    %v8869 = vadd.f32 %v8868, %v8317
    %v8870 = vadd.f32 %v8869, %v8318
    %v8871 = vadd.f32 %v8870, %v8319
    %v8872 = vadd.f32 %v8871, %v8320
    %v8873 = vadd.f32 %v8872, %v8321
    %v8874 = vadd.f32 %v8873, %v8322
    %v8875 = vadd.f32 %v8874, %v8323
    %v8876 = vadd.f32 %v8875, %v8324
    %v8877 = vadd.f32 %v8876, %v8325
    %v8878 = vadd.f32 %v8877, %v8326
    %v8879 = vadd.f32 %v8878, %v8327
    %v8880 = vadd.f32 %v8879, %v8328
    %v8881 = vadd.f32 %v8880, %v8329
    %v8882 = vadd.f32 %v8881, %v8330
    %v8883 = vadd.f32 %v8882, %v8331
    %v8884 = vadd.f32 %v8883, %v8332
    %v8885 = vadd.f32 %v8884, %v8333
    %v8886 = vadd.f32 %v8885, %v8334
    %v8887 = vadd.f32 %v8886, %v8335
    %v8888 = vadd.f32 %v8887, %v8336
    %v8889 = vadd.f32 %v8888, %v8337
    %v8890 = vadd.f32 %v8889, %v8338
    %v8891 = vadd.f32 %v8890, %v8339
    %v8892 = vadd.f32 %v8891, %v8340
    %v8893 = vadd.f32 %v8892, %v8341
    %v8894 = vadd.f32 %v8893, %v8342
    %v8895 = vadd.f32 %v8894, %v8343
    %v8896 = vadd.f32 %v8895, %v8344
    %v8897 = vadd.f32 %v8896, %v8345
    %v8898 = vadd.f32 %v8897, %v8346
    %v8899 = vadd.f32 %v8898, %v8347
    %v8900 = vadd.f32 %v8899, %v8348
    %v8901 = vadd.f32 %v8900, %v8349
    %v8902 = vadd.f32 %v8901, %v8350
    %v8903 = vadd.f32 %v8902, %v8351
    %v8904 = vadd.f32 %v8903, %v8352
    %v8905 = vadd.f32 %v8904, %v8353
    %v8906 = vadd.f32 %v8905, %v8354
    %v8907 = vadd.f32 %v8906, %v8355
    %v8908 = vadd.f32 %v8907, %v8356
    %v8909 = vadd.f32 %v8908, %v8357
    %v8910 = vadd.f32 %v8909, %v8358
    %v8911 = vadd.f32 %v8910, %v8359
    %v8912 = vadd.f32 %v8911, %v8360
    %v8913 = vadd.f32 %v8912, %v8361
    %v8914 = vadd.f32 %v8913, %v8362
    %v8915 = vadd.f32 %v8914, %v8363
    %v8916 = vadd.f32 %v8915, %v8364
    %v8917 = vadd.f32 %v8916, %v8365
    %v8918 = vadd.f32 %v8917, %v8366
    %v8919 = vadd.f32 %v8918, %v8367
    %v8920 = vadd.f32 %v8919, %v8368
    %v8921 = vadd.f32 %v8920, %v8369
    %v8922 = vadd.f32 %v8921, %v8370
    %v8923 = vadd.f32 %v8922, %v8371
    %v8924 = vadd.f32 %v8923, %v8372
    %v8925 = vadd.f32 %v8924, %v8373
    %v8926 = vadd.f32 %v8925, %v8374
    %v8927 = vadd.f32 %v8926, %v8375
    %v8928 = vadd.f32 %v8927, %v8376
    %v8929 = vadd.f32 %v8928, %v8377
    %v8930 = vadd.f32 %v8929, %v8378
    %v8931 = vadd.f32 %v8930, %v8379
    %v8932 = vadd.f32 %v8931, %v8380
    %v8933 = vadd.f32 %v8932, %v8381
    %v8934 = vadd.f32 %v8933, %v8382
    %v8935 = vadd.f32 %v8934, %v8383
    %v8936 = vadd.f32 %v8935, %v8384
    %v8937 = vadd.f32 %v8936, %v8385
    %v8938 = vadd.f32 %v8937, %v8386
    %v8939 = vadd.f32 %v8938, %v8387
    %v8940 = vadd.f32 %v8939, %v8388
    %v8941 = vadd.f32 %v8940, %v8389
    %v8942 = vadd.f32 %v8941, %v8390
    %v8943 = vadd.f32 %v8942, %v8391
    %v8944 = vadd.f32 %v8943, %v8392
    %v8945 = vsel %vm7277, %v8393, 0.0
    %v8946 = vadd.f32 %v8944, %v8945
    %v8947 = vrot.slane %v8946, 4
    %v8948 = vadd.f32 %v8946, %v8947
    %v8949 = vrot.slane %v8948, 2
    %v8950 = vadd.f32 %v8948, %v8949
    %v8951 = vrot.slane %v8950, 1
    %v8952 = vadd.f32 %v8950, %v8951
    %v8953 = vmul.f32 %v8952, %v7286
    %v8954 = vadd.f32 %v8953, 1e-05
    %v8955 = vrsqrt.pop %v8954
    %v8956 = vmul.f32 %v7288, %v8955
    %v8957 = vmul.f32 %v7289, %v8955
    %v8958 = vmul.f32 %v7290, %v8955
    %v8959 = vmul.f32 %v7291, %v8955
    %v8960 = vmul.f32 %v7292, %v8955
    %v8961 = vmul.f32 %v7293, %v8955
    %v8962 = vmul.f32 %v7294, %v8955
    %v8963 = vmul.f32 %v7295, %v8955
    %v8964 = vmul.f32 %v7296, %v8955
    %v8965 = vmul.f32 %v7297, %v8955
    %v8966 = vmul.f32 %v7298, %v8955
    %v8967 = vmul.f32 %v7299, %v8955
    %v8968 = vmul.f32 %v7300, %v8955
    %v8969 = vmul.f32 %v7301, %v8955
    %v8970 = vmul.f32 %v7302, %v8955
    %v8971 = vmul.f32 %v7303, %v8955
    %v8972 = vmul.f32 %v7304, %v8955
    %v8973 = vmul.f32 %v7305, %v8955
    %v8974 = vmul.f32 %v7306, %v8955
    %v8975 = vmul.f32 %v7307, %v8955
    %v8976 = vmul.f32 %v7308, %v8955
    %v8977 = vmul.f32 %v7309, %v8955
    %v8978 = vmul.f32 %v7310, %v8955
    %v8979 = vmul.f32 %v7311, %v8955
    %v8980 = vmul.f32 %v7312, %v8955
    %v8981 = vmul.f32 %v7313, %v8955
    %v8982 = vmul.f32 %v7314, %v8955
    %v8983 = vmul.f32 %v7315, %v8955
    %v8984 = vmul.f32 %v7316, %v8955
    %v8985 = vmul.f32 %v7317, %v8955
    %v8986 = vmul.f32 %v7318, %v8955
    %v8987 = vmul.f32 %v7319, %v8955
    %v8988 = vmul.f32 %v7320, %v8955
    %v8989 = vmul.f32 %v7321, %v8955
    %v8990 = vmul.f32 %v7322, %v8955
    %v8991 = vmul.f32 %v7323, %v8955
    %v8992 = vmul.f32 %v7324, %v8955
    %v8993 = vmul.f32 %v7325, %v8955
    %v8994 = vmul.f32 %v7326, %v8955
    %v8995 = vmul.f32 %v7327, %v8955
    %v8996 = vmul.f32 %v7328, %v8955
    %v8997 = vmul.f32 %v7329, %v8955
    %v8998 = vmul.f32 %v7330, %v8955
    %v8999 = vmul.f32 %v7331, %v8955
    %v9000 = vmul.f32 %v7332, %v8955
    %v9001 = vmul.f32 %v7333, %v8955
    %v9002 = vmul.f32 %v7334, %v8955
    %v9003 = vmul.f32 %v7335, %v8955
    %v9004 = vmul.f32 %v7336, %v8955
    %v9005 = vmul.f32 %v7337, %v8955
    %v9006 = vmul.f32 %v7338, %v8955
    %v9007 = vmul.f32 %v7339, %v8955
    %v9008 = vmul.f32 %v7340, %v8955
    %v9009 = vmul.f32 %v7341, %v8955
    %v9010 = vmul.f32 %v7342, %v8955
    %v9011 = vmul.f32 %v7343, %v8955
    %v9012 = vmul.f32 %v7344, %v8955
    %v9013 = vmul.f32 %v7345, %v8955
    %v9014 = vmul.f32 %v7346, %v8955
    %v9015 = vmul.f32 %v7347, %v8955
    %v9016 = vmul.f32 %v7348, %v8955
    %v9017 = vmul.f32 %v7349, %v8955
    %v9018 = vmul.f32 %v7350, %v8955
    %v9019 = vmul.f32 %v7351, %v8955
    %v9020 = vmul.f32 %v7352, %v8955
    %v9021 = vmul.f32 %v7353, %v8955
    %v9022 = vmul.f32 %v7354, %v8955
    %v9023 = vmul.f32 %v7355, %v8955
    %v9024 = vmul.f32 %v7356, %v8955
    %v9025 = vmul.f32 %v7357, %v8955
    %v9026 = vmul.f32 %v7358, %v8955
    %v9027 = vmul.f32 %v7359, %v8955
    %v9028 = vmul.f32 %v7360, %v8955
    %v9029 = vmul.f32 %v7361, %v8955
    %v9030 = vmul.f32 %v7362, %v8955
    %v9031 = vmul.f32 %v7363, %v8955
    %v9032 = vmul.f32 %v7364, %v8955
    %v9033 = vmul.f32 %v7365, %v8955
    %v9034 = vmul.f32 %v7366, %v8955
    %v9035 = vmul.f32 %v7367, %v8955
    %v9036 = vmul.f32 %v7368, %v8955
    %v9037 = vmul.f32 %v7369, %v8955
    %v9038 = vmul.f32 %v7370, %v8955
    %v9039 = vmul.f32 %v7371, %v8955
    %v9040 = vmul.f32 %v7372, %v8955
    %v9041 = vmul.f32 %v7373, %v8955
    %v9042 = vmul.f32 %v7374, %v8955
    %v9043 = vmul.f32 %v7375, %v8955
    %v9044 = vmul.f32 %v7376, %v8955
    %v9045 = vmul.f32 %v7377, %v8955
    %v9046 = vmul.f32 %v7378, %v8955
    %v9047 = vmul.f32 %v7379, %v8955
    %v9048 = vmul.f32 %v7380, %v8955
    %v9049 = vmul.f32 %v7381, %v8955
    %v9050 = vmul.f32 %v7382, %v8955
    %v9051 = vmul.f32 %v7383, %v8955
    %v9052 = vmul.f32 %v7384, %v8955
    %v9053 = vmul.f32 %v7385, %v8955
    %v9054 = vmul.f32 %v7386, %v8955
    %v9055 = vmul.f32 %v7387, %v8955
    %v9056 = vmul.f32 %v7388, %v8955
    %v9057 = vmul.f32 %v7389, %v8955
    %v9058 = vmul.f32 %v7390, %v8955
    %v9059 = vmul.f32 %v7391, %v8955
    %v9060 = vmul.f32 %v7392, %v8955
    %v9061 = vmul.f32 %v7393, %v8955
    %v9062 = vmul.f32 %v7394, %v8955
    %v9063 = vmul.f32 %v7395, %v8955
    %v9064 = vmul.f32 %v7396, %v8955
    %v9065 = vmul.f32 %v7397, %v8955
    %v9066 = vmul.f32 %v7398, %v8955
    %v9067 = vmul.f32 %v7399, %v8955
    %v9068 = vmul.f32 %v7400, %v8955
    %v9069 = vmul.f32 %v7401, %v8955
    %v9070 = vmul.f32 %v7402, %v8955
    %v9071 = vmul.f32 %v7403, %v8955
    %v9072 = vmul.f32 %v7404, %v8955
    %v9073 = vmul.f32 %v7405, %v8955
    %v9074 = vmul.f32 %v7406, %v8955
    %v9075 = vmul.f32 %v7407, %v8955
    %v9076 = vmul.f32 %v7408, %v8955
    %v9077 = vmul.f32 %v7409, %v8955
    %v9078 = vmul.f32 %v7410, %v8955
    %v9079 = vmul.f32 %v7411, %v8955
    %v9080 = vmul.f32 %v7412, %v8955
    %v9081 = vmul.f32 %v7413, %v8955
    %v9082 = vmul.f32 %v7414, %v8955
    %v9083 = vmul.f32 %v7415, %v8955
    %v9084 = vmul.f32 %v7416, %v8955
    %v9085 = vmul.f32 %v7417, %v8955
    %v9086 = vmul.f32 %v7418, %v8955
    %v9087 = vmul.f32 %v7419, %v8955
    %v9088 = vmul.f32 %v7420, %v8955
    %v9089 = vmul.f32 %v7421, %v8955
    %v9090 = vmul.f32 %v7422, %v8955
    %v9091 = vmul.f32 %v7423, %v8955
    %v9092 = vmul.f32 %v7424, %v8955
    %v9093 = vmul.f32 %v7425, %v8955
    %v9094 = vmul.f32 %v7426, %v8955
    %v9095 = vmul.f32 %v7427, %v8955
    %v9096 = vmul.f32 %v7428, %v8955
    %v9097 = vmul.f32 %v7429, %v8955
    %v9098 = vmul.f32 %v7430, %v8955
    %v9099 = vmul.f32 %v7431, %v8955
    %v9100 = vmul.f32 %v7432, %v8955
    %v9101 = vmul.f32 %v7433, %v8955
    %v9102 = vmul.f32 %v7434, %v8955
    %v9103 = vmul.f32 %v7435, %v8955
    %v9104 = vmul.f32 %v7436, %v8955
    %v9105 = vmul.f32 %v7437, %v8955
    %v9106 = vmul.f32 %v7438, %v8955
    %v9107 = vmul.f32 %v7439, %v8955
    %v9108 = vmul.f32 %v7440, %v8955
    %v9109 = vmul.f32 %v7441, %v8955
    %v9110 = vmul.f32 %v7442, %v8955
    %v9111 = vmul.f32 %v7443, %v8955
    %v9112 = vmul.f32 %v7444, %v8955
    %v9113 = vmul.f32 %v7445, %v8955
    %v9114 = vmul.f32 %v7446, %v8955
    %v9115 = vmul.f32 %v7447, %v8955
    %v9116 = vmul.f32 %v7448, %v8955
    %v9117 = vmul.f32 %v7449, %v8955
    %v9118 = vmul.f32 %v7450, %v8955
    %v9119 = vmul.f32 %v7451, %v8955
    %v9120 = vmul.f32 %v7452, %v8955
    %v9121 = vmul.f32 %v7453, %v8955
    %v9122 = vmul.f32 %v7454, %v8955
    %v9123 = vmul.f32 %v7455, %v8955
    %v9124 = vmul.f32 %v7456, %v8955
    %v9125 = vmul.f32 %v7457, %v8955
    %v9126 = vmul.f32 %v7458, %v8955
    %v9127 = vmul.f32 %v7459, %v8955
    %v9128 = vmul.f32 %v7460, %v8955
    %v9129 = vmul.f32 %v7461, %v8955
    %v9130 = vmul.f32 %v7462, %v8955
    %v9131 = vmul.f32 %v7463, %v8955
    %v9132 = vmul.f32 %v7464, %v8955
    %v9133 = vmul.f32 %v7465, %v8955
    %v9134 = vmul.f32 %v7466, %v8955
    %v9135 = vmul.f32 %v7467, %v8955
    %v9136 = vmul.f32 %v7468, %v8955
    %v9137 = vmul.f32 %v7469, %v8955
    %v9138 = vmul.f32 %v7470, %v8955
    %v9139 = vmul.f32 %v7471, %v8955
    %v9140 = vmul.f32 %v7472, %v8955
    %v9141 = vmul.f32 %v7473, %v8955
    %v9142 = vmul.f32 %v7474, %v8955
    %v9143 = vmul.f32 %v7475, %v8955
    %v9144 = vmul.f32 %v7476, %v8955
    %v9145 = vmul.f32 %v7477, %v8955
    %v9146 = vmul.f32 %v7478, %v8955
    %v9147 = vmul.f32 %v7479, %v8955
    %v9148 = vmul.f32 %v7480, %v8955
    %v9149 = vmul.f32 %v7481, %v8955
    %v9150 = vmul.f32 %v7482, %v8955
    %v9151 = vmul.f32 %v7483, %v8955
    %v9152 = vmul.f32 %v7484, %v8955
    %v9153 = vmul.f32 %v7485, %v8955
    %v9154 = vmul.f32 %v7486, %v8955
    %v9155 = vmul.f32 %v7487, %v8955
    %v9156 = vmul.f32 %v7488, %v8955
    %v9157 = vmul.f32 %v7489, %v8955
    %v9158 = vmul.f32 %v7490, %v8955
    %v9159 = vmul.f32 %v7491, %v8955
    %v9160 = vmul.f32 %v7492, %v8955
    %v9161 = vmul.f32 %v7493, %v8955
    %v9162 = vmul.f32 %v7494, %v8955
    %v9163 = vmul.f32 %v7495, %v8955
    %v9164 = vmul.f32 %v7496, %v8955
    %v9165 = vmul.f32 %v7497, %v8955
    %v9166 = vmul.f32 %v7498, %v8955
    %v9167 = vmul.f32 %v7499, %v8955
    %v9168 = vmul.f32 %v7500, %v8955
    %v9169 = vmul.f32 %v7501, %v8955
    %v9170 = vmul.f32 %v7502, %v8955
    %v9171 = vmul.f32 %v7503, %v8955
    %v9172 = vmul.f32 %v7504, %v8955
    %v9173 = vmul.f32 %v7505, %v8955
    %v9174 = vmul.f32 %v7506, %v8955
    %v9175 = vmul.f32 %v7507, %v8955
    %v9176 = vmul.f32 %v7508, %v8955
    %v9177 = vmul.f32 %v7509, %v8955
    %v9178 = vmul.f32 %v7510, %v8955
    %v9179 = vmul.f32 %v7511, %v8955
    %v9180 = vmul.f32 %v7512, %v8955
    %v9181 = vmul.f32 %v7513, %v8955
    %v9182 = vmul.f32 %v7514, %v8955
    %v9183 = vmul.f32 %v7515, %v8955
    %v9184 = vmul.f32 %v7516, %v8955
    %v9185 = vmul.f32 %v7517, %v8955
    %v9186 = vmul.f32 %v7518, %v8955
    %v9187 = vmul.f32 %v7519, %v8955
    %v9188 = vmul.f32 %v7520, %v8955
    %v9189 = vmul.f32 %v7521, %v8955
    %v9190 = vmul.f32 %v7522, %v8955
    %v9191 = vmul.f32 %v7523, %v8955
    %v9192 = vmul.f32 %v7524, %v8955
    %v9193 = vmul.f32 %v7525, %v8955
    %v9194 = vmul.f32 %v7526, %v8955
    %v9195 = vmul.f32 %v7527, %v8955
    %v9196 = vmul.f32 %v7528, %v8955
    %v9197 = vmul.f32 %v7529, %v8955
    %v9198 = vmul.f32 %v7530, %v8955
    %v9199 = vmul.f32 %v7531, %v8955
    %v9200 = vmul.f32 %v7532, %v8955
    %v9201 = vmul.f32 %v7533, %v8955
    %v9202 = vmul.f32 %v7534, %v8955
    %v9203 = vmul.f32 %v7535, %v8955
    %v9204 = vmul.f32 %v7536, %v8955
    %v9205 = vmul.f32 %v7537, %v8955
    %v9206 = vmul.f32 %v7538, %v8955
    %v9207 = vmul.f32 %v7539, %v8955
    %v9208 = vmul.f32 %v7540, %v8955
    %v9209 = vmul.f32 %v7541, %v8955
    %v9210 = vmul.f32 %v7542, %v8955
    %v9211 = vmul.f32 %v7543, %v8955
    %v9212 = vmul.f32 %v7544, %v8955
    %v9213 = vmul.f32 %v7545, %v8955
    %v9214 = vmul.f32 %v7546, %v8955
    %v9215 = vmul.f32 %v7547, %v8955
    %v9216 = vmul.f32 %v7548, %v8955
    %v9217 = vmul.f32 %v7549, %v8955
    %v9218 = vmul.f32 %v7550, %v8955
    %v9219 = vmul.f32 %v7551, %v8955
    %v9220 = vmul.f32 %v7552, %v8955
    %v9221 = vmul.f32 %v7553, %v8955
    %v9222 = vmul.f32 %v7554, %v8955
    %v9223 = vmul.f32 %v7555, %v8955
    %v9224 = vmul.f32 %v7556, %v8955
    %v9225 = vmul.f32 %v7557, %v8955
    %v9226 = vmul.f32 %v7558, %v8955
    %v9227 = vmul.f32 %v7559, %v8955
    %v9228 = vmul.f32 %v7560, %v8955
    %v9229 = vmul.f32 %v7561, %v8955
    %v9230 = vmul.f32 %v7562, %v8955
    %v9231 = vmul.f32 %v7563, %v8955
    %v9232 = vmul.f32 %v7564, %v8955
    %v9233 = vmul.f32 %v7565, %v8955
    %v9234 = vmul.f32 %v7566, %v8955
    %v9235 = vmul.f32 %v7567, %v8955
    %v9236 = vmul.f32 %v7568, %v8955
    %v9237 = vmul.f32 %v7569, %v8955
    %v9238 = vmul.f32 %v7570, %v8955
    %v9239 = vmul.f32 %v7571, %v8955
    %v9240 = vmul.f32 %v7572, %v8955
    %v9241 = vmul.f32 %v7573, %v8955
    %v9242 = vmul.f32 %v7574, %v8955
    %v9243 = vmul.f32 %v7575, %v8955
    %v9244 = vmul.f32 %v7576, %v8955
    %v9245 = vmul.f32 %v7577, %v8955
    %v9246 = vmul.f32 %v7578, %v8955
    %v9247 = vmul.f32 %v7579, %v8955
    %v9248 = vmul.f32 %v7580, %v8955
    %v9249 = vmul.f32 %v7581, %v8955
    %v9250 = vmul.f32 %v7582, %v8955
    %v9251 = vmul.f32 %v7583, %v8955
    %v9252 = vmul.f32 %v7584, %v8955
    %v9253 = vmul.f32 %v7585, %v8955
    %v9254 = vmul.f32 %v7586, %v8955
    %v9255 = vmul.f32 %v7587, %v8955
    %v9256 = vmul.f32 %v7588, %v8955
    %v9257 = vmul.f32 %v7589, %v8955
    %v9258 = vmul.f32 %v7590, %v8955
    %v9259 = vmul.f32 %v7591, %v8955
    %v9260 = vmul.f32 %v7592, %v8955
    %v9261 = vmul.f32 %v7593, %v8955
    %v9262 = vmul.f32 %v7594, %v8955
    %v9263 = vmul.f32 %v7595, %v8955
    %v9264 = vmul.f32 %v7596, %v8955
    %v9265 = vmul.f32 %v7597, %v8955
    %v9266 = vmul.f32 %v7598, %v8955
    %v9267 = vmul.f32 %v7599, %v8955
    %v9268 = vmul.f32 %v7600, %v8955
    %v9269 = vmul.f32 %v7601, %v8955
    %v9270 = vmul.f32 %v7602, %v8955
    %v9271 = vmul.f32 %v7603, %v8955
    %v9272 = vmul.f32 %v7604, %v8955
    %v9273 = vmul.f32 %v7605, %v8955
    %v9274 = vmul.f32 %v7606, %v8955
    %v9275 = vmul.f32 %v7607, %v8955
    %v9276 = vmul.f32 %v7608, %v8955
    %v9277 = vmul.f32 %v7609, %v8955
    %v9278 = vmul.f32 %v7610, %v8955
    %v9279 = vmul.f32 %v7611, %v8955
    %v9280 = vmul.f32 %v7612, %v8955
    %v9281 = vmul.f32 %v7613, %v8955
    %v9282 = vmul.f32 %v7614, %v8955
    %v9283 = vmul.f32 %v7615, %v8955
    %v9284 = vmul.f32 %v7616, %v8955
    %v9285 = vmul.f32 %v7617, %v8955
    %v9286 = vmul.f32 %v7618, %v8955
    %v9287 = vmul.f32 %v7619, %v8955
    %v9288 = vmul.f32 %v7620, %v8955
    %v9289 = vmul.f32 %v7621, %v8955
    %v9290 = vmul.f32 %v7622, %v8955
    %v9291 = vmul.f32 %v7623, %v8955
    %v9292 = vmul.f32 %v7624, %v8955
    %v9293 = vmul.f32 %v7625, %v8955
    %v9294 = vmul.f32 %v7626, %v8955
    %v9295 = vmul.f32 %v7627, %v8955
    %v9296 = vmul.f32 %v7628, %v8955
    %v9297 = vmul.f32 %v7629, %v8955
    %v9298 = vmul.f32 %v7630, %v8955
    %v9299 = vmul.f32 %v7631, %v8955
    %v9300 = vmul.f32 %v7632, %v8955
    %v9301 = vmul.f32 %v7633, %v8955
    %v9302 = vmul.f32 %v7634, %v8955
    %v9303 = vmul.f32 %v7635, %v8955
    %v9304 = vmul.f32 %v7636, %v8955
    %v9305 = vmul.f32 %v7637, %v8955
    %v9306 = vmul.f32 %v7638, %v8955
    %v9307 = vmul.f32 %v7639, %v8955
    %v9308 = vmul.f32 %v7640, %v8955
    %v9309 = vmul.f32 %v7641, %v8955
    %v9310 = vmul.f32 %v7642, %v8955
    %v9311 = vmul.f32 %v7643, %v8955
    %v9312 = vmul.f32 %v7644, %v8955
    %v9313 = vmul.f32 %v7645, %v8955
    %v9314 = vmul.f32 %v7646, %v8955
    %v9315 = vmul.f32 %v7647, %v8955
    %v9316 = vmul.f32 %v7648, %v8955
    %v9317 = vmul.f32 %v7649, %v8955
    %v9318 = vmul.f32 %v7650, %v8955
    %v9319 = vmul.f32 %v7651, %v8955
    %v9320 = vmul.f32 %v7652, %v8955
    %v9321 = vmul.f32 %v7653, %v8955
    %v9322 = vmul.f32 %v7654, %v8955
    %v9323 = vmul.f32 %v7655, %v8955
    %v9324 = vmul.f32 %v7656, %v8955
    %v9325 = vmul.f32 %v7657, %v8955
    %v9326 = vmul.f32 %v7658, %v8955
    %v9327 = vmul.f32 %v7659, %v8955
    %v9328 = vmul.f32 %v7660, %v8955
    %v9329 = vmul.f32 %v7661, %v8955
    %v9330 = vmul.f32 %v7662, %v8955
    %v9331 = vmul.f32 %v7663, %v8955
    %v9332 = vmul.f32 %v7664, %v8955
    %v9333 = vmul.f32 %v7665, %v8955
    %v9334 = vmul.f32 %v7666, %v8955
    %v9335 = vmul.f32 %v7667, %v8955
    %v9336 = vmul.f32 %v7668, %v8955
    %v9337 = vmul.f32 %v7669, %v8955
    %v9338 = vmul.f32 %v7670, %v8955
    %v9339 = vmul.f32 %v7671, %v8955
    %v9340 = vmul.f32 %v7672, %v8955
    %v9341 = vmul.f32 %v7673, %v8955
    %v9342 = vmul.f32 %v7674, %v8955
    %v9343 = vmul.f32 %v7675, %v8955
    %v9344 = vmul.f32 %v7676, %v8955
    %v9345 = vmul.f32 %v7677, %v8955
    %v9346 = vmul.f32 %v7678, %v8955
    %v9347 = vmul.f32 %v7679, %v8955
    %v9348 = vmul.f32 %v7680, %v8955
    %v9349 = vmul.f32 %v7681, %v8955
    %v9350 = vmul.f32 %v7682, %v8955
    %v9351 = vmul.f32 %v7683, %v8955
    %v9352 = vmul.f32 %v7684, %v8955
    %v9353 = vmul.f32 %v7685, %v8955
    %v9354 = vmul.f32 %v7686, %v8955
    %v9355 = vmul.f32 %v7687, %v8955
    %v9356 = vmul.f32 %v7688, %v8955
    %v9357 = vmul.f32 %v7689, %v8955
    %v9358 = vmul.f32 %v7690, %v8955
    %v9359 = vmul.f32 %v7691, %v8955
    %v9360 = vmul.f32 %v7692, %v8955
    %v9361 = vmul.f32 %v7693, %v8955
    %v9362 = vmul.f32 %v7694, %v8955
    %v9363 = vmul.f32 %v7695, %v8955
    %v9364 = vmul.f32 %v7696, %v8955
    %v9365 = vmul.f32 %v7697, %v8955
    %v9366 = vmul.f32 %v7698, %v8955
    %v9367 = vmul.f32 %v7699, %v8955
    %v9368 = vmul.f32 %v7700, %v8955
    %v9369 = vmul.f32 %v7701, %v8955
    %v9370 = vmul.f32 %v7702, %v8955
    %v9371 = vmul.f32 %v7703, %v8955
    %v9372 = vmul.f32 %v7704, %v8955
    %v9373 = vmul.f32 %v7705, %v8955
    %v9374 = vmul.f32 %v7706, %v8955
    %v9375 = vmul.f32 %v7707, %v8955
    %v9376 = vmul.f32 %v7708, %v8955
    %v9377 = vmul.f32 %v7709, %v8955
    %v9378 = vmul.f32 %v7710, %v8955
    %v9379 = vmul.f32 %v7711, %v8955
    %v9380 = vmul.f32 %v7712, %v8955
    %v9381 = vmul.f32 %v7713, %v8955
    %v9382 = vmul.f32 %v7714, %v8955
    %v9383 = vmul.f32 %v7715, %v8955
    %v9384 = vmul.f32 %v7716, %v8955
    %v9385 = vmul.f32 %v7717, %v8955
    %v9386 = vmul.f32 %v7718, %v8955
    %v9387 = vmul.f32 %v7719, %v8955
    %v9388 = vmul.f32 %v7720, %v8955
    %v9389 = vmul.f32 %v7721, %v8955
    %v9390 = vmul.f32 %v7722, %v8955
    %v9391 = vmul.f32 %v7723, %v8955
    %v9392 = vmul.f32 %v7724, %v8955
    %v9393 = vmul.f32 %v7725, %v8955
    %v9394 = vmul.f32 %v7726, %v8955
    %v9395 = vmul.f32 %v7727, %v8955
    %v9396 = vmul.f32 %v7728, %v8955
    %v9397 = vmul.f32 %v7729, %v8955
    %v9398 = vmul.f32 %v7730, %v8955
    %v9399 = vmul.f32 %v7731, %v8955
    %v9400 = vmul.f32 %v7732, %v8955
    %v9401 = vmul.f32 %v7733, %v8955
    %v9402 = vmul.f32 %v7734, %v8955
    %v9403 = vmul.f32 %v7735, %v8955
    %v9404 = vmul.f32 %v7736, %v8955
    %v9405 = vmul.f32 %v7737, %v8955
    %v9406 = vmul.f32 %v7738, %v8955
    %v9407 = vmul.f32 %v7739, %v8955
    %v9408 = vmul.f32 %v7740, %v8955
    %v9409 = vmul.f32 %v7741, %v8955
    %v9410 = vmul.f32 %v7742, %v8955
    %v9411 = vmul.f32 %v7743, %v8955
    %v9412 = vmul.f32 %v7744, %v8955
    %v9413 = vmul.f32 %v7745, %v8955
    %v9414 = vmul.f32 %v7746, %v8955
    %v9415 = vmul.f32 %v7747, %v8955
    %v9416 = vmul.f32 %v7748, %v8955
    %v9417 = vmul.f32 %v7749, %v8955
    %v9418 = vmul.f32 %v7750, %v8955
    %v9419 = vmul.f32 %v7751, %v8955
    %v9420 = vmul.f32 %v7752, %v8955
    %v9421 = vmul.f32 %v7753, %v8955
    %v9422 = vmul.f32 %v7754, %v8955
    %v9423 = vmul.f32 %v7755, %v8955
    %v9424 = vmul.f32 %v7756, %v8955
    %v9425 = vmul.f32 %v7757, %v8955
    %v9426 = vmul.f32 %v7758, %v8955
    %v9427 = vmul.f32 %v7759, %v8955
    %v9428 = vmul.f32 %v7760, %v8955
    %v9429 = vmul.f32 %v7761, %v8955
    %v9430 = vmul.f32 %v7762, %v8955
    %v9431 = vmul.f32 %v7763, %v8955
    %v9432 = vmul.f32 %v7764, %v8955
    %v9433 = vmul.f32 %v7765, %v8955
    %v9434 = vmul.f32 %v7766, %v8955
    %v9435 = vmul.f32 %v7767, %v8955
    %v9436 = vmul.f32 %v7768, %v8955
    %v9437 = vmul.f32 %v7769, %v8955
    %v9438 = vmul.f32 %v7770, %v8955
    %v9439 = vmul.f32 %v7771, %v8955
    %v9440 = vmul.f32 %v7772, %v8955
    %v9441 = vmul.f32 %v7773, %v8955
    %v9442 = vmul.f32 %v7774, %v8955
    %v9443 = vmul.f32 %v7775, %v8955
    %v9444 = vmul.f32 %v7776, %v8955
    %v9445 = vmul.f32 %v7777, %v8955
    %v9446 = vmul.f32 %v7778, %v8955
    %v9447 = vmul.f32 %v7779, %v8955
    %v9448 = vmul.f32 %v7780, %v8955
    %v9449 = vmul.f32 %v7781, %v8955
    %v9450 = vmul.f32 %v7782, %v8955
    %v9451 = vmul.f32 %v7783, %v8955
    %v9452 = vmul.f32 %v7784, %v8955
    %v9453 = vmul.f32 %v7785, %v8955
    %v9454 = vmul.f32 %v7786, %v8955
    %v9455 = vmul.f32 %v7787, %v8955
    %v9456 = vmul.f32 %v7788, %v8955
    %v9457 = vmul.f32 %v7789, %v8955
    %v9458 = vmul.f32 %v7790, %v8955
    %v9459 = vmul.f32 %v7791, %v8955
    %v9460 = vmul.f32 %v7792, %v8955
    %v9461 = vmul.f32 %v7793, %v8955
    %v9462 = vmul.f32 %v7794, %v8955
    %v9463 = vmul.f32 %v7795, %v8955
    %v9464 = vmul.f32 %v7796, %v8955
    %v9465 = vmul.f32 %v7797, %v8955
    %v9466 = vmul.f32 %v7798, %v8955
    %v9467 = vmul.f32 %v7799, %v8955
    %v9468 = vmul.f32 %v7800, %v8955
    %v9469 = vmul.f32 %v7801, %v8955
    %v9470 = vmul.f32 %v7802, %v8955
    %v9471 = vmul.f32 %v7803, %v8955
    %v9472 = vmul.f32 %v7804, %v8955
    %v9473 = vmul.f32 %v7805, %v8955
    %v9474 = vmul.f32 %v7806, %v8955
    %v9475 = vmul.f32 %v7807, %v8955
    %v9476 = vmul.f32 %v7808, %v8955
    %v9477 = vmul.f32 %v7809, %v8955
    %v9478 = vmul.f32 %v7810, %v8955
    %v9479 = vmul.f32 %v7811, %v8955
    %v9480 = vmul.f32 %v7812, %v8955
    %v9481 = vmul.f32 %v7813, %v8955
    %v9482 = vmul.f32 %v7814, %v8955
    %v9483 = vmul.f32 %v7815, %v8955
    %v9484 = vmul.f32 %v7816, %v8955
    %v9485 = vmul.f32 %v7817, %v8955
    %v9486 = vmul.f32 %v7818, %v8955
    %v9487 = vmul.f32 %v7819, %v8955
    %v9488 = vmul.f32 %v7820, %v8955
    %v9489 = vmul.f32 %v7821, %v8955
    %v9490 = vmul.f32 %v7822, %v8955
    %v9491 = vmul.f32 %v7823, %v8955
    %v9492 = vmul.f32 %v7824, %v8955
    %v9493 = vmul.f32 %v7825, %v8955
    %v9494 = vmul.f32 %v7826, %v8955
    %v9495 = vmul.f32 %v7827, %v8955
    %v9496 = vmul.f32 %v7828, %v8955
    %v9497 = vmul.f32 %v7829, %v8955
    %v9498 = vmul.f32 %v7830, %v8955
    %v9499 = vmul.f32 %v7831, %v8955
    %v9500 = vmul.f32 %v7832, %v8955
    %v9501 = vmul.f32 %v7833, %v8955
    %v9502 = vmul.f32 %v7834, %v8955
    %v9503 = vmul.f32 %v7835, %v8955
    %v9504 = vmul.f32 %v7836, %v8955
    %v9505 = vmul.f32 %v7837, %v8955
    %v9506 = vmul.f32 %v7838, %v8955
    %v9507 = vmul.f32 %v7839, %v8955
    %v9508 = vmul.f32 %v7840, %v8955
    %v9509 = vld [vmem:[%s3] sm:$0x1]
    %v9511 = vlaneseq
    %v9512 = vshrl.u32 %v9511, 7
    %v9513 = vsub.s32 0, %v9512
    %v9514 = vrot.slane %v9509, %v9513
    %v9516 = vmul.f32 %v8956, %v9514
    %v9517 = vmul.f32 %v8957, %v9514
    %v9518 = vmul.f32 %v8958, %v9514
    %v9519 = vmul.f32 %v8959, %v9514
    %v9520 = vmul.f32 %v8960, %v9514
    %v9521 = vmul.f32 %v8961, %v9514
    %v9522 = vmul.f32 %v8962, %v9514
    %v9523 = vmul.f32 %v8963, %v9514
    %v9524 = vmul.f32 %v8964, %v9514
    %v9525 = vmul.f32 %v8965, %v9514
    %v9526 = vmul.f32 %v8966, %v9514
    %v9527 = vmul.f32 %v8967, %v9514
    %v9528 = vmul.f32 %v8968, %v9514
    %v9529 = vmul.f32 %v8969, %v9514
    %v9530 = vmul.f32 %v8970, %v9514
    %v9531 = vmul.f32 %v8971, %v9514
    %v9532 = vmul.f32 %v8972, %v9514
    %v9533 = vmul.f32 %v8973, %v9514
    %v9534 = vmul.f32 %v8974, %v9514
    %v9535 = vmul.f32 %v8975, %v9514
    %v9536 = vmul.f32 %v8976, %v9514
    %v9537 = vmul.f32 %v8977, %v9514
    %v9538 = vmul.f32 %v8978, %v9514
    %v9539 = vmul.f32 %v8979, %v9514
    %v9540 = vmul.f32 %v8980, %v9514
    %v9541 = vmul.f32 %v8981, %v9514
    %v9542 = vmul.f32 %v8982, %v9514
    %v9543 = vmul.f32 %v8983, %v9514
    %v9544 = vmul.f32 %v8984, %v9514
    %v9545 = vmul.f32 %v8985, %v9514
    %v9546 = vmul.f32 %v8986, %v9514
    %v9547 = vmul.f32 %v8987, %v9514
    %v9548 = vmul.f32 %v8988, %v9514
    %v9549 = vmul.f32 %v8989, %v9514
    %v9550 = vmul.f32 %v8990, %v9514
    %v9551 = vmul.f32 %v8991, %v9514
    %v9552 = vmul.f32 %v8992, %v9514
    %v9553 = vmul.f32 %v8993, %v9514
    %v9554 = vmul.f32 %v8994, %v9514
    %v9555 = vmul.f32 %v8995, %v9514
    %v9556 = vmul.f32 %v8996, %v9514
    %v9557 = vmul.f32 %v8997, %v9514
    %v9558 = vmul.f32 %v8998, %v9514
    %v9559 = vmul.f32 %v8999, %v9514
    %v9560 = vmul.f32 %v9000, %v9514
    %v9561 = vmul.f32 %v9001, %v9514
    %v9562 = vmul.f32 %v9002, %v9514
    %v9563 = vmul.f32 %v9003, %v9514
    %v9564 = vmul.f32 %v9004, %v9514
    %v9565 = vmul.f32 %v9005, %v9514
    %v9566 = vmul.f32 %v9006, %v9514
    %v9567 = vmul.f32 %v9007, %v9514
    %v9568 = vmul.f32 %v9008, %v9514
    %v9569 = vmul.f32 %v9009, %v9514
    %v9570 = vmul.f32 %v9010, %v9514
    %v9571 = vmul.f32 %v9011, %v9514
    %v9572 = vmul.f32 %v9012, %v9514
    %v9573 = vmul.f32 %v9013, %v9514
    %v9574 = vmul.f32 %v9014, %v9514
    %v9575 = vmul.f32 %v9015, %v9514
    %v9576 = vmul.f32 %v9016, %v9514
    %v9577 = vmul.f32 %v9017, %v9514
    %v9578 = vmul.f32 %v9018, %v9514
    %v9579 = vmul.f32 %v9019, %v9514
    %v9580 = vmul.f32 %v9020, %v9514
    %v9581 = vmul.f32 %v9021, %v9514
    %v9582 = vmul.f32 %v9022, %v9514
    %v9583 = vmul.f32 %v9023, %v9514
    %v9584 = vmul.f32 %v9024, %v9514
    %v9585 = vmul.f32 %v9025, %v9514
    %v9586 = vmul.f32 %v9026, %v9514
    %v9587 = vmul.f32 %v9027, %v9514
    %v9588 = vmul.f32 %v9028, %v9514
    %v9589 = vmul.f32 %v9029, %v9514
    %v9590 = vmul.f32 %v9030, %v9514
    %v9591 = vmul.f32 %v9031, %v9514
    %v9592 = vmul.f32 %v9032, %v9514
    %v9593 = vmul.f32 %v9033, %v9514
    %v9594 = vmul.f32 %v9034, %v9514
    %v9595 = vmul.f32 %v9035, %v9514
    %v9596 = vmul.f32 %v9036, %v9514
    %v9597 = vmul.f32 %v9037, %v9514
    %v9598 = vmul.f32 %v9038, %v9514
    %v9599 = vmul.f32 %v9039, %v9514
    %v9600 = vmul.f32 %v9040, %v9514
    %v9601 = vmul.f32 %v9041, %v9514
    %v9602 = vmul.f32 %v9042, %v9514
    %v9603 = vmul.f32 %v9043, %v9514
    %v9604 = vmul.f32 %v9044, %v9514
    %v9605 = vmul.f32 %v9045, %v9514
    %v9606 = vmul.f32 %v9046, %v9514
    %v9607 = vmul.f32 %v9047, %v9514
    %v9608 = vmul.f32 %v9048, %v9514
    %v9609 = vmul.f32 %v9049, %v9514
    %v9610 = vmul.f32 %v9050, %v9514
    %v9611 = vmul.f32 %v9051, %v9514
    %v9612 = vmul.f32 %v9052, %v9514
    %v9613 = vmul.f32 %v9053, %v9514
    %v9614 = vmul.f32 %v9054, %v9514
    %v9615 = vmul.f32 %v9055, %v9514
    %v9616 = vmul.f32 %v9056, %v9514
    %v9617 = vmul.f32 %v9057, %v9514
    %v9618 = vmul.f32 %v9058, %v9514
    %v9619 = vmul.f32 %v9059, %v9514
    %v9620 = vmul.f32 %v9060, %v9514
    %v9621 = vmul.f32 %v9061, %v9514
    %v9622 = vmul.f32 %v9062, %v9514
    %v9623 = vmul.f32 %v9063, %v9514
    %v9624 = vmul.f32 %v9064, %v9514
    %v9625 = vmul.f32 %v9065, %v9514
    %v9626 = vmul.f32 %v9066, %v9514
    %v9627 = vmul.f32 %v9067, %v9514
    %v9628 = vmul.f32 %v9068, %v9514
    %v9629 = vmul.f32 %v9069, %v9514
    %v9630 = vmul.f32 %v9070, %v9514
    %v9631 = vmul.f32 %v9071, %v9514
    %v9632 = vmul.f32 %v9072, %v9514
    %v9633 = vmul.f32 %v9073, %v9514
    %v9634 = vmul.f32 %v9074, %v9514
    %v9635 = vmul.f32 %v9075, %v9514
    %v9636 = vmul.f32 %v9076, %v9514
    %v9637 = vmul.f32 %v9077, %v9514
    %v9638 = vmul.f32 %v9078, %v9514
    %v9639 = vmul.f32 %v9079, %v9514
    %v9640 = vmul.f32 %v9080, %v9514
    %v9641 = vmul.f32 %v9081, %v9514
    %v9642 = vmul.f32 %v9082, %v9514
    %v9643 = vmul.f32 %v9083, %v9514
    %v9644 = vmul.f32 %v9084, %v9514
    %v9645 = vmul.f32 %v9085, %v9514
    %v9646 = vmul.f32 %v9086, %v9514
    %v9647 = vmul.f32 %v9087, %v9514
    %v9648 = vmul.f32 %v9088, %v9514
    %v9649 = vmul.f32 %v9089, %v9514
    %v9650 = vmul.f32 %v9090, %v9514
    %v9651 = vmul.f32 %v9091, %v9514
    %v9652 = vmul.f32 %v9092, %v9514
    %v9653 = vmul.f32 %v9093, %v9514
    %v9654 = vmul.f32 %v9094, %v9514
    %v9655 = vmul.f32 %v9095, %v9514
    %v9656 = vmul.f32 %v9096, %v9514
    %v9657 = vmul.f32 %v9097, %v9514
    %v9658 = vmul.f32 %v9098, %v9514
    %v9659 = vmul.f32 %v9099, %v9514
    %v9660 = vmul.f32 %v9100, %v9514
    %v9661 = vmul.f32 %v9101, %v9514
    %v9662 = vmul.f32 %v9102, %v9514
    %v9663 = vmul.f32 %v9103, %v9514
    %v9664 = vmul.f32 %v9104, %v9514
    %v9665 = vmul.f32 %v9105, %v9514
    %v9666 = vmul.f32 %v9106, %v9514
    %v9667 = vmul.f32 %v9107, %v9514
    %v9668 = vmul.f32 %v9108, %v9514
    %v9669 = vmul.f32 %v9109, %v9514
    %v9670 = vmul.f32 %v9110, %v9514
    %v9671 = vmul.f32 %v9111, %v9514
    %v9672 = vmul.f32 %v9112, %v9514
    %v9673 = vmul.f32 %v9113, %v9514
    %v9674 = vmul.f32 %v9114, %v9514
    %v9675 = vmul.f32 %v9115, %v9514
    %v9676 = vmul.f32 %v9116, %v9514
    %v9677 = vmul.f32 %v9117, %v9514
    %v9678 = vmul.f32 %v9118, %v9514
    %v9679 = vmul.f32 %v9119, %v9514
    %v9680 = vmul.f32 %v9120, %v9514
    %v9681 = vmul.f32 %v9121, %v9514
    %v9682 = vmul.f32 %v9122, %v9514
    %v9683 = vmul.f32 %v9123, %v9514
    %v9684 = vmul.f32 %v9124, %v9514
    %v9685 = vmul.f32 %v9125, %v9514
    %v9686 = vmul.f32 %v9126, %v9514
    %v9687 = vmul.f32 %v9127, %v9514
    %v9688 = vmul.f32 %v9128, %v9514
    %v9689 = vmul.f32 %v9129, %v9514
    %v9690 = vmul.f32 %v9130, %v9514
    %v9691 = vmul.f32 %v9131, %v9514
    %v9692 = vmul.f32 %v9132, %v9514
    %v9693 = vmul.f32 %v9133, %v9514
    %v9694 = vmul.f32 %v9134, %v9514
    %v9695 = vmul.f32 %v9135, %v9514
    %v9696 = vmul.f32 %v9136, %v9514
    %v9697 = vmul.f32 %v9137, %v9514
    %v9698 = vmul.f32 %v9138, %v9514
    %v9699 = vmul.f32 %v9139, %v9514
    %v9700 = vmul.f32 %v9140, %v9514
    %v9701 = vmul.f32 %v9141, %v9514
    %v9702 = vmul.f32 %v9142, %v9514
    %v9703 = vmul.f32 %v9143, %v9514
    %v9704 = vmul.f32 %v9144, %v9514
    %v9705 = vmul.f32 %v9145, %v9514
    %v9706 = vmul.f32 %v9146, %v9514
    %v9707 = vmul.f32 %v9147, %v9514
    %v9708 = vmul.f32 %v9148, %v9514
    %v9709 = vmul.f32 %v9149, %v9514
    %v9710 = vmul.f32 %v9150, %v9514
    %v9711 = vmul.f32 %v9151, %v9514
    %v9712 = vmul.f32 %v9152, %v9514
    %v9713 = vmul.f32 %v9153, %v9514
    %v9714 = vmul.f32 %v9154, %v9514
    %v9715 = vmul.f32 %v9155, %v9514
    %v9716 = vmul.f32 %v9156, %v9514
    %v9717 = vmul.f32 %v9157, %v9514
    %v9718 = vmul.f32 %v9158, %v9514
    %v9719 = vmul.f32 %v9159, %v9514
    %v9720 = vmul.f32 %v9160, %v9514
    %v9721 = vmul.f32 %v9161, %v9514
    %v9722 = vmul.f32 %v9162, %v9514
    %v9723 = vmul.f32 %v9163, %v9514
    %v9724 = vmul.f32 %v9164, %v9514
    %v9725 = vmul.f32 %v9165, %v9514
    %v9726 = vmul.f32 %v9166, %v9514
    %v9727 = vmul.f32 %v9167, %v9514
    %v9728 = vmul.f32 %v9168, %v9514
    %v9729 = vmul.f32 %v9169, %v9514
    %v9730 = vmul.f32 %v9170, %v9514
    %v9731 = vmul.f32 %v9171, %v9514
    %v9732 = vmul.f32 %v9172, %v9514
    %v9733 = vmul.f32 %v9173, %v9514
    %v9734 = vmul.f32 %v9174, %v9514
    %v9735 = vmul.f32 %v9175, %v9514
    %v9736 = vmul.f32 %v9176, %v9514
    %v9737 = vmul.f32 %v9177, %v9514
    %v9738 = vmul.f32 %v9178, %v9514
    %v9739 = vmul.f32 %v9179, %v9514
    %v9740 = vmul.f32 %v9180, %v9514
    %v9741 = vmul.f32 %v9181, %v9514
    %v9742 = vmul.f32 %v9182, %v9514
    %v9743 = vmul.f32 %v9183, %v9514
    %v9744 = vmul.f32 %v9184, %v9514
    %v9745 = vmul.f32 %v9185, %v9514
    %v9746 = vmul.f32 %v9186, %v9514
    %v9747 = vmul.f32 %v9187, %v9514
    %v9748 = vmul.f32 %v9188, %v9514
    %v9749 = vmul.f32 %v9189, %v9514
    %v9750 = vmul.f32 %v9190, %v9514
    %v9751 = vmul.f32 %v9191, %v9514
    %v9752 = vmul.f32 %v9192, %v9514
    %v9753 = vmul.f32 %v9193, %v9514
    %v9754 = vmul.f32 %v9194, %v9514
    %v9755 = vmul.f32 %v9195, %v9514
    %v9756 = vmul.f32 %v9196, %v9514
    %v9757 = vmul.f32 %v9197, %v9514
    %v9758 = vmul.f32 %v9198, %v9514
    %v9759 = vmul.f32 %v9199, %v9514
    %v9760 = vmul.f32 %v9200, %v9514
    %v9761 = vmul.f32 %v9201, %v9514
    %v9762 = vmul.f32 %v9202, %v9514
    %v9763 = vmul.f32 %v9203, %v9514
    %v9764 = vmul.f32 %v9204, %v9514
    %v9765 = vmul.f32 %v9205, %v9514
    %v9766 = vmul.f32 %v9206, %v9514
    %v9767 = vmul.f32 %v9207, %v9514
    %v9768 = vmul.f32 %v9208, %v9514
    %v9769 = vmul.f32 %v9209, %v9514
    %v9770 = vmul.f32 %v9210, %v9514
    %v9771 = vmul.f32 %v9211, %v9514
    %v9772 = vmul.f32 %v9212, %v9514
    %v9773 = vmul.f32 %v9213, %v9514
    %v9774 = vmul.f32 %v9214, %v9514
    %v9775 = vmul.f32 %v9215, %v9514
    %v9776 = vmul.f32 %v9216, %v9514
    %v9777 = vmul.f32 %v9217, %v9514
    %v9778 = vmul.f32 %v9218, %v9514
    %v9779 = vmul.f32 %v9219, %v9514
    %v9780 = vmul.f32 %v9220, %v9514
    %v9781 = vmul.f32 %v9221, %v9514
    %v9782 = vmul.f32 %v9222, %v9514
    %v9783 = vmul.f32 %v9223, %v9514
    %v9784 = vmul.f32 %v9224, %v9514
    %v9785 = vmul.f32 %v9225, %v9514
    %v9786 = vmul.f32 %v9226, %v9514
    %v9787 = vmul.f32 %v9227, %v9514
    %v9788 = vmul.f32 %v9228, %v9514
    %v9789 = vmul.f32 %v9229, %v9514
    %v9790 = vmul.f32 %v9230, %v9514
    %v9791 = vmul.f32 %v9231, %v9514
    %v9792 = vmul.f32 %v9232, %v9514
    %v9793 = vmul.f32 %v9233, %v9514
    %v9794 = vmul.f32 %v9234, %v9514
    %v9795 = vmul.f32 %v9235, %v9514
    %v9796 = vmul.f32 %v9236, %v9514
    %v9797 = vmul.f32 %v9237, %v9514
    %v9798 = vmul.f32 %v9238, %v9514
    %v9799 = vmul.f32 %v9239, %v9514
    %v9800 = vmul.f32 %v9240, %v9514
    %v9801 = vmul.f32 %v9241, %v9514
    %v9802 = vmul.f32 %v9242, %v9514
    %v9803 = vmul.f32 %v9243, %v9514
    %v9804 = vmul.f32 %v9244, %v9514
    %v9805 = vmul.f32 %v9245, %v9514
    %v9806 = vmul.f32 %v9246, %v9514
    %v9807 = vmul.f32 %v9247, %v9514
    %v9808 = vmul.f32 %v9248, %v9514
    %v9809 = vmul.f32 %v9249, %v9514
    %v9810 = vmul.f32 %v9250, %v9514
    %v9811 = vmul.f32 %v9251, %v9514
    %v9812 = vmul.f32 %v9252, %v9514
    %v9813 = vmul.f32 %v9253, %v9514
    %v9814 = vmul.f32 %v9254, %v9514
    %v9815 = vmul.f32 %v9255, %v9514
    %v9816 = vmul.f32 %v9256, %v9514
    %v9817 = vmul.f32 %v9257, %v9514
    %v9818 = vmul.f32 %v9258, %v9514
    %v9819 = vmul.f32 %v9259, %v9514
    %v9820 = vmul.f32 %v9260, %v9514
    %v9821 = vmul.f32 %v9261, %v9514
    %v9822 = vmul.f32 %v9262, %v9514
    %v9823 = vmul.f32 %v9263, %v9514
    %v9824 = vmul.f32 %v9264, %v9514
    %v9825 = vmul.f32 %v9265, %v9514
    %v9826 = vmul.f32 %v9266, %v9514
    %v9827 = vmul.f32 %v9267, %v9514
    %v9828 = vmul.f32 %v9268, %v9514
    %v9829 = vmul.f32 %v9269, %v9514
    %v9830 = vmul.f32 %v9270, %v9514
    %v9831 = vmul.f32 %v9271, %v9514
    %v9832 = vmul.f32 %v9272, %v9514
    %v9833 = vmul.f32 %v9273, %v9514
    %v9834 = vmul.f32 %v9274, %v9514
    %v9835 = vmul.f32 %v9275, %v9514
    %v9836 = vmul.f32 %v9276, %v9514
    %v9837 = vmul.f32 %v9277, %v9514
    %v9838 = vmul.f32 %v9278, %v9514
    %v9839 = vmul.f32 %v9279, %v9514
    %v9840 = vmul.f32 %v9280, %v9514
    %v9841 = vmul.f32 %v9281, %v9514
    %v9842 = vmul.f32 %v9282, %v9514
    %v9843 = vmul.f32 %v9283, %v9514
    %v9844 = vmul.f32 %v9284, %v9514
    %v9845 = vmul.f32 %v9285, %v9514
    %v9846 = vmul.f32 %v9286, %v9514
    %v9847 = vmul.f32 %v9287, %v9514
    %v9848 = vmul.f32 %v9288, %v9514
    %v9849 = vmul.f32 %v9289, %v9514
    %v9850 = vmul.f32 %v9290, %v9514
    %v9851 = vmul.f32 %v9291, %v9514
    %v9852 = vmul.f32 %v9292, %v9514
    %v9853 = vmul.f32 %v9293, %v9514
    %v9854 = vmul.f32 %v9294, %v9514
    %v9855 = vmul.f32 %v9295, %v9514
    %v9856 = vmul.f32 %v9296, %v9514
    %v9857 = vmul.f32 %v9297, %v9514
    %v9858 = vmul.f32 %v9298, %v9514
    %v9859 = vmul.f32 %v9299, %v9514
    %v9860 = vmul.f32 %v9300, %v9514
    %v9861 = vmul.f32 %v9301, %v9514
    %v9862 = vmul.f32 %v9302, %v9514
    %v9863 = vmul.f32 %v9303, %v9514
    %v9864 = vmul.f32 %v9304, %v9514
    %v9865 = vmul.f32 %v9305, %v9514
    %v9866 = vmul.f32 %v9306, %v9514
    %v9867 = vmul.f32 %v9307, %v9514
    %v9868 = vmul.f32 %v9308, %v9514
    %v9869 = vmul.f32 %v9309, %v9514
    %v9870 = vmul.f32 %v9310, %v9514
    %v9871 = vmul.f32 %v9311, %v9514
    %v9872 = vmul.f32 %v9312, %v9514
    %v9873 = vmul.f32 %v9313, %v9514
    %v9874 = vmul.f32 %v9314, %v9514
    %v9875 = vmul.f32 %v9315, %v9514
    %v9876 = vmul.f32 %v9316, %v9514
    %v9877 = vmul.f32 %v9317, %v9514
    %v9878 = vmul.f32 %v9318, %v9514
    %v9879 = vmul.f32 %v9319, %v9514
    %v9880 = vmul.f32 %v9320, %v9514
    %v9881 = vmul.f32 %v9321, %v9514
    %v9882 = vmul.f32 %v9322, %v9514
    %v9883 = vmul.f32 %v9323, %v9514
    %v9884 = vmul.f32 %v9324, %v9514
    %v9885 = vmul.f32 %v9325, %v9514
    %v9886 = vmul.f32 %v9326, %v9514
    %v9887 = vmul.f32 %v9327, %v9514
    %v9888 = vmul.f32 %v9328, %v9514
    %v9889 = vmul.f32 %v9329, %v9514
    %v9890 = vmul.f32 %v9330, %v9514
    %v9891 = vmul.f32 %v9331, %v9514
    %v9892 = vmul.f32 %v9332, %v9514
    %v9893 = vmul.f32 %v9333, %v9514
    %v9894 = vmul.f32 %v9334, %v9514
    %v9895 = vmul.f32 %v9335, %v9514
    %v9896 = vmul.f32 %v9336, %v9514
    %v9897 = vmul.f32 %v9337, %v9514
    %v9898 = vmul.f32 %v9338, %v9514
    %v9899 = vmul.f32 %v9339, %v9514
    %v9900 = vmul.f32 %v9340, %v9514
    %v9901 = vmul.f32 %v9341, %v9514
    %v9902 = vmul.f32 %v9342, %v9514
    %v9903 = vmul.f32 %v9343, %v9514
    %v9904 = vmul.f32 %v9344, %v9514
    %v9905 = vmul.f32 %v9345, %v9514
    %v9906 = vmul.f32 %v9346, %v9514
    %v9907 = vmul.f32 %v9347, %v9514
    %v9908 = vmul.f32 %v9348, %v9514
    %v9909 = vmul.f32 %v9349, %v9514
    %v9910 = vmul.f32 %v9350, %v9514
    %v9911 = vmul.f32 %v9351, %v9514
    %v9912 = vmul.f32 %v9352, %v9514
    %v9913 = vmul.f32 %v9353, %v9514
    %v9914 = vmul.f32 %v9354, %v9514
    %v9915 = vmul.f32 %v9355, %v9514
    %v9916 = vmul.f32 %v9356, %v9514
    %v9917 = vmul.f32 %v9357, %v9514
    %v9918 = vmul.f32 %v9358, %v9514
    %v9919 = vmul.f32 %v9359, %v9514
    %v9920 = vmul.f32 %v9360, %v9514
    %v9921 = vmul.f32 %v9361, %v9514
    %v9922 = vmul.f32 %v9362, %v9514
    %v9923 = vmul.f32 %v9363, %v9514
    %v9924 = vmul.f32 %v9364, %v9514
    %v9925 = vmul.f32 %v9365, %v9514
    %v9926 = vmul.f32 %v9366, %v9514
    %v9927 = vmul.f32 %v9367, %v9514
    %v9928 = vmul.f32 %v9368, %v9514
    %v9929 = vmul.f32 %v9369, %v9514
    %v9930 = vmul.f32 %v9370, %v9514
    %v9931 = vmul.f32 %v9371, %v9514
    %v9932 = vmul.f32 %v9372, %v9514
    %v9933 = vmul.f32 %v9373, %v9514
    %v9934 = vmul.f32 %v9374, %v9514
    %v9935 = vmul.f32 %v9375, %v9514
    %v9936 = vmul.f32 %v9376, %v9514
    %v9937 = vmul.f32 %v9377, %v9514
    %v9938 = vmul.f32 %v9378, %v9514
    %v9939 = vmul.f32 %v9379, %v9514
    %v9940 = vmul.f32 %v9380, %v9514
    %v9941 = vmul.f32 %v9381, %v9514
    %v9942 = vmul.f32 %v9382, %v9514
    %v9943 = vmul.f32 %v9383, %v9514
    %v9944 = vmul.f32 %v9384, %v9514
    %v9945 = vmul.f32 %v9385, %v9514
    %v9946 = vmul.f32 %v9386, %v9514
    %v9947 = vmul.f32 %v9387, %v9514
    %v9948 = vmul.f32 %v9388, %v9514
    %v9949 = vmul.f32 %v9389, %v9514
    %v9950 = vmul.f32 %v9390, %v9514
    %v9951 = vmul.f32 %v9391, %v9514
    %v9952 = vmul.f32 %v9392, %v9514
    %v9953 = vmul.f32 %v9393, %v9514
    %v9954 = vmul.f32 %v9394, %v9514
    %v9955 = vmul.f32 %v9395, %v9514
    %v9956 = vmul.f32 %v9396, %v9514
    %v9957 = vmul.f32 %v9397, %v9514
    %v9958 = vmul.f32 %v9398, %v9514
    %v9959 = vmul.f32 %v9399, %v9514
    %v9960 = vmul.f32 %v9400, %v9514
    %v9961 = vmul.f32 %v9401, %v9514
    %v9962 = vmul.f32 %v9402, %v9514
    %v9963 = vmul.f32 %v9403, %v9514
    %v9964 = vmul.f32 %v9404, %v9514
    %v9965 = vmul.f32 %v9405, %v9514
    %v9966 = vmul.f32 %v9406, %v9514
    %v9967 = vmul.f32 %v9407, %v9514
    %v9968 = vmul.f32 %v9408, %v9514
    %v9969 = vmul.f32 %v9409, %v9514
    %v9970 = vmul.f32 %v9410, %v9514
    %v9971 = vmul.f32 %v9411, %v9514
    %v9972 = vmul.f32 %v9412, %v9514
    %v9973 = vmul.f32 %v9413, %v9514
    %v9974 = vmul.f32 %v9414, %v9514
    %v9975 = vmul.f32 %v9415, %v9514
    %v9976 = vmul.f32 %v9416, %v9514
    %v9977 = vmul.f32 %v9417, %v9514
    %v9978 = vmul.f32 %v9418, %v9514
    %v9979 = vmul.f32 %v9419, %v9514
    %v9980 = vmul.f32 %v9420, %v9514
    %v9981 = vmul.f32 %v9421, %v9514
    %v9982 = vmul.f32 %v9422, %v9514
    %v9983 = vmul.f32 %v9423, %v9514
    %v9984 = vmul.f32 %v9424, %v9514
    %v9985 = vmul.f32 %v9425, %v9514
    %v9986 = vmul.f32 %v9426, %v9514
    %v9987 = vmul.f32 %v9427, %v9514
    %v9988 = vmul.f32 %v9428, %v9514
    %v9989 = vmul.f32 %v9429, %v9514
    %v9990 = vmul.f32 %v9430, %v9514
    %v9991 = vmul.f32 %v9431, %v9514
    %v9992 = vmul.f32 %v9432, %v9514
    %v9993 = vmul.f32 %v9433, %v9514
    %v9994 = vmul.f32 %v9434, %v9514
    %v9995 = vmul.f32 %v9435, %v9514
    %v9996 = vmul.f32 %v9436, %v9514
    %v9997 = vmul.f32 %v9437, %v9514
    %v9998 = vmul.f32 %v9438, %v9514
    %v9999 = vmul.f32 %v9439, %v9514
    %v10000 = vmul.f32 %v9440, %v9514
    %v10001 = vmul.f32 %v9441, %v9514
    %v10002 = vmul.f32 %v9442, %v9514
    %v10003 = vmul.f32 %v9443, %v9514
    %v10004 = vmul.f32 %v9444, %v9514
    %v10005 = vmul.f32 %v9445, %v9514
    %v10006 = vmul.f32 %v9446, %v9514
    %v10007 = vmul.f32 %v9447, %v9514
    %v10008 = vmul.f32 %v9448, %v9514
    %v10009 = vmul.f32 %v9449, %v9514
    %v10010 = vmul.f32 %v9450, %v9514
    %v10011 = vmul.f32 %v9451, %v9514
    %v10012 = vmul.f32 %v9452, %v9514
    %v10013 = vmul.f32 %v9453, %v9514
    %v10014 = vmul.f32 %v9454, %v9514
    %v10015 = vmul.f32 %v9455, %v9514
    %v10016 = vmul.f32 %v9456, %v9514
    %v10017 = vmul.f32 %v9457, %v9514
    %v10018 = vmul.f32 %v9458, %v9514
    %v10019 = vmul.f32 %v9459, %v9514
    %v10020 = vmul.f32 %v9460, %v9514
    %v10021 = vmul.f32 %v9461, %v9514
    %v10022 = vmul.f32 %v9462, %v9514
    %v10023 = vmul.f32 %v9463, %v9514
    %v10024 = vmul.f32 %v9464, %v9514
    %v10025 = vmul.f32 %v9465, %v9514
    %v10026 = vmul.f32 %v9466, %v9514
    %v10027 = vmul.f32 %v9467, %v9514
    %v10028 = vmul.f32 %v9468, %v9514
    %v10029 = vmul.f32 %v9469, %v9514
    %v10030 = vmul.f32 %v9470, %v9514
    %v10031 = vmul.f32 %v9471, %v9514
    %v10032 = vmul.f32 %v9472, %v9514
    %v10033 = vmul.f32 %v9473, %v9514
    %v10034 = vmul.f32 %v9474, %v9514
    %v10035 = vmul.f32 %v9475, %v9514
    %v10036 = vmul.f32 %v9476, %v9514
    %v10037 = vmul.f32 %v9477, %v9514
    %v10038 = vmul.f32 %v9478, %v9514
    %v10039 = vmul.f32 %v9479, %v9514
    %v10040 = vmul.f32 %v9480, %v9514
    %v10041 = vmul.f32 %v9481, %v9514
    %v10042 = vmul.f32 %v9482, %v9514
    %v10043 = vmul.f32 %v9483, %v9514
    %v10044 = vmul.f32 %v9484, %v9514
    %v10045 = vmul.f32 %v9485, %v9514
    %v10046 = vmul.f32 %v9486, %v9514
    %v10047 = vmul.f32 %v9487, %v9514
    %v10048 = vmul.f32 %v9488, %v9514
    %v10049 = vmul.f32 %v9489, %v9514
    %v10050 = vmul.f32 %v9490, %v9514
    %v10051 = vmul.f32 %v9491, %v9514
    %v10052 = vmul.f32 %v9492, %v9514
    %v10053 = vmul.f32 %v9493, %v9514
    %v10054 = vmul.f32 %v9494, %v9514
    %v10055 = vmul.f32 %v9495, %v9514
    %v10056 = vmul.f32 %v9496, %v9514
    %v10057 = vmul.f32 %v9497, %v9514
    %v10058 = vmul.f32 %v9498, %v9514
    %v10059 = vmul.f32 %v9499, %v9514
    %v10060 = vmul.f32 %v9500, %v9514
    %v10061 = vmul.f32 %v9501, %v9514
    %v10062 = vmul.f32 %v9502, %v9514
    %v10063 = vmul.f32 %v9503, %v9514
    %v10064 = vmul.f32 %v9504, %v9514
    %v10065 = vmul.f32 %v9505, %v9514
    %v10066 = vmul.f32 %v9506, %v9514
    %v10067 = vmul.f32 %v9507, %v9514
    %v10068 = vmul.f32 %v9508, %v9514
    %v10069 = vld [vmem:[%s4] sm:$0x1]
    %v10071 = vlaneseq
    %v10072 = vshrl.u32 %v10071, 7
    %v10073 = vsub.s32 0, %v10072
    %v10074 = vrot.slane %v10069, %v10073
    %v10076 = vadd.f32 %v9516, %v10074
    %v10077 = vadd.f32 %v9517, %v10074
    %v10078 = vadd.f32 %v9518, %v10074
    %v10079 = vadd.f32 %v9519, %v10074
    %v10080 = vadd.f32 %v9520, %v10074
    %v10081 = vadd.f32 %v9521, %v10074
    %v10082 = vadd.f32 %v9522, %v10074
    %v10083 = vadd.f32 %v9523, %v10074
    %v10084 = vadd.f32 %v9524, %v10074
    %v10085 = vadd.f32 %v9525, %v10074
    %v10086 = vadd.f32 %v9526, %v10074
    %v10087 = vadd.f32 %v9527, %v10074
    %v10088 = vadd.f32 %v9528, %v10074
    %v10089 = vadd.f32 %v9529, %v10074
    %v10090 = vadd.f32 %v9530, %v10074
    %v10091 = vadd.f32 %v9531, %v10074
    %v10092 = vadd.f32 %v9532, %v10074
    %v10093 = vadd.f32 %v9533, %v10074
    %v10094 = vadd.f32 %v9534, %v10074
    %v10095 = vadd.f32 %v9535, %v10074
    %v10096 = vadd.f32 %v9536, %v10074
    %v10097 = vadd.f32 %v9537, %v10074
    %v10098 = vadd.f32 %v9538, %v10074
    %v10099 = vadd.f32 %v9539, %v10074
    %v10100 = vadd.f32 %v9540, %v10074
    %v10101 = vadd.f32 %v9541, %v10074
    %v10102 = vadd.f32 %v9542, %v10074
    %v10103 = vadd.f32 %v9543, %v10074
    %v10104 = vadd.f32 %v9544, %v10074
    %v10105 = vadd.f32 %v9545, %v10074
    %v10106 = vadd.f32 %v9546, %v10074
    %v10107 = vadd.f32 %v9547, %v10074
    %v10108 = vadd.f32 %v9548, %v10074
    %v10109 = vadd.f32 %v9549, %v10074
    %v10110 = vadd.f32 %v9550, %v10074
    %v10111 = vadd.f32 %v9551, %v10074
    %v10112 = vadd.f32 %v9552, %v10074
    %v10113 = vadd.f32 %v9553, %v10074
    %v10114 = vadd.f32 %v9554, %v10074
    %v10115 = vadd.f32 %v9555, %v10074
    %v10116 = vadd.f32 %v9556, %v10074
    %v10117 = vadd.f32 %v9557, %v10074
    %v10118 = vadd.f32 %v9558, %v10074
    %v10119 = vadd.f32 %v9559, %v10074
    %v10120 = vadd.f32 %v9560, %v10074
    %v10121 = vadd.f32 %v9561, %v10074
    %v10122 = vadd.f32 %v9562, %v10074
    %v10123 = vadd.f32 %v9563, %v10074
    %v10124 = vadd.f32 %v9564, %v10074
    %v10125 = vadd.f32 %v9565, %v10074
    %v10126 = vadd.f32 %v9566, %v10074
    %v10127 = vadd.f32 %v9567, %v10074
    %v10128 = vadd.f32 %v9568, %v10074
    %v10129 = vadd.f32 %v9569, %v10074
    %v10130 = vadd.f32 %v9570, %v10074
    %v10131 = vadd.f32 %v9571, %v10074
    %v10132 = vadd.f32 %v9572, %v10074
    %v10133 = vadd.f32 %v9573, %v10074
    %v10134 = vadd.f32 %v9574, %v10074
    %v10135 = vadd.f32 %v9575, %v10074
    %v10136 = vadd.f32 %v9576, %v10074
    %v10137 = vadd.f32 %v9577, %v10074
    %v10138 = vadd.f32 %v9578, %v10074
    %v10139 = vadd.f32 %v9579, %v10074
    %v10140 = vadd.f32 %v9580, %v10074
    %v10141 = vadd.f32 %v9581, %v10074
    %v10142 = vadd.f32 %v9582, %v10074
    %v10143 = vadd.f32 %v9583, %v10074
    %v10144 = vadd.f32 %v9584, %v10074
    %v10145 = vadd.f32 %v9585, %v10074
    %v10146 = vadd.f32 %v9586, %v10074
    %v10147 = vadd.f32 %v9587, %v10074
    %v10148 = vadd.f32 %v9588, %v10074
    %v10149 = vadd.f32 %v9589, %v10074
    %v10150 = vadd.f32 %v9590, %v10074
    %v10151 = vadd.f32 %v9591, %v10074
    %v10152 = vadd.f32 %v9592, %v10074
    %v10153 = vadd.f32 %v9593, %v10074
    %v10154 = vadd.f32 %v9594, %v10074
    %v10155 = vadd.f32 %v9595, %v10074
    %v10156 = vadd.f32 %v9596, %v10074
    %v10157 = vadd.f32 %v9597, %v10074
    %v10158 = vadd.f32 %v9598, %v10074
    %v10159 = vadd.f32 %v9599, %v10074
    %v10160 = vadd.f32 %v9600, %v10074
    %v10161 = vadd.f32 %v9601, %v10074
    %v10162 = vadd.f32 %v9602, %v10074
    %v10163 = vadd.f32 %v9603, %v10074
    %v10164 = vadd.f32 %v9604, %v10074
    %v10165 = vadd.f32 %v9605, %v10074
    %v10166 = vadd.f32 %v9606, %v10074
    %v10167 = vadd.f32 %v9607, %v10074
    %v10168 = vadd.f32 %v9608, %v10074
    %v10169 = vadd.f32 %v9609, %v10074
    %v10170 = vadd.f32 %v9610, %v10074
    %v10171 = vadd.f32 %v9611, %v10074
    %v10172 = vadd.f32 %v9612, %v10074
    %v10173 = vadd.f32 %v9613, %v10074
    %v10174 = vadd.f32 %v9614, %v10074
    %v10175 = vadd.f32 %v9615, %v10074
    %v10176 = vadd.f32 %v9616, %v10074
    %v10177 = vadd.f32 %v9617, %v10074
    %v10178 = vadd.f32 %v9618, %v10074
    %v10179 = vadd.f32 %v9619, %v10074
    %v10180 = vadd.f32 %v9620, %v10074
    %v10181 = vadd.f32 %v9621, %v10074
    %v10182 = vadd.f32 %v9622, %v10074
    %v10183 = vadd.f32 %v9623, %v10074
    %v10184 = vadd.f32 %v9624, %v10074
    %v10185 = vadd.f32 %v9625, %v10074
    %v10186 = vadd.f32 %v9626, %v10074
    %v10187 = vadd.f32 %v9627, %v10074
    %v10188 = vadd.f32 %v9628, %v10074
    %v10189 = vadd.f32 %v9629, %v10074
    %v10190 = vadd.f32 %v9630, %v10074
    %v10191 = vadd.f32 %v9631, %v10074
    %v10192 = vadd.f32 %v9632, %v10074
    %v10193 = vadd.f32 %v9633, %v10074
    %v10194 = vadd.f32 %v9634, %v10074
    %v10195 = vadd.f32 %v9635, %v10074
    %v10196 = vadd.f32 %v9636, %v10074
    %v10197 = vadd.f32 %v9637, %v10074
    %v10198 = vadd.f32 %v9638, %v10074
    %v10199 = vadd.f32 %v9639, %v10074
    %v10200 = vadd.f32 %v9640, %v10074
    %v10201 = vadd.f32 %v9641, %v10074
    %v10202 = vadd.f32 %v9642, %v10074
    %v10203 = vadd.f32 %v9643, %v10074
    %v10204 = vadd.f32 %v9644, %v10074
    %v10205 = vadd.f32 %v9645, %v10074
    %v10206 = vadd.f32 %v9646, %v10074
    %v10207 = vadd.f32 %v9647, %v10074
    %v10208 = vadd.f32 %v9648, %v10074
    %v10209 = vadd.f32 %v9649, %v10074
    %v10210 = vadd.f32 %v9650, %v10074
    %v10211 = vadd.f32 %v9651, %v10074
    %v10212 = vadd.f32 %v9652, %v10074
    %v10213 = vadd.f32 %v9653, %v10074
    %v10214 = vadd.f32 %v9654, %v10074
    %v10215 = vadd.f32 %v9655, %v10074
    %v10216 = vadd.f32 %v9656, %v10074
    %v10217 = vadd.f32 %v9657, %v10074
    %v10218 = vadd.f32 %v9658, %v10074
    %v10219 = vadd.f32 %v9659, %v10074
    %v10220 = vadd.f32 %v9660, %v10074
    %v10221 = vadd.f32 %v9661, %v10074
    %v10222 = vadd.f32 %v9662, %v10074
    %v10223 = vadd.f32 %v9663, %v10074
    %v10224 = vadd.f32 %v9664, %v10074
    %v10225 = vadd.f32 %v9665, %v10074
    %v10226 = vadd.f32 %v9666, %v10074
    %v10227 = vadd.f32 %v9667, %v10074
    %v10228 = vadd.f32 %v9668, %v10074
    %v10229 = vadd.f32 %v9669, %v10074
    %v10230 = vadd.f32 %v9670, %v10074
    %v10231 = vadd.f32 %v9671, %v10074
    %v10232 = vadd.f32 %v9672, %v10074
    %v10233 = vadd.f32 %v9673, %v10074
    %v10234 = vadd.f32 %v9674, %v10074
    %v10235 = vadd.f32 %v9675, %v10074
    %v10236 = vadd.f32 %v9676, %v10074
    %v10237 = vadd.f32 %v9677, %v10074
    %v10238 = vadd.f32 %v9678, %v10074
    %v10239 = vadd.f32 %v9679, %v10074
    %v10240 = vadd.f32 %v9680, %v10074
    %v10241 = vadd.f32 %v9681, %v10074
    %v10242 = vadd.f32 %v9682, %v10074
    %v10243 = vadd.f32 %v9683, %v10074
    %v10244 = vadd.f32 %v9684, %v10074
    %v10245 = vadd.f32 %v9685, %v10074
    %v10246 = vadd.f32 %v9686, %v10074
    %v10247 = vadd.f32 %v9687, %v10074
    %v10248 = vadd.f32 %v9688, %v10074
    %v10249 = vadd.f32 %v9689, %v10074
    %v10250 = vadd.f32 %v9690, %v10074
    %v10251 = vadd.f32 %v9691, %v10074
    %v10252 = vadd.f32 %v9692, %v10074
    %v10253 = vadd.f32 %v9693, %v10074
    %v10254 = vadd.f32 %v9694, %v10074
    %v10255 = vadd.f32 %v9695, %v10074
    %v10256 = vadd.f32 %v9696, %v10074
    %v10257 = vadd.f32 %v9697, %v10074
    %v10258 = vadd.f32 %v9698, %v10074
    %v10259 = vadd.f32 %v9699, %v10074
    %v10260 = vadd.f32 %v9700, %v10074
    %v10261 = vadd.f32 %v9701, %v10074
    %v10262 = vadd.f32 %v9702, %v10074
    %v10263 = vadd.f32 %v9703, %v10074
    %v10264 = vadd.f32 %v9704, %v10074
    %v10265 = vadd.f32 %v9705, %v10074
    %v10266 = vadd.f32 %v9706, %v10074
    %v10267 = vadd.f32 %v9707, %v10074
    %v10268 = vadd.f32 %v9708, %v10074
    %v10269 = vadd.f32 %v9709, %v10074
    %v10270 = vadd.f32 %v9710, %v10074
    %v10271 = vadd.f32 %v9711, %v10074
    %v10272 = vadd.f32 %v9712, %v10074
    %v10273 = vadd.f32 %v9713, %v10074
    %v10274 = vadd.f32 %v9714, %v10074
    %v10275 = vadd.f32 %v9715, %v10074
    %v10276 = vadd.f32 %v9716, %v10074
    %v10277 = vadd.f32 %v9717, %v10074
    %v10278 = vadd.f32 %v9718, %v10074
    %v10279 = vadd.f32 %v9719, %v10074
    %v10280 = vadd.f32 %v9720, %v10074
    %v10281 = vadd.f32 %v9721, %v10074
    %v10282 = vadd.f32 %v9722, %v10074
    %v10283 = vadd.f32 %v9723, %v10074
    %v10284 = vadd.f32 %v9724, %v10074
    %v10285 = vadd.f32 %v9725, %v10074
    %v10286 = vadd.f32 %v9726, %v10074
    %v10287 = vadd.f32 %v9727, %v10074
    %v10288 = vadd.f32 %v9728, %v10074
    %v10289 = vadd.f32 %v9729, %v10074
    %v10290 = vadd.f32 %v9730, %v10074
    %v10291 = vadd.f32 %v9731, %v10074
    %v10292 = vadd.f32 %v9732, %v10074
    %v10293 = vadd.f32 %v9733, %v10074
    %v10294 = vadd.f32 %v9734, %v10074
    %v10295 = vadd.f32 %v9735, %v10074
    %v10296 = vadd.f32 %v9736, %v10074
    %v10297 = vadd.f32 %v9737, %v10074
    %v10298 = vadd.f32 %v9738, %v10074
    %v10299 = vadd.f32 %v9739, %v10074
    %v10300 = vadd.f32 %v9740, %v10074
    %v10301 = vadd.f32 %v9741, %v10074
    %v10302 = vadd.f32 %v9742, %v10074
    %v10303 = vadd.f32 %v9743, %v10074
    %v10304 = vadd.f32 %v9744, %v10074
    %v10305 = vadd.f32 %v9745, %v10074
    %v10306 = vadd.f32 %v9746, %v10074
    %v10307 = vadd.f32 %v9747, %v10074
    %v10308 = vadd.f32 %v9748, %v10074
    %v10309 = vadd.f32 %v9749, %v10074
    %v10310 = vadd.f32 %v9750, %v10074
    %v10311 = vadd.f32 %v9751, %v10074
    %v10312 = vadd.f32 %v9752, %v10074
    %v10313 = vadd.f32 %v9753, %v10074
    %v10314 = vadd.f32 %v9754, %v10074
    %v10315 = vadd.f32 %v9755, %v10074
    %v10316 = vadd.f32 %v9756, %v10074
    %v10317 = vadd.f32 %v9757, %v10074
    %v10318 = vadd.f32 %v9758, %v10074
    %v10319 = vadd.f32 %v9759, %v10074
    %v10320 = vadd.f32 %v9760, %v10074
    %v10321 = vadd.f32 %v9761, %v10074
    %v10322 = vadd.f32 %v9762, %v10074
    %v10323 = vadd.f32 %v9763, %v10074
    %v10324 = vadd.f32 %v9764, %v10074
    %v10325 = vadd.f32 %v9765, %v10074
    %v10326 = vadd.f32 %v9766, %v10074
    %v10327 = vadd.f32 %v9767, %v10074
    %v10328 = vadd.f32 %v9768, %v10074
    %v10329 = vadd.f32 %v9769, %v10074
    %v10330 = vadd.f32 %v9770, %v10074
    %v10331 = vadd.f32 %v9771, %v10074
    %v10332 = vadd.f32 %v9772, %v10074
    %v10333 = vadd.f32 %v9773, %v10074
    %v10334 = vadd.f32 %v9774, %v10074
    %v10335 = vadd.f32 %v9775, %v10074
    %v10336 = vadd.f32 %v9776, %v10074
    %v10337 = vadd.f32 %v9777, %v10074
    %v10338 = vadd.f32 %v9778, %v10074
    %v10339 = vadd.f32 %v9779, %v10074
    %v10340 = vadd.f32 %v9780, %v10074
    %v10341 = vadd.f32 %v9781, %v10074
    %v10342 = vadd.f32 %v9782, %v10074
    %v10343 = vadd.f32 %v9783, %v10074
    %v10344 = vadd.f32 %v9784, %v10074
    %v10345 = vadd.f32 %v9785, %v10074
    %v10346 = vadd.f32 %v9786, %v10074
    %v10347 = vadd.f32 %v9787, %v10074
    %v10348 = vadd.f32 %v9788, %v10074
    %v10349 = vadd.f32 %v9789, %v10074
    %v10350 = vadd.f32 %v9790, %v10074
    %v10351 = vadd.f32 %v9791, %v10074
    %v10352 = vadd.f32 %v9792, %v10074
    %v10353 = vadd.f32 %v9793, %v10074
    %v10354 = vadd.f32 %v9794, %v10074
    %v10355 = vadd.f32 %v9795, %v10074
    %v10356 = vadd.f32 %v9796, %v10074
    %v10357 = vadd.f32 %v9797, %v10074
    %v10358 = vadd.f32 %v9798, %v10074
    %v10359 = vadd.f32 %v9799, %v10074
    %v10360 = vadd.f32 %v9800, %v10074
    %v10361 = vadd.f32 %v9801, %v10074
    %v10362 = vadd.f32 %v9802, %v10074
    %v10363 = vadd.f32 %v9803, %v10074
    %v10364 = vadd.f32 %v9804, %v10074
    %v10365 = vadd.f32 %v9805, %v10074
    %v10366 = vadd.f32 %v9806, %v10074
    %v10367 = vadd.f32 %v9807, %v10074
    %v10368 = vadd.f32 %v9808, %v10074
    %v10369 = vadd.f32 %v9809, %v10074
    %v10370 = vadd.f32 %v9810, %v10074
    %v10371 = vadd.f32 %v9811, %v10074
    %v10372 = vadd.f32 %v9812, %v10074
    %v10373 = vadd.f32 %v9813, %v10074
    %v10374 = vadd.f32 %v9814, %v10074
    %v10375 = vadd.f32 %v9815, %v10074
    %v10376 = vadd.f32 %v9816, %v10074
    %v10377 = vadd.f32 %v9817, %v10074
    %v10378 = vadd.f32 %v9818, %v10074
    %v10379 = vadd.f32 %v9819, %v10074
    %v10380 = vadd.f32 %v9820, %v10074
    %v10381 = vadd.f32 %v9821, %v10074
    %v10382 = vadd.f32 %v9822, %v10074
    %v10383 = vadd.f32 %v9823, %v10074
    %v10384 = vadd.f32 %v9824, %v10074
    %v10385 = vadd.f32 %v9825, %v10074
    %v10386 = vadd.f32 %v9826, %v10074
    %v10387 = vadd.f32 %v9827, %v10074
    %v10388 = vadd.f32 %v9828, %v10074
    %v10389 = vadd.f32 %v9829, %v10074
    %v10390 = vadd.f32 %v9830, %v10074
    %v10391 = vadd.f32 %v9831, %v10074
    %v10392 = vadd.f32 %v9832, %v10074
    %v10393 = vadd.f32 %v9833, %v10074
    %v10394 = vadd.f32 %v9834, %v10074
    %v10395 = vadd.f32 %v9835, %v10074
    %v10396 = vadd.f32 %v9836, %v10074
    %v10397 = vadd.f32 %v9837, %v10074
    %v10398 = vadd.f32 %v9838, %v10074
    %v10399 = vadd.f32 %v9839, %v10074
    %v10400 = vadd.f32 %v9840, %v10074
    %v10401 = vadd.f32 %v9841, %v10074
    %v10402 = vadd.f32 %v9842, %v10074
    %v10403 = vadd.f32 %v9843, %v10074
    %v10404 = vadd.f32 %v9844, %v10074
    %v10405 = vadd.f32 %v9845, %v10074
    %v10406 = vadd.f32 %v9846, %v10074
    %v10407 = vadd.f32 %v9847, %v10074
    %v10408 = vadd.f32 %v9848, %v10074
    %v10409 = vadd.f32 %v9849, %v10074
    %v10410 = vadd.f32 %v9850, %v10074
    %v10411 = vadd.f32 %v9851, %v10074
    %v10412 = vadd.f32 %v9852, %v10074
    %v10413 = vadd.f32 %v9853, %v10074
    %v10414 = vadd.f32 %v9854, %v10074
    %v10415 = vadd.f32 %v9855, %v10074
    %v10416 = vadd.f32 %v9856, %v10074
    %v10417 = vadd.f32 %v9857, %v10074
    %v10418 = vadd.f32 %v9858, %v10074
    %v10419 = vadd.f32 %v9859, %v10074
    %v10420 = vadd.f32 %v9860, %v10074
    %v10421 = vadd.f32 %v9861, %v10074
    %v10422 = vadd.f32 %v9862, %v10074
    %v10423 = vadd.f32 %v9863, %v10074
    %v10424 = vadd.f32 %v9864, %v10074
    %v10425 = vadd.f32 %v9865, %v10074
    %v10426 = vadd.f32 %v9866, %v10074
    %v10427 = vadd.f32 %v9867, %v10074
    %v10428 = vadd.f32 %v9868, %v10074
    %v10429 = vadd.f32 %v9869, %v10074
    %v10430 = vadd.f32 %v9870, %v10074
    %v10431 = vadd.f32 %v9871, %v10074
    %v10432 = vadd.f32 %v9872, %v10074
    %v10433 = vadd.f32 %v9873, %v10074
    %v10434 = vadd.f32 %v9874, %v10074
    %v10435 = vadd.f32 %v9875, %v10074
    %v10436 = vadd.f32 %v9876, %v10074
    %v10437 = vadd.f32 %v9877, %v10074
    %v10438 = vadd.f32 %v9878, %v10074
    %v10439 = vadd.f32 %v9879, %v10074
    %v10440 = vadd.f32 %v9880, %v10074
    %v10441 = vadd.f32 %v9881, %v10074
    %v10442 = vadd.f32 %v9882, %v10074
    %v10443 = vadd.f32 %v9883, %v10074
    %v10444 = vadd.f32 %v9884, %v10074
    %v10445 = vadd.f32 %v9885, %v10074
    %v10446 = vadd.f32 %v9886, %v10074
    %v10447 = vadd.f32 %v9887, %v10074
    %v10448 = vadd.f32 %v9888, %v10074
    %v10449 = vadd.f32 %v9889, %v10074
    %v10450 = vadd.f32 %v9890, %v10074
    %v10451 = vadd.f32 %v9891, %v10074
    %v10452 = vadd.f32 %v9892, %v10074
    %v10453 = vadd.f32 %v9893, %v10074
    %v10454 = vadd.f32 %v9894, %v10074
    %v10455 = vadd.f32 %v9895, %v10074
    %v10456 = vadd.f32 %v9896, %v10074
    %v10457 = vadd.f32 %v9897, %v10074
    %v10458 = vadd.f32 %v9898, %v10074
    %v10459 = vadd.f32 %v9899, %v10074
    %v10460 = vadd.f32 %v9900, %v10074
    %v10461 = vadd.f32 %v9901, %v10074
    %v10462 = vadd.f32 %v9902, %v10074
    %v10463 = vadd.f32 %v9903, %v10074
    %v10464 = vadd.f32 %v9904, %v10074
    %v10465 = vadd.f32 %v9905, %v10074
    %v10466 = vadd.f32 %v9906, %v10074
    %v10467 = vadd.f32 %v9907, %v10074
    %v10468 = vadd.f32 %v9908, %v10074
    %v10469 = vadd.f32 %v9909, %v10074
    %v10470 = vadd.f32 %v9910, %v10074
    %v10471 = vadd.f32 %v9911, %v10074
    %v10472 = vadd.f32 %v9912, %v10074
    %v10473 = vadd.f32 %v9913, %v10074
    %v10474 = vadd.f32 %v9914, %v10074
    %v10475 = vadd.f32 %v9915, %v10074
    %v10476 = vadd.f32 %v9916, %v10074
    %v10477 = vadd.f32 %v9917, %v10074
    %v10478 = vadd.f32 %v9918, %v10074
    %v10479 = vadd.f32 %v9919, %v10074
    %v10480 = vadd.f32 %v9920, %v10074
    %v10481 = vadd.f32 %v9921, %v10074
    %v10482 = vadd.f32 %v9922, %v10074
    %v10483 = vadd.f32 %v9923, %v10074
    %v10484 = vadd.f32 %v9924, %v10074
    %v10485 = vadd.f32 %v9925, %v10074
    %v10486 = vadd.f32 %v9926, %v10074
    %v10487 = vadd.f32 %v9927, %v10074
    %v10488 = vadd.f32 %v9928, %v10074
    %v10489 = vadd.f32 %v9929, %v10074
    %v10490 = vadd.f32 %v9930, %v10074
    %v10491 = vadd.f32 %v9931, %v10074
    %v10492 = vadd.f32 %v9932, %v10074
    %v10493 = vadd.f32 %v9933, %v10074
    %v10494 = vadd.f32 %v9934, %v10074
    %v10495 = vadd.f32 %v9935, %v10074
    %v10496 = vadd.f32 %v9936, %v10074
    %v10497 = vadd.f32 %v9937, %v10074
    %v10498 = vadd.f32 %v9938, %v10074
    %v10499 = vadd.f32 %v9939, %v10074
    %v10500 = vadd.f32 %v9940, %v10074
    %v10501 = vadd.f32 %v9941, %v10074
    %v10502 = vadd.f32 %v9942, %v10074
    %v10503 = vadd.f32 %v9943, %v10074
    %v10504 = vadd.f32 %v9944, %v10074
    %v10505 = vadd.f32 %v9945, %v10074
    %v10506 = vadd.f32 %v9946, %v10074
    %v10507 = vadd.f32 %v9947, %v10074
    %v10508 = vadd.f32 %v9948, %v10074
    %v10509 = vadd.f32 %v9949, %v10074
    %v10510 = vadd.f32 %v9950, %v10074
    %v10511 = vadd.f32 %v9951, %v10074
    %v10512 = vadd.f32 %v9952, %v10074
    %v10513 = vadd.f32 %v9953, %v10074
    %v10514 = vadd.f32 %v9954, %v10074
    %v10515 = vadd.f32 %v9955, %v10074
    %v10516 = vadd.f32 %v9956, %v10074
    %v10517 = vadd.f32 %v9957, %v10074
    %v10518 = vadd.f32 %v9958, %v10074
    %v10519 = vadd.f32 %v9959, %v10074
    %v10520 = vadd.f32 %v9960, %v10074
    %v10521 = vadd.f32 %v9961, %v10074
    %v10522 = vadd.f32 %v9962, %v10074
    %v10523 = vadd.f32 %v9963, %v10074
    %v10524 = vadd.f32 %v9964, %v10074
    %v10525 = vadd.f32 %v9965, %v10074
    %v10526 = vadd.f32 %v9966, %v10074
    %v10527 = vadd.f32 %v9967, %v10074
    %v10528 = vadd.f32 %v9968, %v10074
    %v10529 = vadd.f32 %v9969, %v10074
    %v10530 = vadd.f32 %v9970, %v10074
    %v10531 = vadd.f32 %v9971, %v10074
    %v10532 = vadd.f32 %v9972, %v10074
    %v10533 = vadd.f32 %v9973, %v10074
    %v10534 = vadd.f32 %v9974, %v10074
    %v10535 = vadd.f32 %v9975, %v10074
    %v10536 = vadd.f32 %v9976, %v10074
    %v10537 = vadd.f32 %v9977, %v10074
    %v10538 = vadd.f32 %v9978, %v10074
    %v10539 = vadd.f32 %v9979, %v10074
    %v10540 = vadd.f32 %v9980, %v10074
    %v10541 = vadd.f32 %v9981, %v10074
    %v10542 = vadd.f32 %v9982, %v10074
    %v10543 = vadd.f32 %v9983, %v10074
    %v10544 = vadd.f32 %v9984, %v10074
    %v10545 = vadd.f32 %v9985, %v10074
    %v10546 = vadd.f32 %v9986, %v10074
    %v10547 = vadd.f32 %v9987, %v10074
    %v10548 = vadd.f32 %v9988, %v10074
    %v10549 = vadd.f32 %v9989, %v10074
    %v10550 = vadd.f32 %v9990, %v10074
    %v10551 = vadd.f32 %v9991, %v10074
    %v10552 = vadd.f32 %v9992, %v10074
    %v10553 = vadd.f32 %v9993, %v10074
    %v10554 = vadd.f32 %v9994, %v10074
    %v10555 = vadd.f32 %v9995, %v10074
    %v10556 = vadd.f32 %v9996, %v10074
    %v10557 = vadd.f32 %v9997, %v10074
    %v10558 = vadd.f32 %v9998, %v10074
    %v10559 = vadd.f32 %v9999, %v10074
    %v10560 = vadd.f32 %v10000, %v10074
    %v10561 = vadd.f32 %v10001, %v10074
    %v10562 = vadd.f32 %v10002, %v10074
    %v10563 = vadd.f32 %v10003, %v10074
    %v10564 = vadd.f32 %v10004, %v10074
    %v10565 = vadd.f32 %v10005, %v10074
    %v10566 = vadd.f32 %v10006, %v10074
    %v10567 = vadd.f32 %v10007, %v10074
    %v10568 = vadd.f32 %v10008, %v10074
    %v10569 = vadd.f32 %v10009, %v10074
    %v10570 = vadd.f32 %v10010, %v10074
    %v10571 = vadd.f32 %v10011, %v10074
    %v10572 = vadd.f32 %v10012, %v10074
    %v10573 = vadd.f32 %v10013, %v10074
    %v10574 = vadd.f32 %v10014, %v10074
    %v10575 = vadd.f32 %v10015, %v10074
    %v10576 = vadd.f32 %v10016, %v10074
    %v10577 = vadd.f32 %v10017, %v10074
    %v10578 = vadd.f32 %v10018, %v10074
    %v10579 = vadd.f32 %v10019, %v10074
    %v10580 = vadd.f32 %v10020, %v10074
    %v10581 = vadd.f32 %v10021, %v10074
    %v10582 = vadd.f32 %v10022, %v10074
    %v10583 = vadd.f32 %v10023, %v10074
    %v10584 = vadd.f32 %v10024, %v10074
    %v10585 = vadd.f32 %v10025, %v10074
    %v10586 = vadd.f32 %v10026, %v10074
    %v10587 = vadd.f32 %v10027, %v10074
    %v10588 = vadd.f32 %v10028, %v10074
    %v10589 = vadd.f32 %v10029, %v10074
    %v10590 = vadd.f32 %v10030, %v10074
    %v10591 = vadd.f32 %v10031, %v10074
    %v10592 = vadd.f32 %v10032, %v10074
    %v10593 = vadd.f32 %v10033, %v10074
    %v10594 = vadd.f32 %v10034, %v10074
    %v10595 = vadd.f32 %v10035, %v10074
    %v10596 = vadd.f32 %v10036, %v10074
    %v10597 = vadd.f32 %v10037, %v10074
    %v10598 = vadd.f32 %v10038, %v10074
    %v10599 = vadd.f32 %v10039, %v10074
    %v10600 = vadd.f32 %v10040, %v10074
    %v10601 = vadd.f32 %v10041, %v10074
    %v10602 = vadd.f32 %v10042, %v10074
    %v10603 = vadd.f32 %v10043, %v10074
    %v10604 = vadd.f32 %v10044, %v10074
    %v10605 = vadd.f32 %v10045, %v10074
    %v10606 = vadd.f32 %v10046, %v10074
    %v10607 = vadd.f32 %v10047, %v10074
    %v10608 = vadd.f32 %v10048, %v10074
    %v10609 = vadd.f32 %v10049, %v10074
    %v10610 = vadd.f32 %v10050, %v10074
    %v10611 = vadd.f32 %v10051, %v10074
    %v10612 = vadd.f32 %v10052, %v10074
    %v10613 = vadd.f32 %v10053, %v10074
    %v10614 = vadd.f32 %v10054, %v10074
    %v10615 = vadd.f32 %v10055, %v10074
    %v10616 = vadd.f32 %v10056, %v10074
    %v10617 = vadd.f32 %v10057, %v10074
    %v10618 = vadd.f32 %v10058, %v10074
    %v10619 = vadd.f32 %v10059, %v10074
    %v10620 = vadd.f32 %v10060, %v10074
    %v10621 = vadd.f32 %v10061, %v10074
    %v10622 = vadd.f32 %v10062, %v10074
    %v10623 = vadd.f32 %v10063, %v10074
    %v10624 = vadd.f32 %v10064, %v10074
    %v10625 = vadd.f32 %v10065, %v10074
    %v10626 = vadd.f32 %v10066, %v10074
    %v10627 = vadd.f32 %v10067, %v10074
    %v10628 = vadd.f32 %v10068, %v10074
    %v10629 = vpack.c.bf16 %v10077, %v10076
    %v10630 = vpack.c.bf16 %v10079, %v10078
    %v10631 = vpack.c.bf16 %v10081, %v10080
    %v10632 = vpack.c.bf16 %v10083, %v10082
    %v10633 = vpack.c.bf16 %v10085, %v10084
    %v10634 = vpack.c.bf16 %v10087, %v10086
    %v10635 = vpack.c.bf16 %v10089, %v10088
    %v10636 = vpack.c.bf16 %v10091, %v10090
    %v10637 = vpack.c.bf16 %v10093, %v10092
    %v10638 = vpack.c.bf16 %v10095, %v10094
    %v10639 = vpack.c.bf16 %v10097, %v10096
    %v10640 = vpack.c.bf16 %v10099, %v10098
    %v10641 = vpack.c.bf16 %v10101, %v10100
    %v10642 = vpack.c.bf16 %v10103, %v10102
    %v10643 = vpack.c.bf16 %v10105, %v10104
    %v10644 = vpack.c.bf16 %v10107, %v10106
    %v10645 = vpack.c.bf16 %v10109, %v10108
    %v10646 = vpack.c.bf16 %v10111, %v10110
    %v10647 = vpack.c.bf16 %v10113, %v10112
    %v10648 = vpack.c.bf16 %v10115, %v10114
    %v10649 = vpack.c.bf16 %v10117, %v10116
    %v10650 = vpack.c.bf16 %v10119, %v10118
    %v10651 = vpack.c.bf16 %v10121, %v10120
    %v10652 = vpack.c.bf16 %v10123, %v10122
    %v10653 = vpack.c.bf16 %v10125, %v10124
    %v10654 = vpack.c.bf16 %v10127, %v10126
    %v10655 = vpack.c.bf16 %v10129, %v10128
    %v10656 = vpack.c.bf16 %v10131, %v10130
    %v10657 = vpack.c.bf16 %v10133, %v10132
    %v10658 = vpack.c.bf16 %v10135, %v10134
    %v10659 = vpack.c.bf16 %v10137, %v10136
    %v10660 = vpack.c.bf16 %v10139, %v10138
    %v10661 = vpack.c.bf16 %v10141, %v10140
    %v10662 = vpack.c.bf16 %v10143, %v10142
    %v10663 = vpack.c.bf16 %v10145, %v10144
    %v10664 = vpack.c.bf16 %v10147, %v10146
    %v10665 = vpack.c.bf16 %v10149, %v10148
    %v10666 = vpack.c.bf16 %v10151, %v10150
    %v10667 = vpack.c.bf16 %v10153, %v10152
    %v10668 = vpack.c.bf16 %v10155, %v10154
    %v10669 = vpack.c.bf16 %v10157, %v10156
    %v10670 = vpack.c.bf16 %v10159, %v10158
    %v10671 = vpack.c.bf16 %v10161, %v10160
    %v10672 = vpack.c.bf16 %v10163, %v10162
    %v10673 = vpack.c.bf16 %v10165, %v10164
    %v10674 = vpack.c.bf16 %v10167, %v10166
    %v10675 = vpack.c.bf16 %v10169, %v10168
    %v10676 = vpack.c.bf16 %v10171, %v10170
    %v10677 = vpack.c.bf16 %v10173, %v10172
    %v10678 = vpack.c.bf16 %v10175, %v10174
    %v10679 = vpack.c.bf16 %v10177, %v10176
    %v10680 = vpack.c.bf16 %v10179, %v10178
    %v10681 = vpack.c.bf16 %v10181, %v10180
    %v10682 = vpack.c.bf16 %v10183, %v10182
    %v10683 = vpack.c.bf16 %v10185, %v10184
    %v10684 = vpack.c.bf16 %v10187, %v10186
    %v10685 = vpack.c.bf16 %v10189, %v10188
    %v10686 = vpack.c.bf16 %v10191, %v10190
    %v10687 = vpack.c.bf16 %v10193, %v10192
    %v10688 = vpack.c.bf16 %v10195, %v10194
    %v10689 = vpack.c.bf16 %v10197, %v10196
    %v10690 = vpack.c.bf16 %v10199, %v10198
    %v10691 = vpack.c.bf16 %v10201, %v10200
    %v10692 = vpack.c.bf16 %v10203, %v10202
    %v10693 = vpack.c.bf16 %v10205, %v10204
    %v10694 = vpack.c.bf16 %v10207, %v10206
    %v10695 = vpack.c.bf16 %v10209, %v10208
    %v10696 = vpack.c.bf16 %v10211, %v10210
    %v10697 = vpack.c.bf16 %v10213, %v10212
    %v10698 = vpack.c.bf16 %v10215, %v10214
    %v10699 = vpack.c.bf16 %v10217, %v10216
    %v10700 = vpack.c.bf16 %v10219, %v10218
    %v10701 = vpack.c.bf16 %v10221, %v10220
    %v10702 = vpack.c.bf16 %v10223, %v10222
    %v10703 = vpack.c.bf16 %v10225, %v10224
    %v10704 = vpack.c.bf16 %v10227, %v10226
    %v10705 = vpack.c.bf16 %v10229, %v10228
    %v10706 = vpack.c.bf16 %v10231, %v10230
    %v10707 = vpack.c.bf16 %v10233, %v10232
    %v10708 = vpack.c.bf16 %v10235, %v10234
    %v10709 = vpack.c.bf16 %v10237, %v10236
    %v10710 = vpack.c.bf16 %v10239, %v10238
    %v10711 = vpack.c.bf16 %v10241, %v10240
    %v10712 = vpack.c.bf16 %v10243, %v10242
    %v10713 = vpack.c.bf16 %v10245, %v10244
    %v10714 = vpack.c.bf16 %v10247, %v10246
    %v10715 = vpack.c.bf16 %v10249, %v10248
    %v10716 = vpack.c.bf16 %v10251, %v10250
    %v10717 = vpack.c.bf16 %v10253, %v10252
    %v10718 = vpack.c.bf16 %v10255, %v10254
    %v10719 = vpack.c.bf16 %v10257, %v10256
    %v10720 = vpack.c.bf16 %v10259, %v10258
    %v10721 = vpack.c.bf16 %v10261, %v10260
    %v10722 = vpack.c.bf16 %v10263, %v10262
    %v10723 = vpack.c.bf16 %v10265, %v10264
    %v10724 = vpack.c.bf16 %v10267, %v10266
    %v10725 = vpack.c.bf16 %v10269, %v10268
    %v10726 = vpack.c.bf16 %v10271, %v10270
    %v10727 = vpack.c.bf16 %v10273, %v10272
    %v10728 = vpack.c.bf16 %v10275, %v10274
    %v10729 = vpack.c.bf16 %v10277, %v10276
    %v10730 = vpack.c.bf16 %v10279, %v10278
    %v10731 = vpack.c.bf16 %v10281, %v10280
    %v10732 = vpack.c.bf16 %v10283, %v10282
    %v10733 = vpack.c.bf16 %v10285, %v10284
    %v10734 = vpack.c.bf16 %v10287, %v10286
    %v10735 = vpack.c.bf16 %v10289, %v10288
    %v10736 = vpack.c.bf16 %v10291, %v10290
    %v10737 = vpack.c.bf16 %v10293, %v10292
    %v10738 = vpack.c.bf16 %v10295, %v10294
    %v10739 = vpack.c.bf16 %v10297, %v10296
    %v10740 = vpack.c.bf16 %v10299, %v10298
    %v10741 = vpack.c.bf16 %v10301, %v10300
    %v10742 = vpack.c.bf16 %v10303, %v10302
    %v10743 = vpack.c.bf16 %v10305, %v10304
    %v10744 = vpack.c.bf16 %v10307, %v10306
    %v10745 = vpack.c.bf16 %v10309, %v10308
    %v10746 = vpack.c.bf16 %v10311, %v10310
    %v10747 = vpack.c.bf16 %v10313, %v10312
    %v10748 = vpack.c.bf16 %v10315, %v10314
    %v10749 = vpack.c.bf16 %v10317, %v10316
    %v10750 = vpack.c.bf16 %v10319, %v10318
    %v10751 = vpack.c.bf16 %v10321, %v10320
    %v10752 = vpack.c.bf16 %v10323, %v10322
    %v10753 = vpack.c.bf16 %v10325, %v10324
    %v10754 = vpack.c.bf16 %v10327, %v10326
    %v10755 = vpack.c.bf16 %v10329, %v10328
    %v10756 = vpack.c.bf16 %v10331, %v10330
    %v10757 = vpack.c.bf16 %v10333, %v10332
    %v10758 = vpack.c.bf16 %v10335, %v10334
    %v10759 = vpack.c.bf16 %v10337, %v10336
    %v10760 = vpack.c.bf16 %v10339, %v10338
    %v10761 = vpack.c.bf16 %v10341, %v10340
    %v10762 = vpack.c.bf16 %v10343, %v10342
    %v10763 = vpack.c.bf16 %v10345, %v10344
    %v10764 = vpack.c.bf16 %v10347, %v10346
    %v10765 = vpack.c.bf16 %v10349, %v10348
    %v10766 = vpack.c.bf16 %v10351, %v10350
    %v10767 = vpack.c.bf16 %v10353, %v10352
    %v10768 = vpack.c.bf16 %v10355, %v10354
    %v10769 = vpack.c.bf16 %v10357, %v10356
    %v10770 = vpack.c.bf16 %v10359, %v10358
    %v10771 = vpack.c.bf16 %v10361, %v10360
    %v10772 = vpack.c.bf16 %v10363, %v10362
    %v10773 = vpack.c.bf16 %v10365, %v10364
    %v10774 = vpack.c.bf16 %v10367, %v10366
    %v10775 = vpack.c.bf16 %v10369, %v10368
    %v10776 = vpack.c.bf16 %v10371, %v10370
    %v10777 = vpack.c.bf16 %v10373, %v10372
    %v10778 = vpack.c.bf16 %v10375, %v10374
    %v10779 = vpack.c.bf16 %v10377, %v10376
    %v10780 = vpack.c.bf16 %v10379, %v10378
    %v10781 = vpack.c.bf16 %v10381, %v10380
    %v10782 = vpack.c.bf16 %v10383, %v10382
    %v10783 = vpack.c.bf16 %v10385, %v10384
    %v10784 = vpack.c.bf16 %v10387, %v10386
    %v10785 = vpack.c.bf16 %v10389, %v10388
    %v10786 = vpack.c.bf16 %v10391, %v10390
    %v10787 = vpack.c.bf16 %v10393, %v10392
    %v10788 = vpack.c.bf16 %v10395, %v10394
    %v10789 = vpack.c.bf16 %v10397, %v10396
    %v10790 = vpack.c.bf16 %v10399, %v10398
    %v10791 = vpack.c.bf16 %v10401, %v10400
    %v10792 = vpack.c.bf16 %v10403, %v10402
    %v10793 = vpack.c.bf16 %v10405, %v10404
    %v10794 = vpack.c.bf16 %v10407, %v10406
    %v10795 = vpack.c.bf16 %v10409, %v10408
    %v10796 = vpack.c.bf16 %v10411, %v10410
    %v10797 = vpack.c.bf16 %v10413, %v10412
    %v10798 = vpack.c.bf16 %v10415, %v10414
    %v10799 = vpack.c.bf16 %v10417, %v10416
    %v10800 = vpack.c.bf16 %v10419, %v10418
    %v10801 = vpack.c.bf16 %v10421, %v10420
    %v10802 = vpack.c.bf16 %v10423, %v10422
    %v10803 = vpack.c.bf16 %v10425, %v10424
    %v10804 = vpack.c.bf16 %v10427, %v10426
    %v10805 = vpack.c.bf16 %v10429, %v10428
    %v10806 = vpack.c.bf16 %v10431, %v10430
    %v10807 = vpack.c.bf16 %v10433, %v10432
    %v10808 = vpack.c.bf16 %v10435, %v10434
    %v10809 = vpack.c.bf16 %v10437, %v10436
    %v10810 = vpack.c.bf16 %v10439, %v10438
    %v10811 = vpack.c.bf16 %v10441, %v10440
    %v10812 = vpack.c.bf16 %v10443, %v10442
    %v10813 = vpack.c.bf16 %v10445, %v10444
    %v10814 = vpack.c.bf16 %v10447, %v10446
    %v10815 = vpack.c.bf16 %v10449, %v10448
    %v10816 = vpack.c.bf16 %v10451, %v10450
    %v10817 = vpack.c.bf16 %v10453, %v10452
    %v10818 = vpack.c.bf16 %v10455, %v10454
    %v10819 = vpack.c.bf16 %v10457, %v10456
    %v10820 = vpack.c.bf16 %v10459, %v10458
    %v10821 = vpack.c.bf16 %v10461, %v10460
    %v10822 = vpack.c.bf16 %v10463, %v10462
    %v10823 = vpack.c.bf16 %v10465, %v10464
    %v10824 = vpack.c.bf16 %v10467, %v10466
    %v10825 = vpack.c.bf16 %v10469, %v10468
    %v10826 = vpack.c.bf16 %v10471, %v10470
    %v10827 = vpack.c.bf16 %v10473, %v10472
    %v10828 = vpack.c.bf16 %v10475, %v10474
    %v10829 = vpack.c.bf16 %v10477, %v10476
    %v10830 = vpack.c.bf16 %v10479, %v10478
    %v10831 = vpack.c.bf16 %v10481, %v10480
    %v10832 = vpack.c.bf16 %v10483, %v10482
    %v10833 = vpack.c.bf16 %v10485, %v10484
    %v10834 = vpack.c.bf16 %v10487, %v10486
    %v10835 = vpack.c.bf16 %v10489, %v10488
    %v10836 = vpack.c.bf16 %v10491, %v10490
    %v10837 = vpack.c.bf16 %v10493, %v10492
    %v10838 = vpack.c.bf16 %v10495, %v10494
    %v10839 = vpack.c.bf16 %v10497, %v10496
    %v10840 = vpack.c.bf16 %v10499, %v10498
    %v10841 = vpack.c.bf16 %v10501, %v10500
    %v10842 = vpack.c.bf16 %v10503, %v10502
    %v10843 = vpack.c.bf16 %v10505, %v10504
    %v10844 = vpack.c.bf16 %v10507, %v10506
    %v10845 = vpack.c.bf16 %v10509, %v10508
    %v10846 = vpack.c.bf16 %v10511, %v10510
    %v10847 = vpack.c.bf16 %v10513, %v10512
    %v10848 = vpack.c.bf16 %v10515, %v10514
    %v10849 = vpack.c.bf16 %v10517, %v10516
    %v10850 = vpack.c.bf16 %v10519, %v10518
    %v10851 = vpack.c.bf16 %v10521, %v10520
    %v10852 = vpack.c.bf16 %v10523, %v10522
    %v10853 = vpack.c.bf16 %v10525, %v10524
    %v10854 = vpack.c.bf16 %v10527, %v10526
    %v10855 = vpack.c.bf16 %v10529, %v10528
    %v10856 = vpack.c.bf16 %v10531, %v10530
    %v10857 = vpack.c.bf16 %v10533, %v10532
    %v10858 = vpack.c.bf16 %v10535, %v10534
    %v10859 = vpack.c.bf16 %v10537, %v10536
    %v10860 = vpack.c.bf16 %v10539, %v10538
    %v10861 = vpack.c.bf16 %v10541, %v10540
    %v10862 = vpack.c.bf16 %v10543, %v10542
    %v10863 = vpack.c.bf16 %v10545, %v10544
    %v10864 = vpack.c.bf16 %v10547, %v10546
    %v10865 = vpack.c.bf16 %v10549, %v10548
    %v10866 = vpack.c.bf16 %v10551, %v10550
    %v10867 = vpack.c.bf16 %v10553, %v10552
    %v10868 = vpack.c.bf16 %v10555, %v10554
    %v10869 = vpack.c.bf16 %v10557, %v10556
    %v10870 = vpack.c.bf16 %v10559, %v10558
    %v10871 = vpack.c.bf16 %v10561, %v10560
    %v10872 = vpack.c.bf16 %v10563, %v10562
    %v10873 = vpack.c.bf16 %v10565, %v10564
    %v10874 = vpack.c.bf16 %v10567, %v10566
    %v10875 = vpack.c.bf16 %v10569, %v10568
    %v10876 = vpack.c.bf16 %v10571, %v10570
    %v10877 = vpack.c.bf16 %v10573, %v10572
    %v10878 = vpack.c.bf16 %v10575, %v10574
    %v10879 = vpack.c.bf16 %v10577, %v10576
    %v10880 = vpack.c.bf16 %v10579, %v10578
    %v10881 = vpack.c.bf16 %v10581, %v10580
    %v10882 = vpack.c.bf16 %v10583, %v10582
    %v10883 = vpack.c.bf16 %v10585, %v10584
    %v10884 = vpack.c.bf16 %v10587, %v10586
    %v10885 = vpack.c.bf16 %v10589, %v10588
    %v10886 = vpack.c.bf16 %v10591, %v10590
    %v10887 = vpack.c.bf16 %v10593, %v10592
    %v10888 = vpack.c.bf16 %v10595, %v10594
    %v10889 = vpack.c.bf16 %v10597, %v10596
    %v10890 = vpack.c.bf16 %v10599, %v10598
    %v10891 = vpack.c.bf16 %v10601, %v10600
    %v10892 = vpack.c.bf16 %v10603, %v10602
    %v10893 = vpack.c.bf16 %v10605, %v10604
    %v10894 = vpack.c.bf16 %v10607, %v10606
    %v10895 = vpack.c.bf16 %v10609, %v10608
    %v10896 = vpack.c.bf16 %v10611, %v10610
    %v10897 = vpack.c.bf16 %v10613, %v10612
    %v10898 = vpack.c.bf16 %v10615, %v10614
    %v10899 = vpack.c.bf16 %v10617, %v10616
    %v10900 = vpack.c.bf16 %v10619, %v10618
    %v10901 = vpack.c.bf16 %v10621, %v10620
    %v10902 = vpack.c.bf16 %v10623, %v10622
    %v10903 = vpack.c.bf16 %v10625, %v10624
    %v10904 = vpack.c.bf16 %v10627, %v10626
    %v10905 = vpack.c.bf16 %v10628, %v10628
    %v11183 = vunpack.c.l.b16 %v10629
    %v11184 = vunpack.c.h.b16 %v10629
    %v11185 = vunpack.c.l.b16 %v10630
    %v11186 = vunpack.c.h.b16 %v10630
    %v11187 = vunpack.c.l.b16 %v10631
    %v11188 = vunpack.c.h.b16 %v10631
    %v11189 = vunpack.c.l.b16 %v10632
    %v11190 = vunpack.c.h.b16 %v10632
    %v11191 = vunpack.c.l.b16 %v10633
    %v11192 = vunpack.c.h.b16 %v10633
    %v11193 = vunpack.c.l.b16 %v10634
    %v11194 = vunpack.c.h.b16 %v10634
    %v11195 = vunpack.c.l.b16 %v10635
    %v11196 = vunpack.c.h.b16 %v10635
    %v11197 = vunpack.c.l.b16 %v10636
    %v11198 = vunpack.c.h.b16 %v10636
    %v11199 = vunpack.c.l.b16 %v10637
    %v11200 = vunpack.c.h.b16 %v10637
    %v11201 = vunpack.c.l.b16 %v10638
    %v11202 = vunpack.c.h.b16 %v10638
    %v11203 = vunpack.c.l.b16 %v10639
    %v11204 = vunpack.c.h.b16 %v10639
    %v11205 = vunpack.c.l.b16 %v10640
    %v11206 = vunpack.c.h.b16 %v10640
    %v11207 = vunpack.c.l.b16 %v10641
    %v11208 = vunpack.c.h.b16 %v10641
    %v11209 = vunpack.c.l.b16 %v10642
    %v11210 = vunpack.c.h.b16 %v10642
    %v11211 = vunpack.c.l.b16 %v10643
    %v11212 = vunpack.c.h.b16 %v10643
    %v11213 = vunpack.c.l.b16 %v10644
    %v11214 = vunpack.c.h.b16 %v10644
    %v11215 = vunpack.c.l.b16 %v10645
    %v11216 = vunpack.c.h.b16 %v10645
    %v11217 = vunpack.c.l.b16 %v10646
    %v11218 = vunpack.c.h.b16 %v10646
    %v11219 = vunpack.c.l.b16 %v10647
    %v11220 = vunpack.c.h.b16 %v10647
    %v11221 = vunpack.c.l.b16 %v10648
    %v11222 = vunpack.c.h.b16 %v10648
    %v11223 = vunpack.c.l.b16 %v10649
    %v11224 = vunpack.c.h.b16 %v10649
    %v11225 = vunpack.c.l.b16 %v10650
    %v11226 = vunpack.c.h.b16 %v10650
    %v11227 = vunpack.c.l.b16 %v10651
    %v11228 = vunpack.c.h.b16 %v10651
    %v11229 = vunpack.c.l.b16 %v10652
    %v11230 = vunpack.c.h.b16 %v10652
    %v11231 = vunpack.c.l.b16 %v10653
    %v11232 = vunpack.c.h.b16 %v10653
    %v11233 = vunpack.c.l.b16 %v10654
    %v11234 = vunpack.c.h.b16 %v10654
    %v11235 = vunpack.c.l.b16 %v10655
    %v11236 = vunpack.c.h.b16 %v10655
    %v11237 = vunpack.c.l.b16 %v10656
    %v11238 = vunpack.c.h.b16 %v10656
    %v11239 = vunpack.c.l.b16 %v10657
    %v11240 = vunpack.c.h.b16 %v10657
    %v11241 = vunpack.c.l.b16 %v10658
    %v11242 = vunpack.c.h.b16 %v10658
    %v11243 = vunpack.c.l.b16 %v10659
    %v11244 = vunpack.c.h.b16 %v10659
    %v11245 = vunpack.c.l.b16 %v10660
    %v11246 = vunpack.c.h.b16 %v10660
    %v11247 = vunpack.c.l.b16 %v10661
    %v11248 = vunpack.c.h.b16 %v10661
    %v11249 = vunpack.c.l.b16 %v10662
    %v11250 = vunpack.c.h.b16 %v10662
    %v11251 = vunpack.c.l.b16 %v10663
    %v11252 = vunpack.c.h.b16 %v10663
    %v11253 = vunpack.c.l.b16 %v10664
    %v11254 = vunpack.c.h.b16 %v10664
    %v11255 = vunpack.c.l.b16 %v10665
    %v11256 = vunpack.c.h.b16 %v10665
    %v11257 = vunpack.c.l.b16 %v10666
    %v11258 = vunpack.c.h.b16 %v10666
    %v11259 = vunpack.c.l.b16 %v10667
    %v11260 = vunpack.c.h.b16 %v10667
    %v11261 = vunpack.c.l.b16 %v10668
    %v11262 = vunpack.c.h.b16 %v10668
    %v11263 = vunpack.c.l.b16 %v10669
    %v11264 = vunpack.c.h.b16 %v10669
    %v11265 = vunpack.c.l.b16 %v10670
    %v11266 = vunpack.c.h.b16 %v10670
    %v11267 = vunpack.c.l.b16 %v10671
    %v11268 = vunpack.c.h.b16 %v10671
    %v11269 = vunpack.c.l.b16 %v10672
    %v11270 = vunpack.c.h.b16 %v10672
    %v11271 = vunpack.c.l.b16 %v10673
    %v11272 = vunpack.c.h.b16 %v10673
    %v11273 = vunpack.c.l.b16 %v10674
    %v11274 = vunpack.c.h.b16 %v10674
    %v11275 = vunpack.c.l.b16 %v10675
    %v11276 = vunpack.c.h.b16 %v10675
    %v11277 = vunpack.c.l.b16 %v10676
    %v11278 = vunpack.c.h.b16 %v10676
    %v11279 = vunpack.c.l.b16 %v10677
    %v11280 = vunpack.c.h.b16 %v10677
    %v11281 = vunpack.c.l.b16 %v10678
    %v11282 = vunpack.c.h.b16 %v10678
    %v11283 = vunpack.c.l.b16 %v10679
    %v11284 = vunpack.c.h.b16 %v10679
    %v11285 = vunpack.c.l.b16 %v10680
    %v11286 = vunpack.c.h.b16 %v10680
    %v11287 = vunpack.c.l.b16 %v10681
    %v11288 = vunpack.c.h.b16 %v10681
    %v11289 = vunpack.c.l.b16 %v10682
    %v11290 = vunpack.c.h.b16 %v10682
    %v11291 = vunpack.c.l.b16 %v10683
    %v11292 = vunpack.c.h.b16 %v10683
    %v11293 = vunpack.c.l.b16 %v10684
    %v11294 = vunpack.c.h.b16 %v10684
    %v11295 = vunpack.c.l.b16 %v10685
    %v11296 = vunpack.c.h.b16 %v10685
    %v11297 = vunpack.c.l.b16 %v10686
    %v11298 = vunpack.c.h.b16 %v10686
    %v11299 = vunpack.c.l.b16 %v10687
    %v11300 = vunpack.c.h.b16 %v10687
    %v11301 = vunpack.c.l.b16 %v10688
    %v11302 = vunpack.c.h.b16 %v10688
    %v11303 = vunpack.c.l.b16 %v10689
    %v11304 = vunpack.c.h.b16 %v10689
    %v11305 = vunpack.c.l.b16 %v10690
    %v11306 = vunpack.c.h.b16 %v10690
    %v11307 = vunpack.c.l.b16 %v10691
    %v11308 = vunpack.c.h.b16 %v10691
    %v11309 = vunpack.c.l.b16 %v10692
    %v11310 = vunpack.c.h.b16 %v10692
    %v11311 = vunpack.c.l.b16 %v10693
    %v11312 = vunpack.c.h.b16 %v10693
    %v11313 = vunpack.c.l.b16 %v10694
    %v11314 = vunpack.c.h.b16 %v10694
    %v11315 = vunpack.c.l.b16 %v10695
    %v11316 = vunpack.c.h.b16 %v10695
    %v11317 = vunpack.c.l.b16 %v10696
    %v11318 = vunpack.c.h.b16 %v10696
    %v11319 = vunpack.c.l.b16 %v10697
    %v11320 = vunpack.c.h.b16 %v10697
    %v11321 = vunpack.c.l.b16 %v10698
    %v11322 = vunpack.c.h.b16 %v10698
    %v11323 = vunpack.c.l.b16 %v10699
    %v11324 = vunpack.c.h.b16 %v10699
    %v11325 = vunpack.c.l.b16 %v10700
    %v11326 = vunpack.c.h.b16 %v10700
    %v11327 = vunpack.c.l.b16 %v10701
    %v11328 = vunpack.c.h.b16 %v10701
    %v11329 = vunpack.c.l.b16 %v10702
    %v11330 = vunpack.c.h.b16 %v10702
    %v11331 = vunpack.c.l.b16 %v10703
    %v11332 = vunpack.c.h.b16 %v10703
    %v11333 = vunpack.c.l.b16 %v10704
    %v11334 = vunpack.c.h.b16 %v10704
    %v11335 = vunpack.c.l.b16 %v10705
    %v11336 = vunpack.c.h.b16 %v10705
    %v11337 = vunpack.c.l.b16 %v10706
    %v11338 = vunpack.c.h.b16 %v10706
    %v11339 = vunpack.c.l.b16 %v10707
    %v11340 = vunpack.c.h.b16 %v10707
    %v11341 = vunpack.c.l.b16 %v10708
    %v11342 = vunpack.c.h.b16 %v10708
    %v11343 = vunpack.c.l.b16 %v10709
    %v11344 = vunpack.c.h.b16 %v10709
    %v11345 = vunpack.c.l.b16 %v10710
    %v11346 = vunpack.c.h.b16 %v10710
    %v11347 = vunpack.c.l.b16 %v10711
    %v11348 = vunpack.c.h.b16 %v10711
    %v11349 = vunpack.c.l.b16 %v10712
    %v11350 = vunpack.c.h.b16 %v10712
    %v11351 = vunpack.c.l.b16 %v10713
    %v11352 = vunpack.c.h.b16 %v10713
    %v11353 = vunpack.c.l.b16 %v10714
    %v11354 = vunpack.c.h.b16 %v10714
    %v11355 = vunpack.c.l.b16 %v10715
    %v11356 = vunpack.c.h.b16 %v10715
    %v11357 = vunpack.c.l.b16 %v10716
    %v11358 = vunpack.c.h.b16 %v10716
    %v11359 = vunpack.c.l.b16 %v10717
    %v11360 = vunpack.c.h.b16 %v10717
    %v11361 = vunpack.c.l.b16 %v10718
    %v11362 = vunpack.c.h.b16 %v10718
    %v11363 = vunpack.c.l.b16 %v10719
    %v11364 = vunpack.c.h.b16 %v10719
    %v11365 = vunpack.c.l.b16 %v10720
    %v11366 = vunpack.c.h.b16 %v10720
    %v11367 = vunpack.c.l.b16 %v10721
    %v11368 = vunpack.c.h.b16 %v10721
    %v11369 = vunpack.c.l.b16 %v10722
    %v11370 = vunpack.c.h.b16 %v10722
    %v11371 = vunpack.c.l.b16 %v10723
    %v11372 = vunpack.c.h.b16 %v10723
    %v11373 = vunpack.c.l.b16 %v10724
    %v11374 = vunpack.c.h.b16 %v10724
    %v11375 = vunpack.c.l.b16 %v10725
    %v11376 = vunpack.c.h.b16 %v10725
    %v11377 = vunpack.c.l.b16 %v10726
    %v11378 = vunpack.c.h.b16 %v10726
    %v11379 = vunpack.c.l.b16 %v10727
    %v11380 = vunpack.c.h.b16 %v10727
    %v11381 = vunpack.c.l.b16 %v10728
    %v11382 = vunpack.c.h.b16 %v10728
    %v11383 = vunpack.c.l.b16 %v10729
    %v11384 = vunpack.c.h.b16 %v10729
    %v11385 = vunpack.c.l.b16 %v10730
    %v11386 = vunpack.c.h.b16 %v10730
    %v11387 = vunpack.c.l.b16 %v10731
    %v11388 = vunpack.c.h.b16 %v10731
    %v11389 = vunpack.c.l.b16 %v10732
    %v11390 = vunpack.c.h.b16 %v10732
    %v11391 = vunpack.c.l.b16 %v10733
    %v11392 = vunpack.c.h.b16 %v10733
    %v11393 = vunpack.c.l.b16 %v10734
    %v11394 = vunpack.c.h.b16 %v10734
    %v11395 = vunpack.c.l.b16 %v10735
    %v11396 = vunpack.c.h.b16 %v10735
    %v11397 = vunpack.c.l.b16 %v10736
    %v11398 = vunpack.c.h.b16 %v10736
    %v11399 = vunpack.c.l.b16 %v10737
    %v11400 = vunpack.c.h.b16 %v10737
    %v11401 = vunpack.c.l.b16 %v10738
    %v11402 = vunpack.c.h.b16 %v10738
    %v11403 = vunpack.c.l.b16 %v10739
    %v11404 = vunpack.c.h.b16 %v10739
    %v11405 = vunpack.c.l.b16 %v10740
    %v11406 = vunpack.c.h.b16 %v10740
    %v11407 = vunpack.c.l.b16 %v10741
    %v11408 = vunpack.c.h.b16 %v10741
    %v11409 = vunpack.c.l.b16 %v10742
    %v11410 = vunpack.c.h.b16 %v10742
    %v11411 = vunpack.c.l.b16 %v10743
    %v11412 = vunpack.c.h.b16 %v10743
    %v11413 = vunpack.c.l.b16 %v10744
    %v11414 = vunpack.c.h.b16 %v10744
    %v11415 = vunpack.c.l.b16 %v10745
    %v11416 = vunpack.c.h.b16 %v10745
    %v11417 = vunpack.c.l.b16 %v10746
    %v11418 = vunpack.c.h.b16 %v10746
    %v11419 = vunpack.c.l.b16 %v10747
    %v11420 = vunpack.c.h.b16 %v10747
    %v11421 = vunpack.c.l.b16 %v10748
    %v11422 = vunpack.c.h.b16 %v10748
    %v11423 = vunpack.c.l.b16 %v10749
    %v11424 = vunpack.c.h.b16 %v10749
    %v11425 = vunpack.c.l.b16 %v10750
    %v11426 = vunpack.c.h.b16 %v10750
    %v11427 = vunpack.c.l.b16 %v10751
    %v11428 = vunpack.c.h.b16 %v10751
    %v11429 = vunpack.c.l.b16 %v10752
    %v11430 = vunpack.c.h.b16 %v10752
    %v11431 = vunpack.c.l.b16 %v10753
    %v11432 = vunpack.c.h.b16 %v10753
    %v11433 = vunpack.c.l.b16 %v10754
    %v11434 = vunpack.c.h.b16 %v10754
    %v11435 = vunpack.c.l.b16 %v10755
    %v11436 = vunpack.c.h.b16 %v10755
    %v11437 = vunpack.c.l.b16 %v10756
    %v11438 = vunpack.c.h.b16 %v10756
    %v11439 = vunpack.c.l.b16 %v10757
    %v11440 = vunpack.c.h.b16 %v10757
    %v11441 = vunpack.c.l.b16 %v10758
    %v11442 = vunpack.c.h.b16 %v10758
    %v11443 = vunpack.c.l.b16 %v10759
    %v11444 = vunpack.c.h.b16 %v10759
    %v11445 = vunpack.c.l.b16 %v10760
    %v11446 = vunpack.c.h.b16 %v10760
    %v11447 = vunpack.c.l.b16 %v10761
    %v11448 = vunpack.c.h.b16 %v10761
    %v11449 = vunpack.c.l.b16 %v10762
    %v11450 = vunpack.c.h.b16 %v10762
    %v11451 = vunpack.c.l.b16 %v10763
    %v11452 = vunpack.c.h.b16 %v10763
    %v11453 = vunpack.c.l.b16 %v10764
    %v11454 = vunpack.c.h.b16 %v10764
    %v11455 = vunpack.c.l.b16 %v10765
    %v11456 = vunpack.c.h.b16 %v10765
    %v11457 = vunpack.c.l.b16 %v10766
    %v11458 = vunpack.c.h.b16 %v10766
    %v11459 = vunpack.c.l.b16 %v10767
    %v11460 = vunpack.c.h.b16 %v10767
    %v11461 = vunpack.c.l.b16 %v10768
    %v11462 = vunpack.c.h.b16 %v10768
    %v11463 = vunpack.c.l.b16 %v10769
    %v11464 = vunpack.c.h.b16 %v10769
    %v11465 = vunpack.c.l.b16 %v10770
    %v11466 = vunpack.c.h.b16 %v10770
    %v11467 = vunpack.c.l.b16 %v10771
    %v11468 = vunpack.c.h.b16 %v10771
    %v11469 = vunpack.c.l.b16 %v10772
    %v11470 = vunpack.c.h.b16 %v10772
    %v11471 = vunpack.c.l.b16 %v10773
    %v11472 = vunpack.c.h.b16 %v10773
    %v11473 = vunpack.c.l.b16 %v10774
    %v11474 = vunpack.c.h.b16 %v10774
    %v11475 = vunpack.c.l.b16 %v10775
    %v11476 = vunpack.c.h.b16 %v10775
    %v11477 = vunpack.c.l.b16 %v10776
    %v11478 = vunpack.c.h.b16 %v10776
    %v11479 = vunpack.c.l.b16 %v10777
    %v11480 = vunpack.c.h.b16 %v10777
    %v11481 = vunpack.c.l.b16 %v10778
    %v11482 = vunpack.c.h.b16 %v10778
    %v11483 = vunpack.c.l.b16 %v10779
    %v11484 = vunpack.c.h.b16 %v10779
    %v11485 = vunpack.c.l.b16 %v10780
    %v11486 = vunpack.c.h.b16 %v10780
    %v11487 = vunpack.c.l.b16 %v10781
    %v11488 = vunpack.c.h.b16 %v10781
    %v11489 = vunpack.c.l.b16 %v10782
    %v11490 = vunpack.c.h.b16 %v10782
    %v11491 = vunpack.c.l.b16 %v10783
    %v11492 = vunpack.c.h.b16 %v10783
    %v11493 = vunpack.c.l.b16 %v10784
    %v11494 = vunpack.c.h.b16 %v10784
    %v11495 = vunpack.c.l.b16 %v10785
    %v11496 = vunpack.c.h.b16 %v10785
    %v11497 = vunpack.c.l.b16 %v10786
    %v11498 = vunpack.c.h.b16 %v10786
    %v11499 = vunpack.c.l.b16 %v10787
    %v11500 = vunpack.c.h.b16 %v10787
    %v11501 = vunpack.c.l.b16 %v10788
    %v11502 = vunpack.c.h.b16 %v10788
    %v11503 = vunpack.c.l.b16 %v10789
    %v11504 = vunpack.c.h.b16 %v10789
    %v11505 = vunpack.c.l.b16 %v10790
    %v11506 = vunpack.c.h.b16 %v10790
    %v11507 = vunpack.c.l.b16 %v10791
    %v11508 = vunpack.c.h.b16 %v10791
    %v11509 = vunpack.c.l.b16 %v10792
    %v11510 = vunpack.c.h.b16 %v10792
    %v11511 = vunpack.c.l.b16 %v10793
    %v11512 = vunpack.c.h.b16 %v10793
    %v11513 = vunpack.c.l.b16 %v10794
    %v11514 = vunpack.c.h.b16 %v10794
    %v11515 = vunpack.c.l.b16 %v10795
    %v11516 = vunpack.c.h.b16 %v10795
    %v11517 = vunpack.c.l.b16 %v10796
    %v11518 = vunpack.c.h.b16 %v10796
    %v11519 = vunpack.c.l.b16 %v10797
    %v11520 = vunpack.c.h.b16 %v10797
    %v11521 = vunpack.c.l.b16 %v10798
    %v11522 = vunpack.c.h.b16 %v10798
    %v11523 = vunpack.c.l.b16 %v10799
    %v11524 = vunpack.c.h.b16 %v10799
    %v11525 = vunpack.c.l.b16 %v10800
    %v11526 = vunpack.c.h.b16 %v10800
    %v11527 = vunpack.c.l.b16 %v10801
    %v11528 = vunpack.c.h.b16 %v10801
    %v11529 = vunpack.c.l.b16 %v10802
    %v11530 = vunpack.c.h.b16 %v10802
    %v11531 = vunpack.c.l.b16 %v10803
    %v11532 = vunpack.c.h.b16 %v10803
    %v11533 = vunpack.c.l.b16 %v10804
    %v11534 = vunpack.c.h.b16 %v10804
    %v11535 = vunpack.c.l.b16 %v10805
    %v11536 = vunpack.c.h.b16 %v10805
    %v11537 = vunpack.c.l.b16 %v10806
    %v11538 = vunpack.c.h.b16 %v10806
    %v11539 = vunpack.c.l.b16 %v10807
    %v11540 = vunpack.c.h.b16 %v10807
    %v11541 = vunpack.c.l.b16 %v10808
    %v11542 = vunpack.c.h.b16 %v10808
    %v11543 = vunpack.c.l.b16 %v10809
    %v11544 = vunpack.c.h.b16 %v10809
    %v11545 = vunpack.c.l.b16 %v10810
    %v11546 = vunpack.c.h.b16 %v10810
    %v11547 = vunpack.c.l.b16 %v10811
    %v11548 = vunpack.c.h.b16 %v10811
    %v11549 = vunpack.c.l.b16 %v10812
    %v11550 = vunpack.c.h.b16 %v10812
    %v11551 = vunpack.c.l.b16 %v10813
    %v11552 = vunpack.c.h.b16 %v10813
    %v11553 = vunpack.c.l.b16 %v10814
    %v11554 = vunpack.c.h.b16 %v10814
    %v11555 = vunpack.c.l.b16 %v10815
    %v11556 = vunpack.c.h.b16 %v10815
    %v11557 = vunpack.c.l.b16 %v10816
    %v11558 = vunpack.c.h.b16 %v10816
    %v11559 = vunpack.c.l.b16 %v10817
    %v11560 = vunpack.c.h.b16 %v10817
    %v11561 = vunpack.c.l.b16 %v10818
    %v11562 = vunpack.c.h.b16 %v10818
    %v11563 = vunpack.c.l.b16 %v10819
    %v11564 = vunpack.c.h.b16 %v10819
    %v11565 = vunpack.c.l.b16 %v10820
    %v11566 = vunpack.c.h.b16 %v10820
    %v11567 = vunpack.c.l.b16 %v10821
    %v11568 = vunpack.c.h.b16 %v10821
    %v11569 = vunpack.c.l.b16 %v10822
    %v11570 = vunpack.c.h.b16 %v10822
    %v11571 = vunpack.c.l.b16 %v10823
    %v11572 = vunpack.c.h.b16 %v10823
    %v11573 = vunpack.c.l.b16 %v10824
    %v11574 = vunpack.c.h.b16 %v10824
    %v11575 = vunpack.c.l.b16 %v10825
    %v11576 = vunpack.c.h.b16 %v10825
    %v11577 = vunpack.c.l.b16 %v10826
    %v11578 = vunpack.c.h.b16 %v10826
    %v11579 = vunpack.c.l.b16 %v10827
    %v11580 = vunpack.c.h.b16 %v10827
    %v11581 = vunpack.c.l.b16 %v10828
    %v11582 = vunpack.c.h.b16 %v10828
    %v11583 = vunpack.c.l.b16 %v10829
    %v11584 = vunpack.c.h.b16 %v10829
    %v11585 = vunpack.c.l.b16 %v10830
    %v11586 = vunpack.c.h.b16 %v10830
    %v11587 = vunpack.c.l.b16 %v10831
    %v11588 = vunpack.c.h.b16 %v10831
    %v11589 = vunpack.c.l.b16 %v10832
    %v11590 = vunpack.c.h.b16 %v10832
    %v11591 = vunpack.c.l.b16 %v10833
    %v11592 = vunpack.c.h.b16 %v10833
    %v11593 = vunpack.c.l.b16 %v10834
    %v11594 = vunpack.c.h.b16 %v10834
    %v11595 = vunpack.c.l.b16 %v10835
    %v11596 = vunpack.c.h.b16 %v10835
    %v11597 = vunpack.c.l.b16 %v10836
    %v11598 = vunpack.c.h.b16 %v10836
    %v11599 = vunpack.c.l.b16 %v10837
    %v11600 = vunpack.c.h.b16 %v10837
    %v11601 = vunpack.c.l.b16 %v10838
    %v11602 = vunpack.c.h.b16 %v10838
    %v11603 = vunpack.c.l.b16 %v10839
    %v11604 = vunpack.c.h.b16 %v10839
    %v11605 = vunpack.c.l.b16 %v10840
    %v11606 = vunpack.c.h.b16 %v10840
    %v11607 = vunpack.c.l.b16 %v10841
    %v11608 = vunpack.c.h.b16 %v10841
    %v11609 = vunpack.c.l.b16 %v10842
    %v11610 = vunpack.c.h.b16 %v10842
    %v11611 = vunpack.c.l.b16 %v10843
    %v11612 = vunpack.c.h.b16 %v10843
    %v11613 = vunpack.c.l.b16 %v10844
    %v11614 = vunpack.c.h.b16 %v10844
    %v11615 = vunpack.c.l.b16 %v10845
    %v11616 = vunpack.c.h.b16 %v10845
    %v11617 = vunpack.c.l.b16 %v10846
    %v11618 = vunpack.c.h.b16 %v10846
    %v11619 = vunpack.c.l.b16 %v10847
    %v11620 = vunpack.c.h.b16 %v10847
    %v11621 = vunpack.c.l.b16 %v10848
    %v11622 = vunpack.c.h.b16 %v10848
    %v11623 = vunpack.c.l.b16 %v10849
    %v11624 = vunpack.c.h.b16 %v10849
    %v11625 = vunpack.c.l.b16 %v10850
    %v11626 = vunpack.c.h.b16 %v10850
    %v11627 = vunpack.c.l.b16 %v10851
    %v11628 = vunpack.c.h.b16 %v10851
    %v11629 = vunpack.c.l.b16 %v10852
    %v11630 = vunpack.c.h.b16 %v10852
    %v11631 = vunpack.c.l.b16 %v10853
    %v11632 = vunpack.c.h.b16 %v10853
    %v11633 = vunpack.c.l.b16 %v10854
    %v11634 = vunpack.c.h.b16 %v10854
    %v11635 = vunpack.c.l.b16 %v10855
    %v11636 = vunpack.c.h.b16 %v10855
    %v11637 = vunpack.c.l.b16 %v10856
    %v11638 = vunpack.c.h.b16 %v10856
    %v11639 = vunpack.c.l.b16 %v10857
    %v11640 = vunpack.c.h.b16 %v10857
    %v11641 = vunpack.c.l.b16 %v10858
    %v11642 = vunpack.c.h.b16 %v10858
    %v11643 = vunpack.c.l.b16 %v10859
    %v11644 = vunpack.c.h.b16 %v10859
    %v11645 = vunpack.c.l.b16 %v10860
    %v11646 = vunpack.c.h.b16 %v10860
    %v11647 = vunpack.c.l.b16 %v10861
    %v11648 = vunpack.c.h.b16 %v10861
    %v11649 = vunpack.c.l.b16 %v10862
    %v11650 = vunpack.c.h.b16 %v10862
    %v11651 = vunpack.c.l.b16 %v10863
    %v11652 = vunpack.c.h.b16 %v10863
    %v11653 = vunpack.c.l.b16 %v10864
    %v11654 = vunpack.c.h.b16 %v10864
    %v11655 = vunpack.c.l.b16 %v10865
    %v11656 = vunpack.c.h.b16 %v10865
    %v11657 = vunpack.c.l.b16 %v10866
    %v11658 = vunpack.c.h.b16 %v10866
    %v11659 = vunpack.c.l.b16 %v10867
    %v11660 = vunpack.c.h.b16 %v10867
    %v11661 = vunpack.c.l.b16 %v10868
    %v11662 = vunpack.c.h.b16 %v10868
    %v11663 = vunpack.c.l.b16 %v10869
    %v11664 = vunpack.c.h.b16 %v10869
    %v11665 = vunpack.c.l.b16 %v10870
    %v11666 = vunpack.c.h.b16 %v10870
    %v11667 = vunpack.c.l.b16 %v10871
    %v11668 = vunpack.c.h.b16 %v10871
    %v11669 = vunpack.c.l.b16 %v10872
    %v11670 = vunpack.c.h.b16 %v10872
    %v11671 = vunpack.c.l.b16 %v10873
    %v11672 = vunpack.c.h.b16 %v10873
    %v11673 = vunpack.c.l.b16 %v10874
    %v11674 = vunpack.c.h.b16 %v10874
    %v11675 = vunpack.c.l.b16 %v10875
    %v11676 = vunpack.c.h.b16 %v10875
    %v11677 = vunpack.c.l.b16 %v10876
    %v11678 = vunpack.c.h.b16 %v10876
    %v11679 = vunpack.c.l.b16 %v10877
    %v11680 = vunpack.c.h.b16 %v10877
    %v11681 = vunpack.c.l.b16 %v10878
    %v11682 = vunpack.c.h.b16 %v10878
    %v11683 = vunpack.c.l.b16 %v10879
    %v11684 = vunpack.c.h.b16 %v10879
    %v11685 = vunpack.c.l.b16 %v10880
    %v11686 = vunpack.c.h.b16 %v10880
    %v11687 = vunpack.c.l.b16 %v10881
    %v11688 = vunpack.c.h.b16 %v10881
    %v11689 = vunpack.c.l.b16 %v10882
    %v11690 = vunpack.c.h.b16 %v10882
    %v11691 = vunpack.c.l.b16 %v10883
    %v11692 = vunpack.c.h.b16 %v10883
    %v11693 = vunpack.c.l.b16 %v10884
    %v11694 = vunpack.c.h.b16 %v10884
    %v11695 = vunpack.c.l.b16 %v10885
    %v11696 = vunpack.c.h.b16 %v10885
    %v11697 = vunpack.c.l.b16 %v10886
    %v11698 = vunpack.c.h.b16 %v10886
    %v11699 = vunpack.c.l.b16 %v10887
    %v11700 = vunpack.c.h.b16 %v10887
    %v11701 = vunpack.c.l.b16 %v10888
    %v11702 = vunpack.c.h.b16 %v10888
    %v11703 = vunpack.c.l.b16 %v10889
    %v11704 = vunpack.c.h.b16 %v10889
    %v11705 = vunpack.c.l.b16 %v10890
    %v11706 = vunpack.c.h.b16 %v10890
    %v11707 = vunpack.c.l.b16 %v10891
    %v11708 = vunpack.c.h.b16 %v10891
    %v11709 = vunpack.c.l.b16 %v10892
    %v11710 = vunpack.c.h.b16 %v10892
    %v11711 = vunpack.c.l.b16 %v10893
    %v11712 = vunpack.c.h.b16 %v10893
    %v11713 = vunpack.c.l.b16 %v10894
    %v11714 = vunpack.c.h.b16 %v10894
    %v11715 = vunpack.c.l.b16 %v10895
    %v11716 = vunpack.c.h.b16 %v10895
    %v11717 = vunpack.c.l.b16 %v10896
    %v11718 = vunpack.c.h.b16 %v10896
    %v11719 = vunpack.c.l.b16 %v10897
    %v11720 = vunpack.c.h.b16 %v10897
    %v11721 = vunpack.c.l.b16 %v10898
    %v11722 = vunpack.c.h.b16 %v10898
    %v11723 = vunpack.c.l.b16 %v10899
    %v11724 = vunpack.c.h.b16 %v10899
    %v11725 = vunpack.c.l.b16 %v10900
    %v11726 = vunpack.c.h.b16 %v10900
    %v11727 = vunpack.c.l.b16 %v10901
    %v11728 = vunpack.c.h.b16 %v10901
    %v11729 = vunpack.c.l.b16 %v10902
    %v11730 = vunpack.c.h.b16 %v10902
    %v11731 = vunpack.c.l.b16 %v10903
    %v11732 = vunpack.c.h.b16 %v10903
    %v11733 = vunpack.c.l.b16 %v10904
    %v11734 = vunpack.c.h.b16 %v10904
    %v11735 = vunpack.c.l.b16 %v10905
    %v11736 = vpack.c.b16 %v11183, %v11183
    %v11737 = vpack.c.b16 %v11184, %v11184
    %v11738 = vpack.c.b16 %v11185, %v11185
    %v11739 = vpack.c.b16 %v11186, %v11186
    %v11740 = vpack.c.b16 %v11187, %v11187
    %v11741 = vpack.c.b16 %v11188, %v11188
    %v11742 = vpack.c.b16 %v11189, %v11189
    %v11743 = vpack.c.b16 %v11190, %v11190
    %v11744 = vpack.c.b16 %v11191, %v11191
    %v11745 = vpack.c.b16 %v11192, %v11192
    %v11746 = vpack.c.b16 %v11193, %v11193
    %v11747 = vpack.c.b16 %v11194, %v11194
    %v11748 = vpack.c.b16 %v11195, %v11195
    %v11749 = vpack.c.b16 %v11196, %v11196
    %v11750 = vpack.c.b16 %v11197, %v11197
    %v11751 = vpack.c.b16 %v11198, %v11198
    %v11752 = vpack.c.b16 %v11199, %v11199
    %v11753 = vpack.c.b16 %v11200, %v11200
    %v11754 = vpack.c.b16 %v11201, %v11201
    %v11755 = vpack.c.b16 %v11202, %v11202
    %v11756 = vpack.c.b16 %v11203, %v11203
    %v11757 = vpack.c.b16 %v11204, %v11204
    %v11758 = vpack.c.b16 %v11205, %v11205
    %v11759 = vpack.c.b16 %v11206, %v11206
    %v11760 = vpack.c.b16 %v11207, %v11207
    %v11761 = vpack.c.b16 %v11208, %v11208
    %v11762 = vpack.c.b16 %v11209, %v11209
    %v11763 = vpack.c.b16 %v11210, %v11210
    %v11764 = vpack.c.b16 %v11211, %v11211
    %v11765 = vpack.c.b16 %v11212, %v11212
    %v11766 = vpack.c.b16 %v11213, %v11213
    %v11767 = vpack.c.b16 %v11214, %v11214
    %v11768 = vpack.c.b16 %v11215, %v11215
    %v11769 = vpack.c.b16 %v11216, %v11216
    %v11770 = vpack.c.b16 %v11217, %v11217
    %v11771 = vpack.c.b16 %v11218, %v11218
    %v11772 = vpack.c.b16 %v11219, %v11219
    %v11773 = vpack.c.b16 %v11220, %v11220
    %v11774 = vpack.c.b16 %v11221, %v11221
    %v11775 = vpack.c.b16 %v11222, %v11222
    %v11776 = vpack.c.b16 %v11223, %v11223
    %v11777 = vpack.c.b16 %v11224, %v11224
    %v11778 = vpack.c.b16 %v11225, %v11225
    %v11779 = vpack.c.b16 %v11226, %v11226
    %v11780 = vpack.c.b16 %v11227, %v11227
    %v11781 = vpack.c.b16 %v11228, %v11228
    %v11782 = vpack.c.b16 %v11229, %v11229
    %v11783 = vpack.c.b16 %v11230, %v11230
    %v11784 = vpack.c.b16 %v11231, %v11231
    %v11785 = vpack.c.b16 %v11232, %v11232
    %v11786 = vpack.c.b16 %v11233, %v11233
    %v11787 = vpack.c.b16 %v11234, %v11234
    %v11788 = vpack.c.b16 %v11235, %v11235
    %v11789 = vpack.c.b16 %v11236, %v11236
    %v11790 = vpack.c.b16 %v11237, %v11237
    %v11791 = vpack.c.b16 %v11238, %v11238
    %v11792 = vpack.c.b16 %v11239, %v11239
    %v11793 = vpack.c.b16 %v11240, %v11240
    %v11794 = vpack.c.b16 %v11241, %v11241
    %v11795 = vpack.c.b16 %v11242, %v11242
    %v11796 = vpack.c.b16 %v11243, %v11243
    %v11797 = vpack.c.b16 %v11244, %v11244
    %v11798 = vpack.c.b16 %v11245, %v11245
    %v11799 = vpack.c.b16 %v11246, %v11246
    %v11800 = vpack.c.b16 %v11247, %v11247
    %v11801 = vpack.c.b16 %v11248, %v11248
    %v11802 = vpack.c.b16 %v11249, %v11249
    %v11803 = vpack.c.b16 %v11250, %v11250
    %v11804 = vpack.c.b16 %v11251, %v11251
    %v11805 = vpack.c.b16 %v11252, %v11252
    %v11806 = vpack.c.b16 %v11253, %v11253
    %v11807 = vpack.c.b16 %v11254, %v11254
    %v11808 = vpack.c.b16 %v11255, %v11255
    %v11809 = vpack.c.b16 %v11256, %v11256
    %v11810 = vpack.c.b16 %v11257, %v11257
    %v11811 = vpack.c.b16 %v11258, %v11258
    %v11812 = vpack.c.b16 %v11259, %v11259
    %v11813 = vpack.c.b16 %v11260, %v11260
    %v11814 = vpack.c.b16 %v11261, %v11261
    %v11815 = vpack.c.b16 %v11262, %v11262
    %v11816 = vpack.c.b16 %v11263, %v11263
    %v11817 = vpack.c.b16 %v11264, %v11264
    %v11818 = vpack.c.b16 %v11265, %v11265
    %v11819 = vpack.c.b16 %v11266, %v11266
    %v11820 = vpack.c.b16 %v11267, %v11267
    %v11821 = vpack.c.b16 %v11268, %v11268
    %v11822 = vpack.c.b16 %v11269, %v11269
    %v11823 = vpack.c.b16 %v11270, %v11270
    %v11824 = vpack.c.b16 %v11271, %v11271
    %v11825 = vpack.c.b16 %v11272, %v11272
    %v11826 = vpack.c.b16 %v11273, %v11273
    %v11827 = vpack.c.b16 %v11274, %v11274
    %v11828 = vpack.c.b16 %v11275, %v11275
    %v11829 = vpack.c.b16 %v11276, %v11276
    %v11830 = vpack.c.b16 %v11277, %v11277
    %v11831 = vpack.c.b16 %v11278, %v11278
    %v11832 = vpack.c.b16 %v11279, %v11279
    %v11833 = vpack.c.b16 %v11280, %v11280
    %v11834 = vpack.c.b16 %v11281, %v11281
    %v11835 = vpack.c.b16 %v11282, %v11282
    %v11836 = vpack.c.b16 %v11283, %v11283
    %v11837 = vpack.c.b16 %v11284, %v11284
    %v11838 = vpack.c.b16 %v11285, %v11285
    %v11839 = vpack.c.b16 %v11286, %v11286
    %v11840 = vpack.c.b16 %v11287, %v11287
    %v11841 = vpack.c.b16 %v11288, %v11288
    %v11842 = vpack.c.b16 %v11289, %v11289
    %v11843 = vpack.c.b16 %v11290, %v11290
    %v11844 = vpack.c.b16 %v11291, %v11291
    %v11845 = vpack.c.b16 %v11292, %v11292
    %v11846 = vpack.c.b16 %v11293, %v11293
    %v11847 = vpack.c.b16 %v11294, %v11294
    %v11848 = vpack.c.b16 %v11295, %v11295
    %v11849 = vpack.c.b16 %v11296, %v11296
    %v11850 = vpack.c.b16 %v11297, %v11297
    %v11851 = vpack.c.b16 %v11298, %v11298
    %v11852 = vpack.c.b16 %v11299, %v11299
    %v11853 = vpack.c.b16 %v11300, %v11300
    %v11854 = vpack.c.b16 %v11301, %v11301
    %v11855 = vpack.c.b16 %v11302, %v11302
    %v11856 = vpack.c.b16 %v11303, %v11303
    %v11857 = vpack.c.b16 %v11304, %v11304
    %v11858 = vpack.c.b16 %v11305, %v11305
    %v11859 = vpack.c.b16 %v11306, %v11306
    %v11860 = vpack.c.b16 %v11307, %v11307
    %v11861 = vpack.c.b16 %v11308, %v11308
    %v11862 = vpack.c.b16 %v11309, %v11309
    %v11863 = vpack.c.b16 %v11310, %v11310
    %v11864 = vpack.c.b16 %v11311, %v11311
    %v11865 = vpack.c.b16 %v11312, %v11312
    %v11866 = vpack.c.b16 %v11313, %v11313
    %v11867 = vpack.c.b16 %v11314, %v11314
    %v11868 = vpack.c.b16 %v11315, %v11315
    %v11869 = vpack.c.b16 %v11316, %v11316
    %v11870 = vpack.c.b16 %v11317, %v11317
    %v11871 = vpack.c.b16 %v11318, %v11318
    %v11872 = vpack.c.b16 %v11319, %v11319
    %v11873 = vpack.c.b16 %v11320, %v11320
    %v11874 = vpack.c.b16 %v11321, %v11321
    %v11875 = vpack.c.b16 %v11322, %v11322
    %v11876 = vpack.c.b16 %v11323, %v11323
    %v11877 = vpack.c.b16 %v11324, %v11324
    %v11878 = vpack.c.b16 %v11325, %v11325
    %v11879 = vpack.c.b16 %v11326, %v11326
    %v11880 = vpack.c.b16 %v11327, %v11327
    %v11881 = vpack.c.b16 %v11328, %v11328
    %v11882 = vpack.c.b16 %v11329, %v11329
    %v11883 = vpack.c.b16 %v11330, %v11330
    %v11884 = vpack.c.b16 %v11331, %v11331
    %v11885 = vpack.c.b16 %v11332, %v11332
    %v11886 = vpack.c.b16 %v11333, %v11333
    %v11887 = vpack.c.b16 %v11334, %v11334
    %v11888 = vpack.c.b16 %v11335, %v11335
    %v11889 = vpack.c.b16 %v11336, %v11336
    %v11890 = vpack.c.b16 %v11337, %v11337
    %v11891 = vpack.c.b16 %v11338, %v11338
    %v11892 = vpack.c.b16 %v11339, %v11339
    %v11893 = vpack.c.b16 %v11340, %v11340
    %v11894 = vpack.c.b16 %v11341, %v11341
    %v11895 = vpack.c.b16 %v11342, %v11342
    %v11896 = vpack.c.b16 %v11343, %v11343
    %v11897 = vpack.c.b16 %v11344, %v11344
    %v11898 = vpack.c.b16 %v11345, %v11345
    %v11899 = vpack.c.b16 %v11346, %v11346
    %v11900 = vpack.c.b16 %v11347, %v11347
    %v11901 = vpack.c.b16 %v11348, %v11348
    %v11902 = vpack.c.b16 %v11349, %v11349
    %v11903 = vpack.c.b16 %v11350, %v11350
    %v11904 = vpack.c.b16 %v11351, %v11351
    %v11905 = vpack.c.b16 %v11352, %v11352
    %v11906 = vpack.c.b16 %v11353, %v11353
    %v11907 = vpack.c.b16 %v11354, %v11354
    %v11908 = vpack.c.b16 %v11355, %v11355
    %v11909 = vpack.c.b16 %v11356, %v11356
    %v11910 = vpack.c.b16 %v11357, %v11357
    %v11911 = vpack.c.b16 %v11358, %v11358
    %v11912 = vpack.c.b16 %v11359, %v11359
    %v11913 = vpack.c.b16 %v11360, %v11360
    %v11914 = vpack.c.b16 %v11361, %v11361
    %v11915 = vpack.c.b16 %v11362, %v11362
    %v11916 = vpack.c.b16 %v11363, %v11363
    %v11917 = vpack.c.b16 %v11364, %v11364
    %v11918 = vpack.c.b16 %v11365, %v11365
    %v11919 = vpack.c.b16 %v11366, %v11366
    %v11920 = vpack.c.b16 %v11367, %v11367
    %v11921 = vpack.c.b16 %v11368, %v11368
    %v11922 = vpack.c.b16 %v11369, %v11369
    %v11923 = vpack.c.b16 %v11370, %v11370
    %v11924 = vpack.c.b16 %v11371, %v11371
    %v11925 = vpack.c.b16 %v11372, %v11372
    %v11926 = vpack.c.b16 %v11373, %v11373
    %v11927 = vpack.c.b16 %v11374, %v11374
    %v11928 = vpack.c.b16 %v11375, %v11375
    %v11929 = vpack.c.b16 %v11376, %v11376
    %v11930 = vpack.c.b16 %v11377, %v11377
    %v11931 = vpack.c.b16 %v11378, %v11378
    %v11932 = vpack.c.b16 %v11379, %v11379
    %v11933 = vpack.c.b16 %v11380, %v11380
    %v11934 = vpack.c.b16 %v11381, %v11381
    %v11935 = vpack.c.b16 %v11382, %v11382
    %v11936 = vpack.c.b16 %v11383, %v11383
    %v11937 = vpack.c.b16 %v11384, %v11384
    %v11938 = vpack.c.b16 %v11385, %v11385
    %v11939 = vpack.c.b16 %v11386, %v11386
    %v11940 = vpack.c.b16 %v11387, %v11387
    %v11941 = vpack.c.b16 %v11388, %v11388
    %v11942 = vpack.c.b16 %v11389, %v11389
    %v11943 = vpack.c.b16 %v11390, %v11390
    %v11944 = vpack.c.b16 %v11391, %v11391
    %v11945 = vpack.c.b16 %v11392, %v11392
    %v11946 = vpack.c.b16 %v11393, %v11393
    %v11947 = vpack.c.b16 %v11394, %v11394
    %v11948 = vpack.c.b16 %v11395, %v11395
    %v11949 = vpack.c.b16 %v11396, %v11396
    %v11950 = vpack.c.b16 %v11397, %v11397
    %v11951 = vpack.c.b16 %v11398, %v11398
    %v11952 = vpack.c.b16 %v11399, %v11399
    %v11953 = vpack.c.b16 %v11400, %v11400
    %v11954 = vpack.c.b16 %v11401, %v11401
    %v11955 = vpack.c.b16 %v11402, %v11402
    %v11956 = vpack.c.b16 %v11403, %v11403
    %v11957 = vpack.c.b16 %v11404, %v11404
    %v11958 = vpack.c.b16 %v11405, %v11405
    %v11959 = vpack.c.b16 %v11406, %v11406
    %v11960 = vpack.c.b16 %v11407, %v11407
    %v11961 = vpack.c.b16 %v11408, %v11408
    %v11962 = vpack.c.b16 %v11409, %v11409
    %v11963 = vpack.c.b16 %v11410, %v11410
    %v11964 = vpack.c.b16 %v11411, %v11411
    %v11965 = vpack.c.b16 %v11412, %v11412
    %v11966 = vpack.c.b16 %v11413, %v11413
    %v11967 = vpack.c.b16 %v11414, %v11414
    %v11968 = vpack.c.b16 %v11415, %v11415
    %v11969 = vpack.c.b16 %v11416, %v11416
    %v11970 = vpack.c.b16 %v11417, %v11417
    %v11971 = vpack.c.b16 %v11418, %v11418
    %v11972 = vpack.c.b16 %v11419, %v11419
    %v11973 = vpack.c.b16 %v11420, %v11420
    %v11974 = vpack.c.b16 %v11421, %v11421
    %v11975 = vpack.c.b16 %v11422, %v11422
    %v11976 = vpack.c.b16 %v11423, %v11423
    %v11977 = vpack.c.b16 %v11424, %v11424
    %v11978 = vpack.c.b16 %v11425, %v11425
    %v11979 = vpack.c.b16 %v11426, %v11426
    %v11980 = vpack.c.b16 %v11427, %v11427
    %v11981 = vpack.c.b16 %v11428, %v11428
    %v11982 = vpack.c.b16 %v11429, %v11429
    %v11983 = vpack.c.b16 %v11430, %v11430
    %v11984 = vpack.c.b16 %v11431, %v11431
    %v11985 = vpack.c.b16 %v11432, %v11432
    %v11986 = vpack.c.b16 %v11433, %v11433
    %v11987 = vpack.c.b16 %v11434, %v11434
    %v11988 = vpack.c.b16 %v11435, %v11435
    %v11989 = vpack.c.b16 %v11436, %v11436
    %v11990 = vpack.c.b16 %v11437, %v11437
    %v11991 = vpack.c.b16 %v11438, %v11438
    %v11992 = vpack.c.b16 %v11439, %v11439
    %v11993 = vpack.c.b16 %v11440, %v11440
    %v11994 = vpack.c.b16 %v11441, %v11441
    %v11995 = vpack.c.b16 %v11442, %v11442
    %v11996 = vpack.c.b16 %v11443, %v11443
    %v11997 = vpack.c.b16 %v11444, %v11444
    %v11998 = vpack.c.b16 %v11445, %v11445
    %v11999 = vpack.c.b16 %v11446, %v11446
    %v12000 = vpack.c.b16 %v11447, %v11447
    %v12001 = vpack.c.b16 %v11448, %v11448
    %v12002 = vpack.c.b16 %v11449, %v11449
    %v12003 = vpack.c.b16 %v11450, %v11450
    %v12004 = vpack.c.b16 %v11451, %v11451
    %v12005 = vpack.c.b16 %v11452, %v11452
    %v12006 = vpack.c.b16 %v11453, %v11453
    %v12007 = vpack.c.b16 %v11454, %v11454
    %v12008 = vpack.c.b16 %v11455, %v11455
    %v12009 = vpack.c.b16 %v11456, %v11456
    %v12010 = vpack.c.b16 %v11457, %v11457
    %v12011 = vpack.c.b16 %v11458, %v11458
    %v12012 = vpack.c.b16 %v11459, %v11459
    %v12013 = vpack.c.b16 %v11460, %v11460
    %v12014 = vpack.c.b16 %v11461, %v11461
    %v12015 = vpack.c.b16 %v11462, %v11462
    %v12016 = vpack.c.b16 %v11463, %v11463
    %v12017 = vpack.c.b16 %v11464, %v11464
    %v12018 = vpack.c.b16 %v11465, %v11465
    %v12019 = vpack.c.b16 %v11466, %v11466
    %v12020 = vpack.c.b16 %v11467, %v11467
    %v12021 = vpack.c.b16 %v11468, %v11468
    %v12022 = vpack.c.b16 %v11469, %v11469
    %v12023 = vpack.c.b16 %v11470, %v11470
    %v12024 = vpack.c.b16 %v11471, %v11471
    %v12025 = vpack.c.b16 %v11472, %v11472
    %v12026 = vpack.c.b16 %v11473, %v11473
    %v12027 = vpack.c.b16 %v11474, %v11474
    %v12028 = vpack.c.b16 %v11475, %v11475
    %v12029 = vpack.c.b16 %v11476, %v11476
    %v12030 = vpack.c.b16 %v11477, %v11477
    %v12031 = vpack.c.b16 %v11478, %v11478
    %v12032 = vpack.c.b16 %v11479, %v11479
    %v12033 = vpack.c.b16 %v11480, %v11480
    %v12034 = vpack.c.b16 %v11481, %v11481
    %v12035 = vpack.c.b16 %v11482, %v11482
    %v12036 = vpack.c.b16 %v11483, %v11483
    %v12037 = vpack.c.b16 %v11484, %v11484
    %v12038 = vpack.c.b16 %v11485, %v11485
    %v12039 = vpack.c.b16 %v11486, %v11486
    %v12040 = vpack.c.b16 %v11487, %v11487
    %v12041 = vpack.c.b16 %v11488, %v11488
    %v12042 = vpack.c.b16 %v11489, %v11489
    %v12043 = vpack.c.b16 %v11490, %v11490
    %v12044 = vpack.c.b16 %v11491, %v11491
    %v12045 = vpack.c.b16 %v11492, %v11492
    %v12046 = vpack.c.b16 %v11493, %v11493
    %v12047 = vpack.c.b16 %v11494, %v11494
    %v12048 = vpack.c.b16 %v11495, %v11495
    %v12049 = vpack.c.b16 %v11496, %v11496
    %v12050 = vpack.c.b16 %v11497, %v11497
    %v12051 = vpack.c.b16 %v11498, %v11498
    %v12052 = vpack.c.b16 %v11499, %v11499
    %v12053 = vpack.c.b16 %v11500, %v11500
    %v12054 = vpack.c.b16 %v11501, %v11501
    %v12055 = vpack.c.b16 %v11502, %v11502
    %v12056 = vpack.c.b16 %v11503, %v11503
    %v12057 = vpack.c.b16 %v11504, %v11504
    %v12058 = vpack.c.b16 %v11505, %v11505
    %v12059 = vpack.c.b16 %v11506, %v11506
    %v12060 = vpack.c.b16 %v11507, %v11507
    %v12061 = vpack.c.b16 %v11508, %v11508
    %v12062 = vpack.c.b16 %v11509, %v11509
    %v12063 = vpack.c.b16 %v11510, %v11510
    %v12064 = vpack.c.b16 %v11511, %v11511
    %v12065 = vpack.c.b16 %v11512, %v11512
    %v12066 = vpack.c.b16 %v11513, %v11513
    %v12067 = vpack.c.b16 %v11514, %v11514
    %v12068 = vpack.c.b16 %v11515, %v11515
    %v12069 = vpack.c.b16 %v11516, %v11516
    %v12070 = vpack.c.b16 %v11517, %v11517
    %v12071 = vpack.c.b16 %v11518, %v11518
    %v12072 = vpack.c.b16 %v11519, %v11519
    %v12073 = vpack.c.b16 %v11520, %v11520
    %v12074 = vpack.c.b16 %v11521, %v11521
    %v12075 = vpack.c.b16 %v11522, %v11522
    %v12076 = vpack.c.b16 %v11523, %v11523
    %v12077 = vpack.c.b16 %v11524, %v11524
    %v12078 = vpack.c.b16 %v11525, %v11525
    %v12079 = vpack.c.b16 %v11526, %v11526
    %v12080 = vpack.c.b16 %v11527, %v11527
    %v12081 = vpack.c.b16 %v11528, %v11528
    %v12082 = vpack.c.b16 %v11529, %v11529
    %v12083 = vpack.c.b16 %v11530, %v11530
    %v12084 = vpack.c.b16 %v11531, %v11531
    %v12085 = vpack.c.b16 %v11532, %v11532
    %v12086 = vpack.c.b16 %v11533, %v11533
    %v12087 = vpack.c.b16 %v11534, %v11534
    %v12088 = vpack.c.b16 %v11535, %v11535
    %v12089 = vpack.c.b16 %v11536, %v11536
    %v12090 = vpack.c.b16 %v11537, %v11537
    %v12091 = vpack.c.b16 %v11538, %v11538
    %v12092 = vpack.c.b16 %v11539, %v11539
    %v12093 = vpack.c.b16 %v11540, %v11540
    %v12094 = vpack.c.b16 %v11541, %v11541
    %v12095 = vpack.c.b16 %v11542, %v11542
    %v12096 = vpack.c.b16 %v11543, %v11543
    %v12097 = vpack.c.b16 %v11544, %v11544
    %v12098 = vpack.c.b16 %v11545, %v11545
    %v12099 = vpack.c.b16 %v11546, %v11546
    %v12100 = vpack.c.b16 %v11547, %v11547
    %v12101 = vpack.c.b16 %v11548, %v11548
    %v12102 = vpack.c.b16 %v11549, %v11549
    %v12103 = vpack.c.b16 %v11550, %v11550
    %v12104 = vpack.c.b16 %v11551, %v11551
    %v12105 = vpack.c.b16 %v11552, %v11552
    %v12106 = vpack.c.b16 %v11553, %v11553
    %v12107 = vpack.c.b16 %v11554, %v11554
    %v12108 = vpack.c.b16 %v11555, %v11555
    %v12109 = vpack.c.b16 %v11556, %v11556
    %v12110 = vpack.c.b16 %v11557, %v11557
    %v12111 = vpack.c.b16 %v11558, %v11558
    %v12112 = vpack.c.b16 %v11559, %v11559
    %v12113 = vpack.c.b16 %v11560, %v11560
    %v12114 = vpack.c.b16 %v11561, %v11561
    %v12115 = vpack.c.b16 %v11562, %v11562
    %v12116 = vpack.c.b16 %v11563, %v11563
    %v12117 = vpack.c.b16 %v11564, %v11564
    %v12118 = vpack.c.b16 %v11565, %v11565
    %v12119 = vpack.c.b16 %v11566, %v11566
    %v12120 = vpack.c.b16 %v11567, %v11567
    %v12121 = vpack.c.b16 %v11568, %v11568
    %v12122 = vpack.c.b16 %v11569, %v11569
    %v12123 = vpack.c.b16 %v11570, %v11570
    %v12124 = vpack.c.b16 %v11571, %v11571
    %v12125 = vpack.c.b16 %v11572, %v11572
    %v12126 = vpack.c.b16 %v11573, %v11573
    %v12127 = vpack.c.b16 %v11574, %v11574
    %v12128 = vpack.c.b16 %v11575, %v11575
    %v12129 = vpack.c.b16 %v11576, %v11576
    %v12130 = vpack.c.b16 %v11577, %v11577
    %v12131 = vpack.c.b16 %v11578, %v11578
    %v12132 = vpack.c.b16 %v11579, %v11579
    %v12133 = vpack.c.b16 %v11580, %v11580
    %v12134 = vpack.c.b16 %v11581, %v11581
    %v12135 = vpack.c.b16 %v11582, %v11582
    %v12136 = vpack.c.b16 %v11583, %v11583
    %v12137 = vpack.c.b16 %v11584, %v11584
    %v12138 = vpack.c.b16 %v11585, %v11585
    %v12139 = vpack.c.b16 %v11586, %v11586
    %v12140 = vpack.c.b16 %v11587, %v11587
    %v12141 = vpack.c.b16 %v11588, %v11588
    %v12142 = vpack.c.b16 %v11589, %v11589
    %v12143 = vpack.c.b16 %v11590, %v11590
    %v12144 = vpack.c.b16 %v11591, %v11591
    %v12145 = vpack.c.b16 %v11592, %v11592
    %v12146 = vpack.c.b16 %v11593, %v11593
    %v12147 = vpack.c.b16 %v11594, %v11594
    %v12148 = vpack.c.b16 %v11595, %v11595
    %v12149 = vpack.c.b16 %v11596, %v11596
    %v12150 = vpack.c.b16 %v11597, %v11597
    %v12151 = vpack.c.b16 %v11598, %v11598
    %v12152 = vpack.c.b16 %v11599, %v11599
    %v12153 = vpack.c.b16 %v11600, %v11600
    %v12154 = vpack.c.b16 %v11601, %v11601
    %v12155 = vpack.c.b16 %v11602, %v11602
    %v12156 = vpack.c.b16 %v11603, %v11603
    %v12157 = vpack.c.b16 %v11604, %v11604
    %v12158 = vpack.c.b16 %v11605, %v11605
    %v12159 = vpack.c.b16 %v11606, %v11606
    %v12160 = vpack.c.b16 %v11607, %v11607
    %v12161 = vpack.c.b16 %v11608, %v11608
    %v12162 = vpack.c.b16 %v11609, %v11609
    %v12163 = vpack.c.b16 %v11610, %v11610
    %v12164 = vpack.c.b16 %v11611, %v11611
    %v12165 = vpack.c.b16 %v11612, %v11612
    %v12166 = vpack.c.b16 %v11613, %v11613
    %v12167 = vpack.c.b16 %v11614, %v11614
    %v12168 = vpack.c.b16 %v11615, %v11615
    %v12169 = vpack.c.b16 %v11616, %v11616
    %v12170 = vpack.c.b16 %v11617, %v11617
    %v12171 = vpack.c.b16 %v11618, %v11618
    %v12172 = vpack.c.b16 %v11619, %v11619
    %v12173 = vpack.c.b16 %v11620, %v11620
    %v12174 = vpack.c.b16 %v11621, %v11621
    %v12175 = vpack.c.b16 %v11622, %v11622
    %v12176 = vpack.c.b16 %v11623, %v11623
    %v12177 = vpack.c.b16 %v11624, %v11624
    %v12178 = vpack.c.b16 %v11625, %v11625
    %v12179 = vpack.c.b16 %v11626, %v11626
    %v12180 = vpack.c.b16 %v11627, %v11627
    %v12181 = vpack.c.b16 %v11628, %v11628
    %v12182 = vpack.c.b16 %v11629, %v11629
    %v12183 = vpack.c.b16 %v11630, %v11630
    %v12184 = vpack.c.b16 %v11631, %v11631
    %v12185 = vpack.c.b16 %v11632, %v11632
    %v12186 = vpack.c.b16 %v11633, %v11633
    %v12187 = vpack.c.b16 %v11634, %v11634
    %v12188 = vpack.c.b16 %v11635, %v11635
    %v12189 = vpack.c.b16 %v11636, %v11636
    %v12190 = vpack.c.b16 %v11637, %v11637
    %v12191 = vpack.c.b16 %v11638, %v11638
    %v12192 = vpack.c.b16 %v11639, %v11639
    %v12193 = vpack.c.b16 %v11640, %v11640
    %v12194 = vpack.c.b16 %v11641, %v11641
    %v12195 = vpack.c.b16 %v11642, %v11642
    %v12196 = vpack.c.b16 %v11643, %v11643
    %v12197 = vpack.c.b16 %v11644, %v11644
    %v12198 = vpack.c.b16 %v11645, %v11645
    %v12199 = vpack.c.b16 %v11646, %v11646
    %v12200 = vpack.c.b16 %v11647, %v11647
    %v12201 = vpack.c.b16 %v11648, %v11648
    %v12202 = vpack.c.b16 %v11649, %v11649
    %v12203 = vpack.c.b16 %v11650, %v11650
    %v12204 = vpack.c.b16 %v11651, %v11651
    %v12205 = vpack.c.b16 %v11652, %v11652
    %v12206 = vpack.c.b16 %v11653, %v11653
    %v12207 = vpack.c.b16 %v11654, %v11654
    %v12208 = vpack.c.b16 %v11655, %v11655
    %v12209 = vpack.c.b16 %v11656, %v11656
    %v12210 = vpack.c.b16 %v11657, %v11657
    %v12211 = vpack.c.b16 %v11658, %v11658
    %v12212 = vpack.c.b16 %v11659, %v11659
    %v12213 = vpack.c.b16 %v11660, %v11660
    %v12214 = vpack.c.b16 %v11661, %v11661
    %v12215 = vpack.c.b16 %v11662, %v11662
    %v12216 = vpack.c.b16 %v11663, %v11663
    %v12217 = vpack.c.b16 %v11664, %v11664
    %v12218 = vpack.c.b16 %v11665, %v11665
    %v12219 = vpack.c.b16 %v11666, %v11666
    %v12220 = vpack.c.b16 %v11667, %v11667
    %v12221 = vpack.c.b16 %v11668, %v11668
    %v12222 = vpack.c.b16 %v11669, %v11669
    %v12223 = vpack.c.b16 %v11670, %v11670
    %v12224 = vpack.c.b16 %v11671, %v11671
    %v12225 = vpack.c.b16 %v11672, %v11672
    %v12226 = vpack.c.b16 %v11673, %v11673
    %v12227 = vpack.c.b16 %v11674, %v11674
    %v12228 = vpack.c.b16 %v11675, %v11675
    %v12229 = vpack.c.b16 %v11676, %v11676
    %v12230 = vpack.c.b16 %v11677, %v11677
    %v12231 = vpack.c.b16 %v11678, %v11678
    %v12232 = vpack.c.b16 %v11679, %v11679
    %v12233 = vpack.c.b16 %v11680, %v11680
    %v12234 = vpack.c.b16 %v11681, %v11681
    %v12235 = vpack.c.b16 %v11682, %v11682
    %v12236 = vpack.c.b16 %v11683, %v11683
    %v12237 = vpack.c.b16 %v11684, %v11684
    %v12238 = vpack.c.b16 %v11685, %v11685
    %v12239 = vpack.c.b16 %v11686, %v11686
    %v12240 = vpack.c.b16 %v11687, %v11687
    %v12241 = vpack.c.b16 %v11688, %v11688
    %v12242 = vpack.c.b16 %v11689, %v11689
    %v12243 = vpack.c.b16 %v11690, %v11690
    %v12244 = vpack.c.b16 %v11691, %v11691
    %v12245 = vpack.c.b16 %v11692, %v11692
    %v12246 = vpack.c.b16 %v11693, %v11693
    %v12247 = vpack.c.b16 %v11694, %v11694
    %v12248 = vpack.c.b16 %v11695, %v11695
    %v12249 = vpack.c.b16 %v11696, %v11696
    %v12250 = vpack.c.b16 %v11697, %v11697
    %v12251 = vpack.c.b16 %v11698, %v11698
    %v12252 = vpack.c.b16 %v11699, %v11699
    %v12253 = vpack.c.b16 %v11700, %v11700
    %v12254 = vpack.c.b16 %v11701, %v11701
    %v12255 = vpack.c.b16 %v11702, %v11702
    %v12256 = vpack.c.b16 %v11703, %v11703
    %v12257 = vpack.c.b16 %v11704, %v11704
    %v12258 = vpack.c.b16 %v11705, %v11705
    %v12259 = vpack.c.b16 %v11706, %v11706
    %v12260 = vpack.c.b16 %v11707, %v11707
    %v12261 = vpack.c.b16 %v11708, %v11708
    %v12262 = vpack.c.b16 %v11709, %v11709
    %v12263 = vpack.c.b16 %v11710, %v11710
    %v12264 = vpack.c.b16 %v11711, %v11711
    %v12265 = vpack.c.b16 %v11712, %v11712
    %v12266 = vpack.c.b16 %v11713, %v11713
    %v12267 = vpack.c.b16 %v11714, %v11714
    %v12268 = vpack.c.b16 %v11715, %v11715
    %v12269 = vpack.c.b16 %v11716, %v11716
    %v12270 = vpack.c.b16 %v11717, %v11717
    %v12271 = vpack.c.b16 %v11718, %v11718
    %v12272 = vpack.c.b16 %v11719, %v11719
    %v12273 = vpack.c.b16 %v11720, %v11720
    %v12274 = vpack.c.b16 %v11721, %v11721
    %v12275 = vpack.c.b16 %v11722, %v11722
    %v12276 = vpack.c.b16 %v11723, %v11723
    %v12277 = vpack.c.b16 %v11724, %v11724
    %v12278 = vpack.c.b16 %v11725, %v11725
    %v12279 = vpack.c.b16 %v11726, %v11726
    %v12280 = vpack.c.b16 %v11727, %v11727
    %v12281 = vpack.c.b16 %v11728, %v11728
    %v12282 = vpack.c.b16 %v11729, %v11729
    %v12283 = vpack.c.b16 %v11730, %v11730
    %v12284 = vpack.c.b16 %v11731, %v11731
    %v12285 = vpack.c.b16 %v11732, %v11732
    %v12286 = vpack.c.b16 %v11733, %v11733
    %v12287 = vpack.c.b16 %v11734, %v11734
    %v12288 = vpack.c.b16 %v11735, %v11735
    %12842 = vst [vmem:[#allocation2] sm:$0xf] %v11736
    %12843 = vst [vmem:[#allocation2 + $0x4] sm:$0xf] %v11737
    %12844 = vst [vmem:[#allocation2 + $0x8] sm:$0xf] %v11738
    %12845 = vst [vmem:[#allocation2 + $0xc] sm:$0xf] %v11739
    %12846 = vst [vmem:[#allocation2 + $0x10] sm:$0xf] %v11740
    %12847 = vst [vmem:[#allocation2 + $0x14] sm:$0xf] %v11741
    %12848 = vst [vmem:[#allocation2 + $0x18] sm:$0xf] %v11742
    %12849 = vst [vmem:[#allocation2 + $0x1c] sm:$0xf] %v11743
    %12850 = vst [vmem:[#allocation2 + $0x20] sm:$0xf] %v11744
    %12851 = vst [vmem:[#allocation2 + $0x24] sm:$0xf] %v11745
    %12852 = vst [vmem:[#allocation2 + $0x28] sm:$0xf] %v11746
    %12853 = vst [vmem:[#allocation2 + $0x2c] sm:$0xf] %v11747
    %12854 = vst [vmem:[#allocation2 + $0x30] sm:$0xf] %v11748
    %12855 = vst [vmem:[#allocation2 + $0x34] sm:$0xf] %v11749
    %12856 = vst [vmem:[#allocation2 + $0x38] sm:$0xf] %v11750
    %12857 = vst [vmem:[#allocation2 + $0x3c] sm:$0xf] %v11751
    %12858 = vst [vmem:[#allocation2 + $0x40] sm:$0xf] %v11752
    %12859 = vst [vmem:[#allocation2 + $0x44] sm:$0xf] %v11753
    %12860 = vst [vmem:[#allocation2 + $0x48] sm:$0xf] %v11754
    %12861 = vst [vmem:[#allocation2 + $0x4c] sm:$0xf] %v11755
    %12862 = vst [vmem:[#allocation2 + $0x50] sm:$0xf] %v11756
    %12863 = vst [vmem:[#allocation2 + $0x54] sm:$0xf] %v11757
    %12864 = vst [vmem:[#allocation2 + $0x58] sm:$0xf] %v11758
    %12865 = vst [vmem:[#allocation2 + $0x5c] sm:$0xf] %v11759
    %12866 = vst [vmem:[#allocation2 + $0x60] sm:$0xf] %v11760
    %12867 = vst [vmem:[#allocation2 + $0x64] sm:$0xf] %v11761
    %12868 = vst [vmem:[#allocation2 + $0x68] sm:$0xf] %v11762
    %12869 = vst [vmem:[#allocation2 + $0x6c] sm:$0xf] %v11763
    %12870 = vst [vmem:[#allocation2 + $0x70] sm:$0xf] %v11764
    %12871 = vst [vmem:[#allocation2 + $0x74] sm:$0xf] %v11765
    %12872 = vst [vmem:[#allocation2 + $0x78] sm:$0xf] %v11766
    %12873 = vst [vmem:[#allocation2 + $0x7c] sm:$0xf] %v11767
    %12874 = vst [vmem:[#allocation2 + $0x80] sm:$0xf] %v11768
    %12875 = vst [vmem:[#allocation2 + $0x84] sm:$0xf] %v11769
    %12876 = vst [vmem:[#allocation2 + $0x88] sm:$0xf] %v11770
    %12877 = vst [vmem:[#allocation2 + $0x8c] sm:$0xf] %v11771
    %12878 = vst [vmem:[#allocation2 + $0x90] sm:$0xf] %v11772
    %12879 = vst [vmem:[#allocation2 + $0x94] sm:$0xf] %v11773
    %12880 = vst [vmem:[#allocation2 + $0x98] sm:$0xf] %v11774
    %12881 = vst [vmem:[#allocation2 + $0x9c] sm:$0xf] %v11775
    %12882 = vst [vmem:[#allocation2 + $0xa0] sm:$0xf] %v11776
    %12883 = vst [vmem:[#allocation2 + $0xa4] sm:$0xf] %v11777
    %12884 = vst [vmem:[#allocation2 + $0xa8] sm:$0xf] %v11778
    %12885 = vst [vmem:[#allocation2 + $0xac] sm:$0xf] %v11779
    %12886 = vst [vmem:[#allocation2 + $0xb0] sm:$0xf] %v11780
    %12887 = vst [vmem:[#allocation2 + $0xb4] sm:$0xf] %v11781
    %12888 = vst [vmem:[#allocation2 + $0xb8] sm:$0xf] %v11782
    %12889 = vst [vmem:[#allocation2 + $0xbc] sm:$0xf] %v11783
    %12890 = vst [vmem:[#allocation2 + $0xc0] sm:$0xf] %v11784
    %12891 = vst [vmem:[#allocation2 + $0xc4] sm:$0xf] %v11785
    %12892 = vst [vmem:[#allocation2 + $0xc8] sm:$0xf] %v11786
    %12893 = vst [vmem:[#allocation2 + $0xcc] sm:$0xf] %v11787
    %12894 = vst [vmem:[#allocation2 + $0xd0] sm:$0xf] %v11788
    %12895 = vst [vmem:[#allocation2 + $0xd4] sm:$0xf] %v11789
    %12896 = vst [vmem:[#allocation2 + $0xd8] sm:$0xf] %v11790
    %12897 = vst [vmem:[#allocation2 + $0xdc] sm:$0xf] %v11791
    %12898 = vst [vmem:[#allocation2 + $0xe0] sm:$0xf] %v11792
    %12899 = vst [vmem:[#allocation2 + $0xe4] sm:$0xf] %v11793
    %12900 = vst [vmem:[#allocation2 + $0xe8] sm:$0xf] %v11794
    %12901 = vst [vmem:[#allocation2 + $0xec] sm:$0xf] %v11795
    %12902 = vst [vmem:[#allocation2 + $0xf0] sm:$0xf] %v11796
    %12903 = vst [vmem:[#allocation2 + $0xf4] sm:$0xf] %v11797
    %12904 = vst [vmem:[#allocation2 + $0xf8] sm:$0xf] %v11798
    %12905 = vst [vmem:[#allocation2 + $0xfc] sm:$0xf] %v11799
    %12906 = vst [vmem:[#allocation2 + $0x100] sm:$0xf] %v11800
    %12907 = vst [vmem:[#allocation2 + $0x104] sm:$0xf] %v11801
    %12908 = vst [vmem:[#allocation2 + $0x108] sm:$0xf] %v11802
    %12909 = vst [vmem:[#allocation2 + $0x10c] sm:$0xf] %v11803
    %12910 = vst [vmem:[#allocation2 + $0x110] sm:$0xf] %v11804
    %12911 = vst [vmem:[#allocation2 + $0x114] sm:$0xf] %v11805
    %12912 = vst [vmem:[#allocation2 + $0x118] sm:$0xf] %v11806
    %12913 = vst [vmem:[#allocation2 + $0x11c] sm:$0xf] %v11807
    %12914 = vst [vmem:[#allocation2 + $0x120] sm:$0xf] %v11808
    %12915 = vst [vmem:[#allocation2 + $0x124] sm:$0xf] %v11809
    %12916 = vst [vmem:[#allocation2 + $0x128] sm:$0xf] %v11810
    %12917 = vst [vmem:[#allocation2 + $0x12c] sm:$0xf] %v11811
    %12918 = vst [vmem:[#allocation2 + $0x130] sm:$0xf] %v11812
    %12919 = vst [vmem:[#allocation2 + $0x134] sm:$0xf] %v11813
    %12920 = vst [vmem:[#allocation2 + $0x138] sm:$0xf] %v11814
    %12921 = vst [vmem:[#allocation2 + $0x13c] sm:$0xf] %v11815
    %12922 = vst [vmem:[#allocation2 + $0x140] sm:$0xf] %v11816
    %12923 = vst [vmem:[#allocation2 + $0x144] sm:$0xf] %v11817
    %12924 = vst [vmem:[#allocation2 + $0x148] sm:$0xf] %v11818
    %12925 = vst [vmem:[#allocation2 + $0x14c] sm:$0xf] %v11819
    %12926 = vst [vmem:[#allocation2 + $0x150] sm:$0xf] %v11820
    %12927 = vst [vmem:[#allocation2 + $0x154] sm:$0xf] %v11821
    %12928 = vst [vmem:[#allocation2 + $0x158] sm:$0xf] %v11822
    %12929 = vst [vmem:[#allocation2 + $0x15c] sm:$0xf] %v11823
    %12930 = vst [vmem:[#allocation2 + $0x160] sm:$0xf] %v11824
    %12931 = vst [vmem:[#allocation2 + $0x164] sm:$0xf] %v11825
    %12932 = vst [vmem:[#allocation2 + $0x168] sm:$0xf] %v11826
    %12933 = vst [vmem:[#allocation2 + $0x16c] sm:$0xf] %v11827
    %12934 = vst [vmem:[#allocation2 + $0x170] sm:$0xf] %v11828
    %12935 = vst [vmem:[#allocation2 + $0x174] sm:$0xf] %v11829
    %12936 = vst [vmem:[#allocation2 + $0x178] sm:$0xf] %v11830
    %12937 = vst [vmem:[#allocation2 + $0x17c] sm:$0xf] %v11831
    %12938 = vst [vmem:[#allocation2 + $0x180] sm:$0xf] %v11832
    %12939 = vst [vmem:[#allocation2 + $0x184] sm:$0xf] %v11833
    %12940 = vst [vmem:[#allocation2 + $0x188] sm:$0xf] %v11834
    %12941 = vst [vmem:[#allocation2 + $0x18c] sm:$0xf] %v11835
    %12942 = vst [vmem:[#allocation2 + $0x190] sm:$0xf] %v11836
    %12943 = vst [vmem:[#allocation2 + $0x194] sm:$0xf] %v11837
    %12944 = vst [vmem:[#allocation2 + $0x198] sm:$0xf] %v11838
    %12945 = vst [vmem:[#allocation2 + $0x19c] sm:$0xf] %v11839
    %12946 = vst [vmem:[#allocation2 + $0x1a0] sm:$0xf] %v11840
    %12947 = vst [vmem:[#allocation2 + $0x1a4] sm:$0xf] %v11841
    %12948 = vst [vmem:[#allocation2 + $0x1a8] sm:$0xf] %v11842
    %12949 = vst [vmem:[#allocation2 + $0x1ac] sm:$0xf] %v11843
    %12950 = vst [vmem:[#allocation2 + $0x1b0] sm:$0xf] %v11844
    %12951 = vst [vmem:[#allocation2 + $0x1b4] sm:$0xf] %v11845
    %12952 = vst [vmem:[#allocation2 + $0x1b8] sm:$0xf] %v11846
    %12953 = vst [vmem:[#allocation2 + $0x1bc] sm:$0xf] %v11847
    %12954 = vst [vmem:[#allocation2 + $0x1c0] sm:$0xf] %v11848
    %12955 = vst [vmem:[#allocation2 + $0x1c4] sm:$0xf] %v11849
    %12956 = vst [vmem:[#allocation2 + $0x1c8] sm:$0xf] %v11850
    %12957 = vst [vmem:[#allocation2 + $0x1cc] sm:$0xf] %v11851
    %12958 = vst [vmem:[#allocation2 + $0x1d0] sm:$0xf] %v11852
    %12959 = vst [vmem:[#allocation2 + $0x1d4] sm:$0xf] %v11853
    %12960 = vst [vmem:[#allocation2 + $0x1d8] sm:$0xf] %v11854
    %12961 = vst [vmem:[#allocation2 + $0x1dc] sm:$0xf] %v11855
    %12962 = vst [vmem:[#allocation2 + $0x1e0] sm:$0xf] %v11856
    %12963 = vst [vmem:[#allocation2 + $0x1e4] sm:$0xf] %v11857
    %12964 = vst [vmem:[#allocation2 + $0x1e8] sm:$0xf] %v11858
    %12965 = vst [vmem:[#allocation2 + $0x1ec] sm:$0xf] %v11859
    %12966 = vst [vmem:[#allocation2 + $0x1f0] sm:$0xf] %v11860
    %12967 = vst [vmem:[#allocation2 + $0x1f4] sm:$0xf] %v11861
    %12968 = vst [vmem:[#allocation2 + $0x1f8] sm:$0xf] %v11862
    %12969 = vst [vmem:[#allocation2 + $0x1fc] sm:$0xf] %v11863
    %12970 = vst [vmem:[#allocation2 + $0x200] sm:$0xf] %v11864
    %12971 = vst [vmem:[#allocation2 + $0x204] sm:$0xf] %v11865
    %12972 = vst [vmem:[#allocation2 + $0x208] sm:$0xf] %v11866
    %12973 = vst [vmem:[#allocation2 + $0x20c] sm:$0xf] %v11867
    %12974 = vst [vmem:[#allocation2 + $0x210] sm:$0xf] %v11868
    %12975 = vst [vmem:[#allocation2 + $0x214] sm:$0xf] %v11869
    %12976 = vst [vmem:[#allocation2 + $0x218] sm:$0xf] %v11870
    %12977 = vst [vmem:[#allocation2 + $0x21c] sm:$0xf] %v11871
    %12978 = vst [vmem:[#allocation2 + $0x220] sm:$0xf] %v11872
    %12979 = vst [vmem:[#allocation2 + $0x224] sm:$0xf] %v11873
    %12980 = vst [vmem:[#allocation2 + $0x228] sm:$0xf] %v11874
    %12981 = vst [vmem:[#allocation2 + $0x22c] sm:$0xf] %v11875
    %12982 = vst [vmem:[#allocation2 + $0x230] sm:$0xf] %v11876
    %12983 = vst [vmem:[#allocation2 + $0x234] sm:$0xf] %v11877
    %12984 = vst [vmem:[#allocation2 + $0x238] sm:$0xf] %v11878
    %12985 = vst [vmem:[#allocation2 + $0x23c] sm:$0xf] %v11879
    %12986 = vst [vmem:[#allocation2 + $0x240] sm:$0xf] %v11880
    %12987 = vst [vmem:[#allocation2 + $0x244] sm:$0xf] %v11881
    %12988 = vst [vmem:[#allocation2 + $0x248] sm:$0xf] %v11882
    %12989 = vst [vmem:[#allocation2 + $0x24c] sm:$0xf] %v11883
    %12990 = vst [vmem:[#allocation2 + $0x250] sm:$0xf] %v11884
    %12991 = vst [vmem:[#allocation2 + $0x254] sm:$0xf] %v11885
    %12992 = vst [vmem:[#allocation2 + $0x258] sm:$0xf] %v11886
    %12993 = vst [vmem:[#allocation2 + $0x25c] sm:$0xf] %v11887
    %12994 = vst [vmem:[#allocation2 + $0x260] sm:$0xf] %v11888
    %12995 = vst [vmem:[#allocation2 + $0x264] sm:$0xf] %v11889
    %12996 = vst [vmem:[#allocation2 + $0x268] sm:$0xf] %v11890
    %12997 = vst [vmem:[#allocation2 + $0x26c] sm:$0xf] %v11891
    %12998 = vst [vmem:[#allocation2 + $0x270] sm:$0xf] %v11892
    %12999 = vst [vmem:[#allocation2 + $0x274] sm:$0xf] %v11893
    %13000 = vst [vmem:[#allocation2 + $0x278] sm:$0xf] %v11894
    %13001 = vst [vmem:[#allocation2 + $0x27c] sm:$0xf] %v11895
    %13002 = vst [vmem:[#allocation2 + $0x280] sm:$0xf] %v11896
    %13003 = vst [vmem:[#allocation2 + $0x284] sm:$0xf] %v11897
    %13004 = vst [vmem:[#allocation2 + $0x288] sm:$0xf] %v11898
    %13005 = vst [vmem:[#allocation2 + $0x28c] sm:$0xf] %v11899
    %13006 = vst [vmem:[#allocation2 + $0x290] sm:$0xf] %v11900
    %13007 = vst [vmem:[#allocation2 + $0x294] sm:$0xf] %v11901
    %13008 = vst [vmem:[#allocation2 + $0x298] sm:$0xf] %v11902
    %13009 = vst [vmem:[#allocation2 + $0x29c] sm:$0xf] %v11903
    %13010 = vst [vmem:[#allocation2 + $0x2a0] sm:$0xf] %v11904
    %13011 = vst [vmem:[#allocation2 + $0x2a4] sm:$0xf] %v11905
    %13012 = vst [vmem:[#allocation2 + $0x2a8] sm:$0xf] %v11906
    %13013 = vst [vmem:[#allocation2 + $0x2ac] sm:$0xf] %v11907
    %13014 = vst [vmem:[#allocation2 + $0x2b0] sm:$0xf] %v11908
    %13015 = vst [vmem:[#allocation2 + $0x2b4] sm:$0xf] %v11909
    %13016 = vst [vmem:[#allocation2 + $0x2b8] sm:$0xf] %v11910
    %13017 = vst [vmem:[#allocation2 + $0x2bc] sm:$0xf] %v11911
    %13018 = vst [vmem:[#allocation2 + $0x2c0] sm:$0xf] %v11912
    %13019 = vst [vmem:[#allocation2 + $0x2c4] sm:$0xf] %v11913
    %13020 = vst [vmem:[#allocation2 + $0x2c8] sm:$0xf] %v11914
    %13021 = vst [vmem:[#allocation2 + $0x2cc] sm:$0xf] %v11915
    %13022 = vst [vmem:[#allocation2 + $0x2d0] sm:$0xf] %v11916
    %13023 = vst [vmem:[#allocation2 + $0x2d4] sm:$0xf] %v11917
    %13024 = vst [vmem:[#allocation2 + $0x2d8] sm:$0xf] %v11918
    %13025 = vst [vmem:[#allocation2 + $0x2dc] sm:$0xf] %v11919
    %13026 = vst [vmem:[#allocation2 + $0x2e0] sm:$0xf] %v11920
    %13027 = vst [vmem:[#allocation2 + $0x2e4] sm:$0xf] %v11921
    %13028 = vst [vmem:[#allocation2 + $0x2e8] sm:$0xf] %v11922
    %13029 = vst [vmem:[#allocation2 + $0x2ec] sm:$0xf] %v11923
    %13030 = vst [vmem:[#allocation2 + $0x2f0] sm:$0xf] %v11924
    %13031 = vst [vmem:[#allocation2 + $0x2f4] sm:$0xf] %v11925
    %13032 = vst [vmem:[#allocation2 + $0x2f8] sm:$0xf] %v11926
    %13033 = vst [vmem:[#allocation2 + $0x2fc] sm:$0xf] %v11927
    %13034 = vst [vmem:[#allocation2 + $0x300] sm:$0xf] %v11928
    %13035 = vst [vmem:[#allocation2 + $0x304] sm:$0xf] %v11929
    %13036 = vst [vmem:[#allocation2 + $0x308] sm:$0xf] %v11930
    %13037 = vst [vmem:[#allocation2 + $0x30c] sm:$0xf] %v11931
    %13038 = vst [vmem:[#allocation2 + $0x310] sm:$0xf] %v11932
    %13039 = vst [vmem:[#allocation2 + $0x314] sm:$0xf] %v11933
    %13040 = vst [vmem:[#allocation2 + $0x318] sm:$0xf] %v11934
    %13041 = vst [vmem:[#allocation2 + $0x31c] sm:$0xf] %v11935
    %13042 = vst [vmem:[#allocation2 + $0x320] sm:$0xf] %v11936
    %13043 = vst [vmem:[#allocation2 + $0x324] sm:$0xf] %v11937
    %13044 = vst [vmem:[#allocation2 + $0x328] sm:$0xf] %v11938
    %13045 = vst [vmem:[#allocation2 + $0x32c] sm:$0xf] %v11939
    %13046 = vst [vmem:[#allocation2 + $0x330] sm:$0xf] %v11940
    %13047 = vst [vmem:[#allocation2 + $0x334] sm:$0xf] %v11941
    %13048 = vst [vmem:[#allocation2 + $0x338] sm:$0xf] %v11942
    %13049 = vst [vmem:[#allocation2 + $0x33c] sm:$0xf] %v11943
    %13050 = vst [vmem:[#allocation2 + $0x340] sm:$0xf] %v11944
    %13051 = vst [vmem:[#allocation2 + $0x344] sm:$0xf] %v11945
    %13052 = vst [vmem:[#allocation2 + $0x348] sm:$0xf] %v11946
    %13053 = vst [vmem:[#allocation2 + $0x34c] sm:$0xf] %v11947
    %13054 = vst [vmem:[#allocation2 + $0x350] sm:$0xf] %v11948
    %13055 = vst [vmem:[#allocation2 + $0x354] sm:$0xf] %v11949
    %13056 = vst [vmem:[#allocation2 + $0x358] sm:$0xf] %v11950
    %13057 = vst [vmem:[#allocation2 + $0x35c] sm:$0xf] %v11951
    %13058 = vst [vmem:[#allocation2 + $0x360] sm:$0xf] %v11952
    %13059 = vst [vmem:[#allocation2 + $0x364] sm:$0xf] %v11953
    %13060 = vst [vmem:[#allocation2 + $0x368] sm:$0xf] %v11954
    %13061 = vst [vmem:[#allocation2 + $0x36c] sm:$0xf] %v11955
    %13062 = vst [vmem:[#allocation2 + $0x370] sm:$0xf] %v11956
    %13063 = vst [vmem:[#allocation2 + $0x374] sm:$0xf] %v11957
    %13064 = vst [vmem:[#allocation2 + $0x378] sm:$0xf] %v11958
    %13065 = vst [vmem:[#allocation2 + $0x37c] sm:$0xf] %v11959
    %13066 = vst [vmem:[#allocation2 + $0x380] sm:$0xf] %v11960
    %13067 = vst [vmem:[#allocation2 + $0x384] sm:$0xf] %v11961
    %13068 = vst [vmem:[#allocation2 + $0x388] sm:$0xf] %v11962
    %13069 = vst [vmem:[#allocation2 + $0x38c] sm:$0xf] %v11963
    %13070 = vst [vmem:[#allocation2 + $0x390] sm:$0xf] %v11964
    %13071 = vst [vmem:[#allocation2 + $0x394] sm:$0xf] %v11965
    %13072 = vst [vmem:[#allocation2 + $0x398] sm:$0xf] %v11966
    %13073 = vst [vmem:[#allocation2 + $0x39c] sm:$0xf] %v11967
    %13074 = vst [vmem:[#allocation2 + $0x3a0] sm:$0xf] %v11968
    %13075 = vst [vmem:[#allocation2 + $0x3a4] sm:$0xf] %v11969
    %13076 = vst [vmem:[#allocation2 + $0x3a8] sm:$0xf] %v11970
    %13077 = vst [vmem:[#allocation2 + $0x3ac] sm:$0xf] %v11971
    %13078 = vst [vmem:[#allocation2 + $0x3b0] sm:$0xf] %v11972
    %13079 = vst [vmem:[#allocation2 + $0x3b4] sm:$0xf] %v11973
    %13080 = vst [vmem:[#allocation2 + $0x3b8] sm:$0xf] %v11974
    %13081 = vst [vmem:[#allocation2 + $0x3bc] sm:$0xf] %v11975
    %13082 = vst [vmem:[#allocation2 + $0x3c0] sm:$0xf] %v11976
    %13083 = vst [vmem:[#allocation2 + $0x3c4] sm:$0xf] %v11977
    %13084 = vst [vmem:[#allocation2 + $0x3c8] sm:$0xf] %v11978
    %13085 = vst [vmem:[#allocation2 + $0x3cc] sm:$0xf] %v11979
    %13086 = vst [vmem:[#allocation2 + $0x3d0] sm:$0xf] %v11980
    %13087 = vst [vmem:[#allocation2 + $0x3d4] sm:$0xf] %v11981
    %13088 = vst [vmem:[#allocation2 + $0x3d8] sm:$0xf] %v11982
    %13089 = vst [vmem:[#allocation2 + $0x3dc] sm:$0xf] %v11983
    %13090 = vst [vmem:[#allocation2 + $0x3e0] sm:$0xf] %v11984
    %13091 = vst [vmem:[#allocation2 + $0x3e4] sm:$0xf] %v11985
    %13092 = vst [vmem:[#allocation2 + $0x3e8] sm:$0xf] %v11986
    %13093 = vst [vmem:[#allocation2 + $0x3ec] sm:$0xf] %v11987
    %13094 = vst [vmem:[#allocation2 + $0x3f0] sm:$0xf] %v11988
    %13095 = vst [vmem:[#allocation2 + $0x3f4] sm:$0xf] %v11989
    %13096 = vst [vmem:[#allocation2 + $0x3f8] sm:$0xf] %v11990
    %13097 = vst [vmem:[#allocation2 + $0x3fc] sm:$0xf] %v11991
    %13098 = vst [vmem:[#allocation2 + $0x400] sm:$0xf] %v11992
    %13099 = vst [vmem:[#allocation2 + $0x404] sm:$0xf] %v11993
    %13100 = vst [vmem:[#allocation2 + $0x408] sm:$0xf] %v11994
    %13101 = vst [vmem:[#allocation2 + $0x40c] sm:$0xf] %v11995
    %13102 = vst [vmem:[#allocation2 + $0x410] sm:$0xf] %v11996
    %13103 = vst [vmem:[#allocation2 + $0x414] sm:$0xf] %v11997
    %13104 = vst [vmem:[#allocation2 + $0x418] sm:$0xf] %v11998
    %13105 = vst [vmem:[#allocation2 + $0x41c] sm:$0xf] %v11999
    %13106 = vst [vmem:[#allocation2 + $0x420] sm:$0xf] %v12000
    %13107 = vst [vmem:[#allocation2 + $0x424] sm:$0xf] %v12001
    %13108 = vst [vmem:[#allocation2 + $0x428] sm:$0xf] %v12002
    %13109 = vst [vmem:[#allocation2 + $0x42c] sm:$0xf] %v12003
    %13110 = vst [vmem:[#allocation2 + $0x430] sm:$0xf] %v12004
    %13111 = vst [vmem:[#allocation2 + $0x434] sm:$0xf] %v12005
    %13112 = vst [vmem:[#allocation2 + $0x438] sm:$0xf] %v12006
    %13113 = vst [vmem:[#allocation2 + $0x43c] sm:$0xf] %v12007
    %13114 = vst [vmem:[#allocation2 + $0x440] sm:$0xf] %v12008
    %13115 = vst [vmem:[#allocation2 + $0x444] sm:$0xf] %v12009
    %13116 = vst [vmem:[#allocation2 + $0x448] sm:$0xf] %v12010
    %13117 = vst [vmem:[#allocation2 + $0x44c] sm:$0xf] %v12011
    %13118 = vst [vmem:[#allocation2 + $0x450] sm:$0xf] %v12012
    %13119 = vst [vmem:[#allocation2 + $0x454] sm:$0xf] %v12013
    %13120 = vst [vmem:[#allocation2 + $0x458] sm:$0xf] %v12014
    %13121 = vst [vmem:[#allocation2 + $0x45c] sm:$0xf] %v12015
    %13122 = vst [vmem:[#allocation2 + $0x460] sm:$0xf] %v12016
    %13123 = vst [vmem:[#allocation2 + $0x464] sm:$0xf] %v12017
    %13124 = vst [vmem:[#allocation2 + $0x468] sm:$0xf] %v12018
    %13125 = vst [vmem:[#allocation2 + $0x46c] sm:$0xf] %v12019
    %13126 = vst [vmem:[#allocation2 + $0x470] sm:$0xf] %v12020
    %13127 = vst [vmem:[#allocation2 + $0x474] sm:$0xf] %v12021
    %13128 = vst [vmem:[#allocation2 + $0x478] sm:$0xf] %v12022
    %13129 = vst [vmem:[#allocation2 + $0x47c] sm:$0xf] %v12023
    %13130 = vst [vmem:[#allocation2 + $0x480] sm:$0xf] %v12024
    %13131 = vst [vmem:[#allocation2 + $0x484] sm:$0xf] %v12025
    %13132 = vst [vmem:[#allocation2 + $0x488] sm:$0xf] %v12026
    %13133 = vst [vmem:[#allocation2 + $0x48c] sm:$0xf] %v12027
    %13134 = vst [vmem:[#allocation2 + $0x490] sm:$0xf] %v12028
    %13135 = vst [vmem:[#allocation2 + $0x494] sm:$0xf] %v12029
    %13136 = vst [vmem:[#allocation2 + $0x498] sm:$0xf] %v12030
    %13137 = vst [vmem:[#allocation2 + $0x49c] sm:$0xf] %v12031
    %13138 = vst [vmem:[#allocation2 + $0x4a0] sm:$0xf] %v12032
    %13139 = vst [vmem:[#allocation2 + $0x4a4] sm:$0xf] %v12033
    %13140 = vst [vmem:[#allocation2 + $0x4a8] sm:$0xf] %v12034
    %13141 = vst [vmem:[#allocation2 + $0x4ac] sm:$0xf] %v12035
    %13142 = vst [vmem:[#allocation2 + $0x4b0] sm:$0xf] %v12036
    %13143 = vst [vmem:[#allocation2 + $0x4b4] sm:$0xf] %v12037
    %13144 = vst [vmem:[#allocation2 + $0x4b8] sm:$0xf] %v12038
    %13145 = vst [vmem:[#allocation2 + $0x4bc] sm:$0xf] %v12039
    %13146 = vst [vmem:[#allocation2 + $0x4c0] sm:$0xf] %v12040
    %13147 = vst [vmem:[#allocation2 + $0x4c4] sm:$0xf] %v12041
    %13148 = vst [vmem:[#allocation2 + $0x4c8] sm:$0xf] %v12042
    %13149 = vst [vmem:[#allocation2 + $0x4cc] sm:$0xf] %v12043
    %13150 = vst [vmem:[#allocation2 + $0x4d0] sm:$0xf] %v12044
    %13151 = vst [vmem:[#allocation2 + $0x4d4] sm:$0xf] %v12045
    %13152 = vst [vmem:[#allocation2 + $0x4d8] sm:$0xf] %v12046
    %13153 = vst [vmem:[#allocation2 + $0x4dc] sm:$0xf] %v12047
    %13154 = vst [vmem:[#allocation2 + $0x4e0] sm:$0xf] %v12048
    %13155 = vst [vmem:[#allocation2 + $0x4e4] sm:$0xf] %v12049
    %13156 = vst [vmem:[#allocation2 + $0x4e8] sm:$0xf] %v12050
    %13157 = vst [vmem:[#allocation2 + $0x4ec] sm:$0xf] %v12051
    %13158 = vst [vmem:[#allocation2 + $0x4f0] sm:$0xf] %v12052
    %13159 = vst [vmem:[#allocation2 + $0x4f4] sm:$0xf] %v12053
    %13160 = vst [vmem:[#allocation2 + $0x4f8] sm:$0xf] %v12054
    %13161 = vst [vmem:[#allocation2 + $0x4fc] sm:$0xf] %v12055
    %13162 = vst [vmem:[#allocation2 + $0x500] sm:$0xf] %v12056
    %13163 = vst [vmem:[#allocation2 + $0x504] sm:$0xf] %v12057
    %13164 = vst [vmem:[#allocation2 + $0x508] sm:$0xf] %v12058
    %13165 = vst [vmem:[#allocation2 + $0x50c] sm:$0xf] %v12059
    %13166 = vst [vmem:[#allocation2 + $0x510] sm:$0xf] %v12060
    %13167 = vst [vmem:[#allocation2 + $0x514] sm:$0xf] %v12061
    %13168 = vst [vmem:[#allocation2 + $0x518] sm:$0xf] %v12062
    %13169 = vst [vmem:[#allocation2 + $0x51c] sm:$0xf] %v12063
    %13170 = vst [vmem:[#allocation2 + $0x520] sm:$0xf] %v12064
    %13171 = vst [vmem:[#allocation2 + $0x524] sm:$0xf] %v12065
    %13172 = vst [vmem:[#allocation2 + $0x528] sm:$0xf] %v12066
    %13173 = vst [vmem:[#allocation2 + $0x52c] sm:$0xf] %v12067
    %13174 = vst [vmem:[#allocation2 + $0x530] sm:$0xf] %v12068
    %13175 = vst [vmem:[#allocation2 + $0x534] sm:$0xf] %v12069
    %13176 = vst [vmem:[#allocation2 + $0x538] sm:$0xf] %v12070
    %13177 = vst [vmem:[#allocation2 + $0x53c] sm:$0xf] %v12071
    %13178 = vst [vmem:[#allocation2 + $0x540] sm:$0xf] %v12072
    %13179 = vst [vmem:[#allocation2 + $0x544] sm:$0xf] %v12073
    %13180 = vst [vmem:[#allocation2 + $0x548] sm:$0xf] %v12074
    %13181 = vst [vmem:[#allocation2 + $0x54c] sm:$0xf] %v12075
    %13182 = vst [vmem:[#allocation2 + $0x550] sm:$0xf] %v12076
    %13183 = vst [vmem:[#allocation2 + $0x554] sm:$0xf] %v12077
    %13184 = vst [vmem:[#allocation2 + $0x558] sm:$0xf] %v12078
    %13185 = vst [vmem:[#allocation2 + $0x55c] sm:$0xf] %v12079
    %13186 = vst [vmem:[#allocation2 + $0x560] sm:$0xf] %v12080
    %13187 = vst [vmem:[#allocation2 + $0x564] sm:$0xf] %v12081
    %13188 = vst [vmem:[#allocation2 + $0x568] sm:$0xf] %v12082
    %13189 = vst [vmem:[#allocation2 + $0x56c] sm:$0xf] %v12083
    %13190 = vst [vmem:[#allocation2 + $0x570] sm:$0xf] %v12084
    %13191 = vst [vmem:[#allocation2 + $0x574] sm:$0xf] %v12085
    %13192 = vst [vmem:[#allocation2 + $0x578] sm:$0xf] %v12086
    %13193 = vst [vmem:[#allocation2 + $0x57c] sm:$0xf] %v12087
    %13194 = vst [vmem:[#allocation2 + $0x580] sm:$0xf] %v12088
    %13195 = vst [vmem:[#allocation2 + $0x584] sm:$0xf] %v12089
    %13196 = vst [vmem:[#allocation2 + $0x588] sm:$0xf] %v12090
    %13197 = vst [vmem:[#allocation2 + $0x58c] sm:$0xf] %v12091
    %13198 = vst [vmem:[#allocation2 + $0x590] sm:$0xf] %v12092
    %13199 = vst [vmem:[#allocation2 + $0x594] sm:$0xf] %v12093
    %13200 = vst [vmem:[#allocation2 + $0x598] sm:$0xf] %v12094
    %13201 = vst [vmem:[#allocation2 + $0x59c] sm:$0xf] %v12095
    %13202 = vst [vmem:[#allocation2 + $0x5a0] sm:$0xf] %v12096
    %13203 = vst [vmem:[#allocation2 + $0x5a4] sm:$0xf] %v12097
    %13204 = vst [vmem:[#allocation2 + $0x5a8] sm:$0xf] %v12098
    %13205 = vst [vmem:[#allocation2 + $0x5ac] sm:$0xf] %v12099
    %13206 = vst [vmem:[#allocation2 + $0x5b0] sm:$0xf] %v12100
    %13207 = vst [vmem:[#allocation2 + $0x5b4] sm:$0xf] %v12101
    %13208 = vst [vmem:[#allocation2 + $0x5b8] sm:$0xf] %v12102
    %13209 = vst [vmem:[#allocation2 + $0x5bc] sm:$0xf] %v12103
    %13210 = vst [vmem:[#allocation2 + $0x5c0] sm:$0xf] %v12104
    %13211 = vst [vmem:[#allocation2 + $0x5c4] sm:$0xf] %v12105
    %13212 = vst [vmem:[#allocation2 + $0x5c8] sm:$0xf] %v12106
    %13213 = vst [vmem:[#allocation2 + $0x5cc] sm:$0xf] %v12107
    %13214 = vst [vmem:[#allocation2 + $0x5d0] sm:$0xf] %v12108
    %13215 = vst [vmem:[#allocation2 + $0x5d4] sm:$0xf] %v12109
    %13216 = vst [vmem:[#allocation2 + $0x5d8] sm:$0xf] %v12110
    %13217 = vst [vmem:[#allocation2 + $0x5dc] sm:$0xf] %v12111
    %13218 = vst [vmem:[#allocation2 + $0x5e0] sm:$0xf] %v12112
    %13219 = vst [vmem:[#allocation2 + $0x5e4] sm:$0xf] %v12113
    %13220 = vst [vmem:[#allocation2 + $0x5e8] sm:$0xf] %v12114
    %13221 = vst [vmem:[#allocation2 + $0x5ec] sm:$0xf] %v12115
    %13222 = vst [vmem:[#allocation2 + $0x5f0] sm:$0xf] %v12116
    %13223 = vst [vmem:[#allocation2 + $0x5f4] sm:$0xf] %v12117
    %13224 = vst [vmem:[#allocation2 + $0x5f8] sm:$0xf] %v12118
    %13225 = vst [vmem:[#allocation2 + $0x5fc] sm:$0xf] %v12119
    %13226 = vst [vmem:[#allocation2 + $0x600] sm:$0xf] %v12120
    %13227 = vst [vmem:[#allocation2 + $0x604] sm:$0xf] %v12121
    %13228 = vst [vmem:[#allocation2 + $0x608] sm:$0xf] %v12122
    %13229 = vst [vmem:[#allocation2 + $0x60c] sm:$0xf] %v12123
    %13230 = vst [vmem:[#allocation2 + $0x610] sm:$0xf] %v12124
    %13231 = vst [vmem:[#allocation2 + $0x614] sm:$0xf] %v12125
    %13232 = vst [vmem:[#allocation2 + $0x618] sm:$0xf] %v12126
    %13233 = vst [vmem:[#allocation2 + $0x61c] sm:$0xf] %v12127
    %13234 = vst [vmem:[#allocation2 + $0x620] sm:$0xf] %v12128
    %13235 = vst [vmem:[#allocation2 + $0x624] sm:$0xf] %v12129
    %13236 = vst [vmem:[#allocation2 + $0x628] sm:$0xf] %v12130
    %13237 = vst [vmem:[#allocation2 + $0x62c] sm:$0xf] %v12131
    %13238 = vst [vmem:[#allocation2 + $0x630] sm:$0xf] %v12132
    %13239 = vst [vmem:[#allocation2 + $0x634] sm:$0xf] %v12133
    %13240 = vst [vmem:[#allocation2 + $0x638] sm:$0xf] %v12134
    %13241 = vst [vmem:[#allocation2 + $0x63c] sm:$0xf] %v12135
    %13242 = vst [vmem:[#allocation2 + $0x640] sm:$0xf] %v12136
    %13243 = vst [vmem:[#allocation2 + $0x644] sm:$0xf] %v12137
    %13244 = vst [vmem:[#allocation2 + $0x648] sm:$0xf] %v12138
    %13245 = vst [vmem:[#allocation2 + $0x64c] sm:$0xf] %v12139
    %13246 = vst [vmem:[#allocation2 + $0x650] sm:$0xf] %v12140
    %13247 = vst [vmem:[#allocation2 + $0x654] sm:$0xf] %v12141
    %13248 = vst [vmem:[#allocation2 + $0x658] sm:$0xf] %v12142
    %13249 = vst [vmem:[#allocation2 + $0x65c] sm:$0xf] %v12143
    %13250 = vst [vmem:[#allocation2 + $0x660] sm:$0xf] %v12144
    %13251 = vst [vmem:[#allocation2 + $0x664] sm:$0xf] %v12145
    %13252 = vst [vmem:[#allocation2 + $0x668] sm:$0xf] %v12146
    %13253 = vst [vmem:[#allocation2 + $0x66c] sm:$0xf] %v12147
    %13254 = vst [vmem:[#allocation2 + $0x670] sm:$0xf] %v12148
    %13255 = vst [vmem:[#allocation2 + $0x674] sm:$0xf] %v12149
    %13256 = vst [vmem:[#allocation2 + $0x678] sm:$0xf] %v12150
    %13257 = vst [vmem:[#allocation2 + $0x67c] sm:$0xf] %v12151
    %13258 = vst [vmem:[#allocation2 + $0x680] sm:$0xf] %v12152
    %13259 = vst [vmem:[#allocation2 + $0x684] sm:$0xf] %v12153
    %13260 = vst [vmem:[#allocation2 + $0x688] sm:$0xf] %v12154
    %13261 = vst [vmem:[#allocation2 + $0x68c] sm:$0xf] %v12155
    %13262 = vst [vmem:[#allocation2 + $0x690] sm:$0xf] %v12156
    %13263 = vst [vmem:[#allocation2 + $0x694] sm:$0xf] %v12157
    %13264 = vst [vmem:[#allocation2 + $0x698] sm:$0xf] %v12158
    %13265 = vst [vmem:[#allocation2 + $0x69c] sm:$0xf] %v12159
    %13266 = vst [vmem:[#allocation2 + $0x6a0] sm:$0xf] %v12160
    %13267 = vst [vmem:[#allocation2 + $0x6a4] sm:$0xf] %v12161
    %13268 = vst [vmem:[#allocation2 + $0x6a8] sm:$0xf] %v12162
    %13269 = vst [vmem:[#allocation2 + $0x6ac] sm:$0xf] %v12163
    %13270 = vst [vmem:[#allocation2 + $0x6b0] sm:$0xf] %v12164
    %13271 = vst [vmem:[#allocation2 + $0x6b4] sm:$0xf] %v12165
    %13272 = vst [vmem:[#allocation2 + $0x6b8] sm:$0xf] %v12166
    %13273 = vst [vmem:[#allocation2 + $0x6bc] sm:$0xf] %v12167
    %13274 = vst [vmem:[#allocation2 + $0x6c0] sm:$0xf] %v12168
    %13275 = vst [vmem:[#allocation2 + $0x6c4] sm:$0xf] %v12169
    %13276 = vst [vmem:[#allocation2 + $0x6c8] sm:$0xf] %v12170
    %13277 = vst [vmem:[#allocation2 + $0x6cc] sm:$0xf] %v12171
    %13278 = vst [vmem:[#allocation2 + $0x6d0] sm:$0xf] %v12172
    %13279 = vst [vmem:[#allocation2 + $0x6d4] sm:$0xf] %v12173
    %13280 = vst [vmem:[#allocation2 + $0x6d8] sm:$0xf] %v12174
    %13281 = vst [vmem:[#allocation2 + $0x6dc] sm:$0xf] %v12175
    %13282 = vst [vmem:[#allocation2 + $0x6e0] sm:$0xf] %v12176
    %13283 = vst [vmem:[#allocation2 + $0x6e4] sm:$0xf] %v12177
    %13284 = vst [vmem:[#allocation2 + $0x6e8] sm:$0xf] %v12178
    %13285 = vst [vmem:[#allocation2 + $0x6ec] sm:$0xf] %v12179
    %13286 = vst [vmem:[#allocation2 + $0x6f0] sm:$0xf] %v12180
    %13287 = vst [vmem:[#allocation2 + $0x6f4] sm:$0xf] %v12181
    %13288 = vst [vmem:[#allocation2 + $0x6f8] sm:$0xf] %v12182
    %13289 = vst [vmem:[#allocation2 + $0x6fc] sm:$0xf] %v12183
    %13290 = vst [vmem:[#allocation2 + $0x700] sm:$0xf] %v12184
    %13291 = vst [vmem:[#allocation2 + $0x704] sm:$0xf] %v12185
    %13292 = vst [vmem:[#allocation2 + $0x708] sm:$0xf] %v12186
    %13293 = vst [vmem:[#allocation2 + $0x70c] sm:$0xf] %v12187
    %13294 = vst [vmem:[#allocation2 + $0x710] sm:$0xf] %v12188
    %13295 = vst [vmem:[#allocation2 + $0x714] sm:$0xf] %v12189
    %13296 = vst [vmem:[#allocation2 + $0x718] sm:$0xf] %v12190
    %13297 = vst [vmem:[#allocation2 + $0x71c] sm:$0xf] %v12191
    %13298 = vst [vmem:[#allocation2 + $0x720] sm:$0xf] %v12192
    %13299 = vst [vmem:[#allocation2 + $0x724] sm:$0xf] %v12193
    %13300 = vst [vmem:[#allocation2 + $0x728] sm:$0xf] %v12194
    %13301 = vst [vmem:[#allocation2 + $0x72c] sm:$0xf] %v12195
    %13302 = vst [vmem:[#allocation2 + $0x730] sm:$0xf] %v12196
    %13303 = vst [vmem:[#allocation2 + $0x734] sm:$0xf] %v12197
    %13304 = vst [vmem:[#allocation2 + $0x738] sm:$0xf] %v12198
    %13305 = vst [vmem:[#allocation2 + $0x73c] sm:$0xf] %v12199
    %13306 = vst [vmem:[#allocation2 + $0x740] sm:$0xf] %v12200
    %13307 = vst [vmem:[#allocation2 + $0x744] sm:$0xf] %v12201
    %13308 = vst [vmem:[#allocation2 + $0x748] sm:$0xf] %v12202
    %13309 = vst [vmem:[#allocation2 + $0x74c] sm:$0xf] %v12203
    %13310 = vst [vmem:[#allocation2 + $0x750] sm:$0xf] %v12204
    %13311 = vst [vmem:[#allocation2 + $0x754] sm:$0xf] %v12205
    %13312 = vst [vmem:[#allocation2 + $0x758] sm:$0xf] %v12206
    %13313 = vst [vmem:[#allocation2 + $0x75c] sm:$0xf] %v12207
    %13314 = vst [vmem:[#allocation2 + $0x760] sm:$0xf] %v12208
    %13315 = vst [vmem:[#allocation2 + $0x764] sm:$0xf] %v12209
    %13316 = vst [vmem:[#allocation2 + $0x768] sm:$0xf] %v12210
    %13317 = vst [vmem:[#allocation2 + $0x76c] sm:$0xf] %v12211
    %13318 = vst [vmem:[#allocation2 + $0x770] sm:$0xf] %v12212
    %13319 = vst [vmem:[#allocation2 + $0x774] sm:$0xf] %v12213
    %13320 = vst [vmem:[#allocation2 + $0x778] sm:$0xf] %v12214
    %13321 = vst [vmem:[#allocation2 + $0x77c] sm:$0xf] %v12215
    %13322 = vst [vmem:[#allocation2 + $0x780] sm:$0xf] %v12216
    %13323 = vst [vmem:[#allocation2 + $0x784] sm:$0xf] %v12217
    %13324 = vst [vmem:[#allocation2 + $0x788] sm:$0xf] %v12218
    %13325 = vst [vmem:[#allocation2 + $0x78c] sm:$0xf] %v12219
    %13326 = vst [vmem:[#allocation2 + $0x790] sm:$0xf] %v12220
    %13327 = vst [vmem:[#allocation2 + $0x794] sm:$0xf] %v12221
    %13328 = vst [vmem:[#allocation2 + $0x798] sm:$0xf] %v12222
    %13329 = vst [vmem:[#allocation2 + $0x79c] sm:$0xf] %v12223
    %13330 = vst [vmem:[#allocation2 + $0x7a0] sm:$0xf] %v12224
    %13331 = vst [vmem:[#allocation2 + $0x7a4] sm:$0xf] %v12225
    %13332 = vst [vmem:[#allocation2 + $0x7a8] sm:$0xf] %v12226
    %13333 = vst [vmem:[#allocation2 + $0x7ac] sm:$0xf] %v12227
    %13334 = vst [vmem:[#allocation2 + $0x7b0] sm:$0xf] %v12228
    %13335 = vst [vmem:[#allocation2 + $0x7b4] sm:$0xf] %v12229
    %13336 = vst [vmem:[#allocation2 + $0x7b8] sm:$0xf] %v12230
    %13337 = vst [vmem:[#allocation2 + $0x7bc] sm:$0xf] %v12231
    %13338 = vst [vmem:[#allocation2 + $0x7c0] sm:$0xf] %v12232
    %13339 = vst [vmem:[#allocation2 + $0x7c4] sm:$0xf] %v12233
    %13340 = vst [vmem:[#allocation2 + $0x7c8] sm:$0xf] %v12234
    %13341 = vst [vmem:[#allocation2 + $0x7cc] sm:$0xf] %v12235
    %13342 = vst [vmem:[#allocation2 + $0x7d0] sm:$0xf] %v12236
    %13343 = vst [vmem:[#allocation2 + $0x7d4] sm:$0xf] %v12237
    %13344 = vst [vmem:[#allocation2 + $0x7d8] sm:$0xf] %v12238
    %13345 = vst [vmem:[#allocation2 + $0x7dc] sm:$0xf] %v12239
    %13346 = vst [vmem:[#allocation2 + $0x7e0] sm:$0xf] %v12240
    %13347 = vst [vmem:[#allocation2 + $0x7e4] sm:$0xf] %v12241
    %13348 = vst [vmem:[#allocation2 + $0x7e8] sm:$0xf] %v12242
    %13349 = vst [vmem:[#allocation2 + $0x7ec] sm:$0xf] %v12243
    %13350 = vst [vmem:[#allocation2 + $0x7f0] sm:$0xf] %v12244
    %13351 = vst [vmem:[#allocation2 + $0x7f4] sm:$0xf] %v12245
    %13352 = vst [vmem:[#allocation2 + $0x7f8] sm:$0xf] %v12246
    %13353 = vst [vmem:[#allocation2 + $0x7fc] sm:$0xf] %v12247
    %13354 = vst [vmem:[#allocation2 + $0x800] sm:$0xf] %v12248
    %13355 = vst [vmem:[#allocation2 + $0x804] sm:$0xf] %v12249
    %13356 = vst [vmem:[#allocation2 + $0x808] sm:$0xf] %v12250
    %13357 = vst [vmem:[#allocation2 + $0x80c] sm:$0xf] %v12251
    %13358 = vst [vmem:[#allocation2 + $0x810] sm:$0xf] %v12252
    %13359 = vst [vmem:[#allocation2 + $0x814] sm:$0xf] %v12253
    %13360 = vst [vmem:[#allocation2 + $0x818] sm:$0xf] %v12254
    %13361 = vst [vmem:[#allocation2 + $0x81c] sm:$0xf] %v12255
    %13362 = vst [vmem:[#allocation2 + $0x820] sm:$0xf] %v12256
    %13363 = vst [vmem:[#allocation2 + $0x824] sm:$0xf] %v12257
    %13364 = vst [vmem:[#allocation2 + $0x828] sm:$0xf] %v12258
    %13365 = vst [vmem:[#allocation2 + $0x82c] sm:$0xf] %v12259
    %13366 = vst [vmem:[#allocation2 + $0x830] sm:$0xf] %v12260
    %13367 = vst [vmem:[#allocation2 + $0x834] sm:$0xf] %v12261
    %13368 = vst [vmem:[#allocation2 + $0x838] sm:$0xf] %v12262
    %13369 = vst [vmem:[#allocation2 + $0x83c] sm:$0xf] %v12263
    %13370 = vst [vmem:[#allocation2 + $0x840] sm:$0xf] %v12264
    %13371 = vst [vmem:[#allocation2 + $0x844] sm:$0xf] %v12265
    %13372 = vst [vmem:[#allocation2 + $0x848] sm:$0xf] %v12266
    %13373 = vst [vmem:[#allocation2 + $0x84c] sm:$0xf] %v12267
    %13374 = vst [vmem:[#allocation2 + $0x850] sm:$0xf] %v12268
    %13375 = vst [vmem:[#allocation2 + $0x854] sm:$0xf] %v12269
    %13376 = vst [vmem:[#allocation2 + $0x858] sm:$0xf] %v12270
    %13377 = vst [vmem:[#allocation2 + $0x85c] sm:$0xf] %v12271
    %13378 = vst [vmem:[#allocation2 + $0x860] sm:$0xf] %v12272
    %13379 = vst [vmem:[#allocation2 + $0x864] sm:$0xf] %v12273
    %13380 = vst [vmem:[#allocation2 + $0x868] sm:$0xf] %v12274
    %13381 = vst [vmem:[#allocation2 + $0x86c] sm:$0xf] %v12275
    %13382 = vst [vmem:[#allocation2 + $0x870] sm:$0xf] %v12276
    %13383 = vst [vmem:[#allocation2 + $0x874] sm:$0xf] %v12277
    %13384 = vst [vmem:[#allocation2 + $0x878] sm:$0xf] %v12278
    %13385 = vst [vmem:[#allocation2 + $0x87c] sm:$0xf] %v12279
    %13386 = vst [vmem:[#allocation2 + $0x880] sm:$0xf] %v12280
    %13387 = vst [vmem:[#allocation2 + $0x884] sm:$0xf] %v12281
    %13388 = vst [vmem:[#allocation2 + $0x888] sm:$0xf] %v12282
    %13389 = vst [vmem:[#allocation2 + $0x88c] sm:$0xf] %v12283
    %13390 = vst [vmem:[#allocation2 + $0x890] sm:$0xf] %v12284
    %13391 = vst [vmem:[#allocation2 + $0x894] sm:$0xf] %v12285
    %13392 = vst [vmem:[#allocation2 + $0x898] sm:$0xf] %v12286
    %13393 = vst [vmem:[#allocation2 + $0x89c] sm:$0xf] %v12287
    %13394 = vst [vmem:[#allocation2 + $0x8a0] sm:$0x1] %v12288
    // Predicated region
    $region22: #{tpu_custom_call.1} parent=1 // pred_check
      _
    $region23: #{tpu_custom_call.1} parent=1 // pred_check_branch
      %13396 = sbr.rel (0) target = $region25
    $region24: #{tpu_custom_call.1} parent=1 // pred_region
      %s13398 = ssub.s32 35392, 35392
      %13399 = vsyncadd [#allocation3], %s13398
      %s13400 = sshll.u32 [#allocation2], 4
      %s13401 = int_to_ptr.vmem [resolvable:$true] %s13400
      %13406 = dma.vmem_to_hbm [thread:$0]  %s13401, 35392, %s5, [#allocation3], 64, 64, 4
    $region25: #{tpu_custom_call.1} parent=1 // pred_fallthru
      _
    // Predicated region
    $region26: #{tpu_custom_call.1} parent=1 // pred_check
      _
    $region27: #{tpu_custom_call.1} parent=1 // pred_check_branch
      %13408 = sbr.rel (0) target = $region29
    $region28: #{tpu_custom_call.1} parent=1 // pred_region
      %13409 = dma.done [#allocation3], 35392
    $region29: #{tpu_custom_call.1} parent=1 // pred_fallthru
      _
    %13410 = vsyncpa [#allocation3], 1

</llo_original>
